<compile_context>
chip_gen: v5e
topology: v5e:2x2
jax: 0.10.0
libtpu: 0.0.40
codegen_flags: <defaults>
</compile_context>

<pallas_src>
from functools import partial

import jax
import jax.numpy as jnp
import numpy as np
from jax.experimental import pallas as pl
from jax.experimental.pallas import tpu as pltpu

NUM_CLASSES = 10
PADDED_CLASSES = 128  # lane-dense output block; sliced back to 10 in the wrapper


def _round_up(x, m=128):
    return -(-x // m) * m


# ----------------------------------------------------------------------------
# The single fused Pallas kernel (runs once per batch tile)
# ----------------------------------------------------------------------------
def _mnist_fused_kernel(
    a1_ref,
    w1_ref, sc1_ref, sh1_ref, r1_ref, c1_ref,
    w2_ref, sc2_ref, sh2_ref, r2_ref, c2_ref,
    w3_ref, sc3_ref, sh3_ref, r3_ref, c3_ref,
    fc1w_ref, fc1b_ref, fc2w_ref, fc2b_ref,
    out_ref,
):
    f32, bf16 = jnp.float32, jnp.bfloat16

    def conv_bn_relu(a_ext, w_ref, sc, sh):
        # a_ext: (TB*Hp + 2, lanes_in) zero-padded input slab (f32)
        # w_ref: (3, lanes_in, lanes_out) banded block-Toeplitz conv weights (bf16)
        r = a_ext.shape[0] - 2
        acc = jnp.dot(a_ext[0:r, :].astype(bf16), w_ref[0],
                      preferred_element_type=f32)
        acc = acc + jnp.dot(a_ext[1:r + 1, :].astype(bf16), w_ref[1],
                            preferred_element_type=f32)
        acc = acc + jnp.dot(a_ext[2:r + 2, :].astype(bf16), w_ref[2],
                            preferred_element_type=f32)
        # folded BatchNorm (inference running stats) + conv bias, then ReLU (f32)
        return jnp.maximum(acc * sc + sh, 0.0)

    def maxpool(o, ra, ca):
        # 2x2 / stride-2 max pool:
        #   (1) row pair-max on the VPU (static 1-row-shifted slices),
        #   (2) one bf16 row-selection matmul (picks the pooled rows and lays
        #       out the next slab's / head's row structure),
        #   (3) lane pair-max on the VPU (static C-lane-shifted slices),
        #   (4) one bf16 column-selection / re-padding matmul.
        # Selector matrices are exact 0/1 -> bf16 matmuls are exact.
        rows = o.shape[0]
        cshift = o.shape[1] - ca.shape[0]        # = Cout of this stage
        rowmax = jnp.maximum(o[0:rows - 1, :], o[1:rows, :])
        sel = jnp.dot(ra, rowmax.astype(bf16), preferred_element_type=f32)
        colmax = jnp.maximum(sel[:, 0:ca.shape[0]], sel[:, cshift:])
        return jnp.dot(colmax.astype(bf16), ca, preferred_element_type=f32)

    a1 = a1_ref[0]
    # conv1 -> bn1 -> relu -> pool (pool emits the next layer's padded slab)
    o1 = conv_bn_relu(a1, w1_ref, sc1_ref[...], sh1_ref[...])
    a2 = maxpool(o1, r1_ref[...], c1_ref[...])
    # conv2 -> bn2 -> relu -> pool
    o2 = conv_bn_relu(a2, w2_ref, sc2_ref[...], sh2_ref[...])
    a3 = maxpool(o2, r2_ref[...], c2_ref[...])
    # conv3 -> bn3 -> relu -> pool (head layout: rows (i*TB + n), lanes (j, c))
    o3 = conv_bn_relu(a3, w3_ref, sc3_ref[...], sh3_ref[...])
    m = maxpool(o3, r3_ref[...], c3_ref[...])

    n = out_ref.shape[0]
    # fc1 (rows pre-permuted at setup to the kernel's (i, j, c) feature order,
    # so PyTorch's NCHW flatten needs no runtime transpose) + ReLU
    h = jnp.dot(m[0:n].astype(bf16), fc1w_ref[0], preferred_element_type=f32)
    h = h + jnp.dot(m[n:2 * n].astype(bf16), fc1w_ref[1],
                    preferred_element_type=f32)
    h = h + jnp.dot(m[2 * n:3 * n].astype(bf16), fc1w_ref[2],
                    preferred_element_type=f32)
    h = jnp.maximum(h + fc1b_ref[...], 0.0)
    # TODO(synk): nn.Dropout is identity in eval mode; training-mode random
    # masking (pltpu.prng_*) is intentionally not implemented.

    # fc2: classes zero-padded to 128 lanes; padded logits biased to -1e30 (f32)
    # so the 128-wide log_softmax equals the 10-class one on the real classes.
    logits = jnp.dot(h.astype(bf16), fc2w_ref[...],
                     preferred_element_type=f32) + fc2b_ref[...]
    mx = jnp.max(logits, axis=-1, keepdims=True)
    s = logits - mx
    lse = jnp.log(jnp.sum(jnp.exp(s), axis=-1, keepdims=True))
    out_ref[...] = s - lse


# ----------------------------------------------------------------------------
# Setup-time constant construction (runs once, outside the kernel / jit)
# ----------------------------------------------------------------------------
def _banded_conv_weight(wt, w_dim, in_lanes, out_lanes):
    """(3,3,Cin,Cout) conv weights -> (3, in_lanes, out_lanes) banded matrices.

    For row slice dy:  Wdy[(w+dx)*Cin + c, w*Cout + co] = wt[dy, dx, c, co].
    in_lanes >= (w_dim+2)*Cin and out_lanes >= w_dim*Cout; excess is zero pad.
    """
    _, _, cin, cout = wt.shape
    out = np.zeros((3, in_lanes, out_lanes), np.float32)
    for dy in range(3):
        for w in range(w_dim):
            for dx in range(3):
                b = w + dx
                out[dy, b * cin:(b + 1) * cin, w * cout:(w + 1) * cout] = wt[dy, dx]
    return out


def _pool_selectors(batch, h_in, w_in, ch, in_lanes, repad, out_lanes):
    """0/1 selection matrices for the restructured 2x2/2 max pool.

    ra: (out_rows, batch*(h_in+2) - 1)  row selector applied to the row pair-max
        (rowmax[r] = max over conv rows r, r+1), picking r = n*Hp + 2i + 1.
    ca: (in_lanes - ch, out_lanes)      column selector applied to the lane
        pair-max (colmax[q] = max over lanes q, q+ch), picking q = (2j)*ch + c.
    If `repad`, output is laid out directly as the next layer's zero-padded
    slab; otherwise rows are (i*batch + n) and lanes (j*ch + c) for the head.
    """
    hp_in = h_in + 2
    h_out, w_out = h_in // 2, w_in // 2
    in_rows = batch * hp_in
    ca = np.zeros((in_lanes - ch, out_lanes), np.float32)
    if repad:
        hp_o = h_out + 2
        ra = np.zeros((batch * hp_o + 2, in_rows - 1), np.float32)
        for n in range(batch):
            for i in range(h_out):
                ra[n * hp_o + i + 2, n * hp_in + 2 * i + 1] = 1.0
        for j in range(w_out):
            for c in range(ch):
                ca[(2 * j) * ch + c, (j + 1) * ch + c] = 1.0
    else:
        ra = np.zeros((h_out * batch, in_rows - 1), np.float32)
        for i in range(h_out):
            for n in range(batch):
                ra[i * batch + n, n * hp_in + 2 * i + 1] = 1.0
        for j in range(w_out):
            for c in range(ch):
                ca[(2 * j) * ch + c, j * ch + c] = 1.0
    return ra, ca


def build_operands(params, tile_batch, num_filters=8, eps=1e-5):
    """Pre-bakes every weight / selection matrix consumed by the fused kernel.

    Selectors are sized for the per-grid-step `tile_batch`, not the global batch.
    """
    nf = num_filters
    dims = [(28, 1, nf), (14, nf, 2 * nf), (7, 2 * nf, 4 * nf)]
    in_lanes = (28 + 2) * 1  # lane width of the HBM input slab
    ops = []
    for li, (hw, _cin, cout) in enumerate(dims):
        p = params[f"c{li + 1}"]
        conv_lanes = _round_up(hw * cout)             # 224 -> 256 (lane-dense)
        wmat = _banded_conv_weight(np.asarray(p["w"], np.float32), hw,
                                   in_lanes, conv_lanes)
        inv = np.asarray(p["gamma"], np.float32) / np.sqrt(
            np.asarray(p["rvar"], np.float32) + eps)
        scale = np.zeros((1, conv_lanes), np.float32)
        scale[0, :hw * cout] = np.tile(inv, hw)
        shift = np.zeros((1, conv_lanes), np.float32)
        shift[0, :hw * cout] = np.tile(
            np.asarray(p["beta"], np.float32)
            + (np.asarray(p["b"], np.float32)
               - np.asarray(p["rmean"], np.float32)) * inv,
            hw)
        repad = li < 2
        h_out = hw // 2
        pool_lanes = _round_up(((h_out + 2) if repad else h_out) * cout)
        ra, ca = _pool_selectors(tile_batch, hw, hw, cout, conv_lanes,
                                 repad, pool_lanes)
        ops += [jnp.asarray(wmat, jnp.bfloat16),
                jnp.asarray(scale), jnp.asarray(shift),
                jnp.asarray(ra, jnp.bfloat16), jnp.asarray(ca, jnp.bfloat16)]
        in_lanes = pool_lanes

    # fc1: permute rows from PyTorch's NCHW-flatten order (c*9 + i*3 + j) into
    # the kernel's (i, j, c) feature order, split per spatial row i; per-i row
    # blocks are zero-padded from 3*c3=96 to the 128-lane head width.
    c3 = 4 * nf
    head_lanes = in_lanes                              # 128 for nf=8
    fc1 = np.asarray(params["fc1_w"], np.float32)      # (9*c3, 256)
    w1p = np.zeros((3, head_lanes, fc1.shape[1]), np.float32)
    for i in range(3):
        for j in range(3):
            for c in range(c3):
                w1p[i, j * c3 + c, :] = fc1[c * 9 + i * 3 + j, :]
    fc1w = jnp.asarray(w1p, jnp.bfloat16)
    fc1b = jnp.asarray(np.asarray(params["fc1_b"], np.float32)[None, :])

    # fc2: zero-pad 10 -> 128 classes (lane-dense store); padded logits pushed
    # to -1e30 via the f32 bias so log_softmax is unchanged for real classes.
    fc2w = np.zeros((fc1.shape[1], PADDED_CLASSES), np.float32)
    fc2w[:, :NUM_CLASSES] = np.asarray(params["fc2_w"], np.float32)
    fc2b = np.full((1, PADDED_CLASSES), -1e30, np.float32)
    fc2b[0, :NUM_CLASSES] = np.asarray(params["fc2_b"], np.float32)
    ops += [fc1w, fc1b, jnp.asarray(fc2w, jnp.bfloat16), jnp.asarray(fc2b)]
    return tuple(ops)


# ----------------------------------------------------------------------------
# Forward pass: build per-tile padded input slabs + one gridded pallas_call
# ----------------------------------------------------------------------------
@partial(jax.jit, static_argnames=("tile_batch",))
def mnist_forward(x_nchw, operands, tile_batch):
    x = x_nchw.astype(jnp.float32)
    n, cin, h, w = x.shape
    assert n % tile_batch == 0
    g = n // tile_batch
    hp, wp = h + 2, w + 2

    # NCHW -> NHWC, zero-pad spatially (conv padding=1), flatten to the slab
    # layout (rows = image x padded row, lanes = padded col x channel), group
    # into batch tiles, and add one extra zero row top/bottom per tile so the
    # conv row taps are static slices.
    xp = jnp.pad(jnp.transpose(x, (0, 2, 3, 1)),
                 ((0, 0), (1, 1), (1, 1), (0, 0)))
    a1 = xp.reshape(g, tile_batch * hp, wp * cin)
    a1_ext = jnp.pad(a1, ((0, 0), (1, 1), (0, 0)))     # (G, TB*Hp + 2, Wp*Cin)

    in_specs = [pl.BlockSpec((1, tile_batch * hp + 2, wp * cin),
                             lambda i: (i, 0, 0))]
    # Weights / selectors: full-array blocks with constant index_maps so they
    # stay VMEM-resident across grid steps (no re-DMA per tile).
    in_specs += [pl.BlockSpec(op.shape, lambda i, nd=op.ndim: (0,) * nd)
                 for op in operands]

    out = pl.pallas_call(
        _mnist_fused_kernel,
        out_shape=jax.ShapeDtypeStruct((n, PADDED_CLASSES), jnp.float32),
        grid=(g,),
        in_specs=in_specs,
        out_specs=pl.BlockSpec((tile_batch, PADDED_CLASSES), lambda i: (i, 0)),
        compiler_params=pltpu.CompilerParams(
            dimension_semantics=("parallel",)),
    )(a1_ext, *operands)
    return out[:, :NUM_CLASSES]


# ----------------------------------------------------------------------------
# Synthetic parameters + pure-JAX reference (for a numerical cross-check)
# ----------------------------------------------------------------------------
def make_params(key, num_filters=8):
    ks = iter(jax.random.split(key, 32))
    f = jnp.float32

    def conv_block(cin, cout):
        fan_in = 9 * cin
        return {
            "w": jax.random.normal(next(ks), (3, 3, cin, cout), f) / jnp.sqrt(fan_in),
            "b": 0.05 * jax.random.normal(next(ks), (cout,), f),
            "gamma": 1.0 + 0.1 * jax.random.normal(next(ks), (cout,), f),
            "beta": 0.1 * jax.random.normal(next(ks), (cout,), f),
            "rmean": 0.1 * jax.random.normal(next(ks), (cout,), f),
            "rvar": 0.5 + jax.random.uniform(next(ks), (cout,), f),
        }

    nf = num_filters
    din = nf * 4 * 3 * 3
    return {
        "c1": conv_block(1, nf),
        "c2": conv_block(nf, nf * 2),
        "c3": conv_block(nf * 2, nf * 4),
        "fc1_w": jax.random.normal(next(ks), (din, 256), f) / jnp.sqrt(din),
        "fc1_b": 0.05 * jax.random.normal(next(ks), (256,), f),
        "fc2_w": jax.random.normal(next(ks), (256, 10), f) / jnp.sqrt(256.0),
        "fc2_b": 0.05 * jax.random.normal(next(ks), (10,), f),
    }


def _reference_forward(x_nchw, params, eps=1e-5):
    """Plain-JAX forward with the same bf16 matmul-operand rounding as the kernel."""
    def r(v):
        return v.astype(jnp.bfloat16).astype(jnp.float32)

    x = jnp.transpose(x_nchw, (0, 2, 3, 1)).astype(jnp.float32)   # NHWC
    for name in ("c1", "c2", "c3"):
        p = params[name]
        y = jax.lax.conv_general_dilated(
            r(x), r(p["w"]), window_strides=(1, 1), padding="SAME",
            dimension_numbers=("NHWC", "HWIO", "NHWC"))
        inv = p["gamma"] / jnp.sqrt(p["rvar"] + eps)
        y = y * inv + (p["beta"] + (p["b"] - p["rmean"]) * inv)
        y = jnp.maximum(y, 0.0)
        x = jax.lax.reduce_window(y, -jnp.inf, jax.lax.max,
                                  (1, 2, 2, 1), (1, 2, 2, 1), "VALID")
    flat = jnp.transpose(x, (0, 3, 1, 2)).reshape(x.shape[0], -1)   # NCHW flatten
    h = jnp.maximum(jnp.dot(r(flat), r(params["fc1_w"])) + params["fc1_b"], 0.0)
    logits = jnp.dot(r(h), r(params["fc2_w"])) + params["fc2_b"]
    return jax.nn.log_softmax(logits, axis=-1)


# ----------------------------------------------------------------------------
# Main
# ----------------------------------------------------------------------------
if __name__ == "__main__":
    nf = 8            # num_filters shrunk from 64; fc1 in-features = nf*4*3*3 = 288
    tile_batch = 16   # per-grid-step batch tile (conv GEMM M dims: 482/258/146)
    batch = 32        # -> grid=(2,)

    key = jax.random.PRNGKey(0)
    kp, kx = jax.random.split(key)
    params = make_params(kp, num_filters=nf)

    # MNIST-like input: 1 channel, 28x28 (three pools -> 3x3 matches fc1).
    x = jax.random.normal(kx, (batch, 1, 28, 28), jnp.float32)

    operands = build_operands(params, tile_batch=tile_batch, num_filters=nf)
    out = jax.block_until_ready(mnist_forward(x, operands, tile_batch=tile_batch))
    ref = _reference_forward(x, params)

    assert out.shape == (batch, NUM_CLASSES)
    assert bool(jnp.all(jnp.isfinite(out)))
    assert bool(jnp.allclose(jnp.exp(out).sum(axis=1), 1.0, atol=1e-3))
    # Fused kernel matches the plain-JAX reference (bf16 operands, f32 accum).
    assert bool(jnp.max(jnp.abs(out - ref)) < 2e-2)

    print("KERNEL_OK")
</pallas_src>

<mosaic_0001>
module attributes {stable_mosaic.version = 11 : i64} {
  func.func @_mnist_fused_kernel(%arg0: i32, %arg1: memref<1x482x30xf32, #tpu.memory_space<vmem>>, %arg2: memref<3x30x256xbf16, #tpu.memory_space<vmem>>, %arg3: memref<1x256xf32, #tpu.memory_space<vmem>>, %arg4: memref<1x256xf32, #tpu.memory_space<vmem>>, %arg5: memref<258x479xbf16, #tpu.memory_space<vmem>>, %arg6: memref<248x128xbf16, #tpu.memory_space<vmem>>, %arg7: memref<3x128x256xbf16, #tpu.memory_space<vmem>>, %arg8: memref<1x256xf32, #tpu.memory_space<vmem>>, %arg9: memref<1x256xf32, #tpu.memory_space<vmem>>, %arg10: memref<146x255xbf16, #tpu.memory_space<vmem>>, %arg11: memref<240x256xbf16, #tpu.memory_space<vmem>>, %arg12: memref<3x256x256xbf16, #tpu.memory_space<vmem>>, %arg13: memref<1x256xf32, #tpu.memory_space<vmem>>, %arg14: memref<1x256xf32, #tpu.memory_space<vmem>>, %arg15: memref<48x143xbf16, #tpu.memory_space<vmem>>, %arg16: memref<224x128xbf16, #tpu.memory_space<vmem>>, %arg17: memref<3x128x256xbf16, #tpu.memory_space<vmem>>, %arg18: memref<1x256xf32, #tpu.memory_space<vmem>>, %arg19: memref<256x128xbf16, #tpu.memory_space<vmem>>, %arg20: memref<1x128xf32, #tpu.memory_space<vmem>>, %arg21: memref<16x128xf32, #tpu.memory_space<vmem>>) attributes {dimension_semantics = [#tpu.dimension_semantics<parallel>], iteration_bounds = array<i64: 2>, scalar_prefetch = 0 : i64, scratch_operands = 0 : i64, tpu.core_type = #tpu.core_type<tc>, window_params = [{transform_indices = @transform_0, window_bounds = array<i64: 1, 482, 30>}, {pipeline_mode = #tpu.pipeline_mode<synchronous>, transform_indices = @transform_1, window_bounds = array<i64: 3, 30, 256>}, {pipeline_mode = #tpu.pipeline_mode<synchronous>, transform_indices = @transform_2, window_bounds = array<i64: 1, 256>}, {pipeline_mode = #tpu.pipeline_mode<synchronous>, transform_indices = @transform_3, window_bounds = array<i64: 1, 256>}, {pipeline_mode = #tpu.pipeline_mode<synchronous>, transform_indices = @transform_4, window_bounds = array<i64: 258, 479>}, {pipeline_mode = #tpu.pipeline_mode<synchronous>, transform_indices = @transform_5, window_bounds = array<i64: 248, 128>}, {pipeline_mode = #tpu.pipeline_mode<synchronous>, transform_indices = @transform_6, window_bounds = array<i64: 3, 128, 256>}, {pipeline_mode = #tpu.pipeline_mode<synchronous>, transform_indices = @transform_7, window_bounds = array<i64: 1, 256>}, {pipeline_mode = #tpu.pipeline_mode<synchronous>, transform_indices = @transform_8, window_bounds = array<i64: 1, 256>}, {pipeline_mode = #tpu.pipeline_mode<synchronous>, transform_indices = @transform_9, window_bounds = array<i64: 146, 255>}, {pipeline_mode = #tpu.pipeline_mode<synchronous>, transform_indices = @transform_10, window_bounds = array<i64: 240, 256>}, {pipeline_mode = #tpu.pipeline_mode<synchronous>, transform_indices = @transform_11, window_bounds = array<i64: 3, 256, 256>}, {pipeline_mode = #tpu.pipeline_mode<synchronous>, transform_indices = @transform_12, window_bounds = array<i64: 1, 256>}, {pipeline_mode = #tpu.pipeline_mode<synchronous>, transform_indices = @transform_13, window_bounds = array<i64: 1, 256>}, {pipeline_mode = #tpu.pipeline_mode<synchronous>, transform_indices = @transform_14, window_bounds = array<i64: 48, 143>}, {pipeline_mode = #tpu.pipeline_mode<synchronous>, transform_indices = @transform_15, window_bounds = array<i64: 224, 128>}, {pipeline_mode = #tpu.pipeline_mode<synchronous>, transform_indices = @transform_16, window_bounds = array<i64: 3, 128, 256>}, {pipeline_mode = #tpu.pipeline_mode<synchronous>, transform_indices = @transform_17, window_bounds = array<i64: 1, 256>}, {pipeline_mode = #tpu.pipeline_mode<synchronous>, transform_indices = @transform_18, window_bounds = array<i64: 256, 128>}, {pipeline_mode = #tpu.pipeline_mode<synchronous>, transform_indices = @transform_19, window_bounds = array<i64: 1, 128>}, {transform_indices = @transform_20, window_bounds = array<i64: 16, 128>}]} {
    %c0 = arith.constant 0 : index
    %c0_0 = arith.constant 0 : index
    %c0_1 = arith.constant 0 : index
    %0 = vector.load %arg1[%c0, %c0_0, %c0_1] : memref<1x482x30xf32, #tpu.memory_space<vmem>>, vector<1x482x30xf32>
    %1 = vector.shape_cast %0 : vector<1x482x30xf32> to vector<482x30xf32>
    %c0_2 = arith.constant 0 : index
    %c0_3 = arith.constant 0 : index
    %2 = vector.load %arg3[%c0_2, %c0_3] : memref<1x256xf32, #tpu.memory_space<vmem>>, vector<1x256xf32>
    %c0_4 = arith.constant 0 : index
    %c0_5 = arith.constant 0 : index
    %3 = vector.load %arg4[%c0_4, %c0_5] : memref<1x256xf32, #tpu.memory_space<vmem>>, vector<1x256xf32>
    %4 = vector.extract_strided_slice %1 {offsets = [0, 0], sizes = [480, 30], strides = [1, 1]} : vector<482x30xf32> to vector<480x30xf32>
    %5 = arith.truncf %4 : vector<480x30xf32> to vector<480x30xbf16>
    %c0_6 = arith.constant 0 : index
    %c0_7 = arith.constant 0 : index
    %c0_8 = arith.constant 0 : index
    %6 = vector.load %arg2[%c0_6, %c0_7, %c0_8] : memref<3x30x256xbf16, #tpu.memory_space<vmem>>, vector<1x30x256xbf16>
    %7 = vector.shape_cast %6 : vector<1x30x256xbf16> to vector<30x256xbf16>
    %cst = arith.constant dense<0.000000e+00> : vector<480x256xf32>
    %8 = tpu.matmul %5, %7, %cst {dimension_numbers = #tpu.dot_dimension_numbers<[1], [0], [0], [1], [0, 0, 1, 1], [], []>} : vector<480x30xbf16>, vector<30x256xbf16>, vector<480x256xf32> -> vector<480x256xf32>
    %9 = vector.extract_strided_slice %1 {offsets = [1, 0], sizes = [480, 30], strides = [1, 1]} : vector<482x30xf32> to vector<480x30xf32>
    %10 = arith.truncf %9 : vector<480x30xf32> to vector<480x30xbf16>
    %c1 = arith.constant 1 : index
    %c0_9 = arith.constant 0 : index
    %c0_10 = arith.constant 0 : index
    %11 = vector.load %arg2[%c1, %c0_9, %c0_10] : memref<3x30x256xbf16, #tpu.memory_space<vmem>>, vector<1x30x256xbf16>
    %12 = vector.shape_cast %11 : vector<1x30x256xbf16> to vector<30x256xbf16>
    %cst_11 = arith.constant dense<0.000000e+00> : vector<480x256xf32>
    %13 = tpu.matmul %10, %12, %cst_11 {dimension_numbers = #tpu.dot_dimension_numbers<[1], [0], [0], [1], [0, 0, 1, 1], [], []>} : vector<480x30xbf16>, vector<30x256xbf16>, vector<480x256xf32> -> vector<480x256xf32>
    %14 = arith.addf %8, %13 : vector<480x256xf32>
    %15 = vector.extract_strided_slice %1 {offsets = [2, 0], sizes = [480, 30], strides = [1, 1]} : vector<482x30xf32> to vector<480x30xf32>
    %16 = arith.truncf %15 : vector<480x30xf32> to vector<480x30xbf16>
    %c2 = arith.constant 2 : index
    %c0_12 = arith.constant 0 : index
    %c0_13 = arith.constant 0 : index
    %17 = vector.load %arg2[%c2, %c0_12, %c0_13] : memref<3x30x256xbf16, #tpu.memory_space<vmem>>, vector<1x30x256xbf16>
    %18 = vector.shape_cast %17 : vector<1x30x256xbf16> to vector<30x256xbf16>
    %cst_14 = arith.constant dense<0.000000e+00> : vector<480x256xf32>
    %19 = tpu.matmul %16, %18, %cst_14 {dimension_numbers = #tpu.dot_dimension_numbers<[1], [0], [0], [1], [0, 0, 1, 1], [], []>} : vector<480x30xbf16>, vector<30x256xbf16>, vector<480x256xf32> -> vector<480x256xf32>
    %20 = arith.addf %14, %19 : vector<480x256xf32>
    %21 = vector.broadcast %2 : vector<1x256xf32> to vector<480x256xf32>
    %22 = arith.mulf %20, %21 : vector<480x256xf32>
    %23 = vector.broadcast %3 : vector<1x256xf32> to vector<480x256xf32>
    %24 = arith.addf %22, %23 : vector<480x256xf32>
    %cst_15 = arith.constant 0.000000e+00 : f32
    %25 = vector.broadcast %cst_15 : f32 to vector<480x256xf32>
    %26 = arith.maximumf %24, %25 : vector<480x256xf32>
    %c0_16 = arith.constant 0 : index
    %c0_17 = arith.constant 0 : index
    %27 = vector.load %arg5[%c0_16, %c0_17] : memref<258x479xbf16, #tpu.memory_space<vmem>>, vector<258x479xbf16>
    %c0_18 = arith.constant 0 : index
    %c0_19 = arith.constant 0 : index
    %28 = vector.load %arg6[%c0_18, %c0_19] : memref<248x128xbf16, #tpu.memory_space<vmem>>, vector<248x128xbf16>
    %29 = vector.extract_strided_slice %26 {offsets = [0, 0], sizes = [479, 256], strides = [1, 1]} : vector<480x256xf32> to vector<479x256xf32>
    %30 = vector.extract_strided_slice %26 {offsets = [1, 0], sizes = [479, 256], strides = [1, 1]} : vector<480x256xf32> to vector<479x256xf32>
    %31 = arith.maximumf %29, %30 : vector<479x256xf32>
    %32 = arith.truncf %31 : vector<479x256xf32> to vector<479x256xbf16>
    %cst_20 = arith.constant dense<0.000000e+00> : vector<258x256xf32>
    %33 = tpu.matmul %27, %32, %cst_20 {dimension_numbers = #tpu.dot_dimension_numbers<[1], [0], [0], [1], [0, 0, 1, 1], [], []>} : vector<258x479xbf16>, vector<479x256xbf16>, vector<258x256xf32> -> vector<258x256xf32>
    %34 = vector.extract_strided_slice %33 {offsets = [0, 0], sizes = [258, 248], strides = [1, 1]} : vector<258x256xf32> to vector<258x248xf32>
    %35 = vector.extract_strided_slice %33 {offsets = [0, 8], sizes = [258, 248], strides = [1, 1]} : vector<258x256xf32> to vector<258x248xf32>
    %36 = arith.maximumf %34, %35 : vector<258x248xf32>
    %37 = arith.truncf %36 : vector<258x248xf32> to vector<258x248xbf16>
    %cst_21 = arith.constant dense<0.000000e+00> : vector<258x128xf32>
    %38 = tpu.matmul %37, %28, %cst_21 {dimension_numbers = #tpu.dot_dimension_numbers<[1], [0], [0], [1], [0, 0, 1, 1], [], []>} : vector<258x248xbf16>, vector<248x128xbf16>, vector<258x128xf32> -> vector<258x128xf32>
    %c0_22 = arith.constant 0 : index
    %c0_23 = arith.constant 0 : index
    %39 = vector.load %arg8[%c0_22, %c0_23] : memref<1x256xf32, #tpu.memory_space<vmem>>, vector<1x256xf32>
    %c0_24 = arith.constant 0 : index
    %c0_25 = arith.constant 0 : index
    %40 = vector.load %arg9[%c0_24, %c0_25] : memref<1x256xf32, #tpu.memory_space<vmem>>, vector<1x256xf32>
    %41 = vector.extract_strided_slice %38 {offsets = [0, 0], sizes = [256, 128], strides = [1, 1]} : vector<258x128xf32> to vector<256x128xf32>
    %42 = arith.truncf %41 : vector<256x128xf32> to vector<256x128xbf16>
    %c0_26 = arith.constant 0 : index
    %c0_27 = arith.constant 0 : index
    %c0_28 = arith.constant 0 : index
    %43 = vector.load %arg7[%c0_26, %c0_27, %c0_28] : memref<3x128x256xbf16, #tpu.memory_space<vmem>>, vector<1x128x256xbf16>
    %44 = vector.shape_cast %43 : vector<1x128x256xbf16> to vector<128x256xbf16>
    %cst_29 = arith.constant dense<0.000000e+00> : vector<256x256xf32>
    %45 = tpu.matmul %42, %44, %cst_29 {dimension_numbers = #tpu.dot_dimension_numbers<[1], [0], [0], [1], [0, 0, 1, 1], [], []>} : vector<256x128xbf16>, vector<128x256xbf16>, vector<256x256xf32> -> vector<256x256xf32>
    %46 = vector.extract_strided_slice %38 {offsets = [1, 0], sizes = [256, 128], strides = [1, 1]} : vector<258x128xf32> to vector<256x128xf32>
    %47 = arith.truncf %46 : vector<256x128xf32> to vector<256x128xbf16>
    %c1_30 = arith.constant 1 : index
    %c0_31 = arith.constant 0 : index
    %c0_32 = arith.constant 0 : index
    %48 = vector.load %arg7[%c1_30, %c0_31, %c0_32] : memref<3x128x256xbf16, #tpu.memory_space<vmem>>, vector<1x128x256xbf16>
    %49 = vector.shape_cast %48 : vector<1x128x256xbf16> to vector<128x256xbf16>
    %cst_33 = arith.constant dense<0.000000e+00> : vector<256x256xf32>
    %50 = tpu.matmul %47, %49, %cst_33 {dimension_numbers = #tpu.dot_dimension_numbers<[1], [0], [0], [1], [0, 0, 1, 1], [], []>} : vector<256x128xbf16>, vector<128x256xbf16>, vector<256x256xf32> -> vector<256x256xf32>
    %51 = arith.addf %45, %50 : vector<256x256xf32>
    %52 = vector.extract_strided_slice %38 {offsets = [2, 0], sizes = [256, 128], strides = [1, 1]} : vector<258x128xf32> to vector<256x128xf32>
    %53 = arith.truncf %52 : vector<256x128xf32> to vector<256x128xbf16>
    %c2_34 = arith.constant 2 : index
    %c0_35 = arith.constant 0 : index
    %c0_36 = arith.constant 0 : index
    %54 = vector.load %arg7[%c2_34, %c0_35, %c0_36] : memref<3x128x256xbf16, #tpu.memory_space<vmem>>, vector<1x128x256xbf16>
    %55 = vector.shape_cast %54 : vector<1x128x256xbf16> to vector<128x256xbf16>
    %cst_37 = arith.constant dense<0.000000e+00> : vector<256x256xf32>
    %56 = tpu.matmul %53, %55, %cst_37 {dimension_numbers = #tpu.dot_dimension_numbers<[1], [0], [0], [1], [0, 0, 1, 1], [], []>} : vector<256x128xbf16>, vector<128x256xbf16>, vector<256x256xf32> -> vector<256x256xf32>
    %57 = arith.addf %51, %56 : vector<256x256xf32>
    %58 = vector.broadcast %39 : vector<1x256xf32> to vector<256x256xf32>
    %59 = arith.mulf %57, %58 : vector<256x256xf32>
    %60 = vector.broadcast %40 : vector<1x256xf32> to vector<256x256xf32>
    %61 = arith.addf %59, %60 : vector<256x256xf32>
    %cst_38 = arith.constant 0.000000e+00 : f32
    %62 = vector.broadcast %cst_38 : f32 to vector<256x256xf32>
    %63 = arith.maximumf %61, %62 : vector<256x256xf32>
    %c0_39 = arith.constant 0 : index
    %c0_40 = arith.constant 0 : index
    %64 = vector.load %arg10[%c0_39, %c0_40] : memref<146x255xbf16, #tpu.memory_space<vmem>>, vector<146x255xbf16>
    %c0_41 = arith.constant 0 : index
    %c0_42 = arith.constant 0 : index
    %65 = vector.load %arg11[%c0_41, %c0_42] : memref<240x256xbf16, #tpu.memory_space<vmem>>, vector<240x256xbf16>
    %66 = vector.extract_strided_slice %63 {offsets = [0, 0], sizes = [255, 256], strides = [1, 1]} : vector<256x256xf32> to vector<255x256xf32>
    %67 = vector.extract_strided_slice %63 {offsets = [1, 0], sizes = [255, 256], strides = [1, 1]} : vector<256x256xf32> to vector<255x256xf32>
    %68 = arith.maximumf %66, %67 : vector<255x256xf32>
    %69 = arith.truncf %68 : vector<255x256xf32> to vector<255x256xbf16>
    %cst_43 = arith.constant dense<0.000000e+00> : vector<146x256xf32>
    %70 = tpu.matmul %64, %69, %cst_43 {dimension_numbers = #tpu.dot_dimension_numbers<[1], [0], [0], [1], [0, 0, 1, 1], [], []>} : vector<146x255xbf16>, vector<255x256xbf16>, vector<146x256xf32> -> vector<146x256xf32>
    %71 = vector.extract_strided_slice %70 {offsets = [0, 0], sizes = [146, 240], strides = [1, 1]} : vector<146x256xf32> to vector<146x240xf32>
    %72 = vector.extract_strided_slice %70 {offsets = [0, 16], sizes = [146, 240], strides = [1, 1]} : vector<146x256xf32> to vector<146x240xf32>
    %73 = arith.maximumf %71, %72 : vector<146x240xf32>
    %74 = arith.truncf %73 : vector<146x240xf32> to vector<146x240xbf16>
    %cst_44 = arith.constant dense<0.000000e+00> : vector<146x256xf32>
    %75 = tpu.matmul %74, %65, %cst_44 {dimension_numbers = #tpu.dot_dimension_numbers<[1], [0], [0], [1], [0, 0, 1, 1], [], []>} : vector<146x240xbf16>, vector<240x256xbf16>, vector<146x256xf32> -> vector<146x256xf32>
    %c0_45 = arith.constant 0 : index
    %c0_46 = arith.constant 0 : index
    %76 = vector.load %arg13[%c0_45, %c0_46] : memref<1x256xf32, #tpu.memory_space<vmem>>, vector<1x256xf32>
    %c0_47 = arith.constant 0 : index
    %c0_48 = arith.constant 0 : index
    %77 = vector.load %arg14[%c0_47, %c0_48] : memref<1x256xf32, #tpu.memory_space<vmem>>, vector<1x256xf32>
    %78 = vector.extract_strided_slice %75 {offsets = [0, 0], sizes = [144, 256], strides = [1, 1]} : vector<146x256xf32> to vector<144x256xf32>
    %79 = arith.truncf %78 : vector<144x256xf32> to vector<144x256xbf16>
    %c0_49 = arith.constant 0 : index
    %c0_50 = arith.constant 0 : index
    %c0_51 = arith.constant 0 : index
    %80 = vector.load %arg12[%c0_49, %c0_50, %c0_51] : memref<3x256x256xbf16, #tpu.memory_space<vmem>>, vector<1x256x256xbf16>
    %81 = vector.shape_cast %80 : vector<1x256x256xbf16> to vector<256x256xbf16>
    %cst_52 = arith.constant dense<0.000000e+00> : vector<144x256xf32>
    %82 = tpu.matmul %79, %81, %cst_52 {dimension_numbers = #tpu.dot_dimension_numbers<[1], [0], [0], [1], [0, 0, 1, 1], [], []>} : vector<144x256xbf16>, vector<256x256xbf16>, vector<144x256xf32> -> vector<144x256xf32>
    %83 = vector.extract_strided_slice %75 {offsets = [1, 0], sizes = [144, 256], strides = [1, 1]} : vector<146x256xf32> to vector<144x256xf32>
    %84 = arith.truncf %83 : vector<144x256xf32> to vector<144x256xbf16>
    %c1_53 = arith.constant 1 : index
    %c0_54 = arith.constant 0 : index
    %c0_55 = arith.constant 0 : index
    %85 = vector.load %arg12[%c1_53, %c0_54, %c0_55] : memref<3x256x256xbf16, #tpu.memory_space<vmem>>, vector<1x256x256xbf16>
    %86 = vector.shape_cast %85 : vector<1x256x256xbf16> to vector<256x256xbf16>
    %cst_56 = arith.constant dense<0.000000e+00> : vector<144x256xf32>
    %87 = tpu.matmul %84, %86, %cst_56 {dimension_numbers = #tpu.dot_dimension_numbers<[1], [0], [0], [1], [0, 0, 1, 1], [], []>} : vector<144x256xbf16>, vector<256x256xbf16>, vector<144x256xf32> -> vector<144x256xf32>
    %88 = arith.addf %82, %87 : vector<144x256xf32>
    %89 = vector.extract_strided_slice %75 {offsets = [2, 0], sizes = [144, 256], strides = [1, 1]} : vector<146x256xf32> to vector<144x256xf32>
    %90 = arith.truncf %89 : vector<144x256xf32> to vector<144x256xbf16>
    %c2_57 = arith.constant 2 : index
    %c0_58 = arith.constant 0 : index
    %c0_59 = arith.constant 0 : index
    %91 = vector.load %arg12[%c2_57, %c0_58, %c0_59] : memref<3x256x256xbf16, #tpu.memory_space<vmem>>, vector<1x256x256xbf16>
    %92 = vector.shape_cast %91 : vector<1x256x256xbf16> to vector<256x256xbf16>
    %cst_60 = arith.constant dense<0.000000e+00> : vector<144x256xf32>
    %93 = tpu.matmul %90, %92, %cst_60 {dimension_numbers = #tpu.dot_dimension_numbers<[1], [0], [0], [1], [0, 0, 1, 1], [], []>} : vector<144x256xbf16>, vector<256x256xbf16>, vector<144x256xf32> -> vector<144x256xf32>
    %94 = arith.addf %88, %93 : vector<144x256xf32>
    %95 = vector.broadcast %76 : vector<1x256xf32> to vector<144x256xf32>
    %96 = arith.mulf %94, %95 : vector<144x256xf32>
    %97 = vector.broadcast %77 : vector<1x256xf32> to vector<144x256xf32>
    %98 = arith.addf %96, %97 : vector<144x256xf32>
    %cst_61 = arith.constant 0.000000e+00 : f32
    %99 = vector.broadcast %cst_61 : f32 to vector<144x256xf32>
    %100 = arith.maximumf %98, %99 : vector<144x256xf32>
    %c0_62 = arith.constant 0 : index
    %c0_63 = arith.constant 0 : index
    %101 = vector.load %arg15[%c0_62, %c0_63] : memref<48x143xbf16, #tpu.memory_space<vmem>>, vector<48x143xbf16>
    %c0_64 = arith.constant 0 : index
    %c0_65 = arith.constant 0 : index
    %102 = vector.load %arg16[%c0_64, %c0_65] : memref<224x128xbf16, #tpu.memory_space<vmem>>, vector<224x128xbf16>
    %103 = vector.extract_strided_slice %100 {offsets = [0, 0], sizes = [143, 256], strides = [1, 1]} : vector<144x256xf32> to vector<143x256xf32>
    %104 = vector.extract_strided_slice %100 {offsets = [1, 0], sizes = [143, 256], strides = [1, 1]} : vector<144x256xf32> to vector<143x256xf32>
    %105 = arith.maximumf %103, %104 : vector<143x256xf32>
    %106 = arith.truncf %105 : vector<143x256xf32> to vector<143x256xbf16>
    %cst_66 = arith.constant dense<0.000000e+00> : vector<48x256xf32>
    %107 = tpu.matmul %101, %106, %cst_66 {dimension_numbers = #tpu.dot_dimension_numbers<[1], [0], [0], [1], [0, 0, 1, 1], [], []>} : vector<48x143xbf16>, vector<143x256xbf16>, vector<48x256xf32> -> vector<48x256xf32>
    %108 = vector.extract_strided_slice %107 {offsets = [0, 0], sizes = [48, 224], strides = [1, 1]} : vector<48x256xf32> to vector<48x224xf32>
    %109 = vector.extract_strided_slice %107 {offsets = [0, 32], sizes = [48, 224], strides = [1, 1]} : vector<48x256xf32> to vector<48x224xf32>
    %110 = arith.maximumf %108, %109 : vector<48x224xf32>
    %111 = arith.truncf %110 : vector<48x224xf32> to vector<48x224xbf16>
    %cst_67 = arith.constant dense<0.000000e+00> : vector<48x128xf32>
    %112 = tpu.matmul %111, %102, %cst_67 {dimension_numbers = #tpu.dot_dimension_numbers<[1], [0], [0], [1], [0, 0, 1, 1], [], []>} : vector<48x224xbf16>, vector<224x128xbf16>, vector<48x128xf32> -> vector<48x128xf32>
    %113 = vector.extract_strided_slice %112 {offsets = [0, 0], sizes = [16, 128], strides = [1, 1]} : vector<48x128xf32> to vector<16x128xf32>
    %114 = arith.truncf %113 : vector<16x128xf32> to vector<16x128xbf16>
    %c0_68 = arith.constant 0 : index
    %c0_69 = arith.constant 0 : index
    %c0_70 = arith.constant 0 : index
    %115 = vector.load %arg17[%c0_68, %c0_69, %c0_70] : memref<3x128x256xbf16, #tpu.memory_space<vmem>>, vector<1x128x256xbf16>
    %116 = vector.shape_cast %115 : vector<1x128x256xbf16> to vector<128x256xbf16>
    %cst_71 = arith.constant dense<0.000000e+00> : vector<16x256xf32>
    %117 = tpu.matmul %114, %116, %cst_71 {dimension_numbers = #tpu.dot_dimension_numbers<[1], [0], [0], [1], [0, 0, 1, 1], [], []>} : vector<16x128xbf16>, vector<128x256xbf16>, vector<16x256xf32> -> vector<16x256xf32>
    %118 = vector.extract_strided_slice %112 {offsets = [16, 0], sizes = [16, 128], strides = [1, 1]} : vector<48x128xf32> to vector<16x128xf32>
    %119 = arith.truncf %118 : vector<16x128xf32> to vector<16x128xbf16>
    %c1_72 = arith.constant 1 : index
    %c0_73 = arith.constant 0 : index
    %c0_74 = arith.constant 0 : index
    %120 = vector.load %arg17[%c1_72, %c0_73, %c0_74] : memref<3x128x256xbf16, #tpu.memory_space<vmem>>, vector<1x128x256xbf16>
    %121 = vector.shape_cast %120 : vector<1x128x256xbf16> to vector<128x256xbf16>
    %cst_75 = arith.constant dense<0.000000e+00> : vector<16x256xf32>
    %122 = tpu.matmul %119, %121, %cst_75 {dimension_numbers = #tpu.dot_dimension_numbers<[1], [0], [0], [1], [0, 0, 1, 1], [], []>} : vector<16x128xbf16>, vector<128x256xbf16>, vector<16x256xf32> -> vector<16x256xf32>
    %123 = arith.addf %117, %122 : vector<16x256xf32>
    %124 = vector.extract_strided_slice %112 {offsets = [32, 0], sizes = [16, 128], strides = [1, 1]} : vector<48x128xf32> to vector<16x128xf32>
    %125 = arith.truncf %124 : vector<16x128xf32> to vector<16x128xbf16>
    %c2_76 = arith.constant 2 : index
    %c0_77 = arith.constant 0 : index
    %c0_78 = arith.constant 0 : index
    %126 = vector.load %arg17[%c2_76, %c0_77, %c0_78] : memref<3x128x256xbf16, #tpu.memory_space<vmem>>, vector<1x128x256xbf16>
    %127 = vector.shape_cast %126 : vector<1x128x256xbf16> to vector<128x256xbf16>
    %cst_79 = arith.constant dense<0.000000e+00> : vector<16x256xf32>
    %128 = tpu.matmul %125, %127, %cst_79 {dimension_numbers = #tpu.dot_dimension_numbers<[1], [0], [0], [1], [0, 0, 1, 1], [], []>} : vector<16x128xbf16>, vector<128x256xbf16>, vector<16x256xf32> -> vector<16x256xf32>
    %129 = arith.addf %123, %128 : vector<16x256xf32>
    %c0_80 = arith.constant 0 : index
    %c0_81 = arith.constant 0 : index
    %130 = vector.load %arg18[%c0_80, %c0_81] : memref<1x256xf32, #tpu.memory_space<vmem>>, vector<1x256xf32>
    %131 = vector.broadcast %130 : vector<1x256xf32> to vector<16x256xf32>
    %132 = arith.addf %129, %131 : vector<16x256xf32>
    %cst_82 = arith.constant 0.000000e+00 : f32
    %133 = vector.broadcast %cst_82 : f32 to vector<16x256xf32>
    %134 = arith.maximumf %132, %133 : vector<16x256xf32>
    %135 = arith.truncf %134 : vector<16x256xf32> to vector<16x256xbf16>
    %c0_83 = arith.constant 0 : index
    %c0_84 = arith.constant 0 : index
    %136 = vector.load %arg19[%c0_83, %c0_84] : memref<256x128xbf16, #tpu.memory_space<vmem>>, vector<256x128xbf16>
    %cst_85 = arith.constant dense<0.000000e+00> : vector<16x128xf32>
    %137 = tpu.matmul %135, %136, %cst_85 {dimension_numbers = #tpu.dot_dimension_numbers<[1], [0], [0], [1], [0, 0, 1, 1], [], []>} : vector<16x256xbf16>, vector<256x128xbf16>, vector<16x128xf32> -> vector<16x128xf32>
    %c0_86 = arith.constant 0 : index
    %c0_87 = arith.constant 0 : index
    %138 = vector.load %arg20[%c0_86, %c0_87] : memref<1x128xf32, #tpu.memory_space<vmem>>, vector<1x128xf32>
    %139 = vector.broadcast %138 : vector<1x128xf32> to vector<16x128xf32>
    %140 = arith.addf %137, %139 : vector<16x128xf32>
    %cst_88 = arith.constant dense<0xFF800000> : vector<16xf32>
    %141 = vector.multi_reduction <maximumf>, %140, %cst_88 [1] : vector<16x128xf32> to vector<16xf32>
    %142 = vector.shape_cast %141 : vector<16xf32> to vector<16x1xf32>
    %143 = vector.broadcast %142 : vector<16x1xf32> to vector<16x128xf32>
    %144 = arith.subf %140, %143 : vector<16x128xf32>
    %145 = math.exp %144 : vector<16x128xf32>
    %cst_89 = arith.constant dense<0.000000e+00> : vector<16xf32>
    %146 = vector.multi_reduction <add>, %145, %cst_89 [1] : vector<16x128xf32> to vector<16xf32>
    %147 = vector.shape_cast %146 : vector<16xf32> to vector<16x1xf32>
    %148 = math.log %147 : vector<16x1xf32>
    %149 = vector.broadcast %148 : vector<16x1xf32> to vector<16x128xf32>
    %150 = arith.subf %144, %149 : vector<16x128xf32>
    %c0_90 = arith.constant 0 : index
    %c0_91 = arith.constant 0 : index
    %151 = vector.load %arg21[%c0_90, %c0_91] : memref<16x128xf32, #tpu.memory_space<vmem>>, vector<16x128xf32>
    tpu.vector_store %arg21[%c0_90, %c0_91], %150 {strides = array<i32>} : memref<16x128xf32, #tpu.memory_space<vmem>>, vector<16x128xf32>,
    return
  }
  func.func @transform_0(%arg0: i32) -> (i32, i32, i32) {
    %c0_i32 = arith.constant 0 : i32
    %c0_i32_0 = arith.constant 0 : i32
    %c0_i32_1 = arith.constant 0 : i32
    return %arg0, %c0_i32, %c0_i32_0 : i32, i32, i32
  }
  func.func @transform_1(%arg0: i32) -> (i32, i32, i32) {
    %c0_i32 = arith.constant 0 : i32
    %c0_i32_0 = arith.constant 0 : i32
    %c0_i32_1 = arith.constant 0 : i32
    %c0_i32_2 = arith.constant 0 : i32
    return %c0_i32, %c0_i32_0, %c0_i32_1 : i32, i32, i32
  }
  func.func @transform_2(%arg0: i32) -> (i32, i32) {
    %c0_i32 = arith.constant 0 : i32
    %c0_i32_0 = arith.constant 0 : i32
    %c0_i32_1 = arith.constant 0 : i32
    return %c0_i32, %c0_i32_0 : i32, i32
  }
  func.func @transform_3(%arg0: i32) -> (i32, i32) {
    %c0_i32 = arith.constant 0 : i32
    %c0_i32_0 = arith.constant 0 : i32
    %c0_i32_1 = arith.constant 0 : i32
    return %c0_i32, %c0_i32_0 : i32, i32
  }
  func.func @transform_4(%arg0: i32) -> (i32, i32) {
    %c0_i32 = arith.constant 0 : i32
    %c0_i32_0 = arith.constant 0 : i32
    %c0_i32_1 = arith.constant 0 : i32
    return %c0_i32, %c0_i32_0 : i32, i32
  }
  func.func @transform_5(%arg0: i32) -> (i32, i32) {
    %c0_i32 = arith.constant 0 : i32
    %c0_i32_0 = arith.constant 0 : i32
    %c0_i32_1 = arith.constant 0 : i32
    return %c0_i32, %c0_i32_0 : i32, i32
  }
  func.func @transform_6(%arg0: i32) -> (i32, i32, i32) {
    %c0_i32 = arith.constant 0 : i32
    %c0_i32_0 = arith.constant 0 : i32
    %c0_i32_1 = arith.constant 0 : i32
    %c0_i32_2 = arith.constant 0 : i32
    return %c0_i32, %c0_i32_0, %c0_i32_1 : i32, i32, i32
  }
  func.func @transform_7(%arg0: i32) -> (i32, i32) {
    %c0_i32 = arith.constant 0 : i32
    %c0_i32_0 = arith.constant 0 : i32
    %c0_i32_1 = arith.constant 0 : i32
    return %c0_i32, %c0_i32_0 : i32, i32
  }
  func.func @transform_8(%arg0: i32) -> (i32, i32) {
    %c0_i32 = arith.constant 0 : i32
    %c0_i32_0 = arith.constant 0 : i32
    %c0_i32_1 = arith.constant 0 : i32
    return %c0_i32, %c0_i32_0 : i32, i32
  }
  func.func @transform_9(%arg0: i32) -> (i32, i32) {
    %c0_i32 = arith.constant 0 : i32
    %c0_i32_0 = arith.constant 0 : i32
    %c0_i32_1 = arith.constant 0 : i32
    return %c0_i32, %c0_i32_0 : i32, i32
  }
  func.func @transform_10(%arg0: i32) -> (i32, i32) {
    %c0_i32 = arith.constant 0 : i32
    %c0_i32_0 = arith.constant 0 : i32
    %c0_i32_1 = arith.constant 0 : i32
    return %c0_i32, %c0_i32_0 : i32, i32
  }
  func.func @transform_11(%arg0: i32) -> (i32, i32, i32) {
    %c0_i32 = arith.constant 0 : i32
    %c0_i32_0 = arith.constant 0 : i32
    %c0_i32_1 = arith.constant 0 : i32
    %c0_i32_2 = arith.constant 0 : i32
    return %c0_i32, %c0_i32_0, %c0_i32_1 : i32, i32, i32
  }
  func.func @transform_12(%arg0: i32) -> (i32, i32) {
    %c0_i32 = arith.constant 0 : i32
    %c0_i32_0 = arith.constant 0 : i32
    %c0_i32_1 = arith.constant 0 : i32
    return %c0_i32, %c0_i32_0 : i32, i32
  }
  func.func @transform_13(%arg0: i32) -> (i32, i32) {
    %c0_i32 = arith.constant 0 : i32
    %c0_i32_0 = arith.constant 0 : i32
    %c0_i32_1 = arith.constant 0 : i32
    return %c0_i32, %c0_i32_0 : i32, i32
  }
  func.func @transform_14(%arg0: i32) -> (i32, i32) {
    %c0_i32 = arith.constant 0 : i32
    %c0_i32_0 = arith.constant 0 : i32
    %c0_i32_1 = arith.constant 0 : i32
    return %c0_i32, %c0_i32_0 : i32, i32
  }
  func.func @transform_15(%arg0: i32) -> (i32, i32) {
    %c0_i32 = arith.constant 0 : i32
    %c0_i32_0 = arith.constant 0 : i32
    %c0_i32_1 = arith.constant 0 : i32
    return %c0_i32, %c0_i32_0 : i32, i32
  }
  func.func @transform_16(%arg0: i32) -> (i32, i32, i32) {
    %c0_i32 = arith.constant 0 : i32
    %c0_i32_0 = arith.constant 0 : i32
    %c0_i32_1 = arith.constant 0 : i32
    %c0_i32_2 = arith.constant 0 : i32
    return %c0_i32, %c0_i32_0, %c0_i32_1 : i32, i32, i32
  }
  func.func @transform_17(%arg0: i32) -> (i32, i32) {
    %c0_i32 = arith.constant 0 : i32
    %c0_i32_0 = arith.constant 0 : i32
    %c0_i32_1 = arith.constant 0 : i32
    return %c0_i32, %c0_i32_0 : i32, i32
  }
  func.func @transform_18(%arg0: i32) -> (i32, i32) {
    %c0_i32 = arith.constant 0 : i32
    %c0_i32_0 = arith.constant 0 : i32
    %c0_i32_1 = arith.constant 0 : i32
    return %c0_i32, %c0_i32_0 : i32, i32
  }
  func.func @transform_19(%arg0: i32) -> (i32, i32) {
    %c0_i32 = arith.constant 0 : i32
    %c0_i32_0 = arith.constant 0 : i32
    %c0_i32_1 = arith.constant 0 : i32
    return %c0_i32, %c0_i32_0 : i32, i32
  }
  func.func @transform_20(%arg0: i32) -> (i32, i32) {
    %c0_i32 = arith.constant 0 : i32
    %c0_i32_0 = arith.constant 0 : i32
    return %arg0, %c0_i32 : i32, i32
  }
}

</mosaic_0001>

<llo_original>
// kernel: mnist_forward.1
$region0: #{mnist_forward.1}
  #allocation0 [shape = 'u32[]', space=smem, size = 0x4, offset = 0x4, fixed_abs, tag = 'smem constant byte address 0x4 - core index']
  #allocation1 [shape = 'u32[72,128]{1,0:T(1,128)}', space=vmem, size = 0x9000, scoped, tag = 'internal scratch']
  %s0 = inlined_call_operand.vmem [shape: f32[2,482,30], index: 0, kind: input, shape index: {}]
  %s1 = inlined_call_operand.vmem [shape: bf16[3,30,256], index: 1, kind: input, shape index: {}]
  %s2 = inlined_call_operand.vmem [shape: f32[1,256], index: 2, kind: input, shape index: {}]
  %s3 = inlined_call_operand.vmem [shape: f32[1,256], index: 3, kind: input, shape index: {}]
  %s4 = inlined_call_operand.vmem [shape: bf16[258,479], index: 4, kind: input, shape index: {}]
  %s5 = inlined_call_operand.vmem [shape: bf16[248,128], index: 5, kind: input, shape index: {}]
  %s6 = inlined_call_operand.vmem [shape: bf16[3,128,256], index: 6, kind: input, shape index: {}]
  %s7 = inlined_call_operand.vmem [shape: f32[1,256], index: 7, kind: input, shape index: {}]
  %s8 = inlined_call_operand.vmem [shape: f32[1,256], index: 8, kind: input, shape index: {}]
  %s9 = inlined_call_operand.vmem [shape: bf16[146,255], index: 9, kind: input, shape index: {}]
  %s10 = inlined_call_operand.vmem [shape: bf16[240,256], index: 10, kind: input, shape index: {}]
  %s11 = inlined_call_operand.vmem [shape: bf16[3,256,256], index: 11, kind: input, shape index: {}]
  %s12 = inlined_call_operand.vmem [shape: f32[1,256], index: 12, kind: input, shape index: {}]
  %s13 = inlined_call_operand.vmem [shape: f32[1,256], index: 13, kind: input, shape index: {}]
  %s14 = inlined_call_operand.vmem [shape: bf16[48,143], index: 14, kind: input, shape index: {}]
  %s15 = inlined_call_operand.vmem [shape: bf16[224,128], index: 15, kind: input, shape index: {}]
  %s16 = inlined_call_operand.vmem [shape: bf16[3,128,256], index: 16, kind: input, shape index: {}]
  %s17 = inlined_call_operand.vmem [shape: f32[1,256], index: 17, kind: input, shape index: {}]
  %s18 = inlined_call_operand.vmem [shape: bf16[256,128], index: 18, kind: input, shape index: {}]
  %s19 = inlined_call_operand.vmem [shape: f32[1,128], index: 19, kind: input, shape index: {}]
  %s20 = inlined_call_operand.vmem [shape: f32[32,128], index: 20, kind: output, shape index: {}]
  %s21 = sld [smem:[#allocation0]]
  $region113: #{mnist_forward.1} parent=0
    _
  %s23 = ssub.s32 1, %s21
  %s24 = scalar_select 0, %s23, %s21
  loop: start=0, step=1, limit=4
  $region2: #{mnist_forward.1} parent=0 // loop_pre_header
    _
  $region3: #{mnist_forward.1} parent=0 // loop_header
    %s26 = sphi 0, %s30
    %p27 = scmp.ge.s32.totalorder %s26, 4
    %s36 = sphi 0, %s38
    %s39 = sphi 0, %s36
    %s40 = sphi 0, %s39
    %s56 = sphi 0, %s40
    %s60 = sphi 0, %s60
    %s62 = sphi 0, %s60
    %s63 = sphi 0, %s62
    %s77 = sphi 0, %s63
    %s81 = sphi 0, %s81
    %s83 = sphi 0, %s81
    %s84 = sphi 0, %s83
    %s98 = sphi 0, %s84
    %s102 = sphi 0, %s102
    %s104 = sphi 0, %s102
    %s105 = sphi 0, %s104
    %s119 = sphi 0, %s105
    %s123 = sphi 0, %s123
    %s125 = sphi 0, %s123
    %s126 = sphi 0, %s125
    %s140 = sphi 0, %s126
    %s144 = sphi 0, %s144
    %s146 = sphi 0, %s144
    %s147 = sphi 0, %s146
    %s161 = sphi 0, %s147
    %s165 = sphi 0, %s165
    %s167 = sphi 0, %s165
    %s168 = sphi 0, %s167
    %s182 = sphi 0, %s168
    %s186 = sphi 0, %s186
    %s188 = sphi 0, %s186
    %s189 = sphi 0, %s188
    %s203 = sphi 0, %s189
    %s207 = sphi 0, %s207
    %s209 = sphi 0, %s207
    %s210 = sphi 0, %s209
    %s224 = sphi 0, %s210
    %s228 = sphi 0, %s228
    %s230 = sphi 0, %s228
    %s231 = sphi 0, %s230
    %s245 = sphi 0, %s231
    %s249 = sphi 0, %s249
    %s251 = sphi 0, %s249
    %s252 = sphi 0, %s251
    %s266 = sphi 0, %s252
    %s270 = sphi 0, %s270
    %s272 = sphi 0, %s270
    %s273 = sphi 0, %s272
    %s287 = sphi 0, %s273
    %s291 = sphi 0, %s291
    %s293 = sphi 0, %s291
    %s294 = sphi 0, %s293
    %s308 = sphi 0, %s294
    %s312 = sphi 0, %s312
    %s314 = sphi 0, %s312
    %s315 = sphi 0, %s314
    %s329 = sphi 0, %s315
    %s333 = sphi 0, %s333
    %s335 = sphi 0, %s333
    %s336 = sphi 0, %s335
    %s350 = sphi 0, %s336
    %s354 = sphi 0, %s354
    %s356 = sphi 0, %s354
    %s357 = sphi 0, %s356
    %s371 = sphi 0, %s357
    %s375 = sphi 0, %s375
    %s377 = sphi 0, %s375
    %s378 = sphi 0, %s377
    %s392 = sphi 0, %s378
    %s396 = sphi 0, %s396
    %s398 = sphi 0, %s396
    %s399 = sphi 0, %s398
    %s413 = sphi 0, %s399
    %s417 = sphi 0, %s417
    %s419 = sphi 0, %s417
    %s420 = sphi 0, %s419
    %s434 = sphi 0, %s420
    %s438 = sphi 0, %s438
    %s440 = sphi 0, %s438
    %s441 = sphi 0, %s440
    %s455 = sphi 0, %s441
    %s461 = sphi 0, %s463
    %s464 = sphi 0, %s461
    %s465 = sphi 0, %s464
    %s481 = sphi 0, %s465
  $region4: #{mnist_forward.1} parent=0 // loop_header_branch
    %29 = sbr.rel (%p27) target = $region8
  $region5: #{mnist_forward.1} parent=0 // loop_body
    %s31 = ssub.s32 %s26, 1
    %s32 = ssub.s32 %s26, 2
    %s33 = sadd.s32 %s26, 1
    %s34 = ssub.s32 %s26, %s33
    %p35 = scmp.eq.s32.totalorder %s34, 0
    %s37 = sadd.s32 %s36, 1
    %s38 = scalar_select %p35, %s36, %s37
    %p41 = pneg %p35
    %p42 = scmp.eq.s32.totalorder %s26, 1
    %p43 = por %p41, %p42
    %p44 = scmp.ne.s32.totalorder %s36, %s39
    %p45 = scmp.eq.s32.totalorder %s26, 0
    %p46 = por %p44, %p45
    %p47 = scmp.ne.s32.totalorder %s36, %s39
    %p48 = scmp.eq.s32.totalorder %s31, 1
    %p49 = por %p47, %p48
    %p50 = scmp.ne.s32.totalorder %s39, %s40
    %p51 = scmp.eq.s32.totalorder %s31, 0
    %p52 = por %p50, %p51
    %p53 = scmp.ne.s32.totalorder %s39, %s40
    %p54 = scmp.eq.s32.totalorder %s32, 1
    %p55 = por %p53, %p54
    %p57 = scmp.ne.s32.totalorder %s40, %s56
    %p58 = scmp.eq.s32.totalorder %s32, 0
    %p59 = por %p57, %p58
    %s61 = sadd.s32 %s60, 1
    %p64 = scmp.eq.s32.totalorder %s26, 1
    %p65 = scmp.ne.s32.totalorder %s60, %s62
    %p66 = scmp.eq.s32.totalorder %s26, 0
    %p67 = por %p65, %p66
    %p68 = scmp.ne.s32.totalorder %s60, %s62
    %p69 = scmp.eq.s32.totalorder %s31, 1
    %p70 = por %p68, %p69
    %p71 = scmp.ne.s32.totalorder %s62, %s63
    %p72 = scmp.eq.s32.totalorder %s31, 0
    %p73 = por %p71, %p72
    %p74 = scmp.ne.s32.totalorder %s62, %s63
    %p75 = scmp.eq.s32.totalorder %s32, 1
    %p76 = por %p74, %p75
    %p78 = scmp.ne.s32.totalorder %s63, %s77
    %p79 = scmp.eq.s32.totalorder %s32, 0
    %p80 = por %p78, %p79
    %s82 = sadd.s32 %s81, 1
    %p85 = scmp.eq.s32.totalorder %s26, 1
    %p86 = scmp.ne.s32.totalorder %s81, %s83
    %p87 = scmp.eq.s32.totalorder %s26, 0
    %p88 = por %p86, %p87
    %p89 = scmp.ne.s32.totalorder %s81, %s83
    %p90 = scmp.eq.s32.totalorder %s31, 1
    %p91 = por %p89, %p90
    %p92 = scmp.ne.s32.totalorder %s83, %s84
    %p93 = scmp.eq.s32.totalorder %s31, 0
    %p94 = por %p92, %p93
    %p95 = scmp.ne.s32.totalorder %s83, %s84
    %p96 = scmp.eq.s32.totalorder %s32, 1
    %p97 = por %p95, %p96
    %p99 = scmp.ne.s32.totalorder %s84, %s98
    %p100 = scmp.eq.s32.totalorder %s32, 0
    %p101 = por %p99, %p100
    %s103 = sadd.s32 %s102, 1
    %p106 = scmp.eq.s32.totalorder %s26, 1
    %p107 = scmp.ne.s32.totalorder %s102, %s104
    %p108 = scmp.eq.s32.totalorder %s26, 0
    %p109 = por %p107, %p108
    %p110 = scmp.ne.s32.totalorder %s102, %s104
    %p111 = scmp.eq.s32.totalorder %s31, 1
    %p112 = por %p110, %p111
    %p113 = scmp.ne.s32.totalorder %s104, %s105
    %p114 = scmp.eq.s32.totalorder %s31, 0
    %p115 = por %p113, %p114
    %p116 = scmp.ne.s32.totalorder %s104, %s105
    %p117 = scmp.eq.s32.totalorder %s32, 1
    %p118 = por %p116, %p117
    %p120 = scmp.ne.s32.totalorder %s105, %s119
    %p121 = scmp.eq.s32.totalorder %s32, 0
    %p122 = por %p120, %p121
    %s124 = sadd.s32 %s123, 1
    %p127 = scmp.eq.s32.totalorder %s26, 1
    %p128 = scmp.ne.s32.totalorder %s123, %s125
    %p129 = scmp.eq.s32.totalorder %s26, 0
    %p130 = por %p128, %p129
    %p131 = scmp.ne.s32.totalorder %s123, %s125
    %p132 = scmp.eq.s32.totalorder %s31, 1
    %p133 = por %p131, %p132
    %p134 = scmp.ne.s32.totalorder %s125, %s126
    %p135 = scmp.eq.s32.totalorder %s31, 0
    %p136 = por %p134, %p135
    %p137 = scmp.ne.s32.totalorder %s125, %s126
    %p138 = scmp.eq.s32.totalorder %s32, 1
    %p139 = por %p137, %p138
    %p141 = scmp.ne.s32.totalorder %s126, %s140
    %p142 = scmp.eq.s32.totalorder %s32, 0
    %p143 = por %p141, %p142
    %s145 = sadd.s32 %s144, 1
    %p148 = scmp.eq.s32.totalorder %s26, 1
    %p149 = scmp.ne.s32.totalorder %s144, %s146
    %p150 = scmp.eq.s32.totalorder %s26, 0
    %p151 = por %p149, %p150
    %p152 = scmp.ne.s32.totalorder %s144, %s146
    %p153 = scmp.eq.s32.totalorder %s31, 1
    %p154 = por %p152, %p153
    %p155 = scmp.ne.s32.totalorder %s146, %s147
    %p156 = scmp.eq.s32.totalorder %s31, 0
    %p157 = por %p155, %p156
    %p158 = scmp.ne.s32.totalorder %s146, %s147
    %p159 = scmp.eq.s32.totalorder %s32, 1
    %p160 = por %p158, %p159
    %p162 = scmp.ne.s32.totalorder %s147, %s161
    %p163 = scmp.eq.s32.totalorder %s32, 0
    %p164 = por %p162, %p163
    %s166 = sadd.s32 %s165, 1
    %p169 = scmp.eq.s32.totalorder %s26, 1
    %p170 = scmp.ne.s32.totalorder %s165, %s167
    %p171 = scmp.eq.s32.totalorder %s26, 0
    %p172 = por %p170, %p171
    %p173 = scmp.ne.s32.totalorder %s165, %s167
    %p174 = scmp.eq.s32.totalorder %s31, 1
    %p175 = por %p173, %p174
    %p176 = scmp.ne.s32.totalorder %s167, %s168
    %p177 = scmp.eq.s32.totalorder %s31, 0
    %p178 = por %p176, %p177
    %p179 = scmp.ne.s32.totalorder %s167, %s168
    %p180 = scmp.eq.s32.totalorder %s32, 1
    %p181 = por %p179, %p180
    %p183 = scmp.ne.s32.totalorder %s168, %s182
    %p184 = scmp.eq.s32.totalorder %s32, 0
    %p185 = por %p183, %p184
    %s187 = sadd.s32 %s186, 1
    %p190 = scmp.eq.s32.totalorder %s26, 1
    %p191 = scmp.ne.s32.totalorder %s186, %s188
    %p192 = scmp.eq.s32.totalorder %s26, 0
    %p193 = por %p191, %p192
    %p194 = scmp.ne.s32.totalorder %s186, %s188
    %p195 = scmp.eq.s32.totalorder %s31, 1
    %p196 = por %p194, %p195
    %p197 = scmp.ne.s32.totalorder %s188, %s189
    %p198 = scmp.eq.s32.totalorder %s31, 0
    %p199 = por %p197, %p198
    %p200 = scmp.ne.s32.totalorder %s188, %s189
    %p201 = scmp.eq.s32.totalorder %s32, 1
    %p202 = por %p200, %p201
    %p204 = scmp.ne.s32.totalorder %s189, %s203
    %p205 = scmp.eq.s32.totalorder %s32, 0
    %p206 = por %p204, %p205
    %s208 = sadd.s32 %s207, 1
    %p211 = scmp.eq.s32.totalorder %s26, 1
    %p212 = scmp.ne.s32.totalorder %s207, %s209
    %p213 = scmp.eq.s32.totalorder %s26, 0
    %p214 = por %p212, %p213
    %p215 = scmp.ne.s32.totalorder %s207, %s209
    %p216 = scmp.eq.s32.totalorder %s31, 1
    %p217 = por %p215, %p216
    %p218 = scmp.ne.s32.totalorder %s209, %s210
    %p219 = scmp.eq.s32.totalorder %s31, 0
    %p220 = por %p218, %p219
    %p221 = scmp.ne.s32.totalorder %s209, %s210
    %p222 = scmp.eq.s32.totalorder %s32, 1
    %p223 = por %p221, %p222
    %p225 = scmp.ne.s32.totalorder %s210, %s224
    %p226 = scmp.eq.s32.totalorder %s32, 0
    %p227 = por %p225, %p226
    %s229 = sadd.s32 %s228, 1
    %p232 = scmp.eq.s32.totalorder %s26, 1
    %p233 = scmp.ne.s32.totalorder %s228, %s230
    %p234 = scmp.eq.s32.totalorder %s26, 0
    %p235 = por %p233, %p234
    %p236 = scmp.ne.s32.totalorder %s228, %s230
    %p237 = scmp.eq.s32.totalorder %s31, 1
    %p238 = por %p236, %p237
    %p239 = scmp.ne.s32.totalorder %s230, %s231
    %p240 = scmp.eq.s32.totalorder %s31, 0
    %p241 = por %p239, %p240
    %p242 = scmp.ne.s32.totalorder %s230, %s231
    %p243 = scmp.eq.s32.totalorder %s32, 1
    %p244 = por %p242, %p243
    %p246 = scmp.ne.s32.totalorder %s231, %s245
    %p247 = scmp.eq.s32.totalorder %s32, 0
    %p248 = por %p246, %p247
    %s250 = sadd.s32 %s249, 1
    %p253 = scmp.eq.s32.totalorder %s26, 1
    %p254 = scmp.ne.s32.totalorder %s249, %s251
    %p255 = scmp.eq.s32.totalorder %s26, 0
    %p256 = por %p254, %p255
    %p257 = scmp.ne.s32.totalorder %s249, %s251
    %p258 = scmp.eq.s32.totalorder %s31, 1
    %p259 = por %p257, %p258
    %p260 = scmp.ne.s32.totalorder %s251, %s252
    %p261 = scmp.eq.s32.totalorder %s31, 0
    %p262 = por %p260, %p261
    %p263 = scmp.ne.s32.totalorder %s251, %s252
    %p264 = scmp.eq.s32.totalorder %s32, 1
    %p265 = por %p263, %p264
    %p267 = scmp.ne.s32.totalorder %s252, %s266
    %p268 = scmp.eq.s32.totalorder %s32, 0
    %p269 = por %p267, %p268
    %s271 = sadd.s32 %s270, 1
    %p274 = scmp.eq.s32.totalorder %s26, 1
    %p275 = scmp.ne.s32.totalorder %s270, %s272
    %p276 = scmp.eq.s32.totalorder %s26, 0
    %p277 = por %p275, %p276
    %p278 = scmp.ne.s32.totalorder %s270, %s272
    %p279 = scmp.eq.s32.totalorder %s31, 1
    %p280 = por %p278, %p279
    %p281 = scmp.ne.s32.totalorder %s272, %s273
    %p282 = scmp.eq.s32.totalorder %s31, 0
    %p283 = por %p281, %p282
    %p284 = scmp.ne.s32.totalorder %s272, %s273
    %p285 = scmp.eq.s32.totalorder %s32, 1
    %p286 = por %p284, %p285
    %p288 = scmp.ne.s32.totalorder %s273, %s287
    %p289 = scmp.eq.s32.totalorder %s32, 0
    %p290 = por %p288, %p289
    %s292 = sadd.s32 %s291, 1
    %p295 = scmp.eq.s32.totalorder %s26, 1
    %p296 = scmp.ne.s32.totalorder %s291, %s293
    %p297 = scmp.eq.s32.totalorder %s26, 0
    %p298 = por %p296, %p297
    %p299 = scmp.ne.s32.totalorder %s291, %s293
    %p300 = scmp.eq.s32.totalorder %s31, 1
    %p301 = por %p299, %p300
    %p302 = scmp.ne.s32.totalorder %s293, %s294
    %p303 = scmp.eq.s32.totalorder %s31, 0
    %p304 = por %p302, %p303
    %p305 = scmp.ne.s32.totalorder %s293, %s294
    %p306 = scmp.eq.s32.totalorder %s32, 1
    %p307 = por %p305, %p306
    %p309 = scmp.ne.s32.totalorder %s294, %s308
    %p310 = scmp.eq.s32.totalorder %s32, 0
    %p311 = por %p309, %p310
    %s313 = sadd.s32 %s312, 1
    %p316 = scmp.eq.s32.totalorder %s26, 1
    %p317 = scmp.ne.s32.totalorder %s312, %s314
    %p318 = scmp.eq.s32.totalorder %s26, 0
    %p319 = por %p317, %p318
    %p320 = scmp.ne.s32.totalorder %s312, %s314
    %p321 = scmp.eq.s32.totalorder %s31, 1
    %p322 = por %p320, %p321
    %p323 = scmp.ne.s32.totalorder %s314, %s315
    %p324 = scmp.eq.s32.totalorder %s31, 0
    %p325 = por %p323, %p324
    %p326 = scmp.ne.s32.totalorder %s314, %s315
    %p327 = scmp.eq.s32.totalorder %s32, 1
    %p328 = por %p326, %p327
    %p330 = scmp.ne.s32.totalorder %s315, %s329
    %p331 = scmp.eq.s32.totalorder %s32, 0
    %p332 = por %p330, %p331
    %s334 = sadd.s32 %s333, 1
    %p337 = scmp.eq.s32.totalorder %s26, 1
    %p338 = scmp.ne.s32.totalorder %s333, %s335
    %p339 = scmp.eq.s32.totalorder %s26, 0
    %p340 = por %p338, %p339
    %p341 = scmp.ne.s32.totalorder %s333, %s335
    %p342 = scmp.eq.s32.totalorder %s31, 1
    %p343 = por %p341, %p342
    %p344 = scmp.ne.s32.totalorder %s335, %s336
    %p345 = scmp.eq.s32.totalorder %s31, 0
    %p346 = por %p344, %p345
    %p347 = scmp.ne.s32.totalorder %s335, %s336
    %p348 = scmp.eq.s32.totalorder %s32, 1
    %p349 = por %p347, %p348
    %p351 = scmp.ne.s32.totalorder %s336, %s350
    %p352 = scmp.eq.s32.totalorder %s32, 0
    %p353 = por %p351, %p352
    %s355 = sadd.s32 %s354, 1
    %p358 = scmp.eq.s32.totalorder %s26, 1
    %p359 = scmp.ne.s32.totalorder %s354, %s356
    %p360 = scmp.eq.s32.totalorder %s26, 0
    %p361 = por %p359, %p360
    %p362 = scmp.ne.s32.totalorder %s354, %s356
    %p363 = scmp.eq.s32.totalorder %s31, 1
    %p364 = por %p362, %p363
    %p365 = scmp.ne.s32.totalorder %s356, %s357
    %p366 = scmp.eq.s32.totalorder %s31, 0
    %p367 = por %p365, %p366
    %p368 = scmp.ne.s32.totalorder %s356, %s357
    %p369 = scmp.eq.s32.totalorder %s32, 1
    %p370 = por %p368, %p369
    %p372 = scmp.ne.s32.totalorder %s357, %s371
    %p373 = scmp.eq.s32.totalorder %s32, 0
    %p374 = por %p372, %p373
    %s376 = sadd.s32 %s375, 1
    %p379 = scmp.eq.s32.totalorder %s26, 1
    %p380 = scmp.ne.s32.totalorder %s375, %s377
    %p381 = scmp.eq.s32.totalorder %s26, 0
    %p382 = por %p380, %p381
    %p383 = scmp.ne.s32.totalorder %s375, %s377
    %p384 = scmp.eq.s32.totalorder %s31, 1
    %p385 = por %p383, %p384
    %p386 = scmp.ne.s32.totalorder %s377, %s378
    %p387 = scmp.eq.s32.totalorder %s31, 0
    %p388 = por %p386, %p387
    %p389 = scmp.ne.s32.totalorder %s377, %s378
    %p390 = scmp.eq.s32.totalorder %s32, 1
    %p391 = por %p389, %p390
    %p393 = scmp.ne.s32.totalorder %s378, %s392
    %p394 = scmp.eq.s32.totalorder %s32, 0
    %p395 = por %p393, %p394
    %s397 = sadd.s32 %s396, 1
    %p400 = scmp.eq.s32.totalorder %s26, 1
    %p401 = scmp.ne.s32.totalorder %s396, %s398
    %p402 = scmp.eq.s32.totalorder %s26, 0
    %p403 = por %p401, %p402
    %p404 = scmp.ne.s32.totalorder %s396, %s398
    %p405 = scmp.eq.s32.totalorder %s31, 1
    %p406 = por %p404, %p405
    %p407 = scmp.ne.s32.totalorder %s398, %s399
    %p408 = scmp.eq.s32.totalorder %s31, 0
    %p409 = por %p407, %p408
    %p410 = scmp.ne.s32.totalorder %s398, %s399
    %p411 = scmp.eq.s32.totalorder %s32, 1
    %p412 = por %p410, %p411
    %p414 = scmp.ne.s32.totalorder %s399, %s413
    %p415 = scmp.eq.s32.totalorder %s32, 0
    %p416 = por %p414, %p415
    %s418 = sadd.s32 %s417, 1
    %p421 = scmp.eq.s32.totalorder %s26, 1
    %p422 = scmp.ne.s32.totalorder %s417, %s419
    %p423 = scmp.eq.s32.totalorder %s26, 0
    %p424 = por %p422, %p423
    %p425 = scmp.ne.s32.totalorder %s417, %s419
    %p426 = scmp.eq.s32.totalorder %s31, 1
    %p427 = por %p425, %p426
    %p428 = scmp.ne.s32.totalorder %s419, %s420
    %p429 = scmp.eq.s32.totalorder %s31, 0
    %p430 = por %p428, %p429
    %p431 = scmp.ne.s32.totalorder %s419, %s420
    %p432 = scmp.eq.s32.totalorder %s32, 1
    %p433 = por %p431, %p432
    %p435 = scmp.ne.s32.totalorder %s420, %s434
    %p436 = scmp.eq.s32.totalorder %s32, 0
    %p437 = por %p435, %p436
    %s439 = sadd.s32 %s438, 1
    %p442 = scmp.eq.s32.totalorder %s26, 1
    %p443 = scmp.ne.s32.totalorder %s438, %s440
    %p444 = scmp.eq.s32.totalorder %s26, 0
    %p445 = por %p443, %p444
    %p446 = scmp.ne.s32.totalorder %s438, %s440
    %p447 = scmp.eq.s32.totalorder %s31, 1
    %p448 = por %p446, %p447
    %p449 = scmp.ne.s32.totalorder %s440, %s441
    %p450 = scmp.eq.s32.totalorder %s31, 0
    %p451 = por %p449, %p450
    %p452 = scmp.ne.s32.totalorder %s440, %s441
    %p453 = scmp.eq.s32.totalorder %s32, 1
    %p454 = por %p452, %p453
    %p456 = scmp.ne.s32.totalorder %s441, %s455
    %p457 = scmp.eq.s32.totalorder %s32, 0
    %p458 = por %p456, %p457
    %s459 = ssub.s32 %s26, %s33
    %p460 = scmp.eq.s32.totalorder %s459, 0
    %s462 = sadd.s32 %s461, 1
    %s463 = scalar_select %p460, %s461, %s462
    %p466 = pneg %p460
    %p467 = scmp.eq.s32.totalorder %s26, 1
    %p468 = por %p466, %p467
    %p469 = scmp.ne.s32.totalorder %s461, %s464
    %p470 = scmp.eq.s32.totalorder %s26, 0
    %p471 = por %p469, %p470
    %p472 = scmp.ne.s32.totalorder %s461, %s464
    %p473 = scmp.eq.s32.totalorder %s31, 1
    %p474 = por %p472, %p473
    %p475 = scmp.ne.s32.totalorder %s464, %s465
    %p476 = scmp.eq.s32.totalorder %s31, 0
    %p477 = por %p475, %p476
    %p478 = scmp.ne.s32.totalorder %s464, %s465
    %p479 = scmp.eq.s32.totalorder %s32, 1
    %p480 = por %p478, %p479
    %p482 = scmp.ne.s32.totalorder %s465, %s481
    %p483 = scmp.eq.s32.totalorder %s32, 0
    %p484 = por %p482, %p483
    %p485 = scmp.le.s32.totalorder 1, %s26
    %p486 = scmp.lt.s32.totalorder %s26, 3
    %p487 = pnand %p485, %p486
    %p488 = pneg %p487
    // Predicated region
    $region9: #{mnist_forward.1} parent=5 // pred_check
      _
    $region10: #{mnist_forward.1} parent=5 // pred_check_branch
      %490 = sbr.rel (%p487) target = $region12
    $region11: #{mnist_forward.1} parent=5 // pred_region
      %s491 = ssub.s32 %s26, 1
      // Predicated region
      $region13: #{mnist_forward.1} parent=11 // pred_check
        %p492 = pneg %p73
      $region14: #{mnist_forward.1} parent=11 // pred_check_branch
        %494 = sbr.rel (%p492) target = $region16
      $region15: #{mnist_forward.1} parent=11 // pred_region
        _
      $region16: #{mnist_forward.1} parent=11 // pred_fallthru
        _
      // Predicated region
      $region17: #{mnist_forward.1} parent=11 // pred_check
        %p495 = pneg %p94
      $region18: #{mnist_forward.1} parent=11 // pred_check_branch
        %497 = sbr.rel (%p495) target = $region20
      $region19: #{mnist_forward.1} parent=11 // pred_region
        _
      $region20: #{mnist_forward.1} parent=11 // pred_fallthru
        _
      // Predicated region
      $region21: #{mnist_forward.1} parent=11 // pred_check
        %p498 = pneg %p115
      $region22: #{mnist_forward.1} parent=11 // pred_check_branch
        %500 = sbr.rel (%p498) target = $region24
      $region23: #{mnist_forward.1} parent=11 // pred_region
        _
      $region24: #{mnist_forward.1} parent=11 // pred_fallthru
        _
      // Predicated region
      $region25: #{mnist_forward.1} parent=11 // pred_check
        %p501 = pneg %p136
      $region26: #{mnist_forward.1} parent=11 // pred_check_branch
        %503 = sbr.rel (%p501) target = $region28
      $region27: #{mnist_forward.1} parent=11 // pred_region
        _
      $region28: #{mnist_forward.1} parent=11 // pred_fallthru
        _
      // Predicated region
      $region29: #{mnist_forward.1} parent=11 // pred_check
        %p504 = pneg %p157
      $region30: #{mnist_forward.1} parent=11 // pred_check_branch
        %506 = sbr.rel (%p504) target = $region32
      $region31: #{mnist_forward.1} parent=11 // pred_region
        _
      $region32: #{mnist_forward.1} parent=11 // pred_fallthru
        _
      // Predicated region
      $region33: #{mnist_forward.1} parent=11 // pred_check
        %p507 = pneg %p178
      $region34: #{mnist_forward.1} parent=11 // pred_check_branch
        %509 = sbr.rel (%p507) target = $region36
      $region35: #{mnist_forward.1} parent=11 // pred_region
        _
      $region36: #{mnist_forward.1} parent=11 // pred_fallthru
        _
      // Predicated region
      $region37: #{mnist_forward.1} parent=11 // pred_check
        %p510 = pneg %p199
      $region38: #{mnist_forward.1} parent=11 // pred_check_branch
        %512 = sbr.rel (%p510) target = $region40
      $region39: #{mnist_forward.1} parent=11 // pred_region
        _
      $region40: #{mnist_forward.1} parent=11 // pred_fallthru
        _
      // Predicated region
      $region41: #{mnist_forward.1} parent=11 // pred_check
        %p513 = pneg %p220
      $region42: #{mnist_forward.1} parent=11 // pred_check_branch
        %515 = sbr.rel (%p513) target = $region44
      $region43: #{mnist_forward.1} parent=11 // pred_region
        _
      $region44: #{mnist_forward.1} parent=11 // pred_fallthru
        _
      // Predicated region
      $region45: #{mnist_forward.1} parent=11 // pred_check
        %p516 = pneg %p241
      $region46: #{mnist_forward.1} parent=11 // pred_check_branch
        %518 = sbr.rel (%p516) target = $region48
      $region47: #{mnist_forward.1} parent=11 // pred_region
        _
      $region48: #{mnist_forward.1} parent=11 // pred_fallthru
        _
      // Predicated region
      $region49: #{mnist_forward.1} parent=11 // pred_check
        %p519 = pneg %p262
      $region50: #{mnist_forward.1} parent=11 // pred_check_branch
        %521 = sbr.rel (%p519) target = $region52
      $region51: #{mnist_forward.1} parent=11 // pred_region
        _
      $region52: #{mnist_forward.1} parent=11 // pred_fallthru
        _
      // Predicated region
      $region53: #{mnist_forward.1} parent=11 // pred_check
        %p522 = pneg %p283
      $region54: #{mnist_forward.1} parent=11 // pred_check_branch
        %524 = sbr.rel (%p522) target = $region56
      $region55: #{mnist_forward.1} parent=11 // pred_region
        _
      $region56: #{mnist_forward.1} parent=11 // pred_fallthru
        _
      // Predicated region
      $region57: #{mnist_forward.1} parent=11 // pred_check
        %p525 = pneg %p304
      $region58: #{mnist_forward.1} parent=11 // pred_check_branch
        %527 = sbr.rel (%p525) target = $region60
      $region59: #{mnist_forward.1} parent=11 // pred_region
        _
      $region60: #{mnist_forward.1} parent=11 // pred_fallthru
        _
      // Predicated region
      $region61: #{mnist_forward.1} parent=11 // pred_check
        %p528 = pneg %p325
      $region62: #{mnist_forward.1} parent=11 // pred_check_branch
        %530 = sbr.rel (%p528) target = $region64
      $region63: #{mnist_forward.1} parent=11 // pred_region
        _
      $region64: #{mnist_forward.1} parent=11 // pred_fallthru
        _
      // Predicated region
      $region65: #{mnist_forward.1} parent=11 // pred_check
        %p531 = pneg %p346
      $region66: #{mnist_forward.1} parent=11 // pred_check_branch
        %533 = sbr.rel (%p531) target = $region68
      $region67: #{mnist_forward.1} parent=11 // pred_region
        _
      $region68: #{mnist_forward.1} parent=11 // pred_fallthru
        _
      // Predicated region
      $region69: #{mnist_forward.1} parent=11 // pred_check
        %p534 = pneg %p367
      $region70: #{mnist_forward.1} parent=11 // pred_check_branch
        %536 = sbr.rel (%p534) target = $region72
      $region71: #{mnist_forward.1} parent=11 // pred_region
        _
      $region72: #{mnist_forward.1} parent=11 // pred_fallthru
        _
      // Predicated region
      $region73: #{mnist_forward.1} parent=11 // pred_check
        %p537 = pneg %p388
      $region74: #{mnist_forward.1} parent=11 // pred_check_branch
        %539 = sbr.rel (%p537) target = $region76
      $region75: #{mnist_forward.1} parent=11 // pred_region
        _
      $region76: #{mnist_forward.1} parent=11 // pred_fallthru
        _
      // Predicated region
      $region77: #{mnist_forward.1} parent=11 // pred_check
        %p540 = pneg %p409
      $region78: #{mnist_forward.1} parent=11 // pred_check_branch
        %542 = sbr.rel (%p540) target = $region80
      $region79: #{mnist_forward.1} parent=11 // pred_region
        _
      $region80: #{mnist_forward.1} parent=11 // pred_fallthru
        _
      // Predicated region
      $region81: #{mnist_forward.1} parent=11 // pred_check
        %p543 = pneg %p430
      $region82: #{mnist_forward.1} parent=11 // pred_check_branch
        %545 = sbr.rel (%p543) target = $region84
      $region83: #{mnist_forward.1} parent=11 // pred_region
        _
      $region84: #{mnist_forward.1} parent=11 // pred_fallthru
        _
      // Predicated region
      $region85: #{mnist_forward.1} parent=11 // pred_check
        %p546 = pneg %p451
      $region86: #{mnist_forward.1} parent=11 // pred_check_branch
        %548 = sbr.rel (%p546) target = $region88
      $region87: #{mnist_forward.1} parent=11 // pred_region
        _
      $region88: #{mnist_forward.1} parent=11 // pred_fallthru
        _
    $region12: #{mnist_forward.1} parent=5 // pred_fallthru
      _
    %p549 = scmp.lt.s32.totalorder %s26, 2
    // Predicated region
    $region89: #{mnist_forward.1} parent=5 // pred_check
      %p550 = pneg %p549
    $region90: #{mnist_forward.1} parent=5 // pred_check_branch
      %552 = sbr.rel (%p550) target = $region92
    $region91: #{mnist_forward.1} parent=5 // pred_region
      // Predicated region
      $region93: #{mnist_forward.1} parent=91 // pred_check
        %p553 = pneg %p46
      $region94: #{mnist_forward.1} parent=91 // pred_check_branch
        %555 = sbr.rel (%p553) target = $region96
      $region95: #{mnist_forward.1} parent=91 // pred_region
        %p556 = scmp.lt.s32.totalorder %s26, 1
        %s557 = scalar_select %p556, %s26, 1
        %s558 = smul.addr %s557, 61
        %s559 = smul.addr %s558, 8
        %s560 = scalar_lea.vmem %s0, %s559
      $region96: #{mnist_forward.1} parent=91 // pred_fallthru
        _
    $region92: #{mnist_forward.1} parent=5 // pred_fallthru
      _
    %p561 = scmp.le.s32.totalorder 1, %s26
    %p562 = scmp.lt.s32.totalorder %s26, 3
    %p563 = pnand %p561, %p562
    %p564 = pneg %p563
    // Predicated region
    $region97: #{mnist_forward.1} parent=5 // pred_check
      _
    $region98: #{mnist_forward.1} parent=5 // pred_check_branch
      %566 = sbr.rel (%p563) target = $region100
    $region99: #{mnist_forward.1} parent=5 // pred_region
      %s567 = ssub.s32 %s26, 1
      %p568 = scmp.lt.s32.totalorder %s31, 1
      %s569 = scalar_select %p568, %s31, 1
      %s570 = smul.addr %s569, 61
      %s571 = smul.addr %s570, 8
      %s572 = scalar_lea.vmem %s0, %s571
      %p573 = pneg %p52
      %p574 = pneg %p49
      %p575 = pneg %p73
      %p576 = pneg %p70
      %p577 = pneg %p94
      %p578 = pneg %p91
      %p579 = pneg %p115
      %p580 = pneg %p112
      %p581 = pneg %p136
      %p582 = pneg %p133
      %p583 = pneg %p157
      %p584 = pneg %p154
      %p585 = pneg %p178
      %p586 = pneg %p175
      %p587 = pneg %p199
      %p588 = pneg %p196
      %p589 = pneg %p220
      %p590 = pneg %p217
      %p591 = pneg %p241
      %p592 = pneg %p238
      %p593 = pneg %p262
      %p594 = pneg %p259
      %p595 = pneg %p283
      %p596 = pneg %p280
      %p597 = pneg %p304
      %p598 = pneg %p301
      %p599 = pneg %p325
      %p600 = pneg %p322
      %p601 = pneg %p346
      %p602 = pneg %p343
      %p603 = pneg %p367
      %p604 = pneg %p364
      %p605 = pneg %p388
      %p606 = pneg %p385
      %p607 = pneg %p409
      %p608 = pneg %p406
      %p609 = pneg %p430
      %p610 = pneg %p427
      %p611 = pneg %p451
      %p612 = pneg %p448
      %p613 = pneg %p477
      %p614 = pneg %p474
      %s615 = smul.u32 2, %s31
      %p616 = scmp.lt.s32.totalorder %s615, 3
      %s617 = scalar_select %p616, %s615, 3
      %s618 = smul.addr %s617, 8
      %s619 = scalar_lea.vmem %s20, %s618
      %p620 = scmp.lt.s32.totalorder %s31, 1
      %s621 = scalar_select %p620, %s31, 1
      %s622 = smul.addr %s621, 61
      %s623 = smul.addr %s622, 8
      %s624 = scalar_lea.vmem %s0, %s623
      %s625 = smul.u32 2, %s31
      %p626 = scmp.lt.s32.totalorder %s625, 3
      %s627 = scalar_select %p626, %s625, 3
      %s628 = smul.addr %s627, 8
      %s629 = scalar_lea.vmem %s20, %s628
      %s630 = smul.u32 2, %s31
      %v632 = vld [vmem:[%s624] sm:$0xff]
      %v633 = vld [vmem:[%s624 + $0x8] sm:$0xff]
      %v634 = vld [vmem:[%s624 + $0x10] sm:$0xff]
      %v635 = vld [vmem:[%s624 + $0x18] sm:$0xff]
      %v636 = vld [vmem:[%s624 + $0x20] sm:$0xff]
      %v637 = vld [vmem:[%s624 + $0x28] sm:$0xff]
      %v638 = vld [vmem:[%s624 + $0x30] sm:$0xff]
      %v639 = vld [vmem:[%s624 + $0x38] sm:$0xff]
      %v640 = vld [vmem:[%s624 + $0x40] sm:$0xff]
      %v641 = vld [vmem:[%s624 + $0x48] sm:$0xff]
      %v642 = vld [vmem:[%s624 + $0x50] sm:$0xff]
      %v643 = vld [vmem:[%s624 + $0x58] sm:$0xff]
      %v644 = vld [vmem:[%s624 + $0x60] sm:$0xff]
      %v645 = vld [vmem:[%s624 + $0x68] sm:$0xff]
      %v646 = vld [vmem:[%s624 + $0x70] sm:$0xff]
      %v647 = vld [vmem:[%s624 + $0x78] sm:$0xff]
      %v648 = vld [vmem:[%s624 + $0x80] sm:$0xff]
      %v649 = vld [vmem:[%s624 + $0x88] sm:$0xff]
      %v650 = vld [vmem:[%s624 + $0x90] sm:$0xff]
      %v651 = vld [vmem:[%s624 + $0x98] sm:$0xff]
      %v652 = vld [vmem:[%s624 + $0xa0] sm:$0xff]
      %v653 = vld [vmem:[%s624 + $0xa8] sm:$0xff]
      %v654 = vld [vmem:[%s624 + $0xb0] sm:$0xff]
      %v655 = vld [vmem:[%s624 + $0xb8] sm:$0xff]
      %v656 = vld [vmem:[%s624 + $0xc0] sm:$0xff]
      %v657 = vld [vmem:[%s624 + $0xc8] sm:$0xff]
      %v658 = vld [vmem:[%s624 + $0xd0] sm:$0xff]
      %v659 = vld [vmem:[%s624 + $0xd8] sm:$0xff]
      %v660 = vld [vmem:[%s624 + $0xe0] sm:$0xff]
      %v661 = vld [vmem:[%s624 + $0xe8] sm:$0xff]
      %v662 = vld [vmem:[%s624 + $0xf0] sm:$0xff]
      %v663 = vld [vmem:[%s624 + $0xf8] sm:$0xff]
      %v664 = vld [vmem:[%s624 + $0x100] sm:$0xff]
      %v665 = vld [vmem:[%s624 + $0x108] sm:$0xff]
      %v666 = vld [vmem:[%s624 + $0x110] sm:$0xff]
      %v667 = vld [vmem:[%s624 + $0x118] sm:$0xff]
      %v668 = vld [vmem:[%s624 + $0x120] sm:$0xff]
      %v669 = vld [vmem:[%s624 + $0x128] sm:$0xff]
      %v670 = vld [vmem:[%s624 + $0x130] sm:$0xff]
      %v671 = vld [vmem:[%s624 + $0x138] sm:$0xff]
      %v672 = vld [vmem:[%s624 + $0x140] sm:$0xff]
      %v673 = vld [vmem:[%s624 + $0x148] sm:$0xff]
      %v674 = vld [vmem:[%s624 + $0x150] sm:$0xff]
      %v675 = vld [vmem:[%s624 + $0x158] sm:$0xff]
      %v676 = vld [vmem:[%s624 + $0x160] sm:$0xff]
      %v677 = vld [vmem:[%s624 + $0x168] sm:$0xff]
      %v678 = vld [vmem:[%s624 + $0x170] sm:$0xff]
      %v679 = vld [vmem:[%s624 + $0x178] sm:$0xff]
      %v680 = vld [vmem:[%s624 + $0x180] sm:$0xff]
      %v681 = vld [vmem:[%s624 + $0x188] sm:$0xff]
      %v682 = vld [vmem:[%s624 + $0x190] sm:$0xff]
      %v683 = vld [vmem:[%s624 + $0x198] sm:$0xff]
      %v684 = vld [vmem:[%s624 + $0x1a0] sm:$0xff]
      %v685 = vld [vmem:[%s624 + $0x1a8] sm:$0xff]
      %v686 = vld [vmem:[%s624 + $0x1b0] sm:$0xff]
      %v687 = vld [vmem:[%s624 + $0x1b8] sm:$0xff]
      %v688 = vld [vmem:[%s624 + $0x1c0] sm:$0xff]
      %v689 = vld [vmem:[%s624 + $0x1c8] sm:$0xff]
      %v690 = vld [vmem:[%s624 + $0x1d0] sm:$0xff]
      %v691 = vld [vmem:[%s624 + $0x1d8] sm:$0xff]
      %v692 = vld [vmem:[%s624 + $0x1e0] sm:$0x3]
      %v693 = vld [vmem:[%s2] sm:$0x3]
      %v694 = vld [vmem:[%s3] sm:$0x3]
      %v695 = vpack.c.bf16 %v633, %v632
      %v696 = vpack.c.bf16 %v635, %v634
      %v697 = vpack.c.bf16 %v637, %v636
      %v698 = vpack.c.bf16 %v639, %v638
      %v699 = vpack.c.bf16 %v641, %v640
      %v700 = vpack.c.bf16 %v643, %v642
      %v701 = vpack.c.bf16 %v645, %v644
      %v702 = vpack.c.bf16 %v647, %v646
      %v703 = vpack.c.bf16 %v649, %v648
      %v704 = vpack.c.bf16 %v651, %v650
      %v705 = vpack.c.bf16 %v653, %v652
      %v706 = vpack.c.bf16 %v655, %v654
      %v707 = vpack.c.bf16 %v657, %v656
      %v708 = vpack.c.bf16 %v659, %v658
      %v709 = vpack.c.bf16 %v661, %v660
      %v710 = vpack.c.bf16 %v663, %v662
      %v711 = vpack.c.bf16 %v665, %v664
      %v712 = vpack.c.bf16 %v667, %v666
      %v713 = vpack.c.bf16 %v669, %v668
      %v714 = vpack.c.bf16 %v671, %v670
      %v715 = vpack.c.bf16 %v673, %v672
      %v716 = vpack.c.bf16 %v675, %v674
      %v717 = vpack.c.bf16 %v677, %v676
      %v718 = vpack.c.bf16 %v679, %v678
      %v719 = vpack.c.bf16 %v681, %v680
      %v720 = vpack.c.bf16 %v683, %v682
      %v721 = vpack.c.bf16 %v685, %v684
      %v722 = vpack.c.bf16 %v687, %v686
      %v723 = vpack.c.bf16 %v689, %v688
      %v724 = vpack.c.bf16 %v691, %v690
      %v725 = vld [vmem:[%s1] sm:$0xff]
      %v726 = vld [vmem:[%s1 + $0x8] sm:$0xff]
      %v727 = vld [vmem:[%s1 + $0x10] sm:$0xff]
      %v728 = vld [vmem:[%s1 + $0x18] sm:$0x77]
      %v729 = vpack.c.bf16 %v692, %v692
      %s730 = scalar_lea.vmem %s1, 32
      %v731 = vld [vmem:[%s730] sm:$0xff]
      %v732 = vld [vmem:[%s730 + $0x8] sm:$0xff]
      %v733 = vld [vmem:[%s730 + $0x10] sm:$0xff]
      %v734 = vld [vmem:[%s730 + $0x18] sm:$0x77]
      %vm735 = vsmask.f32 7424
      %v737 = vshrl.u32 %v695, 16
      %v739 = vshll.u32 %v695, 16
      %v741 = vrot.slane %v739, 1
      %v742 = vor.u32 %v737, %v741
      %v744 = vshll.u32 %v696, 16
      %v746 = vrot.slane %v744, 1
      %v747 = vsel %vm735, %v742, %v746
      %v748 = vshrl.u32 %v696, 16
      %v750 = vor.u32 %v748, %v746
      %v752 = vshll.u32 %v697, 16
      %v754 = vrot.slane %v752, 1
      %v755 = vsel %vm735, %v750, %v754
      %v756 = vshrl.u32 %v697, 16
      %v758 = vor.u32 %v756, %v754
      %v760 = vshll.u32 %v698, 16
      %v762 = vrot.slane %v760, 1
      %v763 = vsel %vm735, %v758, %v762
      %v764 = vshrl.u32 %v698, 16
      %v766 = vor.u32 %v764, %v762
      %v768 = vshll.u32 %v699, 16
      %v770 = vrot.slane %v768, 1
      %v771 = vsel %vm735, %v766, %v770
      %v772 = vshrl.u32 %v699, 16
      %v774 = vor.u32 %v772, %v770
      %v776 = vshll.u32 %v700, 16
      %v778 = vrot.slane %v776, 1
      %v779 = vsel %vm735, %v774, %v778
      %v780 = vshrl.u32 %v700, 16
      %v782 = vor.u32 %v780, %v778
      %v784 = vshll.u32 %v701, 16
      %v786 = vrot.slane %v784, 1
      %v787 = vsel %vm735, %v782, %v786
      %v788 = vshrl.u32 %v701, 16
      %v790 = vor.u32 %v788, %v786
      %v792 = vshll.u32 %v702, 16
      %v794 = vrot.slane %v792, 1
      %v795 = vsel %vm735, %v790, %v794
      %v796 = vshrl.u32 %v702, 16
      %v798 = vor.u32 %v796, %v794
      %v800 = vshll.u32 %v703, 16
      %v802 = vrot.slane %v800, 1
      %v803 = vsel %vm735, %v798, %v802
      %v804 = vshrl.u32 %v703, 16
      %v806 = vor.u32 %v804, %v802
      %v808 = vshll.u32 %v704, 16
      %v810 = vrot.slane %v808, 1
      %v811 = vsel %vm735, %v806, %v810
      %v812 = vshrl.u32 %v704, 16
      %v814 = vor.u32 %v812, %v810
      %v816 = vshll.u32 %v705, 16
      %v818 = vrot.slane %v816, 1
      %v819 = vsel %vm735, %v814, %v818
      %v820 = vshrl.u32 %v705, 16
      %v822 = vor.u32 %v820, %v818
      %v824 = vshll.u32 %v706, 16
      %v826 = vrot.slane %v824, 1
      %v827 = vsel %vm735, %v822, %v826
      %v828 = vshrl.u32 %v706, 16
      %v830 = vor.u32 %v828, %v826
      %v832 = vshll.u32 %v707, 16
      %v834 = vrot.slane %v832, 1
      %v835 = vsel %vm735, %v830, %v834
      %v836 = vshrl.u32 %v707, 16
      %v838 = vor.u32 %v836, %v834
      %v840 = vshll.u32 %v708, 16
      %v842 = vrot.slane %v840, 1
      %v843 = vsel %vm735, %v838, %v842
      %v844 = vshrl.u32 %v708, 16
      %v846 = vor.u32 %v844, %v842
      %v848 = vshll.u32 %v709, 16
      %v850 = vrot.slane %v848, 1
      %v851 = vsel %vm735, %v846, %v850
      %v852 = vshrl.u32 %v709, 16
      %v854 = vor.u32 %v852, %v850
      %v856 = vshll.u32 %v710, 16
      %v858 = vrot.slane %v856, 1
      %v859 = vsel %vm735, %v854, %v858
      %v860 = vshrl.u32 %v710, 16
      %v862 = vor.u32 %v860, %v858
      %v864 = vshll.u32 %v711, 16
      %v866 = vrot.slane %v864, 1
      %v867 = vsel %vm735, %v862, %v866
      %v868 = vshrl.u32 %v711, 16
      %v870 = vor.u32 %v868, %v866
      %v872 = vshll.u32 %v712, 16
      %v874 = vrot.slane %v872, 1
      %v875 = vsel %vm735, %v870, %v874
      %v876 = vshrl.u32 %v712, 16
      %v878 = vor.u32 %v876, %v874
      %v880 = vshll.u32 %v713, 16
      %v882 = vrot.slane %v880, 1
      %v883 = vsel %vm735, %v878, %v882
      %v884 = vshrl.u32 %v713, 16
      %v886 = vor.u32 %v884, %v882
      %v888 = vshll.u32 %v714, 16
      %v890 = vrot.slane %v888, 1
      %v891 = vsel %vm735, %v886, %v890
      %v892 = vshrl.u32 %v714, 16
      %v894 = vor.u32 %v892, %v890
      %v896 = vshll.u32 %v715, 16
      %v898 = vrot.slane %v896, 1
      %v899 = vsel %vm735, %v894, %v898
      %v900 = vshrl.u32 %v715, 16
      %v902 = vor.u32 %v900, %v898
      %v904 = vshll.u32 %v716, 16
      %v906 = vrot.slane %v904, 1
      %v907 = vsel %vm735, %v902, %v906
      %v908 = vshrl.u32 %v716, 16
      %v910 = vor.u32 %v908, %v906
      %v912 = vshll.u32 %v717, 16
      %v914 = vrot.slane %v912, 1
      %v915 = vsel %vm735, %v910, %v914
      %v916 = vshrl.u32 %v717, 16
      %v918 = vor.u32 %v916, %v914
      %v920 = vshll.u32 %v718, 16
      %v922 = vrot.slane %v920, 1
      %v923 = vsel %vm735, %v918, %v922
      %v924 = vshrl.u32 %v718, 16
      %v926 = vor.u32 %v924, %v922
      %v928 = vshll.u32 %v719, 16
      %v930 = vrot.slane %v928, 1
      %v931 = vsel %vm735, %v926, %v930
      %v932 = vshrl.u32 %v719, 16
      %v934 = vor.u32 %v932, %v930
      %v936 = vshll.u32 %v720, 16
      %v938 = vrot.slane %v936, 1
      %v939 = vsel %vm735, %v934, %v938
      %v940 = vshrl.u32 %v720, 16
      %v942 = vor.u32 %v940, %v938
      %v944 = vshll.u32 %v721, 16
      %v946 = vrot.slane %v944, 1
      %v947 = vsel %vm735, %v942, %v946
      %v948 = vshrl.u32 %v721, 16
      %v950 = vor.u32 %v948, %v946
      %v952 = vshll.u32 %v722, 16
      %v954 = vrot.slane %v952, 1
      %v955 = vsel %vm735, %v950, %v954
      %v956 = vshrl.u32 %v722, 16
      %v958 = vor.u32 %v956, %v954
      %v960 = vshll.u32 %v723, 16
      %v962 = vrot.slane %v960, 1
      %v963 = vsel %vm735, %v958, %v962
      %v964 = vshrl.u32 %v723, 16
      %v966 = vor.u32 %v964, %v962
      %v968 = vshll.u32 %v724, 16
      %v970 = vrot.slane %v968, 1
      %v971 = vsel %vm735, %v966, %v970
      %v972 = vshrl.u32 %v724, 16
      %v974 = vor.u32 %v972, %v970
      %v976 = vshll.u32 %v729, 16
      %v978 = vrot.slane %v976, 1
      %v979 = vsel %vm735, %v974, %v978
      %v984 = vunpack.c.l.b16 %v731
      %v985 = vunpack.c.h.b16 %v731
      %v986 = vunpack.c.l.b16 %v732
      %v987 = vunpack.c.h.b16 %v732
      %v988 = vunpack.c.l.b16 %v733
      %v989 = vunpack.c.h.b16 %v733
      %v990 = vunpack.c.l.b16 %v734
      %v991 = vunpack.c.h.b16 %v734
      %v992 = vpack.c.b16 %v986, %v984
      %v993 = vpack.c.b16 %v987, %v985
      %v994 = vpack.c.b16 %v990, %v988
      %v995 = vpack.c.b16 %v991, %v989
      %vm998 = vcmask 244736
      %v1000 = vsel %vm998, %v747, 0
      %v1003 = vsel %vm998, %v755, 0
      %v1006 = vsel %vm998, %v763, 0
      %v1009 = vsel %vm998, %v771, 0
      %v1012 = vsel %vm998, %v779, 0
      %v1015 = vsel %vm998, %v787, 0
      %v1018 = vsel %vm998, %v795, 0
      %v1021 = vsel %vm998, %v803, 0
      %v1024 = vsel %vm998, %v811, 0
      %v1027 = vsel %vm998, %v819, 0
      %v1030 = vsel %vm998, %v827, 0
      %v1033 = vsel %vm998, %v835, 0
      %v1036 = vsel %vm998, %v843, 0
      %v1039 = vsel %vm998, %v851, 0
      %v1042 = vsel %vm998, %v859, 0
      %v1045 = vsel %vm998, %v867, 0
      %v1048 = vsel %vm998, %v875, 0
      %v1051 = vsel %vm998, %v883, 0
      %v1054 = vsel %vm998, %v891, 0
      %v1057 = vsel %vm998, %v899, 0
      %v1060 = vsel %vm998, %v907, 0
      %v1063 = vsel %vm998, %v915, 0
      %v1066 = vsel %vm998, %v923, 0
      %v1069 = vsel %vm998, %v931, 0
      %v1072 = vsel %vm998, %v939, 0
      %v1075 = vsel %vm998, %v947, 0
      %v1078 = vsel %vm998, %v955, 0
      %v1081 = vsel %vm998, %v963, 0
      %v1084 = vsel %vm998, %v971, 0
      %v1087 = vsel %vm998, %v979, 0
      %vm1089 = vcmask 1046528
      %v1091 = vsel %vm1089, %v994, 0
      %v1094 = vsel %vm1089, %v995, 0
      %1096 = vmatpush.bf16.msra.mxu0 0
      %1097 = vmatpush.bf16.msra.mxu0 0
      %1098 = vmatpush.bf16.msra.mxu0 0
      %1099 = vmatpush.bf16.msra.mxu0 0
      %1100 = vmatpush.bf16.msra.mxu0 0
      %1101 = vmatpush.bf16.msra.mxu0 0
      %1102 = vmatpush.bf16.msra.mxu0 %v1091
      %1103 = vmatpush.bf16.msra.mxu0 %v992
      %1104 = vmatmul.bf16.gmra.mxu0 %v1000
      %v1105 = vpop.f32.mrf.mxu0
      %v1106 = vadd.f32 0.0, %v1105
      %v1107 = vpop.f32.mrf.mxu0
      %v1108 = vadd.f32 0.0, %v1107
      %1109 = vmatmul.bf16.gmra.mxu0 %v1003
      %v1110 = vpop.f32.mrf.mxu0
      %v1111 = vadd.f32 0.0, %v1110
      %v1112 = vpop.f32.mrf.mxu0
      %v1113 = vadd.f32 0.0, %v1112
      %1114 = vmatmul.bf16.gmra.mxu0 %v1006
      %v1115 = vpop.f32.mrf.mxu0
      %v1116 = vadd.f32 0.0, %v1115
      %v1117 = vpop.f32.mrf.mxu0
      %v1118 = vadd.f32 0.0, %v1117
      %1119 = vmatmul.bf16.gmra.mxu0 %v1009
      %v1120 = vpop.f32.mrf.mxu0
      %v1121 = vadd.f32 0.0, %v1120
      %v1122 = vpop.f32.mrf.mxu0
      %v1123 = vadd.f32 0.0, %v1122
      %1124 = vmatmul.bf16.gmra.mxu0 %v1012
      %v1125 = vpop.f32.mrf.mxu0
      %v1126 = vadd.f32 0.0, %v1125
      %v1127 = vpop.f32.mrf.mxu0
      %v1128 = vadd.f32 0.0, %v1127
      %1129 = vmatmul.bf16.gmra.mxu0 %v1015
      %v1130 = vpop.f32.mrf.mxu0
      %v1131 = vadd.f32 0.0, %v1130
      %v1132 = vpop.f32.mrf.mxu0
      %v1133 = vadd.f32 0.0, %v1132
      %1134 = vmatmul.bf16.gmra.mxu0 %v1018
      %v1135 = vpop.f32.mrf.mxu0
      %v1136 = vadd.f32 0.0, %v1135
      %v1137 = vpop.f32.mrf.mxu0
      %v1138 = vadd.f32 0.0, %v1137
      %1139 = vmatmul.bf16.gmra.mxu0 %v1021
      %v1140 = vpop.f32.mrf.mxu0
      %v1141 = vadd.f32 0.0, %v1140
      %v1142 = vpop.f32.mrf.mxu0
      %v1143 = vadd.f32 0.0, %v1142
      %1144 = vmatmul.bf16.gmra.mxu0 %v1024
      %v1145 = vpop.f32.mrf.mxu0
      %v1146 = vadd.f32 0.0, %v1145
      %v1147 = vpop.f32.mrf.mxu0
      %v1148 = vadd.f32 0.0, %v1147
      %1149 = vmatmul.bf16.gmra.mxu0 %v1027
      %v1150 = vpop.f32.mrf.mxu0
      %v1151 = vadd.f32 0.0, %v1150
      %v1152 = vpop.f32.mrf.mxu0
      %v1153 = vadd.f32 0.0, %v1152
      %1154 = vmatmul.bf16.gmra.mxu0 %v1030
      %v1155 = vpop.f32.mrf.mxu0
      %v1156 = vadd.f32 0.0, %v1155
      %v1157 = vpop.f32.mrf.mxu0
      %v1158 = vadd.f32 0.0, %v1157
      %1159 = vmatmul.bf16.gmra.mxu0 %v1033
      %v1160 = vpop.f32.mrf.mxu0
      %v1161 = vadd.f32 0.0, %v1160
      %v1162 = vpop.f32.mrf.mxu0
      %v1163 = vadd.f32 0.0, %v1162
      %1164 = vmatmul.bf16.gmra.mxu0 %v1036
      %v1165 = vpop.f32.mrf.mxu0
      %v1166 = vadd.f32 0.0, %v1165
      %v1167 = vpop.f32.mrf.mxu0
      %v1168 = vadd.f32 0.0, %v1167
      %1169 = vmatmul.bf16.gmra.mxu0 %v1039
      %v1170 = vpop.f32.mrf.mxu0
      %v1171 = vadd.f32 0.0, %v1170
      %v1172 = vpop.f32.mrf.mxu0
      %v1173 = vadd.f32 0.0, %v1172
      %1174 = vmatmul.bf16.gmra.mxu0 %v1042
      %v1175 = vpop.f32.mrf.mxu0
      %v1176 = vadd.f32 0.0, %v1175
      %v1177 = vpop.f32.mrf.mxu0
      %v1178 = vadd.f32 0.0, %v1177
      %1179 = vmatmul.bf16.gmra.mxu0 %v1045
      %v1180 = vpop.f32.mrf.mxu0
      %v1181 = vadd.f32 0.0, %v1180
      %v1182 = vpop.f32.mrf.mxu0
      %v1183 = vadd.f32 0.0, %v1182
      %1184 = vmatmul.bf16.gmra.mxu0 %v1048
      %v1185 = vpop.f32.mrf.mxu0
      %v1186 = vadd.f32 0.0, %v1185
      %v1187 = vpop.f32.mrf.mxu0
      %v1188 = vadd.f32 0.0, %v1187
      %1189 = vmatmul.bf16.gmra.mxu0 %v1051
      %v1190 = vpop.f32.mrf.mxu0
      %v1191 = vadd.f32 0.0, %v1190
      %v1192 = vpop.f32.mrf.mxu0
      %v1193 = vadd.f32 0.0, %v1192
      %1194 = vmatmul.bf16.gmra.mxu0 %v1054
      %v1195 = vpop.f32.mrf.mxu0
      %v1196 = vadd.f32 0.0, %v1195
      %v1197 = vpop.f32.mrf.mxu0
      %v1198 = vadd.f32 0.0, %v1197
      %1199 = vmatmul.bf16.gmra.mxu0 %v1057
      %v1200 = vpop.f32.mrf.mxu0
      %v1201 = vadd.f32 0.0, %v1200
      %v1202 = vpop.f32.mrf.mxu0
      %v1203 = vadd.f32 0.0, %v1202
      %1204 = vmatmul.bf16.gmra.mxu0 %v1060
      %v1205 = vpop.f32.mrf.mxu0
      %v1206 = vadd.f32 0.0, %v1205
      %v1207 = vpop.f32.mrf.mxu0
      %v1208 = vadd.f32 0.0, %v1207
      %1209 = vmatmul.bf16.gmra.mxu0 %v1063
      %v1210 = vpop.f32.mrf.mxu0
      %v1211 = vadd.f32 0.0, %v1210
      %v1212 = vpop.f32.mrf.mxu0
      %v1213 = vadd.f32 0.0, %v1212
      %1214 = vmatmul.bf16.gmra.mxu0 %v1066
      %v1215 = vpop.f32.mrf.mxu0
      %v1216 = vadd.f32 0.0, %v1215
      %v1217 = vpop.f32.mrf.mxu0
      %v1218 = vadd.f32 0.0, %v1217
      %1219 = vmatmul.bf16.gmra.mxu0 %v1069
      %v1220 = vpop.f32.mrf.mxu0
      %v1221 = vadd.f32 0.0, %v1220
      %v1222 = vpop.f32.mrf.mxu0
      %v1223 = vadd.f32 0.0, %v1222
      %1224 = vmatmul.bf16.gmra.mxu0 %v1072
      %v1225 = vpop.f32.mrf.mxu0
      %v1226 = vadd.f32 0.0, %v1225
      %v1227 = vpop.f32.mrf.mxu0
      %v1228 = vadd.f32 0.0, %v1227
      %1229 = vmatmul.bf16.gmra.mxu0 %v1075
      %v1230 = vpop.f32.mrf.mxu0
      %v1231 = vadd.f32 0.0, %v1230
      %v1232 = vpop.f32.mrf.mxu0
      %v1233 = vadd.f32 0.0, %v1232
      %1234 = vmatmul.bf16.gmra.mxu0 %v1078
      %v1235 = vpop.f32.mrf.mxu0
      %v1236 = vadd.f32 0.0, %v1235
      %v1237 = vpop.f32.mrf.mxu0
      %v1238 = vadd.f32 0.0, %v1237
      %1239 = vmatmul.bf16.gmra.mxu0 %v1081
      %v1240 = vpop.f32.mrf.mxu0
      %v1241 = vadd.f32 0.0, %v1240
      %v1242 = vpop.f32.mrf.mxu0
      %v1243 = vadd.f32 0.0, %v1242
      %1244 = vmatmul.bf16.gmra.mxu0 %v1084
      %v1245 = vpop.f32.mrf.mxu0
      %v1246 = vadd.f32 0.0, %v1245
      %v1247 = vpop.f32.mrf.mxu0
      %v1248 = vadd.f32 0.0, %v1247
      %1249 = vmatmul.bf16.gmra.mxu0 %v1087
      %v1250 = vpop.f32.mrf.mxu0
      %v1251 = vadd.f32 0.0, %v1250
      %v1252 = vpop.f32.mrf.mxu0
      %v1253 = vadd.f32 0.0, %v1252
      %1254 = vdwg.mxu0
      %1255 = vmatpush.bf16.msra.mxu0 0
      %1256 = vmatpush.bf16.msra.mxu0 0
      %1257 = vmatpush.bf16.msra.mxu0 0
      %1258 = vmatpush.bf16.msra.mxu0 0
      %1259 = vmatpush.bf16.msra.mxu0 0
      %1260 = vmatpush.bf16.msra.mxu0 0
      %1261 = vmatpush.bf16.msra.mxu0 %v1094
      %1262 = vmatpush.bf16.msra.mxu0 %v993
      %1263 = vmatmul.bf16.gmra.mxu0 %v1000
      %v1264 = vpop.f32.mrf.mxu0
      %v1265 = vadd.f32 0.0, %v1264
      %v1266 = vpop.f32.mrf.mxu0
      %v1267 = vadd.f32 0.0, %v1266
      %1268 = vmatmul.bf16.gmra.mxu0 %v1003
      %v1269 = vpop.f32.mrf.mxu0
      %v1270 = vadd.f32 0.0, %v1269
      %v1271 = vpop.f32.mrf.mxu0
      %v1272 = vadd.f32 0.0, %v1271
      %1273 = vmatmul.bf16.gmra.mxu0 %v1006
      %v1274 = vpop.f32.mrf.mxu0
      %v1275 = vadd.f32 0.0, %v1274
      %v1276 = vpop.f32.mrf.mxu0
      %v1277 = vadd.f32 0.0, %v1276
      %1278 = vmatmul.bf16.gmra.mxu0 %v1009
      %v1279 = vpop.f32.mrf.mxu0
      %v1280 = vadd.f32 0.0, %v1279
      %v1281 = vpop.f32.mrf.mxu0
      %v1282 = vadd.f32 0.0, %v1281
      %1283 = vmatmul.bf16.gmra.mxu0 %v1012
      %v1284 = vpop.f32.mrf.mxu0
      %v1285 = vadd.f32 0.0, %v1284
      %v1286 = vpop.f32.mrf.mxu0
      %v1287 = vadd.f32 0.0, %v1286
      %1288 = vmatmul.bf16.gmra.mxu0 %v1015
      %v1289 = vpop.f32.mrf.mxu0
      %v1290 = vadd.f32 0.0, %v1289
      %v1291 = vpop.f32.mrf.mxu0
      %v1292 = vadd.f32 0.0, %v1291
      %1293 = vmatmul.bf16.gmra.mxu0 %v1018
      %v1294 = vpop.f32.mrf.mxu0
      %v1295 = vadd.f32 0.0, %v1294
      %v1296 = vpop.f32.mrf.mxu0
      %v1297 = vadd.f32 0.0, %v1296
      %1298 = vmatmul.bf16.gmra.mxu0 %v1021
      %v1299 = vpop.f32.mrf.mxu0
      %v1300 = vadd.f32 0.0, %v1299
      %v1301 = vpop.f32.mrf.mxu0
      %v1302 = vadd.f32 0.0, %v1301
      %1303 = vmatmul.bf16.gmra.mxu0 %v1024
      %v1304 = vpop.f32.mrf.mxu0
      %v1305 = vadd.f32 0.0, %v1304
      %v1306 = vpop.f32.mrf.mxu0
      %v1307 = vadd.f32 0.0, %v1306
      %1308 = vmatmul.bf16.gmra.mxu0 %v1027
      %v1309 = vpop.f32.mrf.mxu0
      %v1310 = vadd.f32 0.0, %v1309
      %v1311 = vpop.f32.mrf.mxu0
      %v1312 = vadd.f32 0.0, %v1311
      %1313 = vmatmul.bf16.gmra.mxu0 %v1030
      %v1314 = vpop.f32.mrf.mxu0
      %v1315 = vadd.f32 0.0, %v1314
      %v1316 = vpop.f32.mrf.mxu0
      %v1317 = vadd.f32 0.0, %v1316
      %1318 = vmatmul.bf16.gmra.mxu0 %v1033
      %v1319 = vpop.f32.mrf.mxu0
      %v1320 = vadd.f32 0.0, %v1319
      %v1321 = vpop.f32.mrf.mxu0
      %v1322 = vadd.f32 0.0, %v1321
      %1323 = vmatmul.bf16.gmra.mxu0 %v1036
      %v1324 = vpop.f32.mrf.mxu0
      %v1325 = vadd.f32 0.0, %v1324
      %v1326 = vpop.f32.mrf.mxu0
      %v1327 = vadd.f32 0.0, %v1326
      %1328 = vmatmul.bf16.gmra.mxu0 %v1039
      %v1329 = vpop.f32.mrf.mxu0
      %v1330 = vadd.f32 0.0, %v1329
      %v1331 = vpop.f32.mrf.mxu0
      %v1332 = vadd.f32 0.0, %v1331
      %1333 = vmatmul.bf16.gmra.mxu0 %v1042
      %v1334 = vpop.f32.mrf.mxu0
      %v1335 = vadd.f32 0.0, %v1334
      %v1336 = vpop.f32.mrf.mxu0
      %v1337 = vadd.f32 0.0, %v1336
      %1338 = vmatmul.bf16.gmra.mxu0 %v1045
      %v1339 = vpop.f32.mrf.mxu0
      %v1340 = vadd.f32 0.0, %v1339
      %v1341 = vpop.f32.mrf.mxu0
      %v1342 = vadd.f32 0.0, %v1341
      %1343 = vmatmul.bf16.gmra.mxu0 %v1048
      %v1344 = vpop.f32.mrf.mxu0
      %v1345 = vadd.f32 0.0, %v1344
      %v1346 = vpop.f32.mrf.mxu0
      %v1347 = vadd.f32 0.0, %v1346
      %1348 = vmatmul.bf16.gmra.mxu0 %v1051
      %v1349 = vpop.f32.mrf.mxu0
      %v1350 = vadd.f32 0.0, %v1349
      %v1351 = vpop.f32.mrf.mxu0
      %v1352 = vadd.f32 0.0, %v1351
      %1353 = vmatmul.bf16.gmra.mxu0 %v1054
      %v1354 = vpop.f32.mrf.mxu0
      %v1355 = vadd.f32 0.0, %v1354
      %v1356 = vpop.f32.mrf.mxu0
      %v1357 = vadd.f32 0.0, %v1356
      %1358 = vmatmul.bf16.gmra.mxu0 %v1057
      %v1359 = vpop.f32.mrf.mxu0
      %v1360 = vadd.f32 0.0, %v1359
      %v1361 = vpop.f32.mrf.mxu0
      %v1362 = vadd.f32 0.0, %v1361
      %1363 = vmatmul.bf16.gmra.mxu0 %v1060
      %v1364 = vpop.f32.mrf.mxu0
      %v1365 = vadd.f32 0.0, %v1364
      %v1366 = vpop.f32.mrf.mxu0
      %v1367 = vadd.f32 0.0, %v1366
      %1368 = vmatmul.bf16.gmra.mxu0 %v1063
      %v1369 = vpop.f32.mrf.mxu0
      %v1370 = vadd.f32 0.0, %v1369
      %v1371 = vpop.f32.mrf.mxu0
      %v1372 = vadd.f32 0.0, %v1371
      %1373 = vmatmul.bf16.gmra.mxu0 %v1066
      %v1374 = vpop.f32.mrf.mxu0
      %v1375 = vadd.f32 0.0, %v1374
      %v1376 = vpop.f32.mrf.mxu0
      %v1377 = vadd.f32 0.0, %v1376
      %1378 = vmatmul.bf16.gmra.mxu0 %v1069
      %v1379 = vpop.f32.mrf.mxu0
      %v1380 = vadd.f32 0.0, %v1379
      %v1381 = vpop.f32.mrf.mxu0
      %v1382 = vadd.f32 0.0, %v1381
      %1383 = vmatmul.bf16.gmra.mxu0 %v1072
      %v1384 = vpop.f32.mrf.mxu0
      %v1385 = vadd.f32 0.0, %v1384
      %v1386 = vpop.f32.mrf.mxu0
      %v1387 = vadd.f32 0.0, %v1386
      %1388 = vmatmul.bf16.gmra.mxu0 %v1075
      %v1389 = vpop.f32.mrf.mxu0
      %v1390 = vadd.f32 0.0, %v1389
      %v1391 = vpop.f32.mrf.mxu0
      %v1392 = vadd.f32 0.0, %v1391
      %1393 = vmatmul.bf16.gmra.mxu0 %v1078
      %v1394 = vpop.f32.mrf.mxu0
      %v1395 = vadd.f32 0.0, %v1394
      %v1396 = vpop.f32.mrf.mxu0
      %v1397 = vadd.f32 0.0, %v1396
      %1398 = vmatmul.bf16.gmra.mxu0 %v1081
      %v1399 = vpop.f32.mrf.mxu0
      %v1400 = vadd.f32 0.0, %v1399
      %v1401 = vpop.f32.mrf.mxu0
      %v1402 = vadd.f32 0.0, %v1401
      %1403 = vmatmul.bf16.gmra.mxu0 %v1084
      %v1404 = vpop.f32.mrf.mxu0
      %v1405 = vadd.f32 0.0, %v1404
      %v1406 = vpop.f32.mrf.mxu0
      %v1407 = vadd.f32 0.0, %v1406
      %1408 = vmatmul.bf16.gmra.mxu0 %v1087
      %v1409 = vpop.f32.mrf.mxu0
      %v1410 = vadd.f32 0.0, %v1409
      %v1411 = vpop.f32.mrf.mxu0
      %v1412 = vadd.f32 0.0, %v1411
      %1413 = vdwg.mxu0
      %v1418 = vunpack.c.l.b16 %v725
      %v1419 = vunpack.c.h.b16 %v725
      %v1420 = vunpack.c.l.b16 %v726
      %v1421 = vunpack.c.h.b16 %v726
      %v1422 = vunpack.c.l.b16 %v727
      %v1423 = vunpack.c.h.b16 %v727
      %v1424 = vunpack.c.l.b16 %v728
      %v1425 = vunpack.c.h.b16 %v728
      %v1426 = vpack.c.b16 %v1420, %v1418
      %v1427 = vpack.c.b16 %v1421, %v1419
      %v1428 = vpack.c.b16 %v1424, %v1422
      %v1429 = vpack.c.b16 %v1425, %v1423
      %v1432 = vsel %vm998, %v695, 0
      %v1434 = vsel %vm998, %v696, 0
      %v1436 = vsel %vm998, %v697, 0
      %v1438 = vsel %vm998, %v698, 0
      %v1440 = vsel %vm998, %v699, 0
      %v1442 = vsel %vm998, %v700, 0
      %v1444 = vsel %vm998, %v701, 0
      %v1446 = vsel %vm998, %v702, 0
      %v1448 = vsel %vm998, %v703, 0
      %v1450 = vsel %vm998, %v704, 0
      %v1452 = vsel %vm998, %v705, 0
      %v1454 = vsel %vm998, %v706, 0
      %v1456 = vsel %vm998, %v707, 0
      %v1458 = vsel %vm998, %v708, 0
      %v1460 = vsel %vm998, %v709, 0
      %v1462 = vsel %vm998, %v710, 0
      %v1464 = vsel %vm998, %v711, 0
      %v1466 = vsel %vm998, %v712, 0
      %v1468 = vsel %vm998, %v713, 0
      %v1470 = vsel %vm998, %v714, 0
      %v1472 = vsel %vm998, %v715, 0
      %v1474 = vsel %vm998, %v716, 0
      %v1476 = vsel %vm998, %v717, 0
      %v1478 = vsel %vm998, %v718, 0
      %v1480 = vsel %vm998, %v719, 0
      %v1482 = vsel %vm998, %v720, 0
      %v1484 = vsel %vm998, %v721, 0
      %v1486 = vsel %vm998, %v722, 0
      %v1488 = vsel %vm998, %v723, 0
      %v1490 = vsel %vm998, %v724, 0
      %v1493 = vsel %vm1089, %v1428, 0
      %v1496 = vsel %vm1089, %v1429, 0
      %1498 = vmatpush.bf16.msra.mxu0 0
      %1499 = vmatpush.bf16.msra.mxu0 0
      %1500 = vmatpush.bf16.msra.mxu0 0
      %1501 = vmatpush.bf16.msra.mxu0 0
      %1502 = vmatpush.bf16.msra.mxu0 0
      %1503 = vmatpush.bf16.msra.mxu0 0
      %1504 = vmatpush.bf16.msra.mxu0 %v1493
      %1505 = vmatpush.bf16.msra.mxu0 %v1426
      %1506 = vmatmul.bf16.gmra.mxu0 %v1432
      %v1507 = vpop.f32.mrf.mxu0
      %v1508 = vadd.f32 %v1106, %v1507
      %v1509 = vpop.f32.mrf.mxu0
      %v1510 = vadd.f32 %v1108, %v1509
      %1511 = vmatmul.bf16.gmra.mxu0 %v1434
      %v1512 = vpop.f32.mrf.mxu0
      %v1513 = vadd.f32 %v1111, %v1512
      %v1514 = vpop.f32.mrf.mxu0
      %v1515 = vadd.f32 %v1113, %v1514
      %1516 = vmatmul.bf16.gmra.mxu0 %v1436
      %v1517 = vpop.f32.mrf.mxu0
      %v1518 = vadd.f32 %v1116, %v1517
      %v1519 = vpop.f32.mrf.mxu0
      %v1520 = vadd.f32 %v1118, %v1519
      %1521 = vmatmul.bf16.gmra.mxu0 %v1438
      %v1522 = vpop.f32.mrf.mxu0
      %v1523 = vadd.f32 %v1121, %v1522
      %v1524 = vpop.f32.mrf.mxu0
      %v1525 = vadd.f32 %v1123, %v1524
      %1526 = vmatmul.bf16.gmra.mxu0 %v1440
      %v1527 = vpop.f32.mrf.mxu0
      %v1528 = vadd.f32 %v1126, %v1527
      %v1529 = vpop.f32.mrf.mxu0
      %v1530 = vadd.f32 %v1128, %v1529
      %1531 = vmatmul.bf16.gmra.mxu0 %v1442
      %v1532 = vpop.f32.mrf.mxu0
      %v1533 = vadd.f32 %v1131, %v1532
      %v1534 = vpop.f32.mrf.mxu0
      %v1535 = vadd.f32 %v1133, %v1534
      %1536 = vmatmul.bf16.gmra.mxu0 %v1444
      %v1537 = vpop.f32.mrf.mxu0
      %v1538 = vadd.f32 %v1136, %v1537
      %v1539 = vpop.f32.mrf.mxu0
      %v1540 = vadd.f32 %v1138, %v1539
      %1541 = vmatmul.bf16.gmra.mxu0 %v1446
      %v1542 = vpop.f32.mrf.mxu0
      %v1543 = vadd.f32 %v1141, %v1542
      %v1544 = vpop.f32.mrf.mxu0
      %v1545 = vadd.f32 %v1143, %v1544
      %1546 = vmatmul.bf16.gmra.mxu0 %v1448
      %v1547 = vpop.f32.mrf.mxu0
      %v1548 = vadd.f32 %v1146, %v1547
      %v1549 = vpop.f32.mrf.mxu0
      %v1550 = vadd.f32 %v1148, %v1549
      %1551 = vmatmul.bf16.gmra.mxu0 %v1450
      %v1552 = vpop.f32.mrf.mxu0
      %v1553 = vadd.f32 %v1151, %v1552
      %v1554 = vpop.f32.mrf.mxu0
      %v1555 = vadd.f32 %v1153, %v1554
      %1556 = vmatmul.bf16.gmra.mxu0 %v1452
      %v1557 = vpop.f32.mrf.mxu0
      %v1558 = vadd.f32 %v1156, %v1557
      %v1559 = vpop.f32.mrf.mxu0
      %v1560 = vadd.f32 %v1158, %v1559
      %1561 = vmatmul.bf16.gmra.mxu0 %v1454
      %v1562 = vpop.f32.mrf.mxu0
      %v1563 = vadd.f32 %v1161, %v1562
      %v1564 = vpop.f32.mrf.mxu0
      %v1565 = vadd.f32 %v1163, %v1564
      %1566 = vmatmul.bf16.gmra.mxu0 %v1456
      %v1567 = vpop.f32.mrf.mxu0
      %v1568 = vadd.f32 %v1166, %v1567
      %v1569 = vpop.f32.mrf.mxu0
      %v1570 = vadd.f32 %v1168, %v1569
      %1571 = vmatmul.bf16.gmra.mxu0 %v1458
      %v1572 = vpop.f32.mrf.mxu0
      %v1573 = vadd.f32 %v1171, %v1572
      %v1574 = vpop.f32.mrf.mxu0
      %v1575 = vadd.f32 %v1173, %v1574
      %1576 = vmatmul.bf16.gmra.mxu0 %v1460
      %v1577 = vpop.f32.mrf.mxu0
      %v1578 = vadd.f32 %v1176, %v1577
      %v1579 = vpop.f32.mrf.mxu0
      %v1580 = vadd.f32 %v1178, %v1579
      %1581 = vmatmul.bf16.gmra.mxu0 %v1462
      %v1582 = vpop.f32.mrf.mxu0
      %v1583 = vadd.f32 %v1181, %v1582
      %v1584 = vpop.f32.mrf.mxu0
      %v1585 = vadd.f32 %v1183, %v1584
      %1586 = vmatmul.bf16.gmra.mxu0 %v1464
      %v1587 = vpop.f32.mrf.mxu0
      %v1588 = vadd.f32 %v1186, %v1587
      %v1589 = vpop.f32.mrf.mxu0
      %v1590 = vadd.f32 %v1188, %v1589
      %1591 = vmatmul.bf16.gmra.mxu0 %v1466
      %v1592 = vpop.f32.mrf.mxu0
      %v1593 = vadd.f32 %v1191, %v1592
      %v1594 = vpop.f32.mrf.mxu0
      %v1595 = vadd.f32 %v1193, %v1594
      %1596 = vmatmul.bf16.gmra.mxu0 %v1468
      %v1597 = vpop.f32.mrf.mxu0
      %v1598 = vadd.f32 %v1196, %v1597
      %v1599 = vpop.f32.mrf.mxu0
      %v1600 = vadd.f32 %v1198, %v1599
      %1601 = vmatmul.bf16.gmra.mxu0 %v1470
      %v1602 = vpop.f32.mrf.mxu0
      %v1603 = vadd.f32 %v1201, %v1602
      %v1604 = vpop.f32.mrf.mxu0
      %v1605 = vadd.f32 %v1203, %v1604
      %1606 = vmatmul.bf16.gmra.mxu0 %v1472
      %v1607 = vpop.f32.mrf.mxu0
      %v1608 = vadd.f32 %v1206, %v1607
      %v1609 = vpop.f32.mrf.mxu0
      %v1610 = vadd.f32 %v1208, %v1609
      %1611 = vmatmul.bf16.gmra.mxu0 %v1474
      %v1612 = vpop.f32.mrf.mxu0
      %v1613 = vadd.f32 %v1211, %v1612
      %v1614 = vpop.f32.mrf.mxu0
      %v1615 = vadd.f32 %v1213, %v1614
      %1616 = vmatmul.bf16.gmra.mxu0 %v1476
      %v1617 = vpop.f32.mrf.mxu0
      %v1618 = vadd.f32 %v1216, %v1617
      %v1619 = vpop.f32.mrf.mxu0
      %v1620 = vadd.f32 %v1218, %v1619
      %1621 = vmatmul.bf16.gmra.mxu0 %v1478
      %v1622 = vpop.f32.mrf.mxu0
      %v1623 = vadd.f32 %v1221, %v1622
      %v1624 = vpop.f32.mrf.mxu0
      %v1625 = vadd.f32 %v1223, %v1624
      %1626 = vmatmul.bf16.gmra.mxu0 %v1480
      %v1627 = vpop.f32.mrf.mxu0
      %v1628 = vadd.f32 %v1226, %v1627
      %v1629 = vpop.f32.mrf.mxu0
      %v1630 = vadd.f32 %v1228, %v1629
      %1631 = vmatmul.bf16.gmra.mxu0 %v1482
      %v1632 = vpop.f32.mrf.mxu0
      %v1633 = vadd.f32 %v1231, %v1632
      %v1634 = vpop.f32.mrf.mxu0
      %v1635 = vadd.f32 %v1233, %v1634
      %1636 = vmatmul.bf16.gmra.mxu0 %v1484
      %v1637 = vpop.f32.mrf.mxu0
      %v1638 = vadd.f32 %v1236, %v1637
      %v1639 = vpop.f32.mrf.mxu0
      %v1640 = vadd.f32 %v1238, %v1639
      %1641 = vmatmul.bf16.gmra.mxu0 %v1486
      %v1642 = vpop.f32.mrf.mxu0
      %v1643 = vadd.f32 %v1241, %v1642
      %v1644 = vpop.f32.mrf.mxu0
      %v1645 = vadd.f32 %v1243, %v1644
      %1646 = vmatmul.bf16.gmra.mxu0 %v1488
      %v1647 = vpop.f32.mrf.mxu0
      %v1648 = vadd.f32 %v1246, %v1647
      %v1649 = vpop.f32.mrf.mxu0
      %v1650 = vadd.f32 %v1248, %v1649
      %1651 = vmatmul.bf16.gmra.mxu0 %v1490
      %v1652 = vpop.f32.mrf.mxu0
      %v1653 = vadd.f32 %v1251, %v1652
      %v1654 = vpop.f32.mrf.mxu0
      %v1655 = vadd.f32 %v1253, %v1654
      %1656 = vdwg.mxu0
      %1657 = vmatpush.bf16.msra.mxu0 0
      %1658 = vmatpush.bf16.msra.mxu0 0
      %1659 = vmatpush.bf16.msra.mxu0 0
      %1660 = vmatpush.bf16.msra.mxu0 0
      %1661 = vmatpush.bf16.msra.mxu0 0
      %1662 = vmatpush.bf16.msra.mxu0 0
      %1663 = vmatpush.bf16.msra.mxu0 %v1496
      %1664 = vmatpush.bf16.msra.mxu0 %v1427
      %1665 = vmatmul.bf16.gmra.mxu0 %v1432
      %v1666 = vpop.f32.mrf.mxu0
      %v1667 = vadd.f32 %v1265, %v1666
      %v1668 = vpop.f32.mrf.mxu0
      %v1669 = vadd.f32 %v1267, %v1668
      %1670 = vmatmul.bf16.gmra.mxu0 %v1434
      %v1671 = vpop.f32.mrf.mxu0
      %v1672 = vadd.f32 %v1270, %v1671
      %v1673 = vpop.f32.mrf.mxu0
      %v1674 = vadd.f32 %v1272, %v1673
      %1675 = vmatmul.bf16.gmra.mxu0 %v1436
      %v1676 = vpop.f32.mrf.mxu0
      %v1677 = vadd.f32 %v1275, %v1676
      %v1678 = vpop.f32.mrf.mxu0
      %v1679 = vadd.f32 %v1277, %v1678
      %1680 = vmatmul.bf16.gmra.mxu0 %v1438
      %v1681 = vpop.f32.mrf.mxu0
      %v1682 = vadd.f32 %v1280, %v1681
      %v1683 = vpop.f32.mrf.mxu0
      %v1684 = vadd.f32 %v1282, %v1683
      %1685 = vmatmul.bf16.gmra.mxu0 %v1440
      %v1686 = vpop.f32.mrf.mxu0
      %v1687 = vadd.f32 %v1285, %v1686
      %v1688 = vpop.f32.mrf.mxu0
      %v1689 = vadd.f32 %v1287, %v1688
      %1690 = vmatmul.bf16.gmra.mxu0 %v1442
      %v1691 = vpop.f32.mrf.mxu0
      %v1692 = vadd.f32 %v1290, %v1691
      %v1693 = vpop.f32.mrf.mxu0
      %v1694 = vadd.f32 %v1292, %v1693
      %1695 = vmatmul.bf16.gmra.mxu0 %v1444
      %v1696 = vpop.f32.mrf.mxu0
      %v1697 = vadd.f32 %v1295, %v1696
      %v1698 = vpop.f32.mrf.mxu0
      %v1699 = vadd.f32 %v1297, %v1698
      %1700 = vmatmul.bf16.gmra.mxu0 %v1446
      %v1701 = vpop.f32.mrf.mxu0
      %v1702 = vadd.f32 %v1300, %v1701
      %v1703 = vpop.f32.mrf.mxu0
      %v1704 = vadd.f32 %v1302, %v1703
      %1705 = vmatmul.bf16.gmra.mxu0 %v1448
      %v1706 = vpop.f32.mrf.mxu0
      %v1707 = vadd.f32 %v1305, %v1706
      %v1708 = vpop.f32.mrf.mxu0
      %v1709 = vadd.f32 %v1307, %v1708
      %1710 = vmatmul.bf16.gmra.mxu0 %v1450
      %v1711 = vpop.f32.mrf.mxu0
      %v1712 = vadd.f32 %v1310, %v1711
      %v1713 = vpop.f32.mrf.mxu0
      %v1714 = vadd.f32 %v1312, %v1713
      %1715 = vmatmul.bf16.gmra.mxu0 %v1452
      %v1716 = vpop.f32.mrf.mxu0
      %v1717 = vadd.f32 %v1315, %v1716
      %v1718 = vpop.f32.mrf.mxu0
      %v1719 = vadd.f32 %v1317, %v1718
      %1720 = vmatmul.bf16.gmra.mxu0 %v1454
      %v1721 = vpop.f32.mrf.mxu0
      %v1722 = vadd.f32 %v1320, %v1721
      %v1723 = vpop.f32.mrf.mxu0
      %v1724 = vadd.f32 %v1322, %v1723
      %1725 = vmatmul.bf16.gmra.mxu0 %v1456
      %v1726 = vpop.f32.mrf.mxu0
      %v1727 = vadd.f32 %v1325, %v1726
      %v1728 = vpop.f32.mrf.mxu0
      %v1729 = vadd.f32 %v1327, %v1728
      %1730 = vmatmul.bf16.gmra.mxu0 %v1458
      %v1731 = vpop.f32.mrf.mxu0
      %v1732 = vadd.f32 %v1330, %v1731
      %v1733 = vpop.f32.mrf.mxu0
      %v1734 = vadd.f32 %v1332, %v1733
      %1735 = vmatmul.bf16.gmra.mxu0 %v1460
      %v1736 = vpop.f32.mrf.mxu0
      %v1737 = vadd.f32 %v1335, %v1736
      %v1738 = vpop.f32.mrf.mxu0
      %v1739 = vadd.f32 %v1337, %v1738
      %1740 = vmatmul.bf16.gmra.mxu0 %v1462
      %v1741 = vpop.f32.mrf.mxu0
      %v1742 = vadd.f32 %v1340, %v1741
      %v1743 = vpop.f32.mrf.mxu0
      %v1744 = vadd.f32 %v1342, %v1743
      %1745 = vmatmul.bf16.gmra.mxu0 %v1464
      %v1746 = vpop.f32.mrf.mxu0
      %v1747 = vadd.f32 %v1345, %v1746
      %v1748 = vpop.f32.mrf.mxu0
      %v1749 = vadd.f32 %v1347, %v1748
      %1750 = vmatmul.bf16.gmra.mxu0 %v1466
      %v1751 = vpop.f32.mrf.mxu0
      %v1752 = vadd.f32 %v1350, %v1751
      %v1753 = vpop.f32.mrf.mxu0
      %v1754 = vadd.f32 %v1352, %v1753
      %1755 = vmatmul.bf16.gmra.mxu0 %v1468
      %v1756 = vpop.f32.mrf.mxu0
      %v1757 = vadd.f32 %v1355, %v1756
      %v1758 = vpop.f32.mrf.mxu0
      %v1759 = vadd.f32 %v1357, %v1758
      %1760 = vmatmul.bf16.gmra.mxu0 %v1470
      %v1761 = vpop.f32.mrf.mxu0
      %v1762 = vadd.f32 %v1360, %v1761
      %v1763 = vpop.f32.mrf.mxu0
      %v1764 = vadd.f32 %v1362, %v1763
      %1765 = vmatmul.bf16.gmra.mxu0 %v1472
      %v1766 = vpop.f32.mrf.mxu0
      %v1767 = vadd.f32 %v1365, %v1766
      %v1768 = vpop.f32.mrf.mxu0
      %v1769 = vadd.f32 %v1367, %v1768
      %1770 = vmatmul.bf16.gmra.mxu0 %v1474
      %v1771 = vpop.f32.mrf.mxu0
      %v1772 = vadd.f32 %v1370, %v1771
      %v1773 = vpop.f32.mrf.mxu0
      %v1774 = vadd.f32 %v1372, %v1773
      %1775 = vmatmul.bf16.gmra.mxu0 %v1476
      %v1776 = vpop.f32.mrf.mxu0
      %v1777 = vadd.f32 %v1375, %v1776
      %v1778 = vpop.f32.mrf.mxu0
      %v1779 = vadd.f32 %v1377, %v1778
      %1780 = vmatmul.bf16.gmra.mxu0 %v1478
      %v1781 = vpop.f32.mrf.mxu0
      %v1782 = vadd.f32 %v1380, %v1781
      %v1783 = vpop.f32.mrf.mxu0
      %v1784 = vadd.f32 %v1382, %v1783
      %1785 = vmatmul.bf16.gmra.mxu0 %v1480
      %v1786 = vpop.f32.mrf.mxu0
      %v1787 = vadd.f32 %v1385, %v1786
      %v1788 = vpop.f32.mrf.mxu0
      %v1789 = vadd.f32 %v1387, %v1788
      %1790 = vmatmul.bf16.gmra.mxu0 %v1482
      %v1791 = vpop.f32.mrf.mxu0
      %v1792 = vadd.f32 %v1390, %v1791
      %v1793 = vpop.f32.mrf.mxu0
      %v1794 = vadd.f32 %v1392, %v1793
      %1795 = vmatmul.bf16.gmra.mxu0 %v1484
      %v1796 = vpop.f32.mrf.mxu0
      %v1797 = vadd.f32 %v1395, %v1796
      %v1798 = vpop.f32.mrf.mxu0
      %v1799 = vadd.f32 %v1397, %v1798
      %1800 = vmatmul.bf16.gmra.mxu0 %v1486
      %v1801 = vpop.f32.mrf.mxu0
      %v1802 = vadd.f32 %v1400, %v1801
      %v1803 = vpop.f32.mrf.mxu0
      %v1804 = vadd.f32 %v1402, %v1803
      %1805 = vmatmul.bf16.gmra.mxu0 %v1488
      %v1806 = vpop.f32.mrf.mxu0
      %v1807 = vadd.f32 %v1405, %v1806
      %v1808 = vpop.f32.mrf.mxu0
      %v1809 = vadd.f32 %v1407, %v1808
      %1810 = vmatmul.bf16.gmra.mxu0 %v1490
      %v1811 = vpop.f32.mrf.mxu0
      %v1812 = vadd.f32 %v1410, %v1811
      %v1813 = vpop.f32.mrf.mxu0
      %v1814 = vadd.f32 %v1412, %v1813
      %1815 = vdwg.mxu0
      %s1816 = scalar_lea.vmem %s1, 64
      %v1817 = vld [vmem:[%s1816] sm:$0xff]
      %v1818 = vld [vmem:[%s1816 + $0x8] sm:$0xff]
      %v1819 = vld [vmem:[%s1816 + $0x10] sm:$0xff]
      %v1820 = vld [vmem:[%s1816 + $0x18] sm:$0x77]
      %vm1852 = vcmask 1046528
      %v1853 = vrot.slane %v695, 1
      %v1854 = vrot.slane %v696, 1
      %v1855 = vsel %vm1852, %v1853, %v1854
      %v1856 = vrot.slane %v697, 1
      %v1857 = vsel %vm1852, %v1854, %v1856
      %v1858 = vrot.slane %v698, 1
      %v1859 = vsel %vm1852, %v1856, %v1858
      %v1860 = vrot.slane %v699, 1
      %v1861 = vsel %vm1852, %v1858, %v1860
      %v1862 = vrot.slane %v700, 1
      %v1863 = vsel %vm1852, %v1860, %v1862
      %v1864 = vrot.slane %v701, 1
      %v1865 = vsel %vm1852, %v1862, %v1864
      %v1866 = vrot.slane %v702, 1
      %v1867 = vsel %vm1852, %v1864, %v1866
      %v1868 = vrot.slane %v703, 1
      %v1869 = vsel %vm1852, %v1866, %v1868
      %v1870 = vrot.slane %v704, 1
      %v1871 = vsel %vm1852, %v1868, %v1870
      %v1872 = vrot.slane %v705, 1
      %v1873 = vsel %vm1852, %v1870, %v1872
      %v1874 = vrot.slane %v706, 1
      %v1875 = vsel %vm1852, %v1872, %v1874
      %v1876 = vrot.slane %v707, 1
      %v1877 = vsel %vm1852, %v1874, %v1876
      %v1878 = vrot.slane %v708, 1
      %v1879 = vsel %vm1852, %v1876, %v1878
      %v1880 = vrot.slane %v709, 1
      %v1881 = vsel %vm1852, %v1878, %v1880
      %v1882 = vrot.slane %v710, 1
      %v1883 = vsel %vm1852, %v1880, %v1882
      %v1884 = vrot.slane %v711, 1
      %v1885 = vsel %vm1852, %v1882, %v1884
      %v1886 = vrot.slane %v712, 1
      %v1887 = vsel %vm1852, %v1884, %v1886
      %v1888 = vrot.slane %v713, 1
      %v1889 = vsel %vm1852, %v1886, %v1888
      %v1890 = vrot.slane %v714, 1
      %v1891 = vsel %vm1852, %v1888, %v1890
      %v1892 = vrot.slane %v715, 1
      %v1893 = vsel %vm1852, %v1890, %v1892
      %v1894 = vrot.slane %v716, 1
      %v1895 = vsel %vm1852, %v1892, %v1894
      %v1896 = vrot.slane %v717, 1
      %v1897 = vsel %vm1852, %v1894, %v1896
      %v1898 = vrot.slane %v718, 1
      %v1899 = vsel %vm1852, %v1896, %v1898
      %v1900 = vrot.slane %v719, 1
      %v1901 = vsel %vm1852, %v1898, %v1900
      %v1902 = vrot.slane %v720, 1
      %v1903 = vsel %vm1852, %v1900, %v1902
      %v1904 = vrot.slane %v721, 1
      %v1905 = vsel %vm1852, %v1902, %v1904
      %v1906 = vrot.slane %v722, 1
      %v1907 = vsel %vm1852, %v1904, %v1906
      %v1908 = vrot.slane %v723, 1
      %v1909 = vsel %vm1852, %v1906, %v1908
      %v1910 = vrot.slane %v724, 1
      %v1911 = vsel %vm1852, %v1908, %v1910
      %v1912 = vrot.slane %v729, 1
      %v1913 = vsel %vm1852, %v1910, %v1912
      %v1918 = vunpack.c.l.b16 %v1817
      %v1919 = vunpack.c.h.b16 %v1817
      %v1920 = vunpack.c.l.b16 %v1818
      %v1921 = vunpack.c.h.b16 %v1818
      %v1922 = vunpack.c.l.b16 %v1819
      %v1923 = vunpack.c.h.b16 %v1819
      %v1924 = vunpack.c.l.b16 %v1820
      %v1925 = vunpack.c.h.b16 %v1820
      %v1926 = vpack.c.b16 %v1920, %v1918
      %v1927 = vpack.c.b16 %v1921, %v1919
      %v1928 = vpack.c.b16 %v1924, %v1922
      %v1929 = vpack.c.b16 %v1925, %v1923
      %v1933 = vsel %vm998, %v1855, 0
      %v1936 = vsel %vm998, %v1857, 0
      %v1939 = vsel %vm998, %v1859, 0
      %v1942 = vsel %vm998, %v1861, 0
      %v1945 = vsel %vm998, %v1863, 0
      %v1948 = vsel %vm998, %v1865, 0
      %v1951 = vsel %vm998, %v1867, 0
      %v1954 = vsel %vm998, %v1869, 0
      %v1957 = vsel %vm998, %v1871, 0
      %v1960 = vsel %vm998, %v1873, 0
      %v1963 = vsel %vm998, %v1875, 0
      %v1966 = vsel %vm998, %v1877, 0
      %v1969 = vsel %vm998, %v1879, 0
      %v1972 = vsel %vm998, %v1881, 0
      %v1975 = vsel %vm998, %v1883, 0
      %v1978 = vsel %vm998, %v1885, 0
      %v1981 = vsel %vm998, %v1887, 0
      %v1984 = vsel %vm998, %v1889, 0
      %v1987 = vsel %vm998, %v1891, 0
      %v1990 = vsel %vm998, %v1893, 0
      %v1993 = vsel %vm998, %v1895, 0
      %v1996 = vsel %vm998, %v1897, 0
      %v1999 = vsel %vm998, %v1899, 0
      %v2002 = vsel %vm998, %v1901, 0
      %v2005 = vsel %vm998, %v1903, 0
      %v2008 = vsel %vm998, %v1905, 0
      %v2011 = vsel %vm998, %v1907, 0
      %v2014 = vsel %vm998, %v1909, 0
      %v2017 = vsel %vm998, %v1911, 0
      %v2020 = vsel %vm998, %v1913, 0
      %v2023 = vsel %vm1089, %v1928, 0
      %v2026 = vsel %vm1089, %v1929, 0
      %2028 = vmatpush.bf16.msra.mxu0 0
      %2029 = vmatpush.bf16.msra.mxu0 0
      %2030 = vmatpush.bf16.msra.mxu0 0
      %2031 = vmatpush.bf16.msra.mxu0 0
      %2032 = vmatpush.bf16.msra.mxu0 0
      %2033 = vmatpush.bf16.msra.mxu0 0
      %2034 = vmatpush.bf16.msra.mxu0 %v2023
      %2035 = vmatpush.bf16.msra.mxu0 %v1926
      %2036 = vmatmul.bf16.gmra.mxu0 %v1933
      %v2037 = vpop.f32.mrf.mxu0
      %v2038 = vadd.f32 0.0, %v2037
      %v2039 = vpop.f32.mrf.mxu0
      %v2040 = vadd.f32 0.0, %v2039
      %2041 = vmatmul.bf16.gmra.mxu0 %v1936
      %v2042 = vpop.f32.mrf.mxu0
      %v2043 = vadd.f32 0.0, %v2042
      %v2044 = vpop.f32.mrf.mxu0
      %v2045 = vadd.f32 0.0, %v2044
      %2046 = vmatmul.bf16.gmra.mxu0 %v1939
      %v2047 = vpop.f32.mrf.mxu0
      %v2048 = vadd.f32 0.0, %v2047
      %v2049 = vpop.f32.mrf.mxu0
      %v2050 = vadd.f32 0.0, %v2049
      %2051 = vmatmul.bf16.gmra.mxu0 %v1942
      %v2052 = vpop.f32.mrf.mxu0
      %v2053 = vadd.f32 0.0, %v2052
      %v2054 = vpop.f32.mrf.mxu0
      %v2055 = vadd.f32 0.0, %v2054
      %2056 = vmatmul.bf16.gmra.mxu0 %v1945
      %v2057 = vpop.f32.mrf.mxu0
      %v2058 = vadd.f32 0.0, %v2057
      %v2059 = vpop.f32.mrf.mxu0
      %v2060 = vadd.f32 0.0, %v2059
      %2061 = vmatmul.bf16.gmra.mxu0 %v1948
      %v2062 = vpop.f32.mrf.mxu0
      %v2063 = vadd.f32 0.0, %v2062
      %v2064 = vpop.f32.mrf.mxu0
      %v2065 = vadd.f32 0.0, %v2064
      %2066 = vmatmul.bf16.gmra.mxu0 %v1951
      %v2067 = vpop.f32.mrf.mxu0
      %v2068 = vadd.f32 0.0, %v2067
      %v2069 = vpop.f32.mrf.mxu0
      %v2070 = vadd.f32 0.0, %v2069
      %2071 = vmatmul.bf16.gmra.mxu0 %v1954
      %v2072 = vpop.f32.mrf.mxu0
      %v2073 = vadd.f32 0.0, %v2072
      %v2074 = vpop.f32.mrf.mxu0
      %v2075 = vadd.f32 0.0, %v2074
      %2076 = vmatmul.bf16.gmra.mxu0 %v1957
      %v2077 = vpop.f32.mrf.mxu0
      %v2078 = vadd.f32 0.0, %v2077
      %v2079 = vpop.f32.mrf.mxu0
      %v2080 = vadd.f32 0.0, %v2079
      %2081 = vmatmul.bf16.gmra.mxu0 %v1960
      %v2082 = vpop.f32.mrf.mxu0
      %v2083 = vadd.f32 0.0, %v2082
      %v2084 = vpop.f32.mrf.mxu0
      %v2085 = vadd.f32 0.0, %v2084
      %2086 = vmatmul.bf16.gmra.mxu0 %v1963
      %v2087 = vpop.f32.mrf.mxu0
      %v2088 = vadd.f32 0.0, %v2087
      %v2089 = vpop.f32.mrf.mxu0
      %v2090 = vadd.f32 0.0, %v2089
      %2091 = vmatmul.bf16.gmra.mxu0 %v1966
      %v2092 = vpop.f32.mrf.mxu0
      %v2093 = vadd.f32 0.0, %v2092
      %v2094 = vpop.f32.mrf.mxu0
      %v2095 = vadd.f32 0.0, %v2094
      %2096 = vmatmul.bf16.gmra.mxu0 %v1969
      %v2097 = vpop.f32.mrf.mxu0
      %v2098 = vadd.f32 0.0, %v2097
      %v2099 = vpop.f32.mrf.mxu0
      %v2100 = vadd.f32 0.0, %v2099
      %2101 = vmatmul.bf16.gmra.mxu0 %v1972
      %v2102 = vpop.f32.mrf.mxu0
      %v2103 = vadd.f32 0.0, %v2102
      %v2104 = vpop.f32.mrf.mxu0
      %v2105 = vadd.f32 0.0, %v2104
      %2106 = vmatmul.bf16.gmra.mxu0 %v1975
      %v2107 = vpop.f32.mrf.mxu0
      %v2108 = vadd.f32 0.0, %v2107
      %v2109 = vpop.f32.mrf.mxu0
      %v2110 = vadd.f32 0.0, %v2109
      %2111 = vmatmul.bf16.gmra.mxu0 %v1978
      %v2112 = vpop.f32.mrf.mxu0
      %v2113 = vadd.f32 0.0, %v2112
      %v2114 = vpop.f32.mrf.mxu0
      %v2115 = vadd.f32 0.0, %v2114
      %2116 = vmatmul.bf16.gmra.mxu0 %v1981
      %v2117 = vpop.f32.mrf.mxu0
      %v2118 = vadd.f32 0.0, %v2117
      %v2119 = vpop.f32.mrf.mxu0
      %v2120 = vadd.f32 0.0, %v2119
      %2121 = vmatmul.bf16.gmra.mxu0 %v1984
      %v2122 = vpop.f32.mrf.mxu0
      %v2123 = vadd.f32 0.0, %v2122
      %v2124 = vpop.f32.mrf.mxu0
      %v2125 = vadd.f32 0.0, %v2124
      %2126 = vmatmul.bf16.gmra.mxu0 %v1987
      %v2127 = vpop.f32.mrf.mxu0
      %v2128 = vadd.f32 0.0, %v2127
      %v2129 = vpop.f32.mrf.mxu0
      %v2130 = vadd.f32 0.0, %v2129
      %2131 = vmatmul.bf16.gmra.mxu0 %v1990
      %v2132 = vpop.f32.mrf.mxu0
      %v2133 = vadd.f32 0.0, %v2132
      %v2134 = vpop.f32.mrf.mxu0
      %v2135 = vadd.f32 0.0, %v2134
      %2136 = vmatmul.bf16.gmra.mxu0 %v1993
      %v2137 = vpop.f32.mrf.mxu0
      %v2138 = vadd.f32 0.0, %v2137
      %v2139 = vpop.f32.mrf.mxu0
      %v2140 = vadd.f32 0.0, %v2139
      %2141 = vmatmul.bf16.gmra.mxu0 %v1996
      %v2142 = vpop.f32.mrf.mxu0
      %v2143 = vadd.f32 0.0, %v2142
      %v2144 = vpop.f32.mrf.mxu0
      %v2145 = vadd.f32 0.0, %v2144
      %2146 = vmatmul.bf16.gmra.mxu0 %v1999
      %v2147 = vpop.f32.mrf.mxu0
      %v2148 = vadd.f32 0.0, %v2147
      %v2149 = vpop.f32.mrf.mxu0
      %v2150 = vadd.f32 0.0, %v2149
      %2151 = vmatmul.bf16.gmra.mxu0 %v2002
      %v2152 = vpop.f32.mrf.mxu0
      %v2153 = vadd.f32 0.0, %v2152
      %v2154 = vpop.f32.mrf.mxu0
      %v2155 = vadd.f32 0.0, %v2154
      %2156 = vmatmul.bf16.gmra.mxu0 %v2005
      %v2157 = vpop.f32.mrf.mxu0
      %v2158 = vadd.f32 0.0, %v2157
      %v2159 = vpop.f32.mrf.mxu0
      %v2160 = vadd.f32 0.0, %v2159
      %2161 = vmatmul.bf16.gmra.mxu0 %v2008
      %v2162 = vpop.f32.mrf.mxu0
      %v2163 = vadd.f32 0.0, %v2162
      %v2164 = vpop.f32.mrf.mxu0
      %v2165 = vadd.f32 0.0, %v2164
      %2166 = vmatmul.bf16.gmra.mxu0 %v2011
      %v2167 = vpop.f32.mrf.mxu0
      %v2168 = vadd.f32 0.0, %v2167
      %v2169 = vpop.f32.mrf.mxu0
      %v2170 = vadd.f32 0.0, %v2169
      %2171 = vmatmul.bf16.gmra.mxu0 %v2014
      %v2172 = vpop.f32.mrf.mxu0
      %v2173 = vadd.f32 0.0, %v2172
      %v2174 = vpop.f32.mrf.mxu0
      %v2175 = vadd.f32 0.0, %v2174
      %2176 = vmatmul.bf16.gmra.mxu0 %v2017
      %v2177 = vpop.f32.mrf.mxu0
      %v2178 = vadd.f32 0.0, %v2177
      %v2179 = vpop.f32.mrf.mxu0
      %v2180 = vadd.f32 0.0, %v2179
      %2181 = vmatmul.bf16.gmra.mxu0 %v2020
      %v2182 = vpop.f32.mrf.mxu0
      %v2183 = vadd.f32 0.0, %v2182
      %v2184 = vpop.f32.mrf.mxu0
      %v2185 = vadd.f32 0.0, %v2184
      %2186 = vdwg.mxu0
      %2187 = vmatpush.bf16.msra.mxu0 0
      %2188 = vmatpush.bf16.msra.mxu0 0
      %2189 = vmatpush.bf16.msra.mxu0 0
      %2190 = vmatpush.bf16.msra.mxu0 0
      %2191 = vmatpush.bf16.msra.mxu0 0
      %2192 = vmatpush.bf16.msra.mxu0 0
      %2193 = vmatpush.bf16.msra.mxu0 %v2026
      %2194 = vmatpush.bf16.msra.mxu0 %v1927
      %2195 = vmatmul.bf16.gmra.mxu0 %v1933
      %v2196 = vpop.f32.mrf.mxu0
      %v2197 = vadd.f32 0.0, %v2196
      %v2198 = vpop.f32.mrf.mxu0
      %v2199 = vadd.f32 0.0, %v2198
      %2200 = vmatmul.bf16.gmra.mxu0 %v1936
      %v2201 = vpop.f32.mrf.mxu0
      %v2202 = vadd.f32 0.0, %v2201
      %v2203 = vpop.f32.mrf.mxu0
      %v2204 = vadd.f32 0.0, %v2203
      %2205 = vmatmul.bf16.gmra.mxu0 %v1939
      %v2206 = vpop.f32.mrf.mxu0
      %v2207 = vadd.f32 0.0, %v2206
      %v2208 = vpop.f32.mrf.mxu0
      %v2209 = vadd.f32 0.0, %v2208
      %2210 = vmatmul.bf16.gmra.mxu0 %v1942
      %v2211 = vpop.f32.mrf.mxu0
      %v2212 = vadd.f32 0.0, %v2211
      %v2213 = vpop.f32.mrf.mxu0
      %v2214 = vadd.f32 0.0, %v2213
      %2215 = vmatmul.bf16.gmra.mxu0 %v1945
      %v2216 = vpop.f32.mrf.mxu0
      %v2217 = vadd.f32 0.0, %v2216
      %v2218 = vpop.f32.mrf.mxu0
      %v2219 = vadd.f32 0.0, %v2218
      %2220 = vmatmul.bf16.gmra.mxu0 %v1948
      %v2221 = vpop.f32.mrf.mxu0
      %v2222 = vadd.f32 0.0, %v2221
      %v2223 = vpop.f32.mrf.mxu0
      %v2224 = vadd.f32 0.0, %v2223
      %2225 = vmatmul.bf16.gmra.mxu0 %v1951
      %v2226 = vpop.f32.mrf.mxu0
      %v2227 = vadd.f32 0.0, %v2226
      %v2228 = vpop.f32.mrf.mxu0
      %v2229 = vadd.f32 0.0, %v2228
      %2230 = vmatmul.bf16.gmra.mxu0 %v1954
      %v2231 = vpop.f32.mrf.mxu0
      %v2232 = vadd.f32 0.0, %v2231
      %v2233 = vpop.f32.mrf.mxu0
      %v2234 = vadd.f32 0.0, %v2233
      %2235 = vmatmul.bf16.gmra.mxu0 %v1957
      %v2236 = vpop.f32.mrf.mxu0
      %v2237 = vadd.f32 0.0, %v2236
      %v2238 = vpop.f32.mrf.mxu0
      %v2239 = vadd.f32 0.0, %v2238
      %2240 = vmatmul.bf16.gmra.mxu0 %v1960
      %v2241 = vpop.f32.mrf.mxu0
      %v2242 = vadd.f32 0.0, %v2241
      %v2243 = vpop.f32.mrf.mxu0
      %v2244 = vadd.f32 0.0, %v2243
      %2245 = vmatmul.bf16.gmra.mxu0 %v1963
      %v2246 = vpop.f32.mrf.mxu0
      %v2247 = vadd.f32 0.0, %v2246
      %v2248 = vpop.f32.mrf.mxu0
      %v2249 = vadd.f32 0.0, %v2248
      %2250 = vmatmul.bf16.gmra.mxu0 %v1966
      %v2251 = vpop.f32.mrf.mxu0
      %v2252 = vadd.f32 0.0, %v2251
      %v2253 = vpop.f32.mrf.mxu0
      %v2254 = vadd.f32 0.0, %v2253
      %2255 = vmatmul.bf16.gmra.mxu0 %v1969
      %v2256 = vpop.f32.mrf.mxu0
      %v2257 = vadd.f32 0.0, %v2256
      %v2258 = vpop.f32.mrf.mxu0
      %v2259 = vadd.f32 0.0, %v2258
      %2260 = vmatmul.bf16.gmra.mxu0 %v1972
      %v2261 = vpop.f32.mrf.mxu0
      %v2262 = vadd.f32 0.0, %v2261
      %v2263 = vpop.f32.mrf.mxu0
      %v2264 = vadd.f32 0.0, %v2263
      %2265 = vmatmul.bf16.gmra.mxu0 %v1975
      %v2266 = vpop.f32.mrf.mxu0
      %v2267 = vadd.f32 0.0, %v2266
      %v2268 = vpop.f32.mrf.mxu0
      %v2269 = vadd.f32 0.0, %v2268
      %2270 = vmatmul.bf16.gmra.mxu0 %v1978
      %v2271 = vpop.f32.mrf.mxu0
      %v2272 = vadd.f32 0.0, %v2271
      %v2273 = vpop.f32.mrf.mxu0
      %v2274 = vadd.f32 0.0, %v2273
      %2275 = vmatmul.bf16.gmra.mxu0 %v1981
      %v2276 = vpop.f32.mrf.mxu0
      %v2277 = vadd.f32 0.0, %v2276
      %v2278 = vpop.f32.mrf.mxu0
      %v2279 = vadd.f32 0.0, %v2278
      %2280 = vmatmul.bf16.gmra.mxu0 %v1984
      %v2281 = vpop.f32.mrf.mxu0
      %v2282 = vadd.f32 0.0, %v2281
      %v2283 = vpop.f32.mrf.mxu0
      %v2284 = vadd.f32 0.0, %v2283
      %2285 = vmatmul.bf16.gmra.mxu0 %v1987
      %v2286 = vpop.f32.mrf.mxu0
      %v2287 = vadd.f32 0.0, %v2286
      %v2288 = vpop.f32.mrf.mxu0
      %v2289 = vadd.f32 0.0, %v2288
      %2290 = vmatmul.bf16.gmra.mxu0 %v1990
      %v2291 = vpop.f32.mrf.mxu0
      %v2292 = vadd.f32 0.0, %v2291
      %v2293 = vpop.f32.mrf.mxu0
      %v2294 = vadd.f32 0.0, %v2293
      %2295 = vmatmul.bf16.gmra.mxu0 %v1993
      %v2296 = vpop.f32.mrf.mxu0
      %v2297 = vadd.f32 0.0, %v2296
      %v2298 = vpop.f32.mrf.mxu0
      %v2299 = vadd.f32 0.0, %v2298
      %2300 = vmatmul.bf16.gmra.mxu0 %v1996
      %v2301 = vpop.f32.mrf.mxu0
      %v2302 = vadd.f32 0.0, %v2301
      %v2303 = vpop.f32.mrf.mxu0
      %v2304 = vadd.f32 0.0, %v2303
      %2305 = vmatmul.bf16.gmra.mxu0 %v1999
      %v2306 = vpop.f32.mrf.mxu0
      %v2307 = vadd.f32 0.0, %v2306
      %v2308 = vpop.f32.mrf.mxu0
      %v2309 = vadd.f32 0.0, %v2308
      %2310 = vmatmul.bf16.gmra.mxu0 %v2002
      %v2311 = vpop.f32.mrf.mxu0
      %v2312 = vadd.f32 0.0, %v2311
      %v2313 = vpop.f32.mrf.mxu0
      %v2314 = vadd.f32 0.0, %v2313
      %2315 = vmatmul.bf16.gmra.mxu0 %v2005
      %v2316 = vpop.f32.mrf.mxu0
      %v2317 = vadd.f32 0.0, %v2316
      %v2318 = vpop.f32.mrf.mxu0
      %v2319 = vadd.f32 0.0, %v2318
      %2320 = vmatmul.bf16.gmra.mxu0 %v2008
      %v2321 = vpop.f32.mrf.mxu0
      %v2322 = vadd.f32 0.0, %v2321
      %v2323 = vpop.f32.mrf.mxu0
      %v2324 = vadd.f32 0.0, %v2323
      %2325 = vmatmul.bf16.gmra.mxu0 %v2011
      %v2326 = vpop.f32.mrf.mxu0
      %v2327 = vadd.f32 0.0, %v2326
      %v2328 = vpop.f32.mrf.mxu0
      %v2329 = vadd.f32 0.0, %v2328
      %2330 = vmatmul.bf16.gmra.mxu0 %v2014
      %v2331 = vpop.f32.mrf.mxu0
      %v2332 = vadd.f32 0.0, %v2331
      %v2333 = vpop.f32.mrf.mxu0
      %v2334 = vadd.f32 0.0, %v2333
      %2335 = vmatmul.bf16.gmra.mxu0 %v2017
      %v2336 = vpop.f32.mrf.mxu0
      %v2337 = vadd.f32 0.0, %v2336
      %v2338 = vpop.f32.mrf.mxu0
      %v2339 = vadd.f32 0.0, %v2338
      %2340 = vmatmul.bf16.gmra.mxu0 %v2020
      %v2341 = vpop.f32.mrf.mxu0
      %v2342 = vadd.f32 0.0, %v2341
      %v2343 = vpop.f32.mrf.mxu0
      %v2344 = vadd.f32 0.0, %v2343
      %2345 = vdwg.mxu0
      %v2346 = vadd.f32 %v1508, %v2038
      %v2347 = vadd.f32 %v1667, %v2197
      %v2348 = vadd.f32 %v1510, %v2040
      %v2349 = vadd.f32 %v1669, %v2199
      %v2350 = vadd.f32 %v1513, %v2043
      %v2351 = vadd.f32 %v1672, %v2202
      %v2352 = vadd.f32 %v1515, %v2045
      %v2353 = vadd.f32 %v1674, %v2204
      %v2354 = vadd.f32 %v1518, %v2048
      %v2355 = vadd.f32 %v1677, %v2207
      %v2356 = vadd.f32 %v1520, %v2050
      %v2357 = vadd.f32 %v1679, %v2209
      %v2358 = vadd.f32 %v1523, %v2053
      %v2359 = vadd.f32 %v1682, %v2212
      %v2360 = vadd.f32 %v1525, %v2055
      %v2361 = vadd.f32 %v1684, %v2214
      %v2362 = vadd.f32 %v1528, %v2058
      %v2363 = vadd.f32 %v1687, %v2217
      %v2364 = vadd.f32 %v1530, %v2060
      %v2365 = vadd.f32 %v1689, %v2219
      %v2366 = vadd.f32 %v1533, %v2063
      %v2367 = vadd.f32 %v1692, %v2222
      %v2368 = vadd.f32 %v1535, %v2065
      %v2369 = vadd.f32 %v1694, %v2224
      %v2370 = vadd.f32 %v1538, %v2068
      %v2371 = vadd.f32 %v1697, %v2227
      %v2372 = vadd.f32 %v1540, %v2070
      %v2373 = vadd.f32 %v1699, %v2229
      %v2374 = vadd.f32 %v1543, %v2073
      %v2375 = vadd.f32 %v1702, %v2232
      %v2376 = vadd.f32 %v1545, %v2075
      %v2377 = vadd.f32 %v1704, %v2234
      %v2378 = vadd.f32 %v1548, %v2078
      %v2379 = vadd.f32 %v1707, %v2237
      %v2380 = vadd.f32 %v1550, %v2080
      %v2381 = vadd.f32 %v1709, %v2239
      %v2382 = vadd.f32 %v1553, %v2083
      %v2383 = vadd.f32 %v1712, %v2242
      %v2384 = vadd.f32 %v1555, %v2085
      %v2385 = vadd.f32 %v1714, %v2244
      %v2386 = vadd.f32 %v1558, %v2088
      %v2387 = vadd.f32 %v1717, %v2247
      %v2388 = vadd.f32 %v1560, %v2090
      %v2389 = vadd.f32 %v1719, %v2249
      %v2390 = vadd.f32 %v1563, %v2093
      %v2391 = vadd.f32 %v1722, %v2252
      %v2392 = vadd.f32 %v1565, %v2095
      %v2393 = vadd.f32 %v1724, %v2254
      %v2394 = vadd.f32 %v1568, %v2098
      %v2395 = vadd.f32 %v1727, %v2257
      %v2396 = vadd.f32 %v1570, %v2100
      %v2397 = vadd.f32 %v1729, %v2259
      %v2398 = vadd.f32 %v1573, %v2103
      %v2399 = vadd.f32 %v1732, %v2262
      %v2400 = vadd.f32 %v1575, %v2105
      %v2401 = vadd.f32 %v1734, %v2264
      %v2402 = vadd.f32 %v1578, %v2108
      %v2403 = vadd.f32 %v1737, %v2267
      %v2404 = vadd.f32 %v1580, %v2110
      %v2405 = vadd.f32 %v1739, %v2269
      %v2406 = vadd.f32 %v1583, %v2113
      %v2407 = vadd.f32 %v1742, %v2272
      %v2408 = vadd.f32 %v1585, %v2115
      %v2409 = vadd.f32 %v1744, %v2274
      %v2410 = vadd.f32 %v1588, %v2118
      %v2411 = vadd.f32 %v1747, %v2277
      %v2412 = vadd.f32 %v1590, %v2120
      %v2413 = vadd.f32 %v1749, %v2279
      %v2414 = vadd.f32 %v1593, %v2123
      %v2415 = vadd.f32 %v1752, %v2282
      %v2416 = vadd.f32 %v1595, %v2125
      %v2417 = vadd.f32 %v1754, %v2284
      %v2418 = vadd.f32 %v1598, %v2128
      %v2419 = vadd.f32 %v1757, %v2287
      %v2420 = vadd.f32 %v1600, %v2130
      %v2421 = vadd.f32 %v1759, %v2289
      %v2422 = vadd.f32 %v1603, %v2133
      %v2423 = vadd.f32 %v1762, %v2292
      %v2424 = vadd.f32 %v1605, %v2135
      %v2425 = vadd.f32 %v1764, %v2294
      %v2426 = vadd.f32 %v1608, %v2138
      %v2427 = vadd.f32 %v1767, %v2297
      %v2428 = vadd.f32 %v1610, %v2140
      %v2429 = vadd.f32 %v1769, %v2299
      %v2430 = vadd.f32 %v1613, %v2143
      %v2431 = vadd.f32 %v1772, %v2302
      %v2432 = vadd.f32 %v1615, %v2145
      %v2433 = vadd.f32 %v1774, %v2304
      %v2434 = vadd.f32 %v1618, %v2148
      %v2435 = vadd.f32 %v1777, %v2307
      %v2436 = vadd.f32 %v1620, %v2150
      %v2437 = vadd.f32 %v1779, %v2309
      %v2438 = vadd.f32 %v1623, %v2153
      %v2439 = vadd.f32 %v1782, %v2312
      %v2440 = vadd.f32 %v1625, %v2155
      %v2441 = vadd.f32 %v1784, %v2314
      %v2442 = vadd.f32 %v1628, %v2158
      %v2443 = vadd.f32 %v1787, %v2317
      %v2444 = vadd.f32 %v1630, %v2160
      %v2445 = vadd.f32 %v1789, %v2319
      %v2446 = vadd.f32 %v1633, %v2163
      %v2447 = vadd.f32 %v1792, %v2322
      %v2448 = vadd.f32 %v1635, %v2165
      %v2449 = vadd.f32 %v1794, %v2324
      %v2450 = vadd.f32 %v1638, %v2168
      %v2451 = vadd.f32 %v1797, %v2327
      %v2452 = vadd.f32 %v1640, %v2170
      %v2453 = vadd.f32 %v1799, %v2329
      %v2454 = vadd.f32 %v1643, %v2173
      %v2455 = vadd.f32 %v1802, %v2332
      %v2456 = vadd.f32 %v1645, %v2175
      %v2457 = vadd.f32 %v1804, %v2334
      %v2458 = vadd.f32 %v1648, %v2178
      %v2459 = vadd.f32 %v1807, %v2337
      %v2460 = vadd.f32 %v1650, %v2180
      %v2461 = vadd.f32 %v1809, %v2339
      %v2462 = vadd.f32 %v1653, %v2183
      %v2463 = vadd.f32 %v1812, %v2342
      %v2464 = vadd.f32 %v1655, %v2185
      %v2465 = vadd.f32 %v1814, %v2344
      %v2467 = vperm.slane %v693, 0
      %v2468 = vperm.slane %v693, 1
      %v2471 = vmul.f32 %v2346, %v2467
      %v2472 = vmul.f32 %v2347, %v2468
      %v2473 = vmul.f32 %v2348, %v2467
      %v2474 = vmul.f32 %v2349, %v2468
      %v2475 = vmul.f32 %v2350, %v2467
      %v2476 = vmul.f32 %v2351, %v2468
      %v2477 = vmul.f32 %v2352, %v2467
      %v2478 = vmul.f32 %v2353, %v2468
      %v2479 = vmul.f32 %v2354, %v2467
      %v2480 = vmul.f32 %v2355, %v2468
      %v2481 = vmul.f32 %v2356, %v2467
      %v2482 = vmul.f32 %v2357, %v2468
      %v2483 = vmul.f32 %v2358, %v2467
      %v2484 = vmul.f32 %v2359, %v2468
      %v2485 = vmul.f32 %v2360, %v2467
      %v2486 = vmul.f32 %v2361, %v2468
      %v2487 = vmul.f32 %v2362, %v2467
      %v2488 = vmul.f32 %v2363, %v2468
      %v2489 = vmul.f32 %v2364, %v2467
      %v2490 = vmul.f32 %v2365, %v2468
      %v2491 = vmul.f32 %v2366, %v2467
      %v2492 = vmul.f32 %v2367, %v2468
      %v2493 = vmul.f32 %v2368, %v2467
      %v2494 = vmul.f32 %v2369, %v2468
      %v2495 = vmul.f32 %v2370, %v2467
      %v2496 = vmul.f32 %v2371, %v2468
      %v2497 = vmul.f32 %v2372, %v2467
      %v2498 = vmul.f32 %v2373, %v2468
      %v2499 = vmul.f32 %v2374, %v2467
      %v2500 = vmul.f32 %v2375, %v2468
      %v2501 = vmul.f32 %v2376, %v2467
      %v2502 = vmul.f32 %v2377, %v2468
      %v2503 = vmul.f32 %v2378, %v2467
      %v2504 = vmul.f32 %v2379, %v2468
      %v2505 = vmul.f32 %v2380, %v2467
      %v2506 = vmul.f32 %v2381, %v2468
      %v2507 = vmul.f32 %v2382, %v2467
      %v2508 = vmul.f32 %v2383, %v2468
      %v2509 = vmul.f32 %v2384, %v2467
      %v2510 = vmul.f32 %v2385, %v2468
      %v2511 = vmul.f32 %v2386, %v2467
      %v2512 = vmul.f32 %v2387, %v2468
      %v2513 = vmul.f32 %v2388, %v2467
      %v2514 = vmul.f32 %v2389, %v2468
      %v2515 = vmul.f32 %v2390, %v2467
      %v2516 = vmul.f32 %v2391, %v2468
      %v2517 = vmul.f32 %v2392, %v2467
      %v2518 = vmul.f32 %v2393, %v2468
      %v2519 = vmul.f32 %v2394, %v2467
      %v2520 = vmul.f32 %v2395, %v2468
      %v2521 = vmul.f32 %v2396, %v2467
      %v2522 = vmul.f32 %v2397, %v2468
      %v2523 = vmul.f32 %v2398, %v2467
      %v2524 = vmul.f32 %v2399, %v2468
      %v2525 = vmul.f32 %v2400, %v2467
      %v2526 = vmul.f32 %v2401, %v2468
      %v2527 = vmul.f32 %v2402, %v2467
      %v2528 = vmul.f32 %v2403, %v2468
      %v2529 = vmul.f32 %v2404, %v2467
      %v2530 = vmul.f32 %v2405, %v2468
      %v2531 = vmul.f32 %v2406, %v2467
      %v2532 = vmul.f32 %v2407, %v2468
      %v2533 = vmul.f32 %v2408, %v2467
      %v2534 = vmul.f32 %v2409, %v2468
      %v2535 = vmul.f32 %v2410, %v2467
      %v2536 = vmul.f32 %v2411, %v2468
      %v2537 = vmul.f32 %v2412, %v2467
      %v2538 = vmul.f32 %v2413, %v2468
      %v2539 = vmul.f32 %v2414, %v2467
      %v2540 = vmul.f32 %v2415, %v2468
      %v2541 = vmul.f32 %v2416, %v2467
      %v2542 = vmul.f32 %v2417, %v2468
      %v2543 = vmul.f32 %v2418, %v2467
      %v2544 = vmul.f32 %v2419, %v2468
      %v2545 = vmul.f32 %v2420, %v2467
      %v2546 = vmul.f32 %v2421, %v2468
      %v2547 = vmul.f32 %v2422, %v2467
      %v2548 = vmul.f32 %v2423, %v2468
      %v2549 = vmul.f32 %v2424, %v2467
      %v2550 = vmul.f32 %v2425, %v2468
      %v2551 = vmul.f32 %v2426, %v2467
      %v2552 = vmul.f32 %v2427, %v2468
      %v2553 = vmul.f32 %v2428, %v2467
      %v2554 = vmul.f32 %v2429, %v2468
      %v2555 = vmul.f32 %v2430, %v2467
      %v2556 = vmul.f32 %v2431, %v2468
      %v2557 = vmul.f32 %v2432, %v2467
      %v2558 = vmul.f32 %v2433, %v2468
      %v2559 = vmul.f32 %v2434, %v2467
      %v2560 = vmul.f32 %v2435, %v2468
      %v2561 = vmul.f32 %v2436, %v2467
      %v2562 = vmul.f32 %v2437, %v2468
      %v2563 = vmul.f32 %v2438, %v2467
      %v2564 = vmul.f32 %v2439, %v2468
      %v2565 = vmul.f32 %v2440, %v2467
      %v2566 = vmul.f32 %v2441, %v2468
      %v2567 = vmul.f32 %v2442, %v2467
      %v2568 = vmul.f32 %v2443, %v2468
      %v2569 = vmul.f32 %v2444, %v2467
      %v2570 = vmul.f32 %v2445, %v2468
      %v2571 = vmul.f32 %v2446, %v2467
      %v2572 = vmul.f32 %v2447, %v2468
      %v2573 = vmul.f32 %v2448, %v2467
      %v2574 = vmul.f32 %v2449, %v2468
      %v2575 = vmul.f32 %v2450, %v2467
      %v2576 = vmul.f32 %v2451, %v2468
      %v2577 = vmul.f32 %v2452, %v2467
      %v2578 = vmul.f32 %v2453, %v2468
      %v2579 = vmul.f32 %v2454, %v2467
      %v2580 = vmul.f32 %v2455, %v2468
      %v2581 = vmul.f32 %v2456, %v2467
      %v2582 = vmul.f32 %v2457, %v2468
      %v2583 = vmul.f32 %v2458, %v2467
      %v2584 = vmul.f32 %v2459, %v2468
      %v2585 = vmul.f32 %v2460, %v2467
      %v2586 = vmul.f32 %v2461, %v2468
      %v2587 = vmul.f32 %v2462, %v2467
      %v2588 = vmul.f32 %v2463, %v2468
      %v2589 = vmul.f32 %v2464, %v2467
      %v2590 = vmul.f32 %v2465, %v2468
      %v2592 = vperm.slane %v694, 0
      %v2593 = vperm.slane %v694, 1
      %v2596 = vadd.f32 %v2471, %v2592
      %v2597 = vadd.f32 %v2472, %v2593
      %v2598 = vadd.f32 %v2473, %v2592
      %v2599 = vadd.f32 %v2474, %v2593
      %v2600 = vadd.f32 %v2475, %v2592
      %v2601 = vadd.f32 %v2476, %v2593
      %v2602 = vadd.f32 %v2477, %v2592
      %v2603 = vadd.f32 %v2478, %v2593
      %v2604 = vadd.f32 %v2479, %v2592
      %v2605 = vadd.f32 %v2480, %v2593
      %v2606 = vadd.f32 %v2481, %v2592
      %v2607 = vadd.f32 %v2482, %v2593
      %v2608 = vadd.f32 %v2483, %v2592
      %v2609 = vadd.f32 %v2484, %v2593
      %v2610 = vadd.f32 %v2485, %v2592
      %v2611 = vadd.f32 %v2486, %v2593
      %v2612 = vadd.f32 %v2487, %v2592
      %v2613 = vadd.f32 %v2488, %v2593
      %v2614 = vadd.f32 %v2489, %v2592
      %v2615 = vadd.f32 %v2490, %v2593
      %v2616 = vadd.f32 %v2491, %v2592
      %v2617 = vadd.f32 %v2492, %v2593
      %v2618 = vadd.f32 %v2493, %v2592
      %v2619 = vadd.f32 %v2494, %v2593
      %v2620 = vadd.f32 %v2495, %v2592
      %v2621 = vadd.f32 %v2496, %v2593
      %v2622 = vadd.f32 %v2497, %v2592
      %v2623 = vadd.f32 %v2498, %v2593
      %v2624 = vadd.f32 %v2499, %v2592
      %v2625 = vadd.f32 %v2500, %v2593
      %v2626 = vadd.f32 %v2501, %v2592
      %v2627 = vadd.f32 %v2502, %v2593
      %v2628 = vadd.f32 %v2503, %v2592
      %v2629 = vadd.f32 %v2504, %v2593
      %v2630 = vadd.f32 %v2505, %v2592
      %v2631 = vadd.f32 %v2506, %v2593
      %v2632 = vadd.f32 %v2507, %v2592
      %v2633 = vadd.f32 %v2508, %v2593
      %v2634 = vadd.f32 %v2509, %v2592
      %v2635 = vadd.f32 %v2510, %v2593
      %v2636 = vadd.f32 %v2511, %v2592
      %v2637 = vadd.f32 %v2512, %v2593
      %v2638 = vadd.f32 %v2513, %v2592
      %v2639 = vadd.f32 %v2514, %v2593
      %v2640 = vadd.f32 %v2515, %v2592
      %v2641 = vadd.f32 %v2516, %v2593
      %v2642 = vadd.f32 %v2517, %v2592
      %v2643 = vadd.f32 %v2518, %v2593
      %v2644 = vadd.f32 %v2519, %v2592
      %v2645 = vadd.f32 %v2520, %v2593
      %v2646 = vadd.f32 %v2521, %v2592
      %v2647 = vadd.f32 %v2522, %v2593
      %v2648 = vadd.f32 %v2523, %v2592
      %v2649 = vadd.f32 %v2524, %v2593
      %v2650 = vadd.f32 %v2525, %v2592
      %v2651 = vadd.f32 %v2526, %v2593
      %v2652 = vadd.f32 %v2527, %v2592
      %v2653 = vadd.f32 %v2528, %v2593
      %v2654 = vadd.f32 %v2529, %v2592
      %v2655 = vadd.f32 %v2530, %v2593
      %v2656 = vadd.f32 %v2531, %v2592
      %v2657 = vadd.f32 %v2532, %v2593
      %v2658 = vadd.f32 %v2533, %v2592
      %v2659 = vadd.f32 %v2534, %v2593
      %v2660 = vadd.f32 %v2535, %v2592
      %v2661 = vadd.f32 %v2536, %v2593
      %v2662 = vadd.f32 %v2537, %v2592
      %v2663 = vadd.f32 %v2538, %v2593
      %v2664 = vadd.f32 %v2539, %v2592
      %v2665 = vadd.f32 %v2540, %v2593
      %v2666 = vadd.f32 %v2541, %v2592
      %v2667 = vadd.f32 %v2542, %v2593
      %v2668 = vadd.f32 %v2543, %v2592
      %v2669 = vadd.f32 %v2544, %v2593
      %v2670 = vadd.f32 %v2545, %v2592
      %v2671 = vadd.f32 %v2546, %v2593
      %v2672 = vadd.f32 %v2547, %v2592
      %v2673 = vadd.f32 %v2548, %v2593
      %v2674 = vadd.f32 %v2549, %v2592
      %v2675 = vadd.f32 %v2550, %v2593
      %v2676 = vadd.f32 %v2551, %v2592
      %v2677 = vadd.f32 %v2552, %v2593
      %v2678 = vadd.f32 %v2553, %v2592
      %v2679 = vadd.f32 %v2554, %v2593
      %v2680 = vadd.f32 %v2555, %v2592
      %v2681 = vadd.f32 %v2556, %v2593
      %v2682 = vadd.f32 %v2557, %v2592
      %v2683 = vadd.f32 %v2558, %v2593
      %v2684 = vadd.f32 %v2559, %v2592
      %v2685 = vadd.f32 %v2560, %v2593
      %v2686 = vadd.f32 %v2561, %v2592
      %v2687 = vadd.f32 %v2562, %v2593
      %v2688 = vadd.f32 %v2563, %v2592
      %v2689 = vadd.f32 %v2564, %v2593
      %v2690 = vadd.f32 %v2565, %v2592
      %v2691 = vadd.f32 %v2566, %v2593
      %v2692 = vadd.f32 %v2567, %v2592
      %v2693 = vadd.f32 %v2568, %v2593
      %v2694 = vadd.f32 %v2569, %v2592
      %v2695 = vadd.f32 %v2570, %v2593
      %v2696 = vadd.f32 %v2571, %v2592
      %v2697 = vadd.f32 %v2572, %v2593
      %v2698 = vadd.f32 %v2573, %v2592
      %v2699 = vadd.f32 %v2574, %v2593
      %v2700 = vadd.f32 %v2575, %v2592
      %v2701 = vadd.f32 %v2576, %v2593
      %v2702 = vadd.f32 %v2577, %v2592
      %v2703 = vadd.f32 %v2578, %v2593
      %v2704 = vadd.f32 %v2579, %v2592
      %v2705 = vadd.f32 %v2580, %v2593
      %v2706 = vadd.f32 %v2581, %v2592
      %v2707 = vadd.f32 %v2582, %v2593
      %v2708 = vadd.f32 %v2583, %v2592
      %v2709 = vadd.f32 %v2584, %v2593
      %v2710 = vadd.f32 %v2585, %v2592
      %v2711 = vadd.f32 %v2586, %v2593
      %v2712 = vadd.f32 %v2587, %v2592
      %v2713 = vadd.f32 %v2588, %v2593
      %v2714 = vadd.f32 %v2589, %v2592
      %v2715 = vadd.f32 %v2590, %v2593
      %v2716 = vmax.f32 %v2596, 0.0
      %v2717 = vmax.f32 %v2597, 0.0
      %v2718 = vmax.f32 %v2598, 0.0
      %v2719 = vmax.f32 %v2599, 0.0
      %v2720 = vmax.f32 %v2600, 0.0
      %v2721 = vmax.f32 %v2601, 0.0
      %v2722 = vmax.f32 %v2602, 0.0
      %v2723 = vmax.f32 %v2603, 0.0
      %v2724 = vmax.f32 %v2604, 0.0
      %v2725 = vmax.f32 %v2605, 0.0
      %v2726 = vmax.f32 %v2606, 0.0
      %v2727 = vmax.f32 %v2607, 0.0
      %v2728 = vmax.f32 %v2608, 0.0
      %v2729 = vmax.f32 %v2609, 0.0
      %v2730 = vmax.f32 %v2610, 0.0
      %v2731 = vmax.f32 %v2611, 0.0
      %v2732 = vmax.f32 %v2612, 0.0
      %v2733 = vmax.f32 %v2613, 0.0
      %v2734 = vmax.f32 %v2614, 0.0
      %v2735 = vmax.f32 %v2615, 0.0
      %v2736 = vmax.f32 %v2616, 0.0
      %v2737 = vmax.f32 %v2617, 0.0
      %v2738 = vmax.f32 %v2618, 0.0
      %v2739 = vmax.f32 %v2619, 0.0
      %v2740 = vmax.f32 %v2620, 0.0
      %v2741 = vmax.f32 %v2621, 0.0
      %v2742 = vmax.f32 %v2622, 0.0
      %v2743 = vmax.f32 %v2623, 0.0
      %v2744 = vmax.f32 %v2624, 0.0
      %v2745 = vmax.f32 %v2625, 0.0
      %v2746 = vmax.f32 %v2626, 0.0
      %v2747 = vmax.f32 %v2627, 0.0
      %v2748 = vmax.f32 %v2628, 0.0
      %v2749 = vmax.f32 %v2629, 0.0
      %v2750 = vmax.f32 %v2630, 0.0
      %v2751 = vmax.f32 %v2631, 0.0
      %v2752 = vmax.f32 %v2632, 0.0
      %v2753 = vmax.f32 %v2633, 0.0
      %v2754 = vmax.f32 %v2634, 0.0
      %v2755 = vmax.f32 %v2635, 0.0
      %v2756 = vmax.f32 %v2636, 0.0
      %v2757 = vmax.f32 %v2637, 0.0
      %v2758 = vmax.f32 %v2638, 0.0
      %v2759 = vmax.f32 %v2639, 0.0
      %v2760 = vmax.f32 %v2640, 0.0
      %v2761 = vmax.f32 %v2641, 0.0
      %v2762 = vmax.f32 %v2642, 0.0
      %v2763 = vmax.f32 %v2643, 0.0
      %v2764 = vmax.f32 %v2644, 0.0
      %v2765 = vmax.f32 %v2645, 0.0
      %v2766 = vmax.f32 %v2646, 0.0
      %v2767 = vmax.f32 %v2647, 0.0
      %v2768 = vmax.f32 %v2648, 0.0
      %v2769 = vmax.f32 %v2649, 0.0
      %v2770 = vmax.f32 %v2650, 0.0
      %v2771 = vmax.f32 %v2651, 0.0
      %v2772 = vmax.f32 %v2652, 0.0
      %v2773 = vmax.f32 %v2653, 0.0
      %v2774 = vmax.f32 %v2654, 0.0
      %v2775 = vmax.f32 %v2655, 0.0
      %v2776 = vmax.f32 %v2656, 0.0
      %v2777 = vmax.f32 %v2657, 0.0
      %v2778 = vmax.f32 %v2658, 0.0
      %v2779 = vmax.f32 %v2659, 0.0
      %v2780 = vmax.f32 %v2660, 0.0
      %v2781 = vmax.f32 %v2661, 0.0
      %v2782 = vmax.f32 %v2662, 0.0
      %v2783 = vmax.f32 %v2663, 0.0
      %v2784 = vmax.f32 %v2664, 0.0
      %v2785 = vmax.f32 %v2665, 0.0
      %v2786 = vmax.f32 %v2666, 0.0
      %v2787 = vmax.f32 %v2667, 0.0
      %v2788 = vmax.f32 %v2668, 0.0
      %v2789 = vmax.f32 %v2669, 0.0
      %v2790 = vmax.f32 %v2670, 0.0
      %v2791 = vmax.f32 %v2671, 0.0
      %v2792 = vmax.f32 %v2672, 0.0
      %v2793 = vmax.f32 %v2673, 0.0
      %v2794 = vmax.f32 %v2674, 0.0
      %v2795 = vmax.f32 %v2675, 0.0
      %v2796 = vmax.f32 %v2676, 0.0
      %v2797 = vmax.f32 %v2677, 0.0
      %v2798 = vmax.f32 %v2678, 0.0
      %v2799 = vmax.f32 %v2679, 0.0
      %v2800 = vmax.f32 %v2680, 0.0
      %v2801 = vmax.f32 %v2681, 0.0
      %v2802 = vmax.f32 %v2682, 0.0
      %v2803 = vmax.f32 %v2683, 0.0
      %v2804 = vmax.f32 %v2684, 0.0
      %v2805 = vmax.f32 %v2685, 0.0
      %v2806 = vmax.f32 %v2686, 0.0
      %v2807 = vmax.f32 %v2687, 0.0
      %v2808 = vmax.f32 %v2688, 0.0
      %v2809 = vmax.f32 %v2689, 0.0
      %v2810 = vmax.f32 %v2690, 0.0
      %v2811 = vmax.f32 %v2691, 0.0
      %v2812 = vmax.f32 %v2692, 0.0
      %v2813 = vmax.f32 %v2693, 0.0
      %v2814 = vmax.f32 %v2694, 0.0
      %v2815 = vmax.f32 %v2695, 0.0
      %v2816 = vmax.f32 %v2696, 0.0
      %v2817 = vmax.f32 %v2697, 0.0
      %v2818 = vmax.f32 %v2698, 0.0
      %v2819 = vmax.f32 %v2699, 0.0
      %v2820 = vmax.f32 %v2700, 0.0
      %v2821 = vmax.f32 %v2701, 0.0
      %v2822 = vmax.f32 %v2702, 0.0
      %v2823 = vmax.f32 %v2703, 0.0
      %v2824 = vmax.f32 %v2704, 0.0
      %v2825 = vmax.f32 %v2705, 0.0
      %v2826 = vmax.f32 %v2706, 0.0
      %v2827 = vmax.f32 %v2707, 0.0
      %v2828 = vmax.f32 %v2708, 0.0
      %v2829 = vmax.f32 %v2709, 0.0
      %v2830 = vmax.f32 %v2710, 0.0
      %v2831 = vmax.f32 %v2711, 0.0
      %v2832 = vmax.f32 %v2712, 0.0
      %v2833 = vmax.f32 %v2713, 0.0
      %v2834 = vmax.f32 %v2714, 0.0
      %v2835 = vmax.f32 %v2715, 0.0
      %v2836 = vld [vmem:[%s4] sm:$0xff]
      %v2837 = vld [vmem:[%s4 + $0x8] sm:$0xff]
      %v2838 = vld [vmem:[%s4 + $0x10] sm:$0xff]
      %v2839 = vld [vmem:[%s4 + $0x18] sm:$0xff]
      %v2840 = vld [vmem:[%s4 + $0x20] sm:$0xff]
      %v2841 = vld [vmem:[%s4 + $0x28] sm:$0xff]
      %v2842 = vld [vmem:[%s4 + $0x30] sm:$0xff]
      %v2843 = vld [vmem:[%s4 + $0x38] sm:$0xff]
      %v2844 = vld [vmem:[%s4 + $0x40] sm:$0xff]
      %v2845 = vld [vmem:[%s4 + $0x48] sm:$0xff]
      %v2846 = vld [vmem:[%s4 + $0x50] sm:$0xff]
      %v2847 = vld [vmem:[%s4 + $0x58] sm:$0xff]
      %v2848 = vld [vmem:[%s4 + $0x60] sm:$0xff]
      %v2849 = vld [vmem:[%s4 + $0x68] sm:$0xff]
      %v2850 = vld [vmem:[%s4 + $0x70] sm:$0xff]
      %v2851 = vld [vmem:[%s4 + $0x78] sm:$0xff]
      %v2852 = vld [vmem:[%s4 + $0x80] sm:$0xff]
      %v2853 = vld [vmem:[%s4 + $0x88] sm:$0xff]
      %v2854 = vld [vmem:[%s4 + $0x90] sm:$0xff]
      %v2855 = vld [vmem:[%s4 + $0x98] sm:$0xff]
      %v2856 = vld [vmem:[%s4 + $0xa0] sm:$0xff]
      %v2857 = vld [vmem:[%s4 + $0xa8] sm:$0xff]
      %v2858 = vld [vmem:[%s4 + $0xb0] sm:$0xff]
      %v2859 = vld [vmem:[%s4 + $0xb8] sm:$0xff]
      %v2860 = vld [vmem:[%s4 + $0xc0] sm:$0xff]
      %v2861 = vld [vmem:[%s4 + $0xc8] sm:$0xff]
      %v2862 = vld [vmem:[%s4 + $0xd0] sm:$0xff]
      %v2863 = vld [vmem:[%s4 + $0xd8] sm:$0xff]
      %v2864 = vld [vmem:[%s4 + $0xe0] sm:$0xff]
      %v2865 = vld [vmem:[%s4 + $0xe8] sm:$0xff]
      %v2866 = vld [vmem:[%s4 + $0xf0] sm:$0xff]
      %v2867 = vld [vmem:[%s4 + $0xf8] sm:$0xff]
      %v2868 = vld [vmem:[%s4 + $0x100] sm:$0xff]
      %v2869 = vld [vmem:[%s4 + $0x108] sm:$0xff]
      %v2870 = vld [vmem:[%s4 + $0x110] sm:$0xff]
      %v2871 = vld [vmem:[%s4 + $0x118] sm:$0xff]
      %v2872 = vld [vmem:[%s4 + $0x120] sm:$0xff]
      %v2873 = vld [vmem:[%s4 + $0x128] sm:$0xff]
      %v2874 = vld [vmem:[%s4 + $0x130] sm:$0xff]
      %v2875 = vld [vmem:[%s4 + $0x138] sm:$0xff]
      %v2876 = vld [vmem:[%s4 + $0x140] sm:$0xff]
      %v2877 = vld [vmem:[%s4 + $0x148] sm:$0xff]
      %v2878 = vld [vmem:[%s4 + $0x150] sm:$0xff]
      %v2879 = vld [vmem:[%s4 + $0x158] sm:$0xff]
      %v2880 = vld [vmem:[%s4 + $0x160] sm:$0xff]
      %v2881 = vld [vmem:[%s4 + $0x168] sm:$0xff]
      %v2882 = vld [vmem:[%s4 + $0x170] sm:$0xff]
      %v2883 = vld [vmem:[%s4 + $0x178] sm:$0xff]
      %v2884 = vld [vmem:[%s4 + $0x180] sm:$0xff]
      %v2885 = vld [vmem:[%s4 + $0x188] sm:$0xff]
      %v2886 = vld [vmem:[%s4 + $0x190] sm:$0xff]
      %v2887 = vld [vmem:[%s4 + $0x198] sm:$0xff]
      %v2888 = vld [vmem:[%s4 + $0x1a0] sm:$0xff]
      %v2889 = vld [vmem:[%s4 + $0x1a8] sm:$0xff]
      %v2890 = vld [vmem:[%s4 + $0x1b0] sm:$0xff]
      %v2891 = vld [vmem:[%s4 + $0x1b8] sm:$0xff]
      %v2892 = vld [vmem:[%s4 + $0x1c0] sm:$0xff]
      %v2893 = vld [vmem:[%s4 + $0x1c8] sm:$0xff]
      %v2894 = vld [vmem:[%s4 + $0x1d0] sm:$0xff]
      %v2895 = vld [vmem:[%s4 + $0x1d8] sm:$0xff]
      %v2896 = vld [vmem:[%s4 + $0x1e0] sm:$0xff]
      %v2897 = vld [vmem:[%s4 + $0x1e8] sm:$0xff]
      %v2898 = vld [vmem:[%s4 + $0x1f0] sm:$0xff]
      %v2899 = vld [vmem:[%s4 + $0x1f8] sm:$0xff]
      %v2900 = vld [vmem:[%s4 + $0x200] sm:$0x11]
      %v2901 = vld [vmem:[%s4 + $0x208] sm:$0x11]
      %v2902 = vld [vmem:[%s5] sm:$0xf]
      %v2903 = vld [vmem:[%s5 + $0x4] sm:$0xf]
      %v2904 = vld [vmem:[%s5 + $0x8] sm:$0xf]
      %v2905 = vld [vmem:[%s5 + $0xc] sm:$0xf]
      %v2906 = vld [vmem:[%s5 + $0x10] sm:$0xf]
      %v2907 = vld [vmem:[%s5 + $0x14] sm:$0xf]
      %v2908 = vld [vmem:[%s5 + $0x18] sm:$0xf]
      %v2909 = vld [vmem:[%s5 + $0x1c] sm:$0xf]
      %v2910 = vld [vmem:[%s5 + $0x20] sm:$0xf]
      %v2911 = vld [vmem:[%s5 + $0x24] sm:$0xf]
      %v2912 = vld [vmem:[%s5 + $0x28] sm:$0xf]
      %v2913 = vld [vmem:[%s5 + $0x2c] sm:$0xf]
      %v2914 = vld [vmem:[%s5 + $0x30] sm:$0xf]
      %v2915 = vld [vmem:[%s5 + $0x34] sm:$0xf]
      %v2916 = vld [vmem:[%s5 + $0x38] sm:$0xf]
      %v2917 = vld [vmem:[%s5 + $0x3c] sm:$0xf]
      %v2918 = vld [vmem:[%s5 + $0x40] sm:$0xf]
      %v2919 = vld [vmem:[%s5 + $0x44] sm:$0xf]
      %v2920 = vld [vmem:[%s5 + $0x48] sm:$0xf]
      %v2921 = vld [vmem:[%s5 + $0x4c] sm:$0xf]
      %v2922 = vld [vmem:[%s5 + $0x50] sm:$0xf]
      %v2923 = vld [vmem:[%s5 + $0x54] sm:$0xf]
      %v2924 = vld [vmem:[%s5 + $0x58] sm:$0xf]
      %v2925 = vld [vmem:[%s5 + $0x5c] sm:$0xf]
      %v2926 = vld [vmem:[%s5 + $0x60] sm:$0xf]
      %v2927 = vld [vmem:[%s5 + $0x64] sm:$0xf]
      %v2928 = vld [vmem:[%s5 + $0x68] sm:$0xf]
      %v2929 = vld [vmem:[%s5 + $0x6c] sm:$0xf]
      %v2930 = vld [vmem:[%s5 + $0x70] sm:$0xf]
      %v2931 = vld [vmem:[%s5 + $0x74] sm:$0xf]
      %v2932 = vld [vmem:[%s5 + $0x78] sm:$0xf]
      %v3053 = vrot.slane %v2716, 1
      %v3054 = vrot.slane %v2718, 1
      %v3055 = vsel %vm1089, %v3053, %v3054
      %v3056 = vrot.slane %v2717, 1
      %v3057 = vrot.slane %v2719, 1
      %v3058 = vsel %vm1089, %v3056, %v3057
      %v3059 = vrot.slane %v2720, 1
      %v3060 = vsel %vm1089, %v3054, %v3059
      %v3061 = vrot.slane %v2721, 1
      %v3062 = vsel %vm1089, %v3057, %v3061
      %v3063 = vrot.slane %v2722, 1
      %v3064 = vsel %vm1089, %v3059, %v3063
      %v3065 = vrot.slane %v2723, 1
      %v3066 = vsel %vm1089, %v3061, %v3065
      %v3067 = vrot.slane %v2724, 1
      %v3068 = vsel %vm1089, %v3063, %v3067
      %v3069 = vrot.slane %v2725, 1
      %v3070 = vsel %vm1089, %v3065, %v3069
      %v3071 = vrot.slane %v2726, 1
      %v3072 = vsel %vm1089, %v3067, %v3071
      %v3073 = vrot.slane %v2727, 1
      %v3074 = vsel %vm1089, %v3069, %v3073
      %v3075 = vrot.slane %v2728, 1
      %v3076 = vsel %vm1089, %v3071, %v3075
      %v3077 = vrot.slane %v2729, 1
      %v3078 = vsel %vm1089, %v3073, %v3077
      %v3079 = vrot.slane %v2730, 1
      %v3080 = vsel %vm1089, %v3075, %v3079
      %v3081 = vrot.slane %v2731, 1
      %v3082 = vsel %vm1089, %v3077, %v3081
      %v3083 = vrot.slane %v2732, 1
      %v3084 = vsel %vm1089, %v3079, %v3083
      %v3085 = vrot.slane %v2733, 1
      %v3086 = vsel %vm1089, %v3081, %v3085
      %v3087 = vrot.slane %v2734, 1
      %v3088 = vsel %vm1089, %v3083, %v3087
      %v3089 = vrot.slane %v2735, 1
      %v3090 = vsel %vm1089, %v3085, %v3089
      %v3091 = vrot.slane %v2736, 1
      %v3092 = vsel %vm1089, %v3087, %v3091
      %v3093 = vrot.slane %v2737, 1
      %v3094 = vsel %vm1089, %v3089, %v3093
      %v3095 = vrot.slane %v2738, 1
      %v3096 = vsel %vm1089, %v3091, %v3095
      %v3097 = vrot.slane %v2739, 1
      %v3098 = vsel %vm1089, %v3093, %v3097
      %v3099 = vrot.slane %v2740, 1
      %v3100 = vsel %vm1089, %v3095, %v3099
      %v3101 = vrot.slane %v2741, 1
      %v3102 = vsel %vm1089, %v3097, %v3101
      %v3103 = vrot.slane %v2742, 1
      %v3104 = vsel %vm1089, %v3099, %v3103
      %v3105 = vrot.slane %v2743, 1
      %v3106 = vsel %vm1089, %v3101, %v3105
      %v3107 = vrot.slane %v2744, 1
      %v3108 = vsel %vm1089, %v3103, %v3107
      %v3109 = vrot.slane %v2745, 1
      %v3110 = vsel %vm1089, %v3105, %v3109
      %v3111 = vrot.slane %v2746, 1
      %v3112 = vsel %vm1089, %v3107, %v3111
      %v3113 = vrot.slane %v2747, 1
      %v3114 = vsel %vm1089, %v3109, %v3113
      %v3115 = vrot.slane %v2748, 1
      %v3116 = vsel %vm1089, %v3111, %v3115
      %v3117 = vrot.slane %v2749, 1
      %v3118 = vsel %vm1089, %v3113, %v3117
      %v3119 = vrot.slane %v2750, 1
      %v3120 = vsel %vm1089, %v3115, %v3119
      %v3121 = vrot.slane %v2751, 1
      %v3122 = vsel %vm1089, %v3117, %v3121
      %v3123 = vrot.slane %v2752, 1
      %v3124 = vsel %vm1089, %v3119, %v3123
      %v3125 = vrot.slane %v2753, 1
      %v3126 = vsel %vm1089, %v3121, %v3125
      %v3127 = vrot.slane %v2754, 1
      %v3128 = vsel %vm1089, %v3123, %v3127
      %v3129 = vrot.slane %v2755, 1
      %v3130 = vsel %vm1089, %v3125, %v3129
      %v3131 = vrot.slane %v2756, 1
      %v3132 = vsel %vm1089, %v3127, %v3131
      %v3133 = vrot.slane %v2757, 1
      %v3134 = vsel %vm1089, %v3129, %v3133
      %v3135 = vrot.slane %v2758, 1
      %v3136 = vsel %vm1089, %v3131, %v3135
      %v3137 = vrot.slane %v2759, 1
      %v3138 = vsel %vm1089, %v3133, %v3137
      %v3139 = vrot.slane %v2760, 1
      %v3140 = vsel %vm1089, %v3135, %v3139
      %v3141 = vrot.slane %v2761, 1
      %v3142 = vsel %vm1089, %v3137, %v3141
      %v3143 = vrot.slane %v2762, 1
      %v3144 = vsel %vm1089, %v3139, %v3143
      %v3145 = vrot.slane %v2763, 1
      %v3146 = vsel %vm1089, %v3141, %v3145
      %v3147 = vrot.slane %v2764, 1
      %v3148 = vsel %vm1089, %v3143, %v3147
      %v3149 = vrot.slane %v2765, 1
      %v3150 = vsel %vm1089, %v3145, %v3149
      %v3151 = vrot.slane %v2766, 1
      %v3152 = vsel %vm1089, %v3147, %v3151
      %v3153 = vrot.slane %v2767, 1
      %v3154 = vsel %vm1089, %v3149, %v3153
      %v3155 = vrot.slane %v2768, 1
      %v3156 = vsel %vm1089, %v3151, %v3155
      %v3157 = vrot.slane %v2769, 1
      %v3158 = vsel %vm1089, %v3153, %v3157
      %v3159 = vrot.slane %v2770, 1
      %v3160 = vsel %vm1089, %v3155, %v3159
      %v3161 = vrot.slane %v2771, 1
      %v3162 = vsel %vm1089, %v3157, %v3161
      %v3163 = vrot.slane %v2772, 1
      %v3164 = vsel %vm1089, %v3159, %v3163
      %v3165 = vrot.slane %v2773, 1
      %v3166 = vsel %vm1089, %v3161, %v3165
      %v3167 = vrot.slane %v2774, 1
      %v3168 = vsel %vm1089, %v3163, %v3167
      %v3169 = vrot.slane %v2775, 1
      %v3170 = vsel %vm1089, %v3165, %v3169
      %v3171 = vrot.slane %v2776, 1
      %v3172 = vsel %vm1089, %v3167, %v3171
      %v3173 = vrot.slane %v2777, 1
      %v3174 = vsel %vm1089, %v3169, %v3173
      %v3175 = vrot.slane %v2778, 1
      %v3176 = vsel %vm1089, %v3171, %v3175
      %v3177 = vrot.slane %v2779, 1
      %v3178 = vsel %vm1089, %v3173, %v3177
      %v3179 = vrot.slane %v2780, 1
      %v3180 = vsel %vm1089, %v3175, %v3179
      %v3181 = vrot.slane %v2781, 1
      %v3182 = vsel %vm1089, %v3177, %v3181
      %v3183 = vrot.slane %v2782, 1
      %v3184 = vsel %vm1089, %v3179, %v3183
      %v3185 = vrot.slane %v2783, 1
      %v3186 = vsel %vm1089, %v3181, %v3185
      %v3187 = vrot.slane %v2784, 1
      %v3188 = vsel %vm1089, %v3183, %v3187
      %v3189 = vrot.slane %v2785, 1
      %v3190 = vsel %vm1089, %v3185, %v3189
      %v3191 = vrot.slane %v2786, 1
      %v3192 = vsel %vm1089, %v3187, %v3191
      %v3193 = vrot.slane %v2787, 1
      %v3194 = vsel %vm1089, %v3189, %v3193
      %v3195 = vrot.slane %v2788, 1
      %v3196 = vsel %vm1089, %v3191, %v3195
      %v3197 = vrot.slane %v2789, 1
      %v3198 = vsel %vm1089, %v3193, %v3197
      %v3199 = vrot.slane %v2790, 1
      %v3200 = vsel %vm1089, %v3195, %v3199
      %v3201 = vrot.slane %v2791, 1
      %v3202 = vsel %vm1089, %v3197, %v3201
      %v3203 = vrot.slane %v2792, 1
      %v3204 = vsel %vm1089, %v3199, %v3203
      %v3205 = vrot.slane %v2793, 1
      %v3206 = vsel %vm1089, %v3201, %v3205
      %v3207 = vrot.slane %v2794, 1
      %v3208 = vsel %vm1089, %v3203, %v3207
      %v3209 = vrot.slane %v2795, 1
      %v3210 = vsel %vm1089, %v3205, %v3209
      %v3211 = vrot.slane %v2796, 1
      %v3212 = vsel %vm1089, %v3207, %v3211
      %v3213 = vrot.slane %v2797, 1
      %v3214 = vsel %vm1089, %v3209, %v3213
      %v3215 = vrot.slane %v2798, 1
      %v3216 = vsel %vm1089, %v3211, %v3215
      %v3217 = vrot.slane %v2799, 1
      %v3218 = vsel %vm1089, %v3213, %v3217
      %v3219 = vrot.slane %v2800, 1
      %v3220 = vsel %vm1089, %v3215, %v3219
      %v3221 = vrot.slane %v2801, 1
      %v3222 = vsel %vm1089, %v3217, %v3221
      %v3223 = vrot.slane %v2802, 1
      %v3224 = vsel %vm1089, %v3219, %v3223
      %v3225 = vrot.slane %v2803, 1
      %v3226 = vsel %vm1089, %v3221, %v3225
      %v3227 = vrot.slane %v2804, 1
      %v3228 = vsel %vm1089, %v3223, %v3227
      %v3229 = vrot.slane %v2805, 1
      %v3230 = vsel %vm1089, %v3225, %v3229
      %v3231 = vrot.slane %v2806, 1
      %v3232 = vsel %vm1089, %v3227, %v3231
      %v3233 = vrot.slane %v2807, 1
      %v3234 = vsel %vm1089, %v3229, %v3233
      %v3235 = vrot.slane %v2808, 1
      %v3236 = vsel %vm1089, %v3231, %v3235
      %v3237 = vrot.slane %v2809, 1
      %v3238 = vsel %vm1089, %v3233, %v3237
      %v3239 = vrot.slane %v2810, 1
      %v3240 = vsel %vm1089, %v3235, %v3239
      %v3241 = vrot.slane %v2811, 1
      %v3242 = vsel %vm1089, %v3237, %v3241
      %v3243 = vrot.slane %v2812, 1
      %v3244 = vsel %vm1089, %v3239, %v3243
      %v3245 = vrot.slane %v2813, 1
      %v3246 = vsel %vm1089, %v3241, %v3245
      %v3247 = vrot.slane %v2814, 1
      %v3248 = vsel %vm1089, %v3243, %v3247
      %v3249 = vrot.slane %v2815, 1
      %v3250 = vsel %vm1089, %v3245, %v3249
      %v3251 = vrot.slane %v2816, 1
      %v3252 = vsel %vm1089, %v3247, %v3251
      %v3253 = vrot.slane %v2817, 1
      %v3254 = vsel %vm1089, %v3249, %v3253
      %v3255 = vrot.slane %v2818, 1
      %v3256 = vsel %vm1089, %v3251, %v3255
      %v3257 = vrot.slane %v2819, 1
      %v3258 = vsel %vm1089, %v3253, %v3257
      %v3259 = vrot.slane %v2820, 1
      %v3260 = vsel %vm1089, %v3255, %v3259
      %v3261 = vrot.slane %v2821, 1
      %v3262 = vsel %vm1089, %v3257, %v3261
      %v3263 = vrot.slane %v2822, 1
      %v3264 = vsel %vm1089, %v3259, %v3263
      %v3265 = vrot.slane %v2823, 1
      %v3266 = vsel %vm1089, %v3261, %v3265
      %v3267 = vrot.slane %v2824, 1
      %v3268 = vsel %vm1089, %v3263, %v3267
      %v3269 = vrot.slane %v2825, 1
      %v3270 = vsel %vm1089, %v3265, %v3269
      %v3271 = vrot.slane %v2826, 1
      %v3272 = vsel %vm1089, %v3267, %v3271
      %v3273 = vrot.slane %v2827, 1
      %v3274 = vsel %vm1089, %v3269, %v3273
      %v3275 = vrot.slane %v2828, 1
      %v3276 = vsel %vm1089, %v3271, %v3275
      %v3277 = vrot.slane %v2829, 1
      %v3278 = vsel %vm1089, %v3273, %v3277
      %v3279 = vrot.slane %v2830, 1
      %v3280 = vsel %vm1089, %v3275, %v3279
      %v3281 = vrot.slane %v2831, 1
      %v3282 = vsel %vm1089, %v3277, %v3281
      %v3283 = vrot.slane %v2832, 1
      %v3284 = vsel %vm1089, %v3279, %v3283
      %v3285 = vrot.slane %v2833, 1
      %v3286 = vsel %vm1089, %v3281, %v3285
      %v3287 = vrot.slane %v2834, 1
      %v3288 = vsel %vm1089, %v3283, %v3287
      %v3289 = vrot.slane %v2835, 1
      %v3290 = vsel %vm1089, %v3285, %v3289
      %v3411 = vmax.f32 %v2716, %v3055
      %v3412 = vmax.f32 %v2717, %v3058
      %v3413 = vmax.f32 %v2718, %v3060
      %v3414 = vmax.f32 %v2719, %v3062
      %v3415 = vmax.f32 %v2720, %v3064
      %v3416 = vmax.f32 %v2721, %v3066
      %v3417 = vmax.f32 %v2722, %v3068
      %v3418 = vmax.f32 %v2723, %v3070
      %v3419 = vmax.f32 %v2724, %v3072
      %v3420 = vmax.f32 %v2725, %v3074
      %v3421 = vmax.f32 %v2726, %v3076
      %v3422 = vmax.f32 %v2727, %v3078
      %v3423 = vmax.f32 %v2728, %v3080
      %v3424 = vmax.f32 %v2729, %v3082
      %v3425 = vmax.f32 %v2730, %v3084
      %v3426 = vmax.f32 %v2731, %v3086
      %v3427 = vmax.f32 %v2732, %v3088
      %v3428 = vmax.f32 %v2733, %v3090
      %v3429 = vmax.f32 %v2734, %v3092
      %v3430 = vmax.f32 %v2735, %v3094
      %v3431 = vmax.f32 %v2736, %v3096
      %v3432 = vmax.f32 %v2737, %v3098
      %v3433 = vmax.f32 %v2738, %v3100
      %v3434 = vmax.f32 %v2739, %v3102
      %v3435 = vmax.f32 %v2740, %v3104
      %v3436 = vmax.f32 %v2741, %v3106
      %v3437 = vmax.f32 %v2742, %v3108
      %v3438 = vmax.f32 %v2743, %v3110
      %v3439 = vmax.f32 %v2744, %v3112
      %v3440 = vmax.f32 %v2745, %v3114
      %v3441 = vmax.f32 %v2746, %v3116
      %v3442 = vmax.f32 %v2747, %v3118
      %v3443 = vmax.f32 %v2748, %v3120
      %v3444 = vmax.f32 %v2749, %v3122
      %v3445 = vmax.f32 %v2750, %v3124
      %v3446 = vmax.f32 %v2751, %v3126
      %v3447 = vmax.f32 %v2752, %v3128
      %v3448 = vmax.f32 %v2753, %v3130
      %v3449 = vmax.f32 %v2754, %v3132
      %v3450 = vmax.f32 %v2755, %v3134
      %v3451 = vmax.f32 %v2756, %v3136
      %v3452 = vmax.f32 %v2757, %v3138
      %v3453 = vmax.f32 %v2758, %v3140
      %v3454 = vmax.f32 %v2759, %v3142
      %v3455 = vmax.f32 %v2760, %v3144
      %v3456 = vmax.f32 %v2761, %v3146
      %v3457 = vmax.f32 %v2762, %v3148
      %v3458 = vmax.f32 %v2763, %v3150
      %v3459 = vmax.f32 %v2764, %v3152
      %v3460 = vmax.f32 %v2765, %v3154
      %v3461 = vmax.f32 %v2766, %v3156
      %v3462 = vmax.f32 %v2767, %v3158
      %v3463 = vmax.f32 %v2768, %v3160
      %v3464 = vmax.f32 %v2769, %v3162
      %v3465 = vmax.f32 %v2770, %v3164
      %v3466 = vmax.f32 %v2771, %v3166
      %v3467 = vmax.f32 %v2772, %v3168
      %v3468 = vmax.f32 %v2773, %v3170
      %v3469 = vmax.f32 %v2774, %v3172
      %v3470 = vmax.f32 %v2775, %v3174
      %v3471 = vmax.f32 %v2776, %v3176
      %v3472 = vmax.f32 %v2777, %v3178
      %v3473 = vmax.f32 %v2778, %v3180
      %v3474 = vmax.f32 %v2779, %v3182
      %v3475 = vmax.f32 %v2780, %v3184
      %v3476 = vmax.f32 %v2781, %v3186
      %v3477 = vmax.f32 %v2782, %v3188
      %v3478 = vmax.f32 %v2783, %v3190
      %v3479 = vmax.f32 %v2784, %v3192
      %v3480 = vmax.f32 %v2785, %v3194
      %v3481 = vmax.f32 %v2786, %v3196
      %v3482 = vmax.f32 %v2787, %v3198
      %v3483 = vmax.f32 %v2788, %v3200
      %v3484 = vmax.f32 %v2789, %v3202
      %v3485 = vmax.f32 %v2790, %v3204
      %v3486 = vmax.f32 %v2791, %v3206
      %v3487 = vmax.f32 %v2792, %v3208
      %v3488 = vmax.f32 %v2793, %v3210
      %v3489 = vmax.f32 %v2794, %v3212
      %v3490 = vmax.f32 %v2795, %v3214
      %v3491 = vmax.f32 %v2796, %v3216
      %v3492 = vmax.f32 %v2797, %v3218
      %v3493 = vmax.f32 %v2798, %v3220
      %v3494 = vmax.f32 %v2799, %v3222
      %v3495 = vmax.f32 %v2800, %v3224
      %v3496 = vmax.f32 %v2801, %v3226
      %v3497 = vmax.f32 %v2802, %v3228
      %v3498 = vmax.f32 %v2803, %v3230
      %v3499 = vmax.f32 %v2804, %v3232
      %v3500 = vmax.f32 %v2805, %v3234
      %v3501 = vmax.f32 %v2806, %v3236
      %v3502 = vmax.f32 %v2807, %v3238
      %v3503 = vmax.f32 %v2808, %v3240
      %v3504 = vmax.f32 %v2809, %v3242
      %v3505 = vmax.f32 %v2810, %v3244
      %v3506 = vmax.f32 %v2811, %v3246
      %v3507 = vmax.f32 %v2812, %v3248
      %v3508 = vmax.f32 %v2813, %v3250
      %v3509 = vmax.f32 %v2814, %v3252
      %v3510 = vmax.f32 %v2815, %v3254
      %v3511 = vmax.f32 %v2816, %v3256
      %v3512 = vmax.f32 %v2817, %v3258
      %v3513 = vmax.f32 %v2818, %v3260
      %v3514 = vmax.f32 %v2819, %v3262
      %v3515 = vmax.f32 %v2820, %v3264
      %v3516 = vmax.f32 %v2821, %v3266
      %v3517 = vmax.f32 %v2822, %v3268
      %v3518 = vmax.f32 %v2823, %v3270
      %v3519 = vmax.f32 %v2824, %v3272
      %v3520 = vmax.f32 %v2825, %v3274
      %v3521 = vmax.f32 %v2826, %v3276
      %v3522 = vmax.f32 %v2827, %v3278
      %v3523 = vmax.f32 %v2828, %v3280
      %v3524 = vmax.f32 %v2829, %v3282
      %v3525 = vmax.f32 %v2830, %v3284
      %v3526 = vmax.f32 %v2831, %v3286
      %v3527 = vmax.f32 %v2832, %v3288
      %v3528 = vmax.f32 %v2833, %v3290
      %v3529 = vmax.f32 %v2834, %v3287
      %v3530 = vmax.f32 %v2835, %v3289
      %v3531 = vpack.c.bf16 %v3413, %v3411
      %v3532 = vpack.c.bf16 %v3414, %v3412
      %v3533 = vpack.c.bf16 %v3417, %v3415
      %v3534 = vpack.c.bf16 %v3418, %v3416
      %v3535 = vpack.c.bf16 %v3421, %v3419
      %v3536 = vpack.c.bf16 %v3422, %v3420
      %v3537 = vpack.c.bf16 %v3425, %v3423
      %v3538 = vpack.c.bf16 %v3426, %v3424
      %v3539 = vpack.c.bf16 %v3429, %v3427
      %v3540 = vpack.c.bf16 %v3430, %v3428
      %v3541 = vpack.c.bf16 %v3433, %v3431
      %v3542 = vpack.c.bf16 %v3434, %v3432
      %v3543 = vpack.c.bf16 %v3437, %v3435
      %v3544 = vpack.c.bf16 %v3438, %v3436
      %v3545 = vpack.c.bf16 %v3441, %v3439
      %v3546 = vpack.c.bf16 %v3442, %v3440
      %v3547 = vpack.c.bf16 %v3445, %v3443
      %v3548 = vpack.c.bf16 %v3446, %v3444
      %v3549 = vpack.c.bf16 %v3449, %v3447
      %v3550 = vpack.c.bf16 %v3450, %v3448
      %v3551 = vpack.c.bf16 %v3453, %v3451
      %v3552 = vpack.c.bf16 %v3454, %v3452
      %v3553 = vpack.c.bf16 %v3457, %v3455
      %v3554 = vpack.c.bf16 %v3458, %v3456
      %v3555 = vpack.c.bf16 %v3461, %v3459
      %v3556 = vpack.c.bf16 %v3462, %v3460
      %v3557 = vpack.c.bf16 %v3465, %v3463
      %v3558 = vpack.c.bf16 %v3466, %v3464
      %v3559 = vpack.c.bf16 %v3469, %v3467
      %v3560 = vpack.c.bf16 %v3470, %v3468
      %v3561 = vpack.c.bf16 %v3473, %v3471
      %v3562 = vpack.c.bf16 %v3474, %v3472
      %v3563 = vpack.c.bf16 %v3477, %v3475
      %v3564 = vpack.c.bf16 %v3478, %v3476
      %v3565 = vpack.c.bf16 %v3481, %v3479
      %v3566 = vpack.c.bf16 %v3482, %v3480
      %v3567 = vpack.c.bf16 %v3485, %v3483
      %v3568 = vpack.c.bf16 %v3486, %v3484
      %v3569 = vpack.c.bf16 %v3489, %v3487
      %v3570 = vpack.c.bf16 %v3490, %v3488
      %v3571 = vpack.c.bf16 %v3493, %v3491
      %v3572 = vpack.c.bf16 %v3494, %v3492
      %v3573 = vpack.c.bf16 %v3497, %v3495
      %v3574 = vpack.c.bf16 %v3498, %v3496
      %v3575 = vpack.c.bf16 %v3501, %v3499
      %v3576 = vpack.c.bf16 %v3502, %v3500
      %v3577 = vpack.c.bf16 %v3505, %v3503
      %v3578 = vpack.c.bf16 %v3506, %v3504
      %v3579 = vpack.c.bf16 %v3509, %v3507
      %v3580 = vpack.c.bf16 %v3510, %v3508
      %v3581 = vpack.c.bf16 %v3513, %v3511
      %v3582 = vpack.c.bf16 %v3514, %v3512
      %v3583 = vpack.c.bf16 %v3517, %v3515
      %v3584 = vpack.c.bf16 %v3518, %v3516
      %v3585 = vpack.c.bf16 %v3521, %v3519
      %v3586 = vpack.c.bf16 %v3522, %v3520
      %v3587 = vpack.c.bf16 %v3525, %v3523
      %v3588 = vpack.c.bf16 %v3526, %v3524
      %v3589 = vpack.c.bf16 %v3529, %v3527
      %v3590 = vpack.c.bf16 %v3530, %v3528
      %v3657 = vunpack.c.l.b16 %v2836
      %v3658 = vunpack.c.h.b16 %v2836
      %v3659 = vunpack.c.l.b16 %v2837
      %v3660 = vunpack.c.h.b16 %v2837
      %v3661 = vunpack.c.l.b16 %v2838
      %v3662 = vunpack.c.h.b16 %v2838
      %v3663 = vunpack.c.l.b16 %v2839
      %v3664 = vunpack.c.h.b16 %v2839
      %v3665 = vunpack.c.l.b16 %v2840
      %v3666 = vunpack.c.h.b16 %v2840
      %v3667 = vunpack.c.l.b16 %v2841
      %v3668 = vunpack.c.h.b16 %v2841
      %v3669 = vunpack.c.l.b16 %v2842
      %v3670 = vunpack.c.h.b16 %v2842
      %v3671 = vunpack.c.l.b16 %v2843
      %v3672 = vunpack.c.h.b16 %v2843
      %v3673 = vunpack.c.l.b16 %v2844
      %v3674 = vunpack.c.h.b16 %v2844
      %v3675 = vunpack.c.l.b16 %v2845
      %v3676 = vunpack.c.h.b16 %v2845
      %v3677 = vunpack.c.l.b16 %v2846
      %v3678 = vunpack.c.h.b16 %v2846
      %v3679 = vunpack.c.l.b16 %v2847
      %v3680 = vunpack.c.h.b16 %v2847
      %v3681 = vunpack.c.l.b16 %v2848
      %v3682 = vunpack.c.h.b16 %v2848
      %v3683 = vunpack.c.l.b16 %v2849
      %v3684 = vunpack.c.h.b16 %v2849
      %v3685 = vunpack.c.l.b16 %v2850
      %v3686 = vunpack.c.h.b16 %v2850
      %v3687 = vunpack.c.l.b16 %v2851
      %v3688 = vunpack.c.h.b16 %v2851
      %v3689 = vunpack.c.l.b16 %v2852
      %v3690 = vunpack.c.h.b16 %v2852
      %v3691 = vunpack.c.l.b16 %v2853
      %v3692 = vunpack.c.h.b16 %v2853
      %v3693 = vunpack.c.l.b16 %v2854
      %v3694 = vunpack.c.h.b16 %v2854
      %v3695 = vunpack.c.l.b16 %v2855
      %v3696 = vunpack.c.h.b16 %v2855
      %v3697 = vunpack.c.l.b16 %v2856
      %v3698 = vunpack.c.h.b16 %v2856
      %v3699 = vunpack.c.l.b16 %v2857
      %v3700 = vunpack.c.h.b16 %v2857
      %v3701 = vunpack.c.l.b16 %v2858
      %v3702 = vunpack.c.h.b16 %v2858
      %v3703 = vunpack.c.l.b16 %v2859
      %v3704 = vunpack.c.h.b16 %v2859
      %v3705 = vunpack.c.l.b16 %v2860
      %v3706 = vunpack.c.h.b16 %v2860
      %v3707 = vunpack.c.l.b16 %v2861
      %v3708 = vunpack.c.h.b16 %v2861
      %v3709 = vunpack.c.l.b16 %v2862
      %v3710 = vunpack.c.h.b16 %v2862
      %v3711 = vunpack.c.l.b16 %v2863
      %v3712 = vunpack.c.h.b16 %v2863
      %v3713 = vunpack.c.l.b16 %v2864
      %v3714 = vunpack.c.h.b16 %v2864
      %v3715 = vunpack.c.l.b16 %v2865
      %v3716 = vunpack.c.h.b16 %v2865
      %v3717 = vunpack.c.l.b16 %v2866
      %v3718 = vunpack.c.h.b16 %v2866
      %v3719 = vunpack.c.l.b16 %v2867
      %v3720 = vunpack.c.h.b16 %v2867
      %v3721 = vunpack.c.l.b16 %v2868
      %v3722 = vunpack.c.h.b16 %v2868
      %v3723 = vunpack.c.l.b16 %v2869
      %v3724 = vunpack.c.h.b16 %v2869
      %v3725 = vunpack.c.l.b16 %v2870
      %v3726 = vunpack.c.h.b16 %v2870
      %v3727 = vunpack.c.l.b16 %v2871
      %v3728 = vunpack.c.h.b16 %v2871
      %v3729 = vunpack.c.l.b16 %v2872
      %v3730 = vunpack.c.h.b16 %v2872
      %v3731 = vunpack.c.l.b16 %v2873
      %v3732 = vunpack.c.h.b16 %v2873
      %v3733 = vunpack.c.l.b16 %v2874
      %v3734 = vunpack.c.h.b16 %v2874
      %v3735 = vunpack.c.l.b16 %v2875
      %v3736 = vunpack.c.h.b16 %v2875
      %v3737 = vunpack.c.l.b16 %v2876
      %v3738 = vunpack.c.h.b16 %v2876
      %v3739 = vunpack.c.l.b16 %v2877
      %v3740 = vunpack.c.h.b16 %v2877
      %v3741 = vunpack.c.l.b16 %v2878
      %v3742 = vunpack.c.h.b16 %v2878
      %v3743 = vunpack.c.l.b16 %v2879
      %v3744 = vunpack.c.h.b16 %v2879
      %v3745 = vunpack.c.l.b16 %v2880
      %v3746 = vunpack.c.h.b16 %v2880
      %v3747 = vunpack.c.l.b16 %v2881
      %v3748 = vunpack.c.h.b16 %v2881
      %v3749 = vunpack.c.l.b16 %v2882
      %v3750 = vunpack.c.h.b16 %v2882
      %v3751 = vunpack.c.l.b16 %v2883
      %v3752 = vunpack.c.h.b16 %v2883
      %v3753 = vunpack.c.l.b16 %v2884
      %v3754 = vunpack.c.h.b16 %v2884
      %v3755 = vunpack.c.l.b16 %v2885
      %v3756 = vunpack.c.h.b16 %v2885
      %v3757 = vunpack.c.l.b16 %v2886
      %v3758 = vunpack.c.h.b16 %v2886
      %v3759 = vunpack.c.l.b16 %v2887
      %v3760 = vunpack.c.h.b16 %v2887
      %v3761 = vunpack.c.l.b16 %v2888
      %v3762 = vunpack.c.h.b16 %v2888
      %v3763 = vunpack.c.l.b16 %v2889
      %v3764 = vunpack.c.h.b16 %v2889
      %v3765 = vunpack.c.l.b16 %v2890
      %v3766 = vunpack.c.h.b16 %v2890
      %v3767 = vunpack.c.l.b16 %v2891
      %v3768 = vunpack.c.h.b16 %v2891
      %v3769 = vunpack.c.l.b16 %v2892
      %v3770 = vunpack.c.h.b16 %v2892
      %v3771 = vunpack.c.l.b16 %v2893
      %v3772 = vunpack.c.h.b16 %v2893
      %v3773 = vunpack.c.l.b16 %v2894
      %v3774 = vunpack.c.h.b16 %v2894
      %v3775 = vunpack.c.l.b16 %v2895
      %v3776 = vunpack.c.h.b16 %v2895
      %v3777 = vunpack.c.l.b16 %v2896
      %v3778 = vunpack.c.h.b16 %v2896
      %v3779 = vunpack.c.l.b16 %v2897
      %v3780 = vunpack.c.h.b16 %v2897
      %v3781 = vunpack.c.l.b16 %v2898
      %v3782 = vunpack.c.h.b16 %v2898
      %v3783 = vunpack.c.l.b16 %v2899
      %v3784 = vunpack.c.h.b16 %v2899
      %v3785 = vunpack.c.l.b16 %v2900
      %v3786 = vunpack.c.h.b16 %v2900
      %v3787 = vunpack.c.l.b16 %v2901
      %v3788 = vunpack.c.h.b16 %v2901
      %v3789 = vpack.c.b16 %v3661, %v3657
      %v3790 = vpack.c.b16 %v3662, %v3658
      %v3791 = vpack.c.b16 %v3663, %v3659
      %v3792 = vpack.c.b16 %v3664, %v3660
      %v3793 = vpack.c.b16 %v3669, %v3665
      %v3794 = vpack.c.b16 %v3670, %v3666
      %v3795 = vpack.c.b16 %v3671, %v3667
      %v3796 = vpack.c.b16 %v3672, %v3668
      %v3797 = vpack.c.b16 %v3677, %v3673
      %v3798 = vpack.c.b16 %v3678, %v3674
      %v3799 = vpack.c.b16 %v3679, %v3675
      %v3800 = vpack.c.b16 %v3680, %v3676
      %v3801 = vpack.c.b16 %v3685, %v3681
      %v3802 = vpack.c.b16 %v3686, %v3682
      %v3803 = vpack.c.b16 %v3687, %v3683
      %v3804 = vpack.c.b16 %v3688, %v3684
      %v3805 = vpack.c.b16 %v3693, %v3689
      %v3806 = vpack.c.b16 %v3694, %v3690
      %v3807 = vpack.c.b16 %v3695, %v3691
      %v3808 = vpack.c.b16 %v3696, %v3692
      %v3809 = vpack.c.b16 %v3701, %v3697
      %v3810 = vpack.c.b16 %v3702, %v3698
      %v3811 = vpack.c.b16 %v3703, %v3699
      %v3812 = vpack.c.b16 %v3704, %v3700
      %v3813 = vpack.c.b16 %v3709, %v3705
      %v3814 = vpack.c.b16 %v3710, %v3706
      %v3815 = vpack.c.b16 %v3711, %v3707
      %v3816 = vpack.c.b16 %v3712, %v3708
      %v3817 = vpack.c.b16 %v3717, %v3713
      %v3818 = vpack.c.b16 %v3718, %v3714
      %v3819 = vpack.c.b16 %v3719, %v3715
      %v3820 = vpack.c.b16 %v3720, %v3716
      %v3821 = vpack.c.b16 %v3725, %v3721
      %v3822 = vpack.c.b16 %v3726, %v3722
      %v3823 = vpack.c.b16 %v3727, %v3723
      %v3824 = vpack.c.b16 %v3728, %v3724
      %v3825 = vpack.c.b16 %v3733, %v3729
      %v3826 = vpack.c.b16 %v3734, %v3730
      %v3827 = vpack.c.b16 %v3735, %v3731
      %v3828 = vpack.c.b16 %v3736, %v3732
      %v3829 = vpack.c.b16 %v3741, %v3737
      %v3830 = vpack.c.b16 %v3742, %v3738
      %v3831 = vpack.c.b16 %v3743, %v3739
      %v3832 = vpack.c.b16 %v3744, %v3740
      %v3833 = vpack.c.b16 %v3749, %v3745
      %v3834 = vpack.c.b16 %v3750, %v3746
      %v3835 = vpack.c.b16 %v3751, %v3747
      %v3836 = vpack.c.b16 %v3752, %v3748
      %v3837 = vpack.c.b16 %v3757, %v3753
      %v3838 = vpack.c.b16 %v3758, %v3754
      %v3839 = vpack.c.b16 %v3759, %v3755
      %v3840 = vpack.c.b16 %v3760, %v3756
      %v3841 = vpack.c.b16 %v3765, %v3761
      %v3842 = vpack.c.b16 %v3766, %v3762
      %v3843 = vpack.c.b16 %v3767, %v3763
      %v3844 = vpack.c.b16 %v3768, %v3764
      %v3845 = vpack.c.b16 %v3773, %v3769
      %v3846 = vpack.c.b16 %v3774, %v3770
      %v3847 = vpack.c.b16 %v3775, %v3771
      %v3848 = vpack.c.b16 %v3776, %v3772
      %v3849 = vpack.c.b16 %v3781, %v3777
      %v3850 = vpack.c.b16 %v3782, %v3778
      %v3851 = vpack.c.b16 %v3783, %v3779
      %v3852 = vpack.c.b16 %v3784, %v3780
      %v3853 = vpack.c.b16 %v3785, %v3785
      %v3854 = vpack.c.b16 %v3786, %v3786
      %v3855 = vpack.c.b16 %v3787, %v3787
      %v3856 = vpack.c.b16 %v3788, %v3788
      %vm3908 = vcmask 777216
      %v3910 = vsel %vm3908, %v3792, 0
      %v3913 = vsel %vm3908, %v3796, 0
      %v3916 = vsel %vm3908, %v3800, 0
      %v3919 = vsel %vm3908, %v3804, 0
      %v3922 = vsel %vm3908, %v3808, 0
      %v3925 = vsel %vm3908, %v3812, 0
      %v3928 = vsel %vm3908, %v3816, 0
      %v3931 = vsel %vm3908, %v3820, 0
      %v3934 = vsel %vm3908, %v3824, 0
      %v3937 = vsel %vm3908, %v3828, 0
      %v3940 = vsel %vm3908, %v3832, 0
      %v3943 = vsel %vm3908, %v3836, 0
      %v3946 = vsel %vm3908, %v3840, 0
      %v3949 = vsel %vm3908, %v3844, 0
      %v3952 = vsel %vm3908, %v3848, 0
      %v3955 = vsel %vm3908, %v3852, 0
      %v3958 = vsel %vm3908, %v3856, 0
      %vm3960 = vcmask 1047552
      %v3961 = vsel %vm1089, 4294967295, 65535
      %v3962 = vsel %vm3960, %v3961, 0
      %v3964 = vand.u32 %v3589, %v3962
      %v3967 = vand.u32 %v3590, %v3962
      %3969 = vmatpush.bf16.msra.mxu0 %v3545
      %3970 = vmatpush.bf16.msra.mxu0 %v3543
      %3971 = vmatpush.bf16.msra.mxu0 %v3541
      %3972 = vmatpush.bf16.msra.mxu0 %v3539
      %3973 = vmatpush.bf16.msra.mxu0 %v3537
      %3974 = vmatpush.bf16.msra.mxu0 %v3535
      %3975 = vmatpush.bf16.msra.mxu0 %v3533
      %3976 = vmatpush.bf16.msra.mxu0 %v3531
      %3977 = vmatmul.bf16.gmra.mxu0 %v3789
      %v3978 = vpop.f32.mrf.mxu0
      %v3979 = vadd.f32 0.0, %v3978
      %v3980 = vpop.f32.mrf.mxu0
      %v3981 = vadd.f32 0.0, %v3980
      %3982 = vmatmul.bf16.gmra.mxu0 %v3793
      %v3983 = vpop.f32.mrf.mxu0
      %v3984 = vadd.f32 0.0, %v3983
      %v3985 = vpop.f32.mrf.mxu0
      %v3986 = vadd.f32 0.0, %v3985
      %3987 = vmatmul.bf16.gmra.mxu0 %v3797
      %v3988 = vpop.f32.mrf.mxu0
      %v3989 = vadd.f32 0.0, %v3988
      %v3990 = vpop.f32.mrf.mxu0
      %v3991 = vadd.f32 0.0, %v3990
      %3992 = vmatmul.bf16.gmra.mxu0 %v3801
      %v3993 = vpop.f32.mrf.mxu0
      %v3994 = vadd.f32 0.0, %v3993
      %v3995 = vpop.f32.mrf.mxu0
      %v3996 = vadd.f32 0.0, %v3995
      %3997 = vmatmul.bf16.gmra.mxu0 %v3805
      %v3998 = vpop.f32.mrf.mxu0
      %v3999 = vadd.f32 0.0, %v3998
      %v4000 = vpop.f32.mrf.mxu0
      %v4001 = vadd.f32 0.0, %v4000
      %4002 = vmatmul.bf16.gmra.mxu0 %v3809
      %v4003 = vpop.f32.mrf.mxu0
      %v4004 = vadd.f32 0.0, %v4003
      %v4005 = vpop.f32.mrf.mxu0
      %v4006 = vadd.f32 0.0, %v4005
      %4007 = vmatmul.bf16.gmra.mxu0 %v3813
      %v4008 = vpop.f32.mrf.mxu0
      %v4009 = vadd.f32 0.0, %v4008
      %v4010 = vpop.f32.mrf.mxu0
      %v4011 = vadd.f32 0.0, %v4010
      %4012 = vmatmul.bf16.gmra.mxu0 %v3817
      %v4013 = vpop.f32.mrf.mxu0
      %v4014 = vadd.f32 0.0, %v4013
      %v4015 = vpop.f32.mrf.mxu0
      %v4016 = vadd.f32 0.0, %v4015
      %4017 = vmatmul.bf16.gmra.mxu0 %v3821
      %v4018 = vpop.f32.mrf.mxu0
      %v4019 = vadd.f32 0.0, %v4018
      %v4020 = vpop.f32.mrf.mxu0
      %v4021 = vadd.f32 0.0, %v4020
      %4022 = vmatmul.bf16.gmra.mxu0 %v3825
      %v4023 = vpop.f32.mrf.mxu0
      %v4024 = vadd.f32 0.0, %v4023
      %v4025 = vpop.f32.mrf.mxu0
      %v4026 = vadd.f32 0.0, %v4025
      %4027 = vmatmul.bf16.gmra.mxu0 %v3829
      %v4028 = vpop.f32.mrf.mxu0
      %v4029 = vadd.f32 0.0, %v4028
      %v4030 = vpop.f32.mrf.mxu0
      %v4031 = vadd.f32 0.0, %v4030
      %4032 = vmatmul.bf16.gmra.mxu0 %v3833
      %v4033 = vpop.f32.mrf.mxu0
      %v4034 = vadd.f32 0.0, %v4033
      %v4035 = vpop.f32.mrf.mxu0
      %v4036 = vadd.f32 0.0, %v4035
      %4037 = vmatmul.bf16.gmra.mxu0 %v3837
      %v4038 = vpop.f32.mrf.mxu0
      %v4039 = vadd.f32 0.0, %v4038
      %v4040 = vpop.f32.mrf.mxu0
      %v4041 = vadd.f32 0.0, %v4040
      %4042 = vmatmul.bf16.gmra.mxu0 %v3841
      %v4043 = vpop.f32.mrf.mxu0
      %v4044 = vadd.f32 0.0, %v4043
      %v4045 = vpop.f32.mrf.mxu0
      %v4046 = vadd.f32 0.0, %v4045
      %4047 = vmatmul.bf16.gmra.mxu0 %v3845
      %v4048 = vpop.f32.mrf.mxu0
      %v4049 = vadd.f32 0.0, %v4048
      %v4050 = vpop.f32.mrf.mxu0
      %v4051 = vadd.f32 0.0, %v4050
      %4052 = vmatmul.bf16.gmra.mxu0 %v3849
      %v4053 = vpop.f32.mrf.mxu0
      %v4054 = vadd.f32 0.0, %v4053
      %v4055 = vpop.f32.mrf.mxu0
      %v4056 = vadd.f32 0.0, %v4055
      %4057 = vmatmul.bf16.gmra.mxu0 %v3853
      %v4058 = vpop.f32.mrf.mxu0
      %v4059 = vadd.f32 0.0, %v4058
      %v4060 = vpop.f32.mrf.mxu0
      %4061 = vdwg.mxu0
      %4062 = vmatpush.bf16.msra.mxu0 %v3561
      %4063 = vmatpush.bf16.msra.mxu0 %v3559
      %4064 = vmatpush.bf16.msra.mxu0 %v3557
      %4065 = vmatpush.bf16.msra.mxu0 %v3555
      %4066 = vmatpush.bf16.msra.mxu0 %v3553
      %4067 = vmatpush.bf16.msra.mxu0 %v3551
      %4068 = vmatpush.bf16.msra.mxu0 %v3549
      %4069 = vmatpush.bf16.msra.mxu0 %v3547
      %4070 = vmatmul.bf16.gmra.mxu0 %v3790
      %v4071 = vpop.f32.mrf.mxu0
      %v4072 = vadd.f32 %v3979, %v4071
      %v4073 = vpop.f32.mrf.mxu0
      %v4074 = vadd.f32 %v3981, %v4073
      %4075 = vmatmul.bf16.gmra.mxu0 %v3794
      %v4076 = vpop.f32.mrf.mxu0
      %v4077 = vadd.f32 %v3984, %v4076
      %v4078 = vpop.f32.mrf.mxu0
      %v4079 = vadd.f32 %v3986, %v4078
      %4080 = vmatmul.bf16.gmra.mxu0 %v3798
      %v4081 = vpop.f32.mrf.mxu0
      %v4082 = vadd.f32 %v3989, %v4081
      %v4083 = vpop.f32.mrf.mxu0
      %v4084 = vadd.f32 %v3991, %v4083
      %4085 = vmatmul.bf16.gmra.mxu0 %v3802
      %v4086 = vpop.f32.mrf.mxu0
      %v4087 = vadd.f32 %v3994, %v4086
      %v4088 = vpop.f32.mrf.mxu0
      %v4089 = vadd.f32 %v3996, %v4088
      %4090 = vmatmul.bf16.gmra.mxu0 %v3806
      %v4091 = vpop.f32.mrf.mxu0
      %v4092 = vadd.f32 %v3999, %v4091
      %v4093 = vpop.f32.mrf.mxu0
      %v4094 = vadd.f32 %v4001, %v4093
      %4095 = vmatmul.bf16.gmra.mxu0 %v3810
      %v4096 = vpop.f32.mrf.mxu0
      %v4097 = vadd.f32 %v4004, %v4096
      %v4098 = vpop.f32.mrf.mxu0
      %v4099 = vadd.f32 %v4006, %v4098
      %4100 = vmatmul.bf16.gmra.mxu0 %v3814
      %v4101 = vpop.f32.mrf.mxu0
      %v4102 = vadd.f32 %v4009, %v4101
      %v4103 = vpop.f32.mrf.mxu0
      %v4104 = vadd.f32 %v4011, %v4103
      %4105 = vmatmul.bf16.gmra.mxu0 %v3818
      %v4106 = vpop.f32.mrf.mxu0
      %v4107 = vadd.f32 %v4014, %v4106
      %v4108 = vpop.f32.mrf.mxu0
      %v4109 = vadd.f32 %v4016, %v4108
      %4110 = vmatmul.bf16.gmra.mxu0 %v3822
      %v4111 = vpop.f32.mrf.mxu0
      %v4112 = vadd.f32 %v4019, %v4111
      %v4113 = vpop.f32.mrf.mxu0
      %v4114 = vadd.f32 %v4021, %v4113
      %4115 = vmatmul.bf16.gmra.mxu0 %v3826
      %v4116 = vpop.f32.mrf.mxu0
      %v4117 = vadd.f32 %v4024, %v4116
      %v4118 = vpop.f32.mrf.mxu0
      %v4119 = vadd.f32 %v4026, %v4118
      %4120 = vmatmul.bf16.gmra.mxu0 %v3830
      %v4121 = vpop.f32.mrf.mxu0
      %v4122 = vadd.f32 %v4029, %v4121
      %v4123 = vpop.f32.mrf.mxu0
      %v4124 = vadd.f32 %v4031, %v4123
      %4125 = vmatmul.bf16.gmra.mxu0 %v3834
      %v4126 = vpop.f32.mrf.mxu0
      %v4127 = vadd.f32 %v4034, %v4126
      %v4128 = vpop.f32.mrf.mxu0
      %v4129 = vadd.f32 %v4036, %v4128
      %4130 = vmatmul.bf16.gmra.mxu0 %v3838
      %v4131 = vpop.f32.mrf.mxu0
      %v4132 = vadd.f32 %v4039, %v4131
      %v4133 = vpop.f32.mrf.mxu0
      %v4134 = vadd.f32 %v4041, %v4133
      %4135 = vmatmul.bf16.gmra.mxu0 %v3842
      %v4136 = vpop.f32.mrf.mxu0
      %v4137 = vadd.f32 %v4044, %v4136
      %v4138 = vpop.f32.mrf.mxu0
      %v4139 = vadd.f32 %v4046, %v4138
      %4140 = vmatmul.bf16.gmra.mxu0 %v3846
      %v4141 = vpop.f32.mrf.mxu0
      %v4142 = vadd.f32 %v4049, %v4141
      %v4143 = vpop.f32.mrf.mxu0
      %v4144 = vadd.f32 %v4051, %v4143
      %4145 = vmatmul.bf16.gmra.mxu0 %v3850
      %v4146 = vpop.f32.mrf.mxu0
      %v4147 = vadd.f32 %v4054, %v4146
      %v4148 = vpop.f32.mrf.mxu0
      %v4149 = vadd.f32 %v4056, %v4148
      %4150 = vmatmul.bf16.gmra.mxu0 %v3854
      %v4151 = vpop.f32.mrf.mxu0
      %v4152 = vadd.f32 %v4059, %v4151
      %v4153 = vpop.f32.mrf.mxu0
      %4154 = vdwg.mxu0
      %4155 = vmatpush.bf16.msra.mxu0 %v3577
      %4156 = vmatpush.bf16.msra.mxu0 %v3575
      %4157 = vmatpush.bf16.msra.mxu0 %v3573
      %4158 = vmatpush.bf16.msra.mxu0 %v3571
      %4159 = vmatpush.bf16.msra.mxu0 %v3569
      %4160 = vmatpush.bf16.msra.mxu0 %v3567
      %4161 = vmatpush.bf16.msra.mxu0 %v3565
      %4162 = vmatpush.bf16.msra.mxu0 %v3563
      %4163 = vmatmul.bf16.gmra.mxu0 %v3791
      %v4164 = vpop.f32.mrf.mxu0
      %v4165 = vadd.f32 %v4072, %v4164
      %v4166 = vpop.f32.mrf.mxu0
      %v4167 = vadd.f32 %v4074, %v4166
      %4168 = vmatmul.bf16.gmra.mxu0 %v3795
      %v4169 = vpop.f32.mrf.mxu0
      %v4170 = vadd.f32 %v4077, %v4169
      %v4171 = vpop.f32.mrf.mxu0
      %v4172 = vadd.f32 %v4079, %v4171
      %4173 = vmatmul.bf16.gmra.mxu0 %v3799
      %v4174 = vpop.f32.mrf.mxu0
      %v4175 = vadd.f32 %v4082, %v4174
      %v4176 = vpop.f32.mrf.mxu0
      %v4177 = vadd.f32 %v4084, %v4176
      %4178 = vmatmul.bf16.gmra.mxu0 %v3803
      %v4179 = vpop.f32.mrf.mxu0
      %v4180 = vadd.f32 %v4087, %v4179
      %v4181 = vpop.f32.mrf.mxu0
      %v4182 = vadd.f32 %v4089, %v4181
      %4183 = vmatmul.bf16.gmra.mxu0 %v3807
      %v4184 = vpop.f32.mrf.mxu0
      %v4185 = vadd.f32 %v4092, %v4184
      %v4186 = vpop.f32.mrf.mxu0
      %v4187 = vadd.f32 %v4094, %v4186
      %4188 = vmatmul.bf16.gmra.mxu0 %v3811
      %v4189 = vpop.f32.mrf.mxu0
      %v4190 = vadd.f32 %v4097, %v4189
      %v4191 = vpop.f32.mrf.mxu0
      %v4192 = vadd.f32 %v4099, %v4191
      %4193 = vmatmul.bf16.gmra.mxu0 %v3815
      %v4194 = vpop.f32.mrf.mxu0
      %v4195 = vadd.f32 %v4102, %v4194
      %v4196 = vpop.f32.mrf.mxu0
      %v4197 = vadd.f32 %v4104, %v4196
      %4198 = vmatmul.bf16.gmra.mxu0 %v3819
      %v4199 = vpop.f32.mrf.mxu0
      %v4200 = vadd.f32 %v4107, %v4199
      %v4201 = vpop.f32.mrf.mxu0
      %v4202 = vadd.f32 %v4109, %v4201
      %4203 = vmatmul.bf16.gmra.mxu0 %v3823
      %v4204 = vpop.f32.mrf.mxu0
      %v4205 = vadd.f32 %v4112, %v4204
      %v4206 = vpop.f32.mrf.mxu0
      %v4207 = vadd.f32 %v4114, %v4206
      %4208 = vmatmul.bf16.gmra.mxu0 %v3827
      %v4209 = vpop.f32.mrf.mxu0
      %v4210 = vadd.f32 %v4117, %v4209
      %v4211 = vpop.f32.mrf.mxu0
      %v4212 = vadd.f32 %v4119, %v4211
      %4213 = vmatmul.bf16.gmra.mxu0 %v3831
      %v4214 = vpop.f32.mrf.mxu0
      %v4215 = vadd.f32 %v4122, %v4214
      %v4216 = vpop.f32.mrf.mxu0
      %v4217 = vadd.f32 %v4124, %v4216
      %4218 = vmatmul.bf16.gmra.mxu0 %v3835
      %v4219 = vpop.f32.mrf.mxu0
      %v4220 = vadd.f32 %v4127, %v4219
      %v4221 = vpop.f32.mrf.mxu0
      %v4222 = vadd.f32 %v4129, %v4221
      %4223 = vmatmul.bf16.gmra.mxu0 %v3839
      %v4224 = vpop.f32.mrf.mxu0
      %v4225 = vadd.f32 %v4132, %v4224
      %v4226 = vpop.f32.mrf.mxu0
      %v4227 = vadd.f32 %v4134, %v4226
      %4228 = vmatmul.bf16.gmra.mxu0 %v3843
      %v4229 = vpop.f32.mrf.mxu0
      %v4230 = vadd.f32 %v4137, %v4229
      %v4231 = vpop.f32.mrf.mxu0
      %v4232 = vadd.f32 %v4139, %v4231
      %4233 = vmatmul.bf16.gmra.mxu0 %v3847
      %v4234 = vpop.f32.mrf.mxu0
      %v4235 = vadd.f32 %v4142, %v4234
      %v4236 = vpop.f32.mrf.mxu0
      %v4237 = vadd.f32 %v4144, %v4236
      %4238 = vmatmul.bf16.gmra.mxu0 %v3851
      %v4239 = vpop.f32.mrf.mxu0
      %v4240 = vadd.f32 %v4147, %v4239
      %v4241 = vpop.f32.mrf.mxu0
      %v4242 = vadd.f32 %v4149, %v4241
      %4243 = vmatmul.bf16.gmra.mxu0 %v3855
      %v4244 = vpop.f32.mrf.mxu0
      %v4245 = vadd.f32 %v4152, %v4244
      %v4246 = vpop.f32.mrf.mxu0
      %4247 = vdwg.mxu0
      %4248 = vmatpush.bf16.msra.mxu0 0
      %4249 = vmatpush.bf16.msra.mxu0 0
      %4250 = vmatpush.bf16.msra.mxu0 %v3964
      %4251 = vmatpush.bf16.msra.mxu0 %v3587
      %4252 = vmatpush.bf16.msra.mxu0 %v3585
      %4253 = vmatpush.bf16.msra.mxu0 %v3583
      %4254 = vmatpush.bf16.msra.mxu0 %v3581
      %4255 = vmatpush.bf16.msra.mxu0 %v3579
      %4256 = vmatmul.bf16.gmra.mxu0 %v3910
      %v4257 = vpop.f32.mrf.mxu0
      %v4258 = vadd.f32 %v4165, %v4257
      %v4259 = vpop.f32.mrf.mxu0
      %v4260 = vadd.f32 %v4167, %v4259
      %4261 = vmatmul.bf16.gmra.mxu0 %v3913
      %v4262 = vpop.f32.mrf.mxu0
      %v4263 = vadd.f32 %v4170, %v4262
      %v4264 = vpop.f32.mrf.mxu0
      %v4265 = vadd.f32 %v4172, %v4264
      %4266 = vmatmul.bf16.gmra.mxu0 %v3916
      %v4267 = vpop.f32.mrf.mxu0
      %v4268 = vadd.f32 %v4175, %v4267
      %v4269 = vpop.f32.mrf.mxu0
      %v4270 = vadd.f32 %v4177, %v4269
      %4271 = vmatmul.bf16.gmra.mxu0 %v3919
      %v4272 = vpop.f32.mrf.mxu0
      %v4273 = vadd.f32 %v4180, %v4272
      %v4274 = vpop.f32.mrf.mxu0
      %v4275 = vadd.f32 %v4182, %v4274
      %4276 = vmatmul.bf16.gmra.mxu0 %v3922
      %v4277 = vpop.f32.mrf.mxu0
      %v4278 = vadd.f32 %v4185, %v4277
      %v4279 = vpop.f32.mrf.mxu0
      %v4280 = vadd.f32 %v4187, %v4279
      %4281 = vmatmul.bf16.gmra.mxu0 %v3925
      %v4282 = vpop.f32.mrf.mxu0
      %v4283 = vadd.f32 %v4190, %v4282
      %v4284 = vpop.f32.mrf.mxu0
      %v4285 = vadd.f32 %v4192, %v4284
      %4286 = vmatmul.bf16.gmra.mxu0 %v3928
      %v4287 = vpop.f32.mrf.mxu0
      %v4288 = vadd.f32 %v4195, %v4287
      %v4289 = vpop.f32.mrf.mxu0
      %v4290 = vadd.f32 %v4197, %v4289
      %4291 = vmatmul.bf16.gmra.mxu0 %v3931
      %v4292 = vpop.f32.mrf.mxu0
      %v4293 = vadd.f32 %v4200, %v4292
      %v4294 = vpop.f32.mrf.mxu0
      %v4295 = vadd.f32 %v4202, %v4294
      %4296 = vmatmul.bf16.gmra.mxu0 %v3934
      %v4297 = vpop.f32.mrf.mxu0
      %v4298 = vadd.f32 %v4205, %v4297
      %v4299 = vpop.f32.mrf.mxu0
      %v4300 = vadd.f32 %v4207, %v4299
      %4301 = vmatmul.bf16.gmra.mxu0 %v3937
      %v4302 = vpop.f32.mrf.mxu0
      %v4303 = vadd.f32 %v4210, %v4302
      %v4304 = vpop.f32.mrf.mxu0
      %v4305 = vadd.f32 %v4212, %v4304
      %4306 = vmatmul.bf16.gmra.mxu0 %v3940
      %v4307 = vpop.f32.mrf.mxu0
      %v4308 = vadd.f32 %v4215, %v4307
      %v4309 = vpop.f32.mrf.mxu0
      %v4310 = vadd.f32 %v4217, %v4309
      %4311 = vmatmul.bf16.gmra.mxu0 %v3943
      %v4312 = vpop.f32.mrf.mxu0
      %v4313 = vadd.f32 %v4220, %v4312
      %v4314 = vpop.f32.mrf.mxu0
      %v4315 = vadd.f32 %v4222, %v4314
      %4316 = vmatmul.bf16.gmra.mxu0 %v3946
      %v4317 = vpop.f32.mrf.mxu0
      %v4318 = vadd.f32 %v4225, %v4317
      %v4319 = vpop.f32.mrf.mxu0
      %v4320 = vadd.f32 %v4227, %v4319
      %4321 = vmatmul.bf16.gmra.mxu0 %v3949
      %v4322 = vpop.f32.mrf.mxu0
      %v4323 = vadd.f32 %v4230, %v4322
      %v4324 = vpop.f32.mrf.mxu0
      %v4325 = vadd.f32 %v4232, %v4324
      %4326 = vmatmul.bf16.gmra.mxu0 %v3952
      %v4327 = vpop.f32.mrf.mxu0
      %v4328 = vadd.f32 %v4235, %v4327
      %v4329 = vpop.f32.mrf.mxu0
      %v4330 = vadd.f32 %v4237, %v4329
      %4331 = vmatmul.bf16.gmra.mxu0 %v3955
      %v4332 = vpop.f32.mrf.mxu0
      %v4333 = vadd.f32 %v4240, %v4332
      %v4334 = vpop.f32.mrf.mxu0
      %v4335 = vadd.f32 %v4242, %v4334
      %4336 = vmatmul.bf16.gmra.mxu0 %v3958
      %v4337 = vpop.f32.mrf.mxu0
      %v4338 = vadd.f32 %v4245, %v4337
      %v4339 = vpop.f32.mrf.mxu0
      %4340 = vdwg.mxu0
      %4341 = vmatpush.bf16.msra.mxu0 %v3546
      %4342 = vmatpush.bf16.msra.mxu0 %v3544
      %4343 = vmatpush.bf16.msra.mxu0 %v3542
      %4344 = vmatpush.bf16.msra.mxu0 %v3540
      %4345 = vmatpush.bf16.msra.mxu0 %v3538
      %4346 = vmatpush.bf16.msra.mxu0 %v3536
      %4347 = vmatpush.bf16.msra.mxu0 %v3534
      %4348 = vmatpush.bf16.msra.mxu0 %v3532
      %4349 = vmatmul.bf16.gmra.mxu0 %v3789
      %v4350 = vpop.f32.mrf.mxu0
      %v4351 = vadd.f32 0.0, %v4350
      %v4352 = vpop.f32.mrf.mxu0
      %v4353 = vadd.f32 0.0, %v4352
      %4354 = vmatmul.bf16.gmra.mxu0 %v3793
      %v4355 = vpop.f32.mrf.mxu0
      %v4356 = vadd.f32 0.0, %v4355
      %v4357 = vpop.f32.mrf.mxu0
      %v4358 = vadd.f32 0.0, %v4357
      %4359 = vmatmul.bf16.gmra.mxu0 %v3797
      %v4360 = vpop.f32.mrf.mxu0
      %v4361 = vadd.f32 0.0, %v4360
      %v4362 = vpop.f32.mrf.mxu0
      %v4363 = vadd.f32 0.0, %v4362
      %4364 = vmatmul.bf16.gmra.mxu0 %v3801
      %v4365 = vpop.f32.mrf.mxu0
      %v4366 = vadd.f32 0.0, %v4365
      %v4367 = vpop.f32.mrf.mxu0
      %v4368 = vadd.f32 0.0, %v4367
      %4369 = vmatmul.bf16.gmra.mxu0 %v3805
      %v4370 = vpop.f32.mrf.mxu0
      %v4371 = vadd.f32 0.0, %v4370
      %v4372 = vpop.f32.mrf.mxu0
      %v4373 = vadd.f32 0.0, %v4372
      %4374 = vmatmul.bf16.gmra.mxu0 %v3809
      %v4375 = vpop.f32.mrf.mxu0
      %v4376 = vadd.f32 0.0, %v4375
      %v4377 = vpop.f32.mrf.mxu0
      %v4378 = vadd.f32 0.0, %v4377
      %4379 = vmatmul.bf16.gmra.mxu0 %v3813
      %v4380 = vpop.f32.mrf.mxu0
      %v4381 = vadd.f32 0.0, %v4380
      %v4382 = vpop.f32.mrf.mxu0
      %v4383 = vadd.f32 0.0, %v4382
      %4384 = vmatmul.bf16.gmra.mxu0 %v3817
      %v4385 = vpop.f32.mrf.mxu0
      %v4386 = vadd.f32 0.0, %v4385
      %v4387 = vpop.f32.mrf.mxu0
      %v4388 = vadd.f32 0.0, %v4387
      %4389 = vmatmul.bf16.gmra.mxu0 %v3821
      %v4390 = vpop.f32.mrf.mxu0
      %v4391 = vadd.f32 0.0, %v4390
      %v4392 = vpop.f32.mrf.mxu0
      %v4393 = vadd.f32 0.0, %v4392
      %4394 = vmatmul.bf16.gmra.mxu0 %v3825
      %v4395 = vpop.f32.mrf.mxu0
      %v4396 = vadd.f32 0.0, %v4395
      %v4397 = vpop.f32.mrf.mxu0
      %v4398 = vadd.f32 0.0, %v4397
      %4399 = vmatmul.bf16.gmra.mxu0 %v3829
      %v4400 = vpop.f32.mrf.mxu0
      %v4401 = vadd.f32 0.0, %v4400
      %v4402 = vpop.f32.mrf.mxu0
      %v4403 = vadd.f32 0.0, %v4402
      %4404 = vmatmul.bf16.gmra.mxu0 %v3833
      %v4405 = vpop.f32.mrf.mxu0
      %v4406 = vadd.f32 0.0, %v4405
      %v4407 = vpop.f32.mrf.mxu0
      %v4408 = vadd.f32 0.0, %v4407
      %4409 = vmatmul.bf16.gmra.mxu0 %v3837
      %v4410 = vpop.f32.mrf.mxu0
      %v4411 = vadd.f32 0.0, %v4410
      %v4412 = vpop.f32.mrf.mxu0
      %v4413 = vadd.f32 0.0, %v4412
      %4414 = vmatmul.bf16.gmra.mxu0 %v3841
      %v4415 = vpop.f32.mrf.mxu0
      %v4416 = vadd.f32 0.0, %v4415
      %v4417 = vpop.f32.mrf.mxu0
      %v4418 = vadd.f32 0.0, %v4417
      %4419 = vmatmul.bf16.gmra.mxu0 %v3845
      %v4420 = vpop.f32.mrf.mxu0
      %v4421 = vadd.f32 0.0, %v4420
      %v4422 = vpop.f32.mrf.mxu0
      %v4423 = vadd.f32 0.0, %v4422
      %4424 = vmatmul.bf16.gmra.mxu0 %v3849
      %v4425 = vpop.f32.mrf.mxu0
      %v4426 = vadd.f32 0.0, %v4425
      %v4427 = vpop.f32.mrf.mxu0
      %v4428 = vadd.f32 0.0, %v4427
      %4429 = vmatmul.bf16.gmra.mxu0 %v3853
      %v4430 = vpop.f32.mrf.mxu0
      %v4431 = vadd.f32 0.0, %v4430
      %v4432 = vpop.f32.mrf.mxu0
      %4433 = vdwg.mxu0
      %4434 = vmatpush.bf16.msra.mxu0 %v3562
      %4435 = vmatpush.bf16.msra.mxu0 %v3560
      %4436 = vmatpush.bf16.msra.mxu0 %v3558
      %4437 = vmatpush.bf16.msra.mxu0 %v3556
      %4438 = vmatpush.bf16.msra.mxu0 %v3554
      %4439 = vmatpush.bf16.msra.mxu0 %v3552
      %4440 = vmatpush.bf16.msra.mxu0 %v3550
      %4441 = vmatpush.bf16.msra.mxu0 %v3548
      %4442 = vmatmul.bf16.gmra.mxu0 %v3790
      %v4443 = vpop.f32.mrf.mxu0
      %v4444 = vadd.f32 %v4351, %v4443
      %v4445 = vpop.f32.mrf.mxu0
      %v4446 = vadd.f32 %v4353, %v4445
      %4447 = vmatmul.bf16.gmra.mxu0 %v3794
      %v4448 = vpop.f32.mrf.mxu0
      %v4449 = vadd.f32 %v4356, %v4448
      %v4450 = vpop.f32.mrf.mxu0
      %v4451 = vadd.f32 %v4358, %v4450
      %4452 = vmatmul.bf16.gmra.mxu0 %v3798
      %v4453 = vpop.f32.mrf.mxu0
      %v4454 = vadd.f32 %v4361, %v4453
      %v4455 = vpop.f32.mrf.mxu0
      %v4456 = vadd.f32 %v4363, %v4455
      %4457 = vmatmul.bf16.gmra.mxu0 %v3802
      %v4458 = vpop.f32.mrf.mxu0
      %v4459 = vadd.f32 %v4366, %v4458
      %v4460 = vpop.f32.mrf.mxu0
      %v4461 = vadd.f32 %v4368, %v4460
      %4462 = vmatmul.bf16.gmra.mxu0 %v3806
      %v4463 = vpop.f32.mrf.mxu0
      %v4464 = vadd.f32 %v4371, %v4463
      %v4465 = vpop.f32.mrf.mxu0
      %v4466 = vadd.f32 %v4373, %v4465
      %4467 = vmatmul.bf16.gmra.mxu0 %v3810
      %v4468 = vpop.f32.mrf.mxu0
      %v4469 = vadd.f32 %v4376, %v4468
      %v4470 = vpop.f32.mrf.mxu0
      %v4471 = vadd.f32 %v4378, %v4470
      %4472 = vmatmul.bf16.gmra.mxu0 %v3814
      %v4473 = vpop.f32.mrf.mxu0
      %v4474 = vadd.f32 %v4381, %v4473
      %v4475 = vpop.f32.mrf.mxu0
      %v4476 = vadd.f32 %v4383, %v4475
      %4477 = vmatmul.bf16.gmra.mxu0 %v3818
      %v4478 = vpop.f32.mrf.mxu0
      %v4479 = vadd.f32 %v4386, %v4478
      %v4480 = vpop.f32.mrf.mxu0
      %v4481 = vadd.f32 %v4388, %v4480
      %4482 = vmatmul.bf16.gmra.mxu0 %v3822
      %v4483 = vpop.f32.mrf.mxu0
      %v4484 = vadd.f32 %v4391, %v4483
      %v4485 = vpop.f32.mrf.mxu0
      %v4486 = vadd.f32 %v4393, %v4485
      %4487 = vmatmul.bf16.gmra.mxu0 %v3826
      %v4488 = vpop.f32.mrf.mxu0
      %v4489 = vadd.f32 %v4396, %v4488
      %v4490 = vpop.f32.mrf.mxu0
      %v4491 = vadd.f32 %v4398, %v4490
      %4492 = vmatmul.bf16.gmra.mxu0 %v3830
      %v4493 = vpop.f32.mrf.mxu0
      %v4494 = vadd.f32 %v4401, %v4493
      %v4495 = vpop.f32.mrf.mxu0
      %v4496 = vadd.f32 %v4403, %v4495
      %4497 = vmatmul.bf16.gmra.mxu0 %v3834
      %v4498 = vpop.f32.mrf.mxu0
      %v4499 = vadd.f32 %v4406, %v4498
      %v4500 = vpop.f32.mrf.mxu0
      %v4501 = vadd.f32 %v4408, %v4500
      %4502 = vmatmul.bf16.gmra.mxu0 %v3838
      %v4503 = vpop.f32.mrf.mxu0
      %v4504 = vadd.f32 %v4411, %v4503
      %v4505 = vpop.f32.mrf.mxu0
      %v4506 = vadd.f32 %v4413, %v4505
      %4507 = vmatmul.bf16.gmra.mxu0 %v3842
      %v4508 = vpop.f32.mrf.mxu0
      %v4509 = vadd.f32 %v4416, %v4508
      %v4510 = vpop.f32.mrf.mxu0
      %v4511 = vadd.f32 %v4418, %v4510
      %4512 = vmatmul.bf16.gmra.mxu0 %v3846
      %v4513 = vpop.f32.mrf.mxu0
      %v4514 = vadd.f32 %v4421, %v4513
      %v4515 = vpop.f32.mrf.mxu0
      %v4516 = vadd.f32 %v4423, %v4515
      %4517 = vmatmul.bf16.gmra.mxu0 %v3850
      %v4518 = vpop.f32.mrf.mxu0
      %v4519 = vadd.f32 %v4426, %v4518
      %v4520 = vpop.f32.mrf.mxu0
      %v4521 = vadd.f32 %v4428, %v4520
      %4522 = vmatmul.bf16.gmra.mxu0 %v3854
      %v4523 = vpop.f32.mrf.mxu0
      %v4524 = vadd.f32 %v4431, %v4523
      %v4525 = vpop.f32.mrf.mxu0
      %4526 = vdwg.mxu0
      %4527 = vmatpush.bf16.msra.mxu0 %v3578
      %4528 = vmatpush.bf16.msra.mxu0 %v3576
      %4529 = vmatpush.bf16.msra.mxu0 %v3574
      %4530 = vmatpush.bf16.msra.mxu0 %v3572
      %4531 = vmatpush.bf16.msra.mxu0 %v3570
      %4532 = vmatpush.bf16.msra.mxu0 %v3568
      %4533 = vmatpush.bf16.msra.mxu0 %v3566
      %4534 = vmatpush.bf16.msra.mxu0 %v3564
      %4535 = vmatmul.bf16.gmra.mxu0 %v3791
      %v4536 = vpop.f32.mrf.mxu0
      %v4537 = vadd.f32 %v4444, %v4536
      %v4538 = vpop.f32.mrf.mxu0
      %v4539 = vadd.f32 %v4446, %v4538
      %4540 = vmatmul.bf16.gmra.mxu0 %v3795
      %v4541 = vpop.f32.mrf.mxu0
      %v4542 = vadd.f32 %v4449, %v4541
      %v4543 = vpop.f32.mrf.mxu0
      %v4544 = vadd.f32 %v4451, %v4543
      %4545 = vmatmul.bf16.gmra.mxu0 %v3799
      %v4546 = vpop.f32.mrf.mxu0
      %v4547 = vadd.f32 %v4454, %v4546
      %v4548 = vpop.f32.mrf.mxu0
      %v4549 = vadd.f32 %v4456, %v4548
      %4550 = vmatmul.bf16.gmra.mxu0 %v3803
      %v4551 = vpop.f32.mrf.mxu0
      %v4552 = vadd.f32 %v4459, %v4551
      %v4553 = vpop.f32.mrf.mxu0
      %v4554 = vadd.f32 %v4461, %v4553
      %4555 = vmatmul.bf16.gmra.mxu0 %v3807
      %v4556 = vpop.f32.mrf.mxu0
      %v4557 = vadd.f32 %v4464, %v4556
      %v4558 = vpop.f32.mrf.mxu0
      %v4559 = vadd.f32 %v4466, %v4558
      %4560 = vmatmul.bf16.gmra.mxu0 %v3811
      %v4561 = vpop.f32.mrf.mxu0
      %v4562 = vadd.f32 %v4469, %v4561
      %v4563 = vpop.f32.mrf.mxu0
      %v4564 = vadd.f32 %v4471, %v4563
      %4565 = vmatmul.bf16.gmra.mxu0 %v3815
      %v4566 = vpop.f32.mrf.mxu0
      %v4567 = vadd.f32 %v4474, %v4566
      %v4568 = vpop.f32.mrf.mxu0
      %v4569 = vadd.f32 %v4476, %v4568
      %4570 = vmatmul.bf16.gmra.mxu0 %v3819
      %v4571 = vpop.f32.mrf.mxu0
      %v4572 = vadd.f32 %v4479, %v4571
      %v4573 = vpop.f32.mrf.mxu0
      %v4574 = vadd.f32 %v4481, %v4573
      %4575 = vmatmul.bf16.gmra.mxu0 %v3823
      %v4576 = vpop.f32.mrf.mxu0
      %v4577 = vadd.f32 %v4484, %v4576
      %v4578 = vpop.f32.mrf.mxu0
      %v4579 = vadd.f32 %v4486, %v4578
      %4580 = vmatmul.bf16.gmra.mxu0 %v3827
      %v4581 = vpop.f32.mrf.mxu0
      %v4582 = vadd.f32 %v4489, %v4581
      %v4583 = vpop.f32.mrf.mxu0
      %v4584 = vadd.f32 %v4491, %v4583
      %4585 = vmatmul.bf16.gmra.mxu0 %v3831
      %v4586 = vpop.f32.mrf.mxu0
      %v4587 = vadd.f32 %v4494, %v4586
      %v4588 = vpop.f32.mrf.mxu0
      %v4589 = vadd.f32 %v4496, %v4588
      %4590 = vmatmul.bf16.gmra.mxu0 %v3835
      %v4591 = vpop.f32.mrf.mxu0
      %v4592 = vadd.f32 %v4499, %v4591
      %v4593 = vpop.f32.mrf.mxu0
      %v4594 = vadd.f32 %v4501, %v4593
      %4595 = vmatmul.bf16.gmra.mxu0 %v3839
      %v4596 = vpop.f32.mrf.mxu0
      %v4597 = vadd.f32 %v4504, %v4596
      %v4598 = vpop.f32.mrf.mxu0
      %v4599 = vadd.f32 %v4506, %v4598
      %4600 = vmatmul.bf16.gmra.mxu0 %v3843
      %v4601 = vpop.f32.mrf.mxu0
      %v4602 = vadd.f32 %v4509, %v4601
      %v4603 = vpop.f32.mrf.mxu0
      %v4604 = vadd.f32 %v4511, %v4603
      %4605 = vmatmul.bf16.gmra.mxu0 %v3847
      %v4606 = vpop.f32.mrf.mxu0
      %v4607 = vadd.f32 %v4514, %v4606
      %v4608 = vpop.f32.mrf.mxu0
      %v4609 = vadd.f32 %v4516, %v4608
      %4610 = vmatmul.bf16.gmra.mxu0 %v3851
      %v4611 = vpop.f32.mrf.mxu0
      %v4612 = vadd.f32 %v4519, %v4611
      %v4613 = vpop.f32.mrf.mxu0
      %v4614 = vadd.f32 %v4521, %v4613
      %4615 = vmatmul.bf16.gmra.mxu0 %v3855
      %v4616 = vpop.f32.mrf.mxu0
      %v4617 = vadd.f32 %v4524, %v4616
      %v4618 = vpop.f32.mrf.mxu0
      %4619 = vdwg.mxu0
      %4620 = vmatpush.bf16.msra.mxu0 0
      %4621 = vmatpush.bf16.msra.mxu0 0
      %4622 = vmatpush.bf16.msra.mxu0 %v3967
      %4623 = vmatpush.bf16.msra.mxu0 %v3588
      %4624 = vmatpush.bf16.msra.mxu0 %v3586
      %4625 = vmatpush.bf16.msra.mxu0 %v3584
      %4626 = vmatpush.bf16.msra.mxu0 %v3582
      %4627 = vmatpush.bf16.msra.mxu0 %v3580
      %4628 = vmatmul.bf16.gmra.mxu0 %v3910
      %v4629 = vpop.f32.mrf.mxu0
      %v4630 = vadd.f32 %v4537, %v4629
      %v4631 = vpop.f32.mrf.mxu0
      %v4632 = vadd.f32 %v4539, %v4631
      %4633 = vmatmul.bf16.gmra.mxu0 %v3913
      %v4634 = vpop.f32.mrf.mxu0
      %v4635 = vadd.f32 %v4542, %v4634
      %v4636 = vpop.f32.mrf.mxu0
      %v4637 = vadd.f32 %v4544, %v4636
      %4638 = vmatmul.bf16.gmra.mxu0 %v3916
      %v4639 = vpop.f32.mrf.mxu0
      %v4640 = vadd.f32 %v4547, %v4639
      %v4641 = vpop.f32.mrf.mxu0
      %v4642 = vadd.f32 %v4549, %v4641
      %4643 = vmatmul.bf16.gmra.mxu0 %v3919
      %v4644 = vpop.f32.mrf.mxu0
      %v4645 = vadd.f32 %v4552, %v4644
      %v4646 = vpop.f32.mrf.mxu0
      %v4647 = vadd.f32 %v4554, %v4646
      %4648 = vmatmul.bf16.gmra.mxu0 %v3922
      %v4649 = vpop.f32.mrf.mxu0
      %v4650 = vadd.f32 %v4557, %v4649
      %v4651 = vpop.f32.mrf.mxu0
      %v4652 = vadd.f32 %v4559, %v4651
      %4653 = vmatmul.bf16.gmra.mxu0 %v3925
      %v4654 = vpop.f32.mrf.mxu0
      %v4655 = vadd.f32 %v4562, %v4654
      %v4656 = vpop.f32.mrf.mxu0
      %v4657 = vadd.f32 %v4564, %v4656
      %4658 = vmatmul.bf16.gmra.mxu0 %v3928
      %v4659 = vpop.f32.mrf.mxu0
      %v4660 = vadd.f32 %v4567, %v4659
      %v4661 = vpop.f32.mrf.mxu0
      %v4662 = vadd.f32 %v4569, %v4661
      %4663 = vmatmul.bf16.gmra.mxu0 %v3931
      %v4664 = vpop.f32.mrf.mxu0
      %v4665 = vadd.f32 %v4572, %v4664
      %v4666 = vpop.f32.mrf.mxu0
      %v4667 = vadd.f32 %v4574, %v4666
      %4668 = vmatmul.bf16.gmra.mxu0 %v3934
      %v4669 = vpop.f32.mrf.mxu0
      %v4670 = vadd.f32 %v4577, %v4669
      %v4671 = vpop.f32.mrf.mxu0
      %v4672 = vadd.f32 %v4579, %v4671
      %4673 = vmatmul.bf16.gmra.mxu0 %v3937
      %v4674 = vpop.f32.mrf.mxu0
      %v4675 = vadd.f32 %v4582, %v4674
      %v4676 = vpop.f32.mrf.mxu0
      %v4677 = vadd.f32 %v4584, %v4676
      %4678 = vmatmul.bf16.gmra.mxu0 %v3940
      %v4679 = vpop.f32.mrf.mxu0
      %v4680 = vadd.f32 %v4587, %v4679
      %v4681 = vpop.f32.mrf.mxu0
      %v4682 = vadd.f32 %v4589, %v4681
      %4683 = vmatmul.bf16.gmra.mxu0 %v3943
      %v4684 = vpop.f32.mrf.mxu0
      %v4685 = vadd.f32 %v4592, %v4684
      %v4686 = vpop.f32.mrf.mxu0
      %v4687 = vadd.f32 %v4594, %v4686
      %4688 = vmatmul.bf16.gmra.mxu0 %v3946
      %v4689 = vpop.f32.mrf.mxu0
      %v4690 = vadd.f32 %v4597, %v4689
      %v4691 = vpop.f32.mrf.mxu0
      %v4692 = vadd.f32 %v4599, %v4691
      %4693 = vmatmul.bf16.gmra.mxu0 %v3949
      %v4694 = vpop.f32.mrf.mxu0
      %v4695 = vadd.f32 %v4602, %v4694
      %v4696 = vpop.f32.mrf.mxu0
      %v4697 = vadd.f32 %v4604, %v4696
      %4698 = vmatmul.bf16.gmra.mxu0 %v3952
      %v4699 = vpop.f32.mrf.mxu0
      %v4700 = vadd.f32 %v4607, %v4699
      %v4701 = vpop.f32.mrf.mxu0
      %v4702 = vadd.f32 %v4609, %v4701
      %4703 = vmatmul.bf16.gmra.mxu0 %v3955
      %v4704 = vpop.f32.mrf.mxu0
      %v4705 = vadd.f32 %v4612, %v4704
      %v4706 = vpop.f32.mrf.mxu0
      %v4707 = vadd.f32 %v4614, %v4706
      %4708 = vmatmul.bf16.gmra.mxu0 %v3958
      %v4709 = vpop.f32.mrf.mxu0
      %v4710 = vadd.f32 %v4617, %v4709
      %v4711 = vpop.f32.mrf.mxu0
      %4712 = vdwg.mxu0
      %4779 = vrot.lane.b32.xlu0 %v4258, 120
      %v4780 = vpop.permute.xlu0 %4779
      %4781 = vrot.lane.b32.xlu0 %v4630, 120
      %v4782 = vpop.permute.xlu0 %4781
      %4783 = vrot.lane.b32.xlu0 %v4260, 120
      %v4784 = vpop.permute.xlu0 %4783
      %4785 = vrot.lane.b32.xlu0 %v4632, 120
      %v4786 = vpop.permute.xlu0 %4785
      %4787 = vrot.lane.b32.xlu0 %v4263, 120
      %v4788 = vpop.permute.xlu0 %4787
      %4789 = vrot.lane.b32.xlu0 %v4635, 120
      %v4790 = vpop.permute.xlu0 %4789
      %4791 = vrot.lane.b32.xlu0 %v4265, 120
      %v4792 = vpop.permute.xlu0 %4791
      %4793 = vrot.lane.b32.xlu0 %v4637, 120
      %v4794 = vpop.permute.xlu0 %4793
      %4795 = vrot.lane.b32.xlu0 %v4268, 120
      %v4796 = vpop.permute.xlu0 %4795
      %4797 = vrot.lane.b32.xlu0 %v4640, 120
      %v4798 = vpop.permute.xlu0 %4797
      %4799 = vrot.lane.b32.xlu0 %v4270, 120
      %v4800 = vpop.permute.xlu0 %4799
      %4801 = vrot.lane.b32.xlu0 %v4642, 120
      %v4802 = vpop.permute.xlu0 %4801
      %4803 = vrot.lane.b32.xlu0 %v4273, 120
      %v4804 = vpop.permute.xlu0 %4803
      %4805 = vrot.lane.b32.xlu0 %v4645, 120
      %v4806 = vpop.permute.xlu0 %4805
      %4807 = vrot.lane.b32.xlu0 %v4275, 120
      %v4808 = vpop.permute.xlu0 %4807
      %4809 = vrot.lane.b32.xlu0 %v4647, 120
      %v4810 = vpop.permute.xlu0 %4809
      %4811 = vrot.lane.b32.xlu0 %v4278, 120
      %v4812 = vpop.permute.xlu0 %4811
      %4813 = vrot.lane.b32.xlu0 %v4650, 120
      %v4814 = vpop.permute.xlu0 %4813
      %4815 = vrot.lane.b32.xlu0 %v4280, 120
      %v4816 = vpop.permute.xlu0 %4815
      %4817 = vrot.lane.b32.xlu0 %v4652, 120
      %v4818 = vpop.permute.xlu0 %4817
      %4819 = vrot.lane.b32.xlu0 %v4283, 120
      %v4820 = vpop.permute.xlu0 %4819
      %4821 = vrot.lane.b32.xlu0 %v4655, 120
      %v4822 = vpop.permute.xlu0 %4821
      %4823 = vrot.lane.b32.xlu0 %v4285, 120
      %v4824 = vpop.permute.xlu0 %4823
      %4825 = vrot.lane.b32.xlu0 %v4657, 120
      %v4826 = vpop.permute.xlu0 %4825
      %4827 = vrot.lane.b32.xlu0 %v4288, 120
      %v4828 = vpop.permute.xlu0 %4827
      %4829 = vrot.lane.b32.xlu0 %v4660, 120
      %v4830 = vpop.permute.xlu0 %4829
      %4831 = vrot.lane.b32.xlu0 %v4290, 120
      %v4832 = vpop.permute.xlu0 %4831
      %4833 = vrot.lane.b32.xlu0 %v4662, 120
      %v4834 = vpop.permute.xlu0 %4833
      %4835 = vrot.lane.b32.xlu0 %v4293, 120
      %v4836 = vpop.permute.xlu0 %4835
      %4837 = vrot.lane.b32.xlu0 %v4665, 120
      %v4838 = vpop.permute.xlu0 %4837
      %4839 = vrot.lane.b32.xlu0 %v4295, 120
      %v4840 = vpop.permute.xlu0 %4839
      %4841 = vrot.lane.b32.xlu0 %v4667, 120
      %v4842 = vpop.permute.xlu0 %4841
      %4843 = vrot.lane.b32.xlu0 %v4298, 120
      %v4844 = vpop.permute.xlu0 %4843
      %4845 = vrot.lane.b32.xlu0 %v4670, 120
      %v4846 = vpop.permute.xlu0 %4845
      %4847 = vrot.lane.b32.xlu0 %v4300, 120
      %v4848 = vpop.permute.xlu0 %4847
      %4849 = vrot.lane.b32.xlu0 %v4672, 120
      %v4850 = vpop.permute.xlu0 %4849
      %4851 = vrot.lane.b32.xlu0 %v4303, 120
      %v4852 = vpop.permute.xlu0 %4851
      %4853 = vrot.lane.b32.xlu0 %v4675, 120
      %v4854 = vpop.permute.xlu0 %4853
      %4855 = vrot.lane.b32.xlu0 %v4305, 120
      %v4856 = vpop.permute.xlu0 %4855
      %4857 = vrot.lane.b32.xlu0 %v4677, 120
      %v4858 = vpop.permute.xlu0 %4857
      %4859 = vrot.lane.b32.xlu0 %v4308, 120
      %v4860 = vpop.permute.xlu0 %4859
      %4861 = vrot.lane.b32.xlu0 %v4680, 120
      %v4862 = vpop.permute.xlu0 %4861
      %4863 = vrot.lane.b32.xlu0 %v4310, 120
      %v4864 = vpop.permute.xlu0 %4863
      %4865 = vrot.lane.b32.xlu0 %v4682, 120
      %v4866 = vpop.permute.xlu0 %4865
      %4867 = vrot.lane.b32.xlu0 %v4313, 120
      %v4868 = vpop.permute.xlu0 %4867
      %4869 = vrot.lane.b32.xlu0 %v4685, 120
      %v4870 = vpop.permute.xlu0 %4869
      %4871 = vrot.lane.b32.xlu0 %v4315, 120
      %v4872 = vpop.permute.xlu0 %4871
      %4873 = vrot.lane.b32.xlu0 %v4687, 120
      %v4874 = vpop.permute.xlu0 %4873
      %4875 = vrot.lane.b32.xlu0 %v4318, 120
      %v4876 = vpop.permute.xlu0 %4875
      %4877 = vrot.lane.b32.xlu0 %v4690, 120
      %v4878 = vpop.permute.xlu0 %4877
      %4879 = vrot.lane.b32.xlu0 %v4320, 120
      %v4880 = vpop.permute.xlu0 %4879
      %4881 = vrot.lane.b32.xlu0 %v4692, 120
      %v4882 = vpop.permute.xlu0 %4881
      %4883 = vrot.lane.b32.xlu0 %v4323, 120
      %v4884 = vpop.permute.xlu0 %4883
      %4885 = vrot.lane.b32.xlu0 %v4695, 120
      %v4886 = vpop.permute.xlu0 %4885
      %4887 = vrot.lane.b32.xlu0 %v4325, 120
      %v4888 = vpop.permute.xlu0 %4887
      %4889 = vrot.lane.b32.xlu0 %v4697, 120
      %v4890 = vpop.permute.xlu0 %4889
      %4891 = vrot.lane.b32.xlu0 %v4328, 120
      %v4892 = vpop.permute.xlu0 %4891
      %4893 = vrot.lane.b32.xlu0 %v4700, 120
      %v4894 = vpop.permute.xlu0 %4893
      %4895 = vrot.lane.b32.xlu0 %v4330, 120
      %v4896 = vpop.permute.xlu0 %4895
      %4897 = vrot.lane.b32.xlu0 %v4702, 120
      %v4898 = vpop.permute.xlu0 %4897
      %4899 = vrot.lane.b32.xlu0 %v4333, 120
      %v4900 = vpop.permute.xlu0 %4899
      %4901 = vrot.lane.b32.xlu0 %v4705, 120
      %v4902 = vpop.permute.xlu0 %4901
      %4903 = vrot.lane.b32.xlu0 %v4335, 120
      %v4904 = vpop.permute.xlu0 %4903
      %4905 = vrot.lane.b32.xlu0 %v4707, 120
      %v4906 = vpop.permute.xlu0 %4905
      %4907 = vrot.lane.b32.xlu0 %v4338, 120
      %v4908 = vpop.permute.xlu0 %4907
      %4909 = vrot.lane.b32.xlu0 %v4710, 120
      %v4910 = vpop.permute.xlu0 %4909
      %vm4911 = vcmask 982016
      %v4912 = vsel %vm4911, %v4780, %v4782
      %v4913 = vsel %vm4911, %v4784, %v4786
      %v4914 = vsel %vm4911, %v4788, %v4790
      %v4915 = vsel %vm4911, %v4792, %v4794
      %v4916 = vsel %vm4911, %v4796, %v4798
      %v4917 = vsel %vm4911, %v4800, %v4802
      %v4918 = vsel %vm4911, %v4804, %v4806
      %v4919 = vsel %vm4911, %v4808, %v4810
      %v4920 = vsel %vm4911, %v4812, %v4814
      %v4921 = vsel %vm4911, %v4816, %v4818
      %v4922 = vsel %vm4911, %v4820, %v4822
      %v4923 = vsel %vm4911, %v4824, %v4826
      %v4924 = vsel %vm4911, %v4828, %v4830
      %v4925 = vsel %vm4911, %v4832, %v4834
      %v4926 = vsel %vm4911, %v4836, %v4838
      %v4927 = vsel %vm4911, %v4840, %v4842
      %v4928 = vsel %vm4911, %v4844, %v4846
      %v4929 = vsel %vm4911, %v4848, %v4850
      %v4930 = vsel %vm4911, %v4852, %v4854
      %v4931 = vsel %vm4911, %v4856, %v4858
      %v4932 = vsel %vm4911, %v4860, %v4862
      %v4933 = vsel %vm4911, %v4864, %v4866
      %v4934 = vsel %vm4911, %v4868, %v4870
      %v4935 = vsel %vm4911, %v4872, %v4874
      %v4936 = vsel %vm4911, %v4876, %v4878
      %v4937 = vsel %vm4911, %v4880, %v4882
      %v4938 = vsel %vm4911, %v4884, %v4886
      %v4939 = vsel %vm4911, %v4888, %v4890
      %v4940 = vsel %vm4911, %v4892, %v4894
      %v4941 = vsel %vm4911, %v4896, %v4898
      %v4942 = vsel %vm4911, %v4900, %v4902
      %v4943 = vsel %vm4911, %v4904, %v4906
      %v4944 = vsel %vm4911, %v4908, %v4910
      %v5011 = vmax.f32 %v4258, %v4912
      %v5012 = vmax.f32 %v4630, %v4782
      %v5013 = vmax.f32 %v4260, %v4913
      %v5014 = vmax.f32 %v4632, %v4786
      %v5015 = vmax.f32 %v4263, %v4914
      %v5016 = vmax.f32 %v4635, %v4790
      %v5017 = vmax.f32 %v4265, %v4915
      %v5018 = vmax.f32 %v4637, %v4794
      %v5019 = vmax.f32 %v4268, %v4916
      %v5020 = vmax.f32 %v4640, %v4798
      %v5021 = vmax.f32 %v4270, %v4917
      %v5022 = vmax.f32 %v4642, %v4802
      %v5023 = vmax.f32 %v4273, %v4918
      %v5024 = vmax.f32 %v4645, %v4806
      %v5025 = vmax.f32 %v4275, %v4919
      %v5026 = vmax.f32 %v4647, %v4810
      %v5027 = vmax.f32 %v4278, %v4920
      %v5028 = vmax.f32 %v4650, %v4814
      %v5029 = vmax.f32 %v4280, %v4921
      %v5030 = vmax.f32 %v4652, %v4818
      %v5031 = vmax.f32 %v4283, %v4922
      %v5032 = vmax.f32 %v4655, %v4822
      %v5033 = vmax.f32 %v4285, %v4923
      %v5034 = vmax.f32 %v4657, %v4826
      %v5035 = vmax.f32 %v4288, %v4924
      %v5036 = vmax.f32 %v4660, %v4830
      %v5037 = vmax.f32 %v4290, %v4925
      %v5038 = vmax.f32 %v4662, %v4834
      %v5039 = vmax.f32 %v4293, %v4926
      %v5040 = vmax.f32 %v4665, %v4838
      %v5041 = vmax.f32 %v4295, %v4927
      %v5042 = vmax.f32 %v4667, %v4842
      %v5043 = vmax.f32 %v4298, %v4928
      %v5044 = vmax.f32 %v4670, %v4846
      %v5045 = vmax.f32 %v4300, %v4929
      %v5046 = vmax.f32 %v4672, %v4850
      %v5047 = vmax.f32 %v4303, %v4930
      %v5048 = vmax.f32 %v4675, %v4854
      %v5049 = vmax.f32 %v4305, %v4931
      %v5050 = vmax.f32 %v4677, %v4858
      %v5051 = vmax.f32 %v4308, %v4932
      %v5052 = vmax.f32 %v4680, %v4862
      %v5053 = vmax.f32 %v4310, %v4933
      %v5054 = vmax.f32 %v4682, %v4866
      %v5055 = vmax.f32 %v4313, %v4934
      %v5056 = vmax.f32 %v4685, %v4870
      %v5057 = vmax.f32 %v4315, %v4935
      %v5058 = vmax.f32 %v4687, %v4874
      %v5059 = vmax.f32 %v4318, %v4936
      %v5060 = vmax.f32 %v4690, %v4878
      %v5061 = vmax.f32 %v4320, %v4937
      %v5062 = vmax.f32 %v4692, %v4882
      %v5063 = vmax.f32 %v4323, %v4938
      %v5064 = vmax.f32 %v4695, %v4886
      %v5065 = vmax.f32 %v4325, %v4939
      %v5066 = vmax.f32 %v4697, %v4890
      %v5067 = vmax.f32 %v4328, %v4940
      %v5068 = vmax.f32 %v4700, %v4894
      %v5069 = vmax.f32 %v4330, %v4941
      %v5070 = vmax.f32 %v4702, %v4898
      %v5071 = vmax.f32 %v4333, %v4942
      %v5072 = vmax.f32 %v4705, %v4902
      %v5073 = vmax.f32 %v4335, %v4943
      %v5074 = vmax.f32 %v4707, %v4906
      %v5075 = vmax.f32 %v4338, %v4944
      %v5076 = vmax.f32 %v4710, %v4910
      %v5077 = vpack.c.bf16 %v5013, %v5011
      %v5078 = vpack.c.bf16 %v5014, %v5012
      %v5079 = vpack.c.bf16 %v5017, %v5015
      %v5080 = vpack.c.bf16 %v5018, %v5016
      %v5081 = vpack.c.bf16 %v5021, %v5019
      %v5082 = vpack.c.bf16 %v5022, %v5020
      %v5083 = vpack.c.bf16 %v5025, %v5023
      %v5084 = vpack.c.bf16 %v5026, %v5024
      %v5085 = vpack.c.bf16 %v5029, %v5027
      %v5086 = vpack.c.bf16 %v5030, %v5028
      %v5087 = vpack.c.bf16 %v5033, %v5031
      %v5088 = vpack.c.bf16 %v5034, %v5032
      %v5089 = vpack.c.bf16 %v5037, %v5035
      %v5090 = vpack.c.bf16 %v5038, %v5036
      %v5091 = vpack.c.bf16 %v5041, %v5039
      %v5092 = vpack.c.bf16 %v5042, %v5040
      %v5093 = vpack.c.bf16 %v5045, %v5043
      %v5094 = vpack.c.bf16 %v5046, %v5044
      %v5095 = vpack.c.bf16 %v5049, %v5047
      %v5096 = vpack.c.bf16 %v5050, %v5048
      %v5097 = vpack.c.bf16 %v5053, %v5051
      %v5098 = vpack.c.bf16 %v5054, %v5052
      %v5099 = vpack.c.bf16 %v5057, %v5055
      %v5100 = vpack.c.bf16 %v5058, %v5056
      %v5101 = vpack.c.bf16 %v5061, %v5059
      %v5102 = vpack.c.bf16 %v5062, %v5060
      %v5103 = vpack.c.bf16 %v5065, %v5063
      %v5104 = vpack.c.bf16 %v5066, %v5064
      %v5105 = vpack.c.bf16 %v5069, %v5067
      %v5106 = vpack.c.bf16 %v5070, %v5068
      %v5107 = vpack.c.bf16 %v5073, %v5071
      %v5108 = vpack.c.bf16 %v5074, %v5072
      %v5109 = vpack.c.bf16 %v5075, %v5075
      %v5110 = vpack.c.bf16 %v5076, %v5076
      %v5142 = vunpack.c.l.b16 %v2902
      %v5143 = vunpack.c.l.b16 %v2903
      %v5144 = vunpack.c.l.b16 %v2904
      %v5145 = vunpack.c.l.b16 %v2905
      %v5146 = vunpack.c.l.b16 %v2906
      %v5147 = vunpack.c.l.b16 %v2907
      %v5148 = vunpack.c.l.b16 %v2908
      %v5149 = vunpack.c.l.b16 %v2909
      %v5150 = vunpack.c.l.b16 %v2910
      %v5151 = vunpack.c.l.b16 %v2911
      %v5152 = vunpack.c.l.b16 %v2912
      %v5153 = vunpack.c.l.b16 %v2913
      %v5154 = vunpack.c.l.b16 %v2914
      %v5155 = vunpack.c.l.b16 %v2915
      %v5156 = vunpack.c.l.b16 %v2916
      %v5157 = vunpack.c.l.b16 %v2917
      %v5158 = vunpack.c.l.b16 %v2918
      %v5159 = vunpack.c.l.b16 %v2919
      %v5160 = vunpack.c.l.b16 %v2920
      %v5161 = vunpack.c.l.b16 %v2921
      %v5162 = vunpack.c.l.b16 %v2922
      %v5163 = vunpack.c.l.b16 %v2923
      %v5164 = vunpack.c.l.b16 %v2924
      %v5165 = vunpack.c.l.b16 %v2925
      %v5166 = vunpack.c.l.b16 %v2926
      %v5167 = vunpack.c.l.b16 %v2927
      %v5168 = vunpack.c.l.b16 %v2928
      %v5169 = vunpack.c.l.b16 %v2929
      %v5170 = vunpack.c.l.b16 %v2930
      %v5171 = vunpack.c.l.b16 %v2931
      %v5172 = vunpack.c.l.b16 %v2932
      %v5173 = vpack.c.b16 %v5143, %v5142
      %v5174 = vpack.c.b16 %v5145, %v5144
      %v5175 = vpack.c.b16 %v5147, %v5146
      %v5176 = vpack.c.b16 %v5149, %v5148
      %v5177 = vpack.c.b16 %v5151, %v5150
      %v5178 = vpack.c.b16 %v5153, %v5152
      %v5179 = vpack.c.b16 %v5155, %v5154
      %v5180 = vpack.c.b16 %v5157, %v5156
      %v5181 = vpack.c.b16 %v5159, %v5158
      %v5182 = vpack.c.b16 %v5161, %v5160
      %v5183 = vpack.c.b16 %v5163, %v5162
      %v5184 = vpack.c.b16 %v5165, %v5164
      %v5185 = vpack.c.b16 %v5167, %v5166
      %v5186 = vpack.c.b16 %v5169, %v5168
      %v5187 = vpack.c.b16 %v5171, %v5170
      %v5188 = vpack.c.b16 %v5172, %v5172
      %v5205 = vsel %vm4911, %v5078, 0
      %v5208 = vsel %vm4911, %v5080, 0
      %v5211 = vsel %vm4911, %v5082, 0
      %v5214 = vsel %vm4911, %v5084, 0
      %v5217 = vsel %vm4911, %v5086, 0
      %v5220 = vsel %vm4911, %v5088, 0
      %v5223 = vsel %vm4911, %v5090, 0
      %v5226 = vsel %vm4911, %v5092, 0
      %v5229 = vsel %vm4911, %v5094, 0
      %v5232 = vsel %vm4911, %v5096, 0
      %v5235 = vsel %vm4911, %v5098, 0
      %v5238 = vsel %vm4911, %v5100, 0
      %v5241 = vsel %vm4911, %v5102, 0
      %v5244 = vsel %vm4911, %v5104, 0
      %v5247 = vsel %vm4911, %v5106, 0
      %v5250 = vsel %vm4911, %v5108, 0
      %v5253 = vsel %vm4911, %v5110, 0
      %vm5255 = vcmask 1043456
      %v5257 = vsel %vm5255, %v5188, 0
      %5259 = vmatpush.bf16.msra.mxu0 %v5180
      %5260 = vmatpush.bf16.msra.mxu0 %v5179
      %5261 = vmatpush.bf16.msra.mxu0 %v5178
      %5262 = vmatpush.bf16.msra.mxu0 %v5177
      %5263 = vmatpush.bf16.msra.mxu0 %v5176
      %5264 = vmatpush.bf16.msra.mxu0 %v5175
      %5265 = vmatpush.bf16.msra.mxu0 %v5174
      %5266 = vmatpush.bf16.msra.mxu0 %v5173
      %5267 = vmatmul.bf16.gmra.mxu0 %v5077
      %v5268 = vpop.f32.mrf.mxu0
      %v5269 = vadd.f32 0.0, %v5268
      %v5270 = vpop.f32.mrf.mxu0
      %v5271 = vadd.f32 0.0, %v5270
      %5272 = vmatmul.bf16.gmra.mxu0 %v5079
      %v5273 = vpop.f32.mrf.mxu0
      %v5274 = vadd.f32 0.0, %v5273
      %v5275 = vpop.f32.mrf.mxu0
      %v5276 = vadd.f32 0.0, %v5275
      %5277 = vmatmul.bf16.gmra.mxu0 %v5081
      %v5278 = vpop.f32.mrf.mxu0
      %v5279 = vadd.f32 0.0, %v5278
      %v5280 = vpop.f32.mrf.mxu0
      %v5281 = vadd.f32 0.0, %v5280
      %5282 = vmatmul.bf16.gmra.mxu0 %v5083
      %v5283 = vpop.f32.mrf.mxu0
      %v5284 = vadd.f32 0.0, %v5283
      %v5285 = vpop.f32.mrf.mxu0
      %v5286 = vadd.f32 0.0, %v5285
      %5287 = vmatmul.bf16.gmra.mxu0 %v5085
      %v5288 = vpop.f32.mrf.mxu0
      %v5289 = vadd.f32 0.0, %v5288
      %v5290 = vpop.f32.mrf.mxu0
      %v5291 = vadd.f32 0.0, %v5290
      %5292 = vmatmul.bf16.gmra.mxu0 %v5087
      %v5293 = vpop.f32.mrf.mxu0
      %v5294 = vadd.f32 0.0, %v5293
      %v5295 = vpop.f32.mrf.mxu0
      %v5296 = vadd.f32 0.0, %v5295
      %5297 = vmatmul.bf16.gmra.mxu0 %v5089
      %v5298 = vpop.f32.mrf.mxu0
      %v5299 = vadd.f32 0.0, %v5298
      %v5300 = vpop.f32.mrf.mxu0
      %v5301 = vadd.f32 0.0, %v5300
      %5302 = vmatmul.bf16.gmra.mxu0 %v5091
      %v5303 = vpop.f32.mrf.mxu0
      %v5304 = vadd.f32 0.0, %v5303
      %v5305 = vpop.f32.mrf.mxu0
      %v5306 = vadd.f32 0.0, %v5305
      %5307 = vmatmul.bf16.gmra.mxu0 %v5093
      %v5308 = vpop.f32.mrf.mxu0
      %v5309 = vadd.f32 0.0, %v5308
      %v5310 = vpop.f32.mrf.mxu0
      %v5311 = vadd.f32 0.0, %v5310
      %5312 = vmatmul.bf16.gmra.mxu0 %v5095
      %v5313 = vpop.f32.mrf.mxu0
      %v5314 = vadd.f32 0.0, %v5313
      %v5315 = vpop.f32.mrf.mxu0
      %v5316 = vadd.f32 0.0, %v5315
      %5317 = vmatmul.bf16.gmra.mxu0 %v5097
      %v5318 = vpop.f32.mrf.mxu0
      %v5319 = vadd.f32 0.0, %v5318
      %v5320 = vpop.f32.mrf.mxu0
      %v5321 = vadd.f32 0.0, %v5320
      %5322 = vmatmul.bf16.gmra.mxu0 %v5099
      %v5323 = vpop.f32.mrf.mxu0
      %v5324 = vadd.f32 0.0, %v5323
      %v5325 = vpop.f32.mrf.mxu0
      %v5326 = vadd.f32 0.0, %v5325
      %5327 = vmatmul.bf16.gmra.mxu0 %v5101
      %v5328 = vpop.f32.mrf.mxu0
      %v5329 = vadd.f32 0.0, %v5328
      %v5330 = vpop.f32.mrf.mxu0
      %v5331 = vadd.f32 0.0, %v5330
      %5332 = vmatmul.bf16.gmra.mxu0 %v5103
      %v5333 = vpop.f32.mrf.mxu0
      %v5334 = vadd.f32 0.0, %v5333
      %v5335 = vpop.f32.mrf.mxu0
      %v5336 = vadd.f32 0.0, %v5335
      %5337 = vmatmul.bf16.gmra.mxu0 %v5105
      %v5338 = vpop.f32.mrf.mxu0
      %v5339 = vadd.f32 0.0, %v5338
      %v5340 = vpop.f32.mrf.mxu0
      %v5341 = vadd.f32 0.0, %v5340
      %5342 = vmatmul.bf16.gmra.mxu0 %v5107
      %v5343 = vpop.f32.mrf.mxu0
      %v5344 = vadd.f32 0.0, %v5343
      %v5345 = vpop.f32.mrf.mxu0
      %v5346 = vadd.f32 0.0, %v5345
      %5347 = vmatmul.bf16.gmra.mxu0 %v5109
      %v5348 = vpop.f32.mrf.mxu0
      %v5349 = vadd.f32 0.0, %v5348
      %v5350 = vpop.f32.mrf.mxu0
      %5351 = vdwg.mxu0
      %5352 = vmatpush.bf16.msra.mxu0 %v5257
      %5353 = vmatpush.bf16.msra.mxu0 %v5187
      %5354 = vmatpush.bf16.msra.mxu0 %v5186
      %5355 = vmatpush.bf16.msra.mxu0 %v5185
      %5356 = vmatpush.bf16.msra.mxu0 %v5184
      %5357 = vmatpush.bf16.msra.mxu0 %v5183
      %5358 = vmatpush.bf16.msra.mxu0 %v5182
      %5359 = vmatpush.bf16.msra.mxu0 %v5181
      %5360 = vmatmul.bf16.gmra.mxu0 %v5205
      %v5361 = vpop.f32.mrf.mxu0
      %v5362 = vadd.f32 %v5269, %v5361
      %v5363 = vpop.f32.mrf.mxu0
      %v5364 = vadd.f32 %v5271, %v5363
      %5365 = vmatmul.bf16.gmra.mxu0 %v5208
      %v5366 = vpop.f32.mrf.mxu0
      %v5367 = vadd.f32 %v5274, %v5366
      %v5368 = vpop.f32.mrf.mxu0
      %v5369 = vadd.f32 %v5276, %v5368
      %5370 = vmatmul.bf16.gmra.mxu0 %v5211
      %v5371 = vpop.f32.mrf.mxu0
      %v5372 = vadd.f32 %v5279, %v5371
      %v5373 = vpop.f32.mrf.mxu0
      %v5374 = vadd.f32 %v5281, %v5373
      %5375 = vmatmul.bf16.gmra.mxu0 %v5214
      %v5376 = vpop.f32.mrf.mxu0
      %v5377 = vadd.f32 %v5284, %v5376
      %v5378 = vpop.f32.mrf.mxu0
      %v5379 = vadd.f32 %v5286, %v5378
      %5380 = vmatmul.bf16.gmra.mxu0 %v5217
      %v5381 = vpop.f32.mrf.mxu0
      %v5382 = vadd.f32 %v5289, %v5381
      %v5383 = vpop.f32.mrf.mxu0
      %v5384 = vadd.f32 %v5291, %v5383
      %5385 = vmatmul.bf16.gmra.mxu0 %v5220
      %v5386 = vpop.f32.mrf.mxu0
      %v5387 = vadd.f32 %v5294, %v5386
      %v5388 = vpop.f32.mrf.mxu0
      %v5389 = vadd.f32 %v5296, %v5388
      %5390 = vmatmul.bf16.gmra.mxu0 %v5223
      %v5391 = vpop.f32.mrf.mxu0
      %v5392 = vadd.f32 %v5299, %v5391
      %v5393 = vpop.f32.mrf.mxu0
      %v5394 = vadd.f32 %v5301, %v5393
      %5395 = vmatmul.bf16.gmra.mxu0 %v5226
      %v5396 = vpop.f32.mrf.mxu0
      %v5397 = vadd.f32 %v5304, %v5396
      %v5398 = vpop.f32.mrf.mxu0
      %v5399 = vadd.f32 %v5306, %v5398
      %5400 = vmatmul.bf16.gmra.mxu0 %v5229
      %v5401 = vpop.f32.mrf.mxu0
      %v5402 = vadd.f32 %v5309, %v5401
      %v5403 = vpop.f32.mrf.mxu0
      %v5404 = vadd.f32 %v5311, %v5403
      %5405 = vmatmul.bf16.gmra.mxu0 %v5232
      %v5406 = vpop.f32.mrf.mxu0
      %v5407 = vadd.f32 %v5314, %v5406
      %v5408 = vpop.f32.mrf.mxu0
      %v5409 = vadd.f32 %v5316, %v5408
      %5410 = vmatmul.bf16.gmra.mxu0 %v5235
      %v5411 = vpop.f32.mrf.mxu0
      %v5412 = vadd.f32 %v5319, %v5411
      %v5413 = vpop.f32.mrf.mxu0
      %v5414 = vadd.f32 %v5321, %v5413
      %5415 = vmatmul.bf16.gmra.mxu0 %v5238
      %v5416 = vpop.f32.mrf.mxu0
      %v5417 = vadd.f32 %v5324, %v5416
      %v5418 = vpop.f32.mrf.mxu0
      %v5419 = vadd.f32 %v5326, %v5418
      %5420 = vmatmul.bf16.gmra.mxu0 %v5241
      %v5421 = vpop.f32.mrf.mxu0
      %v5422 = vadd.f32 %v5329, %v5421
      %v5423 = vpop.f32.mrf.mxu0
      %v5424 = vadd.f32 %v5331, %v5423
      %5425 = vmatmul.bf16.gmra.mxu0 %v5244
      %v5426 = vpop.f32.mrf.mxu0
      %v5427 = vadd.f32 %v5334, %v5426
      %v5428 = vpop.f32.mrf.mxu0
      %v5429 = vadd.f32 %v5336, %v5428
      %5430 = vmatmul.bf16.gmra.mxu0 %v5247
      %v5431 = vpop.f32.mrf.mxu0
      %v5432 = vadd.f32 %v5339, %v5431
      %v5433 = vpop.f32.mrf.mxu0
      %v5434 = vadd.f32 %v5341, %v5433
      %5435 = vmatmul.bf16.gmra.mxu0 %v5250
      %v5436 = vpop.f32.mrf.mxu0
      %v5437 = vadd.f32 %v5344, %v5436
      %v5438 = vpop.f32.mrf.mxu0
      %v5439 = vadd.f32 %v5346, %v5438
      %5440 = vmatmul.bf16.gmra.mxu0 %v5253
      %v5441 = vpop.f32.mrf.mxu0
      %v5442 = vadd.f32 %v5349, %v5441
      %v5443 = vpop.f32.mrf.mxu0
      %5444 = vdwg.mxu0
      %v5445 = vld [vmem:[%s7] sm:$0x3]
      %v5446 = vld [vmem:[%s8] sm:$0x3]
      %v5447 = vpack.c.bf16 %v5364, %v5362
      %v5448 = vpack.c.bf16 %v5369, %v5367
      %v5449 = vpack.c.bf16 %v5374, %v5372
      %v5450 = vpack.c.bf16 %v5379, %v5377
      %v5451 = vpack.c.bf16 %v5384, %v5382
      %v5452 = vpack.c.bf16 %v5389, %v5387
      %v5453 = vpack.c.bf16 %v5394, %v5392
      %v5454 = vpack.c.bf16 %v5399, %v5397
      %v5455 = vpack.c.bf16 %v5404, %v5402
      %v5456 = vpack.c.bf16 %v5409, %v5407
      %v5457 = vpack.c.bf16 %v5414, %v5412
      %v5458 = vpack.c.bf16 %v5419, %v5417
      %v5459 = vpack.c.bf16 %v5424, %v5422
      %v5460 = vpack.c.bf16 %v5429, %v5427
      %v5461 = vpack.c.bf16 %v5434, %v5432
      %v5462 = vpack.c.bf16 %v5439, %v5437
      %v5463 = vld [vmem:[%s6] sm:$0xff]
      %v5464 = vld [vmem:[%s6 + $0x8] sm:$0xff]
      %v5465 = vld [vmem:[%s6 + $0x10] sm:$0xff]
      %v5466 = vld [vmem:[%s6 + $0x18] sm:$0xff]
      %v5467 = vld [vmem:[%s6 + $0x20] sm:$0xff]
      %v5468 = vld [vmem:[%s6 + $0x28] sm:$0xff]
      %v5469 = vld [vmem:[%s6 + $0x30] sm:$0xff]
      %v5470 = vld [vmem:[%s6 + $0x38] sm:$0xff]
      %v5471 = vld [vmem:[%s6 + $0x40] sm:$0xff]
      %v5472 = vld [vmem:[%s6 + $0x48] sm:$0xff]
      %v5473 = vld [vmem:[%s6 + $0x50] sm:$0xff]
      %v5474 = vld [vmem:[%s6 + $0x58] sm:$0xff]
      %v5475 = vld [vmem:[%s6 + $0x60] sm:$0xff]
      %v5476 = vld [vmem:[%s6 + $0x68] sm:$0xff]
      %v5477 = vld [vmem:[%s6 + $0x70] sm:$0xff]
      %v5478 = vld [vmem:[%s6 + $0x78] sm:$0xff]
      %v5479 = vpack.c.bf16 %v5442, %v5442
      %s5480 = scalar_lea.vmem %s6, 128
      %v5481 = vld [vmem:[%s5480] sm:$0xff]
      %v5482 = vld [vmem:[%s5480 + $0x8] sm:$0xff]
      %v5483 = vld [vmem:[%s5480 + $0x10] sm:$0xff]
      %v5484 = vld [vmem:[%s5480 + $0x18] sm:$0xff]
      %v5485 = vld [vmem:[%s5480 + $0x20] sm:$0xff]
      %v5486 = vld [vmem:[%s5480 + $0x28] sm:$0xff]
      %v5487 = vld [vmem:[%s5480 + $0x30] sm:$0xff]
      %v5488 = vld [vmem:[%s5480 + $0x38] sm:$0xff]
      %v5489 = vld [vmem:[%s5480 + $0x40] sm:$0xff]
      %v5490 = vld [vmem:[%s5480 + $0x48] sm:$0xff]
      %v5491 = vld [vmem:[%s5480 + $0x50] sm:$0xff]
      %v5492 = vld [vmem:[%s5480 + $0x58] sm:$0xff]
      %v5493 = vld [vmem:[%s5480 + $0x60] sm:$0xff]
      %v5494 = vld [vmem:[%s5480 + $0x68] sm:$0xff]
      %v5495 = vld [vmem:[%s5480 + $0x70] sm:$0xff]
      %v5496 = vld [vmem:[%s5480 + $0x78] sm:$0xff]
      %v5498 = vshrl.u32 %v5447, 16
      %v5500 = vshll.u32 %v5447, 16
      %v5502 = vrot.slane %v5500, 1
      %v5503 = vor.u32 %v5498, %v5502
      %v5505 = vshll.u32 %v5448, 16
      %v5507 = vrot.slane %v5505, 1
      %v5508 = vsel %vm735, %v5503, %v5507
      %v5509 = vshrl.u32 %v5448, 16
      %v5511 = vor.u32 %v5509, %v5507
      %v5513 = vshll.u32 %v5449, 16
      %v5515 = vrot.slane %v5513, 1
      %v5516 = vsel %vm735, %v5511, %v5515
      %v5517 = vshrl.u32 %v5449, 16
      %v5519 = vor.u32 %v5517, %v5515
      %v5521 = vshll.u32 %v5450, 16
      %v5523 = vrot.slane %v5521, 1
      %v5524 = vsel %vm735, %v5519, %v5523
      %v5525 = vshrl.u32 %v5450, 16
      %v5527 = vor.u32 %v5525, %v5523
      %v5529 = vshll.u32 %v5451, 16
      %v5531 = vrot.slane %v5529, 1
      %v5532 = vsel %vm735, %v5527, %v5531
      %v5533 = vshrl.u32 %v5451, 16
      %v5535 = vor.u32 %v5533, %v5531
      %v5537 = vshll.u32 %v5452, 16
      %v5539 = vrot.slane %v5537, 1
      %v5540 = vsel %vm735, %v5535, %v5539
      %v5541 = vshrl.u32 %v5452, 16
      %v5543 = vor.u32 %v5541, %v5539
      %v5545 = vshll.u32 %v5453, 16
      %v5547 = vrot.slane %v5545, 1
      %v5548 = vsel %vm735, %v5543, %v5547
      %v5549 = vshrl.u32 %v5453, 16
      %v5551 = vor.u32 %v5549, %v5547
      %v5553 = vshll.u32 %v5454, 16
      %v5555 = vrot.slane %v5553, 1
      %v5556 = vsel %vm735, %v5551, %v5555
      %v5557 = vshrl.u32 %v5454, 16
      %v5559 = vor.u32 %v5557, %v5555
      %v5561 = vshll.u32 %v5455, 16
      %v5563 = vrot.slane %v5561, 1
      %v5564 = vsel %vm735, %v5559, %v5563
      %v5565 = vshrl.u32 %v5455, 16
      %v5567 = vor.u32 %v5565, %v5563
      %v5569 = vshll.u32 %v5456, 16
      %v5571 = vrot.slane %v5569, 1
      %v5572 = vsel %vm735, %v5567, %v5571
      %v5573 = vshrl.u32 %v5456, 16
      %v5575 = vor.u32 %v5573, %v5571
      %v5577 = vshll.u32 %v5457, 16
      %v5579 = vrot.slane %v5577, 1
      %v5580 = vsel %vm735, %v5575, %v5579
      %v5581 = vshrl.u32 %v5457, 16
      %v5583 = vor.u32 %v5581, %v5579
      %v5585 = vshll.u32 %v5458, 16
      %v5587 = vrot.slane %v5585, 1
      %v5588 = vsel %vm735, %v5583, %v5587
      %v5589 = vshrl.u32 %v5458, 16
      %v5591 = vor.u32 %v5589, %v5587
      %v5593 = vshll.u32 %v5459, 16
      %v5595 = vrot.slane %v5593, 1
      %v5596 = vsel %vm735, %v5591, %v5595
      %v5597 = vshrl.u32 %v5459, 16
      %v5599 = vor.u32 %v5597, %v5595
      %v5601 = vshll.u32 %v5460, 16
      %v5603 = vrot.slane %v5601, 1
      %v5604 = vsel %vm735, %v5599, %v5603
      %v5605 = vshrl.u32 %v5460, 16
      %v5607 = vor.u32 %v5605, %v5603
      %v5609 = vshll.u32 %v5461, 16
      %v5611 = vrot.slane %v5609, 1
      %v5612 = vsel %vm735, %v5607, %v5611
      %v5613 = vshrl.u32 %v5461, 16
      %v5615 = vor.u32 %v5613, %v5611
      %v5617 = vshll.u32 %v5462, 16
      %v5619 = vrot.slane %v5617, 1
      %v5620 = vsel %vm735, %v5615, %v5619
      %v5621 = vshrl.u32 %v5462, 16
      %v5623 = vor.u32 %v5621, %v5619
      %v5625 = vshll.u32 %v5479, 16
      %v5627 = vrot.slane %v5625, 1
      %v5628 = vsel %vm735, %v5623, %v5627
      %v5661 = vunpack.c.l.b16 %v5481
      %v5662 = vunpack.c.h.b16 %v5481
      %v5663 = vunpack.c.l.b16 %v5482
      %v5664 = vunpack.c.h.b16 %v5482
      %v5665 = vunpack.c.l.b16 %v5483
      %v5666 = vunpack.c.h.b16 %v5483
      %v5667 = vunpack.c.l.b16 %v5484
      %v5668 = vunpack.c.h.b16 %v5484
      %v5669 = vunpack.c.l.b16 %v5485
      %v5670 = vunpack.c.h.b16 %v5485
      %v5671 = vunpack.c.l.b16 %v5486
      %v5672 = vunpack.c.h.b16 %v5486
      %v5673 = vunpack.c.l.b16 %v5487
      %v5674 = vunpack.c.h.b16 %v5487
      %v5675 = vunpack.c.l.b16 %v5488
      %v5676 = vunpack.c.h.b16 %v5488
      %v5677 = vunpack.c.l.b16 %v5489
      %v5678 = vunpack.c.h.b16 %v5489
      %v5679 = vunpack.c.l.b16 %v5490
      %v5680 = vunpack.c.h.b16 %v5490
      %v5681 = vunpack.c.l.b16 %v5491
      %v5682 = vunpack.c.h.b16 %v5491
      %v5683 = vunpack.c.l.b16 %v5492
      %v5684 = vunpack.c.h.b16 %v5492
      %v5685 = vunpack.c.l.b16 %v5493
      %v5686 = vunpack.c.h.b16 %v5493
      %v5687 = vunpack.c.l.b16 %v5494
      %v5688 = vunpack.c.h.b16 %v5494
      %v5689 = vunpack.c.l.b16 %v5495
      %v5690 = vunpack.c.h.b16 %v5495
      %v5691 = vunpack.c.l.b16 %v5496
      %v5692 = vunpack.c.h.b16 %v5496
      %v5693 = vpack.c.b16 %v5663, %v5661
      %v5694 = vpack.c.b16 %v5664, %v5662
      %v5695 = vpack.c.b16 %v5667, %v5665
      %v5696 = vpack.c.b16 %v5668, %v5666
      %v5697 = vpack.c.b16 %v5671, %v5669
      %v5698 = vpack.c.b16 %v5672, %v5670
      %v5699 = vpack.c.b16 %v5675, %v5673
      %v5700 = vpack.c.b16 %v5676, %v5674
      %v5701 = vpack.c.b16 %v5679, %v5677
      %v5702 = vpack.c.b16 %v5680, %v5678
      %v5703 = vpack.c.b16 %v5683, %v5681
      %v5704 = vpack.c.b16 %v5684, %v5682
      %v5705 = vpack.c.b16 %v5687, %v5685
      %v5706 = vpack.c.b16 %v5688, %v5686
      %v5707 = vpack.c.b16 %v5691, %v5689
      %v5708 = vpack.c.b16 %v5692, %v5690
      %5725 = vmatpush.bf16.msra.mxu0 %v5707
      %5726 = vmatpush.bf16.msra.mxu0 %v5705
      %5727 = vmatpush.bf16.msra.mxu0 %v5703
      %5728 = vmatpush.bf16.msra.mxu0 %v5701
      %5729 = vmatpush.bf16.msra.mxu0 %v5699
      %5730 = vmatpush.bf16.msra.mxu0 %v5697
      %5731 = vmatpush.bf16.msra.mxu0 %v5695
      %5732 = vmatpush.bf16.msra.mxu0 %v5693
      %5733 = vmatmul.bf16.gmra.mxu0 %v5508
      %v5734 = vpop.f32.mrf.mxu0
      %v5735 = vadd.f32 0.0, %v5734
      %v5736 = vpop.f32.mrf.mxu0
      %v5737 = vadd.f32 0.0, %v5736
      %5738 = vmatmul.bf16.gmra.mxu0 %v5516
      %v5739 = vpop.f32.mrf.mxu0
      %v5740 = vadd.f32 0.0, %v5739
      %v5741 = vpop.f32.mrf.mxu0
      %v5742 = vadd.f32 0.0, %v5741
      %5743 = vmatmul.bf16.gmra.mxu0 %v5524
      %v5744 = vpop.f32.mrf.mxu0
      %v5745 = vadd.f32 0.0, %v5744
      %v5746 = vpop.f32.mrf.mxu0
      %v5747 = vadd.f32 0.0, %v5746
      %5748 = vmatmul.bf16.gmra.mxu0 %v5532
      %v5749 = vpop.f32.mrf.mxu0
      %v5750 = vadd.f32 0.0, %v5749
      %v5751 = vpop.f32.mrf.mxu0
      %v5752 = vadd.f32 0.0, %v5751
      %5753 = vmatmul.bf16.gmra.mxu0 %v5540
      %v5754 = vpop.f32.mrf.mxu0
      %v5755 = vadd.f32 0.0, %v5754
      %v5756 = vpop.f32.mrf.mxu0
      %v5757 = vadd.f32 0.0, %v5756
      %5758 = vmatmul.bf16.gmra.mxu0 %v5548
      %v5759 = vpop.f32.mrf.mxu0
      %v5760 = vadd.f32 0.0, %v5759
      %v5761 = vpop.f32.mrf.mxu0
      %v5762 = vadd.f32 0.0, %v5761
      %5763 = vmatmul.bf16.gmra.mxu0 %v5556
      %v5764 = vpop.f32.mrf.mxu0
      %v5765 = vadd.f32 0.0, %v5764
      %v5766 = vpop.f32.mrf.mxu0
      %v5767 = vadd.f32 0.0, %v5766
      %5768 = vmatmul.bf16.gmra.mxu0 %v5564
      %v5769 = vpop.f32.mrf.mxu0
      %v5770 = vadd.f32 0.0, %v5769
      %v5771 = vpop.f32.mrf.mxu0
      %v5772 = vadd.f32 0.0, %v5771
      %5773 = vmatmul.bf16.gmra.mxu0 %v5572
      %v5774 = vpop.f32.mrf.mxu0
      %v5775 = vadd.f32 0.0, %v5774
      %v5776 = vpop.f32.mrf.mxu0
      %v5777 = vadd.f32 0.0, %v5776
      %5778 = vmatmul.bf16.gmra.mxu0 %v5580
      %v5779 = vpop.f32.mrf.mxu0
      %v5780 = vadd.f32 0.0, %v5779
      %v5781 = vpop.f32.mrf.mxu0
      %v5782 = vadd.f32 0.0, %v5781
      %5783 = vmatmul.bf16.gmra.mxu0 %v5588
      %v5784 = vpop.f32.mrf.mxu0
      %v5785 = vadd.f32 0.0, %v5784
      %v5786 = vpop.f32.mrf.mxu0
      %v5787 = vadd.f32 0.0, %v5786
      %5788 = vmatmul.bf16.gmra.mxu0 %v5596
      %v5789 = vpop.f32.mrf.mxu0
      %v5790 = vadd.f32 0.0, %v5789
      %v5791 = vpop.f32.mrf.mxu0
      %v5792 = vadd.f32 0.0, %v5791
      %5793 = vmatmul.bf16.gmra.mxu0 %v5604
      %v5794 = vpop.f32.mrf.mxu0
      %v5795 = vadd.f32 0.0, %v5794
      %v5796 = vpop.f32.mrf.mxu0
      %v5797 = vadd.f32 0.0, %v5796
      %5798 = vmatmul.bf16.gmra.mxu0 %v5612
      %v5799 = vpop.f32.mrf.mxu0
      %v5800 = vadd.f32 0.0, %v5799
      %v5801 = vpop.f32.mrf.mxu0
      %v5802 = vadd.f32 0.0, %v5801
      %5803 = vmatmul.bf16.gmra.mxu0 %v5620
      %v5804 = vpop.f32.mrf.mxu0
      %v5805 = vadd.f32 0.0, %v5804
      %v5806 = vpop.f32.mrf.mxu0
      %v5807 = vadd.f32 0.0, %v5806
      %5808 = vmatmul.bf16.gmra.mxu0 %v5628
      %v5809 = vpop.f32.mrf.mxu0
      %v5810 = vadd.f32 0.0, %v5809
      %v5811 = vpop.f32.mrf.mxu0
      %v5812 = vadd.f32 0.0, %v5811
      %5813 = vdwg.mxu0
      %5814 = vmatpush.bf16.msra.mxu0 %v5708
      %5815 = vmatpush.bf16.msra.mxu0 %v5706
      %5816 = vmatpush.bf16.msra.mxu0 %v5704
      %5817 = vmatpush.bf16.msra.mxu0 %v5702
      %5818 = vmatpush.bf16.msra.mxu0 %v5700
      %5819 = vmatpush.bf16.msra.mxu0 %v5698
      %5820 = vmatpush.bf16.msra.mxu0 %v5696
      %5821 = vmatpush.bf16.msra.mxu0 %v5694
      %5822 = vmatmul.bf16.gmra.mxu0 %v5508
      %v5823 = vpop.f32.mrf.mxu0
      %v5824 = vadd.f32 0.0, %v5823
      %v5825 = vpop.f32.mrf.mxu0
      %v5826 = vadd.f32 0.0, %v5825
      %5827 = vmatmul.bf16.gmra.mxu0 %v5516
      %v5828 = vpop.f32.mrf.mxu0
      %v5829 = vadd.f32 0.0, %v5828
      %v5830 = vpop.f32.mrf.mxu0
      %v5831 = vadd.f32 0.0, %v5830
      %5832 = vmatmul.bf16.gmra.mxu0 %v5524
      %v5833 = vpop.f32.mrf.mxu0
      %v5834 = vadd.f32 0.0, %v5833
      %v5835 = vpop.f32.mrf.mxu0
      %v5836 = vadd.f32 0.0, %v5835
      %5837 = vmatmul.bf16.gmra.mxu0 %v5532
      %v5838 = vpop.f32.mrf.mxu0
      %v5839 = vadd.f32 0.0, %v5838
      %v5840 = vpop.f32.mrf.mxu0
      %v5841 = vadd.f32 0.0, %v5840
      %5842 = vmatmul.bf16.gmra.mxu0 %v5540
      %v5843 = vpop.f32.mrf.mxu0
      %v5844 = vadd.f32 0.0, %v5843
      %v5845 = vpop.f32.mrf.mxu0
      %v5846 = vadd.f32 0.0, %v5845
      %5847 = vmatmul.bf16.gmra.mxu0 %v5548
      %v5848 = vpop.f32.mrf.mxu0
      %v5849 = vadd.f32 0.0, %v5848
      %v5850 = vpop.f32.mrf.mxu0
      %v5851 = vadd.f32 0.0, %v5850
      %5852 = vmatmul.bf16.gmra.mxu0 %v5556
      %v5853 = vpop.f32.mrf.mxu0
      %v5854 = vadd.f32 0.0, %v5853
      %v5855 = vpop.f32.mrf.mxu0
      %v5856 = vadd.f32 0.0, %v5855
      %5857 = vmatmul.bf16.gmra.mxu0 %v5564
      %v5858 = vpop.f32.mrf.mxu0
      %v5859 = vadd.f32 0.0, %v5858
      %v5860 = vpop.f32.mrf.mxu0
      %v5861 = vadd.f32 0.0, %v5860
      %5862 = vmatmul.bf16.gmra.mxu0 %v5572
      %v5863 = vpop.f32.mrf.mxu0
      %v5864 = vadd.f32 0.0, %v5863
      %v5865 = vpop.f32.mrf.mxu0
      %v5866 = vadd.f32 0.0, %v5865
      %5867 = vmatmul.bf16.gmra.mxu0 %v5580
      %v5868 = vpop.f32.mrf.mxu0
      %v5869 = vadd.f32 0.0, %v5868
      %v5870 = vpop.f32.mrf.mxu0
      %v5871 = vadd.f32 0.0, %v5870
      %5872 = vmatmul.bf16.gmra.mxu0 %v5588
      %v5873 = vpop.f32.mrf.mxu0
      %v5874 = vadd.f32 0.0, %v5873
      %v5875 = vpop.f32.mrf.mxu0
      %v5876 = vadd.f32 0.0, %v5875
      %5877 = vmatmul.bf16.gmra.mxu0 %v5596
      %v5878 = vpop.f32.mrf.mxu0
      %v5879 = vadd.f32 0.0, %v5878
      %v5880 = vpop.f32.mrf.mxu0
      %v5881 = vadd.f32 0.0, %v5880
      %5882 = vmatmul.bf16.gmra.mxu0 %v5604
      %v5883 = vpop.f32.mrf.mxu0
      %v5884 = vadd.f32 0.0, %v5883
      %v5885 = vpop.f32.mrf.mxu0
      %v5886 = vadd.f32 0.0, %v5885
      %5887 = vmatmul.bf16.gmra.mxu0 %v5612
      %v5888 = vpop.f32.mrf.mxu0
      %v5889 = vadd.f32 0.0, %v5888
      %v5890 = vpop.f32.mrf.mxu0
      %v5891 = vadd.f32 0.0, %v5890
      %5892 = vmatmul.bf16.gmra.mxu0 %v5620
      %v5893 = vpop.f32.mrf.mxu0
      %v5894 = vadd.f32 0.0, %v5893
      %v5895 = vpop.f32.mrf.mxu0
      %v5896 = vadd.f32 0.0, %v5895
      %5897 = vmatmul.bf16.gmra.mxu0 %v5628
      %v5898 = vpop.f32.mrf.mxu0
      %v5899 = vadd.f32 0.0, %v5898
      %v5900 = vpop.f32.mrf.mxu0
      %v5901 = vadd.f32 0.0, %v5900
      %5902 = vdwg.mxu0
      %v5919 = vunpack.c.l.b16 %v5463
      %v5920 = vunpack.c.h.b16 %v5463
      %v5921 = vunpack.c.l.b16 %v5464
      %v5922 = vunpack.c.h.b16 %v5464
      %v5923 = vunpack.c.l.b16 %v5465
      %v5924 = vunpack.c.h.b16 %v5465
      %v5925 = vunpack.c.l.b16 %v5466
      %v5926 = vunpack.c.h.b16 %v5466
      %v5927 = vunpack.c.l.b16 %v5467
      %v5928 = vunpack.c.h.b16 %v5467
      %v5929 = vunpack.c.l.b16 %v5468
      %v5930 = vunpack.c.h.b16 %v5468
      %v5931 = vunpack.c.l.b16 %v5469
      %v5932 = vunpack.c.h.b16 %v5469
      %v5933 = vunpack.c.l.b16 %v5470
      %v5934 = vunpack.c.h.b16 %v5470
      %v5935 = vunpack.c.l.b16 %v5471
      %v5936 = vunpack.c.h.b16 %v5471
      %v5937 = vunpack.c.l.b16 %v5472
      %v5938 = vunpack.c.h.b16 %v5472
      %v5939 = vunpack.c.l.b16 %v5473
      %v5940 = vunpack.c.h.b16 %v5473
      %v5941 = vunpack.c.l.b16 %v5474
      %v5942 = vunpack.c.h.b16 %v5474
      %v5943 = vunpack.c.l.b16 %v5475
      %v5944 = vunpack.c.h.b16 %v5475
      %v5945 = vunpack.c.l.b16 %v5476
      %v5946 = vunpack.c.h.b16 %v5476
      %v5947 = vunpack.c.l.b16 %v5477
      %v5948 = vunpack.c.h.b16 %v5477
      %v5949 = vunpack.c.l.b16 %v5478
      %v5950 = vunpack.c.h.b16 %v5478
      %v5951 = vpack.c.b16 %v5921, %v5919
      %v5952 = vpack.c.b16 %v5922, %v5920
      %v5953 = vpack.c.b16 %v5925, %v5923
      %v5954 = vpack.c.b16 %v5926, %v5924
      %v5955 = vpack.c.b16 %v5929, %v5927
      %v5956 = vpack.c.b16 %v5930, %v5928
      %v5957 = vpack.c.b16 %v5933, %v5931
      %v5958 = vpack.c.b16 %v5934, %v5932
      %v5959 = vpack.c.b16 %v5937, %v5935
      %v5960 = vpack.c.b16 %v5938, %v5936
      %v5961 = vpack.c.b16 %v5941, %v5939
      %v5962 = vpack.c.b16 %v5942, %v5940
      %v5963 = vpack.c.b16 %v5945, %v5943
      %v5964 = vpack.c.b16 %v5946, %v5944
      %v5965 = vpack.c.b16 %v5949, %v5947
      %v5966 = vpack.c.b16 %v5950, %v5948
      %5983 = vmatpush.bf16.msra.mxu0 %v5965
      %5984 = vmatpush.bf16.msra.mxu0 %v5963
      %5985 = vmatpush.bf16.msra.mxu0 %v5961
      %5986 = vmatpush.bf16.msra.mxu0 %v5959
      %5987 = vmatpush.bf16.msra.mxu0 %v5957
      %5988 = vmatpush.bf16.msra.mxu0 %v5955
      %5989 = vmatpush.bf16.msra.mxu0 %v5953
      %5990 = vmatpush.bf16.msra.mxu0 %v5951
      %5991 = vmatmul.bf16.gmra.mxu0 %v5447
      %v5992 = vpop.f32.mrf.mxu0
      %v5993 = vadd.f32 %v5735, %v5992
      %v5994 = vpop.f32.mrf.mxu0
      %v5995 = vadd.f32 %v5737, %v5994
      %5996 = vmatmul.bf16.gmra.mxu0 %v5448
      %v5997 = vpop.f32.mrf.mxu0
      %v5998 = vadd.f32 %v5740, %v5997
      %v5999 = vpop.f32.mrf.mxu0
      %v6000 = vadd.f32 %v5742, %v5999
      %6001 = vmatmul.bf16.gmra.mxu0 %v5449
      %v6002 = vpop.f32.mrf.mxu0
      %v6003 = vadd.f32 %v5745, %v6002
      %v6004 = vpop.f32.mrf.mxu0
      %v6005 = vadd.f32 %v5747, %v6004
      %6006 = vmatmul.bf16.gmra.mxu0 %v5450
      %v6007 = vpop.f32.mrf.mxu0
      %v6008 = vadd.f32 %v5750, %v6007
      %v6009 = vpop.f32.mrf.mxu0
      %v6010 = vadd.f32 %v5752, %v6009
      %6011 = vmatmul.bf16.gmra.mxu0 %v5451
      %v6012 = vpop.f32.mrf.mxu0
      %v6013 = vadd.f32 %v5755, %v6012
      %v6014 = vpop.f32.mrf.mxu0
      %v6015 = vadd.f32 %v5757, %v6014
      %6016 = vmatmul.bf16.gmra.mxu0 %v5452
      %v6017 = vpop.f32.mrf.mxu0
      %v6018 = vadd.f32 %v5760, %v6017
      %v6019 = vpop.f32.mrf.mxu0
      %v6020 = vadd.f32 %v5762, %v6019
      %6021 = vmatmul.bf16.gmra.mxu0 %v5453
      %v6022 = vpop.f32.mrf.mxu0
      %v6023 = vadd.f32 %v5765, %v6022
      %v6024 = vpop.f32.mrf.mxu0
      %v6025 = vadd.f32 %v5767, %v6024
      %6026 = vmatmul.bf16.gmra.mxu0 %v5454
      %v6027 = vpop.f32.mrf.mxu0
      %v6028 = vadd.f32 %v5770, %v6027
      %v6029 = vpop.f32.mrf.mxu0
      %v6030 = vadd.f32 %v5772, %v6029
      %6031 = vmatmul.bf16.gmra.mxu0 %v5455
      %v6032 = vpop.f32.mrf.mxu0
      %v6033 = vadd.f32 %v5775, %v6032
      %v6034 = vpop.f32.mrf.mxu0
      %v6035 = vadd.f32 %v5777, %v6034
      %6036 = vmatmul.bf16.gmra.mxu0 %v5456
      %v6037 = vpop.f32.mrf.mxu0
      %v6038 = vadd.f32 %v5780, %v6037
      %v6039 = vpop.f32.mrf.mxu0
      %v6040 = vadd.f32 %v5782, %v6039
      %6041 = vmatmul.bf16.gmra.mxu0 %v5457
      %v6042 = vpop.f32.mrf.mxu0
      %v6043 = vadd.f32 %v5785, %v6042
      %v6044 = vpop.f32.mrf.mxu0
      %v6045 = vadd.f32 %v5787, %v6044
      %6046 = vmatmul.bf16.gmra.mxu0 %v5458
      %v6047 = vpop.f32.mrf.mxu0
      %v6048 = vadd.f32 %v5790, %v6047
      %v6049 = vpop.f32.mrf.mxu0
      %v6050 = vadd.f32 %v5792, %v6049
      %6051 = vmatmul.bf16.gmra.mxu0 %v5459
      %v6052 = vpop.f32.mrf.mxu0
      %v6053 = vadd.f32 %v5795, %v6052
      %v6054 = vpop.f32.mrf.mxu0
      %v6055 = vadd.f32 %v5797, %v6054
      %6056 = vmatmul.bf16.gmra.mxu0 %v5460
      %v6057 = vpop.f32.mrf.mxu0
      %v6058 = vadd.f32 %v5800, %v6057
      %v6059 = vpop.f32.mrf.mxu0
      %v6060 = vadd.f32 %v5802, %v6059
      %6061 = vmatmul.bf16.gmra.mxu0 %v5461
      %v6062 = vpop.f32.mrf.mxu0
      %v6063 = vadd.f32 %v5805, %v6062
      %v6064 = vpop.f32.mrf.mxu0
      %v6065 = vadd.f32 %v5807, %v6064
      %6066 = vmatmul.bf16.gmra.mxu0 %v5462
      %v6067 = vpop.f32.mrf.mxu0
      %v6068 = vadd.f32 %v5810, %v6067
      %v6069 = vpop.f32.mrf.mxu0
      %v6070 = vadd.f32 %v5812, %v6069
      %6071 = vdwg.mxu0
      %6072 = vmatpush.bf16.msra.mxu0 %v5966
      %6073 = vmatpush.bf16.msra.mxu0 %v5964
      %6074 = vmatpush.bf16.msra.mxu0 %v5962
      %6075 = vmatpush.bf16.msra.mxu0 %v5960
      %6076 = vmatpush.bf16.msra.mxu0 %v5958
      %6077 = vmatpush.bf16.msra.mxu0 %v5956
      %6078 = vmatpush.bf16.msra.mxu0 %v5954
      %6079 = vmatpush.bf16.msra.mxu0 %v5952
      %6080 = vmatmul.bf16.gmra.mxu0 %v5447
      %v6081 = vpop.f32.mrf.mxu0
      %v6082 = vadd.f32 %v5824, %v6081
      %v6083 = vpop.f32.mrf.mxu0
      %v6084 = vadd.f32 %v5826, %v6083
      %6085 = vmatmul.bf16.gmra.mxu0 %v5448
      %v6086 = vpop.f32.mrf.mxu0
      %v6087 = vadd.f32 %v5829, %v6086
      %v6088 = vpop.f32.mrf.mxu0
      %v6089 = vadd.f32 %v5831, %v6088
      %6090 = vmatmul.bf16.gmra.mxu0 %v5449
      %v6091 = vpop.f32.mrf.mxu0
      %v6092 = vadd.f32 %v5834, %v6091
      %v6093 = vpop.f32.mrf.mxu0
      %v6094 = vadd.f32 %v5836, %v6093
      %6095 = vmatmul.bf16.gmra.mxu0 %v5450
      %v6096 = vpop.f32.mrf.mxu0
      %v6097 = vadd.f32 %v5839, %v6096
      %v6098 = vpop.f32.mrf.mxu0
      %v6099 = vadd.f32 %v5841, %v6098
      %6100 = vmatmul.bf16.gmra.mxu0 %v5451
      %v6101 = vpop.f32.mrf.mxu0
      %v6102 = vadd.f32 %v5844, %v6101
      %v6103 = vpop.f32.mrf.mxu0
      %v6104 = vadd.f32 %v5846, %v6103
      %6105 = vmatmul.bf16.gmra.mxu0 %v5452
      %v6106 = vpop.f32.mrf.mxu0
      %v6107 = vadd.f32 %v5849, %v6106
      %v6108 = vpop.f32.mrf.mxu0
      %v6109 = vadd.f32 %v5851, %v6108
      %6110 = vmatmul.bf16.gmra.mxu0 %v5453
      %v6111 = vpop.f32.mrf.mxu0
      %v6112 = vadd.f32 %v5854, %v6111
      %v6113 = vpop.f32.mrf.mxu0
      %v6114 = vadd.f32 %v5856, %v6113
      %6115 = vmatmul.bf16.gmra.mxu0 %v5454
      %v6116 = vpop.f32.mrf.mxu0
      %v6117 = vadd.f32 %v5859, %v6116
      %v6118 = vpop.f32.mrf.mxu0
      %v6119 = vadd.f32 %v5861, %v6118
      %6120 = vmatmul.bf16.gmra.mxu0 %v5455
      %v6121 = vpop.f32.mrf.mxu0
      %v6122 = vadd.f32 %v5864, %v6121
      %v6123 = vpop.f32.mrf.mxu0
      %v6124 = vadd.f32 %v5866, %v6123
      %6125 = vmatmul.bf16.gmra.mxu0 %v5456
      %v6126 = vpop.f32.mrf.mxu0
      %v6127 = vadd.f32 %v5869, %v6126
      %v6128 = vpop.f32.mrf.mxu0
      %v6129 = vadd.f32 %v5871, %v6128
      %6130 = vmatmul.bf16.gmra.mxu0 %v5457
      %v6131 = vpop.f32.mrf.mxu0
      %v6132 = vadd.f32 %v5874, %v6131
      %v6133 = vpop.f32.mrf.mxu0
      %v6134 = vadd.f32 %v5876, %v6133
      %6135 = vmatmul.bf16.gmra.mxu0 %v5458
      %v6136 = vpop.f32.mrf.mxu0
      %v6137 = vadd.f32 %v5879, %v6136
      %v6138 = vpop.f32.mrf.mxu0
      %v6139 = vadd.f32 %v5881, %v6138
      %6140 = vmatmul.bf16.gmra.mxu0 %v5459
      %v6141 = vpop.f32.mrf.mxu0
      %v6142 = vadd.f32 %v5884, %v6141
      %v6143 = vpop.f32.mrf.mxu0
      %v6144 = vadd.f32 %v5886, %v6143
      %6145 = vmatmul.bf16.gmra.mxu0 %v5460
      %v6146 = vpop.f32.mrf.mxu0
      %v6147 = vadd.f32 %v5889, %v6146
      %v6148 = vpop.f32.mrf.mxu0
      %v6149 = vadd.f32 %v5891, %v6148
      %6150 = vmatmul.bf16.gmra.mxu0 %v5461
      %v6151 = vpop.f32.mrf.mxu0
      %v6152 = vadd.f32 %v5894, %v6151
      %v6153 = vpop.f32.mrf.mxu0
      %v6154 = vadd.f32 %v5896, %v6153
      %6155 = vmatmul.bf16.gmra.mxu0 %v5462
      %v6156 = vpop.f32.mrf.mxu0
      %v6157 = vadd.f32 %v5899, %v6156
      %v6158 = vpop.f32.mrf.mxu0
      %v6159 = vadd.f32 %v5901, %v6158
      %6160 = vdwg.mxu0
      %s6161 = scalar_lea.vmem %s6, 256
      %v6162 = vld [vmem:[%s6161] sm:$0xff]
      %v6163 = vld [vmem:[%s6161 + $0x8] sm:$0xff]
      %v6164 = vld [vmem:[%s6161 + $0x10] sm:$0xff]
      %v6165 = vld [vmem:[%s6161 + $0x18] sm:$0xff]
      %v6166 = vld [vmem:[%s6161 + $0x20] sm:$0xff]
      %v6167 = vld [vmem:[%s6161 + $0x28] sm:$0xff]
      %v6168 = vld [vmem:[%s6161 + $0x30] sm:$0xff]
      %v6169 = vld [vmem:[%s6161 + $0x38] sm:$0xff]
      %v6170 = vld [vmem:[%s6161 + $0x40] sm:$0xff]
      %v6171 = vld [vmem:[%s6161 + $0x48] sm:$0xff]
      %v6172 = vld [vmem:[%s6161 + $0x50] sm:$0xff]
      %v6173 = vld [vmem:[%s6161 + $0x58] sm:$0xff]
      %v6174 = vld [vmem:[%s6161 + $0x60] sm:$0xff]
      %v6175 = vld [vmem:[%s6161 + $0x68] sm:$0xff]
      %v6176 = vld [vmem:[%s6161 + $0x70] sm:$0xff]
      %v6177 = vld [vmem:[%s6161 + $0x78] sm:$0xff]
      %v6195 = vrot.slane %v5447, 1
      %v6196 = vrot.slane %v5448, 1
      %v6197 = vsel %vm1852, %v6195, %v6196
      %v6198 = vrot.slane %v5449, 1
      %v6199 = vsel %vm1852, %v6196, %v6198
      %v6200 = vrot.slane %v5450, 1
      %v6201 = vsel %vm1852, %v6198, %v6200
      %v6202 = vrot.slane %v5451, 1
      %v6203 = vsel %vm1852, %v6200, %v6202
      %v6204 = vrot.slane %v5452, 1
      %v6205 = vsel %vm1852, %v6202, %v6204
      %v6206 = vrot.slane %v5453, 1
      %v6207 = vsel %vm1852, %v6204, %v6206
      %v6208 = vrot.slane %v5454, 1
      %v6209 = vsel %vm1852, %v6206, %v6208
      %v6210 = vrot.slane %v5455, 1
      %v6211 = vsel %vm1852, %v6208, %v6210
      %v6212 = vrot.slane %v5456, 1
      %v6213 = vsel %vm1852, %v6210, %v6212
      %v6214 = vrot.slane %v5457, 1
      %v6215 = vsel %vm1852, %v6212, %v6214
      %v6216 = vrot.slane %v5458, 1
      %v6217 = vsel %vm1852, %v6214, %v6216
      %v6218 = vrot.slane %v5459, 1
      %v6219 = vsel %vm1852, %v6216, %v6218
      %v6220 = vrot.slane %v5460, 1
      %v6221 = vsel %vm1852, %v6218, %v6220
      %v6222 = vrot.slane %v5461, 1
      %v6223 = vsel %vm1852, %v6220, %v6222
      %v6224 = vrot.slane %v5462, 1
      %v6225 = vsel %vm1852, %v6222, %v6224
      %v6226 = vrot.slane %v5479, 1
      %v6227 = vsel %vm1852, %v6224, %v6226
      %v6260 = vunpack.c.l.b16 %v6162
      %v6261 = vunpack.c.h.b16 %v6162
      %v6262 = vunpack.c.l.b16 %v6163
      %v6263 = vunpack.c.h.b16 %v6163
      %v6264 = vunpack.c.l.b16 %v6164
      %v6265 = vunpack.c.h.b16 %v6164
      %v6266 = vunpack.c.l.b16 %v6165
      %v6267 = vunpack.c.h.b16 %v6165
      %v6268 = vunpack.c.l.b16 %v6166
      %v6269 = vunpack.c.h.b16 %v6166
      %v6270 = vunpack.c.l.b16 %v6167
      %v6271 = vunpack.c.h.b16 %v6167
      %v6272 = vunpack.c.l.b16 %v6168
      %v6273 = vunpack.c.h.b16 %v6168
      %v6274 = vunpack.c.l.b16 %v6169
      %v6275 = vunpack.c.h.b16 %v6169
      %v6276 = vunpack.c.l.b16 %v6170
      %v6277 = vunpack.c.h.b16 %v6170
      %v6278 = vunpack.c.l.b16 %v6171
      %v6279 = vunpack.c.h.b16 %v6171
      %v6280 = vunpack.c.l.b16 %v6172
      %v6281 = vunpack.c.h.b16 %v6172
      %v6282 = vunpack.c.l.b16 %v6173
      %v6283 = vunpack.c.h.b16 %v6173
      %v6284 = vunpack.c.l.b16 %v6174
      %v6285 = vunpack.c.h.b16 %v6174
      %v6286 = vunpack.c.l.b16 %v6175
      %v6287 = vunpack.c.h.b16 %v6175
      %v6288 = vunpack.c.l.b16 %v6176
      %v6289 = vunpack.c.h.b16 %v6176
      %v6290 = vunpack.c.l.b16 %v6177
      %v6291 = vunpack.c.h.b16 %v6177
      %v6292 = vpack.c.b16 %v6262, %v6260
      %v6293 = vpack.c.b16 %v6263, %v6261
      %v6294 = vpack.c.b16 %v6266, %v6264
      %v6295 = vpack.c.b16 %v6267, %v6265
      %v6296 = vpack.c.b16 %v6270, %v6268
      %v6297 = vpack.c.b16 %v6271, %v6269
      %v6298 = vpack.c.b16 %v6274, %v6272
      %v6299 = vpack.c.b16 %v6275, %v6273
      %v6300 = vpack.c.b16 %v6278, %v6276
      %v6301 = vpack.c.b16 %v6279, %v6277
      %v6302 = vpack.c.b16 %v6282, %v6280
      %v6303 = vpack.c.b16 %v6283, %v6281
      %v6304 = vpack.c.b16 %v6286, %v6284
      %v6305 = vpack.c.b16 %v6287, %v6285
      %v6306 = vpack.c.b16 %v6290, %v6288
      %v6307 = vpack.c.b16 %v6291, %v6289
      %6324 = vmatpush.bf16.msra.mxu0 %v6306
      %6325 = vmatpush.bf16.msra.mxu0 %v6304
      %6326 = vmatpush.bf16.msra.mxu0 %v6302
      %6327 = vmatpush.bf16.msra.mxu0 %v6300
      %6328 = vmatpush.bf16.msra.mxu0 %v6298
      %6329 = vmatpush.bf16.msra.mxu0 %v6296
      %6330 = vmatpush.bf16.msra.mxu0 %v6294
      %6331 = vmatpush.bf16.msra.mxu0 %v6292
      %6332 = vmatmul.bf16.gmra.mxu0 %v6197
      %v6333 = vpop.f32.mrf.mxu0
      %v6334 = vadd.f32 0.0, %v6333
      %v6335 = vpop.f32.mrf.mxu0
      %v6336 = vadd.f32 0.0, %v6335
      %6337 = vmatmul.bf16.gmra.mxu0 %v6199
      %v6338 = vpop.f32.mrf.mxu0
      %v6339 = vadd.f32 0.0, %v6338
      %v6340 = vpop.f32.mrf.mxu0
      %v6341 = vadd.f32 0.0, %v6340
      %6342 = vmatmul.bf16.gmra.mxu0 %v6201
      %v6343 = vpop.f32.mrf.mxu0
      %v6344 = vadd.f32 0.0, %v6343
      %v6345 = vpop.f32.mrf.mxu0
      %v6346 = vadd.f32 0.0, %v6345
      %6347 = vmatmul.bf16.gmra.mxu0 %v6203
      %v6348 = vpop.f32.mrf.mxu0
      %v6349 = vadd.f32 0.0, %v6348
      %v6350 = vpop.f32.mrf.mxu0
      %v6351 = vadd.f32 0.0, %v6350
      %6352 = vmatmul.bf16.gmra.mxu0 %v6205
      %v6353 = vpop.f32.mrf.mxu0
      %v6354 = vadd.f32 0.0, %v6353
      %v6355 = vpop.f32.mrf.mxu0
      %v6356 = vadd.f32 0.0, %v6355
      %6357 = vmatmul.bf16.gmra.mxu0 %v6207
      %v6358 = vpop.f32.mrf.mxu0
      %v6359 = vadd.f32 0.0, %v6358
      %v6360 = vpop.f32.mrf.mxu0
      %v6361 = vadd.f32 0.0, %v6360
      %6362 = vmatmul.bf16.gmra.mxu0 %v6209
      %v6363 = vpop.f32.mrf.mxu0
      %v6364 = vadd.f32 0.0, %v6363
      %v6365 = vpop.f32.mrf.mxu0
      %v6366 = vadd.f32 0.0, %v6365
      %6367 = vmatmul.bf16.gmra.mxu0 %v6211
      %v6368 = vpop.f32.mrf.mxu0
      %v6369 = vadd.f32 0.0, %v6368
      %v6370 = vpop.f32.mrf.mxu0
      %v6371 = vadd.f32 0.0, %v6370
      %6372 = vmatmul.bf16.gmra.mxu0 %v6213
      %v6373 = vpop.f32.mrf.mxu0
      %v6374 = vadd.f32 0.0, %v6373
      %v6375 = vpop.f32.mrf.mxu0
      %v6376 = vadd.f32 0.0, %v6375
      %6377 = vmatmul.bf16.gmra.mxu0 %v6215
      %v6378 = vpop.f32.mrf.mxu0
      %v6379 = vadd.f32 0.0, %v6378
      %v6380 = vpop.f32.mrf.mxu0
      %v6381 = vadd.f32 0.0, %v6380
      %6382 = vmatmul.bf16.gmra.mxu0 %v6217
      %v6383 = vpop.f32.mrf.mxu0
      %v6384 = vadd.f32 0.0, %v6383
      %v6385 = vpop.f32.mrf.mxu0
      %v6386 = vadd.f32 0.0, %v6385
      %6387 = vmatmul.bf16.gmra.mxu0 %v6219
      %v6388 = vpop.f32.mrf.mxu0
      %v6389 = vadd.f32 0.0, %v6388
      %v6390 = vpop.f32.mrf.mxu0
      %v6391 = vadd.f32 0.0, %v6390
      %6392 = vmatmul.bf16.gmra.mxu0 %v6221
      %v6393 = vpop.f32.mrf.mxu0
      %v6394 = vadd.f32 0.0, %v6393
      %v6395 = vpop.f32.mrf.mxu0
      %v6396 = vadd.f32 0.0, %v6395
      %6397 = vmatmul.bf16.gmra.mxu0 %v6223
      %v6398 = vpop.f32.mrf.mxu0
      %v6399 = vadd.f32 0.0, %v6398
      %v6400 = vpop.f32.mrf.mxu0
      %v6401 = vadd.f32 0.0, %v6400
      %6402 = vmatmul.bf16.gmra.mxu0 %v6225
      %v6403 = vpop.f32.mrf.mxu0
      %v6404 = vadd.f32 0.0, %v6403
      %v6405 = vpop.f32.mrf.mxu0
      %v6406 = vadd.f32 0.0, %v6405
      %6407 = vmatmul.bf16.gmra.mxu0 %v6227
      %v6408 = vpop.f32.mrf.mxu0
      %v6409 = vadd.f32 0.0, %v6408
      %v6410 = vpop.f32.mrf.mxu0
      %v6411 = vadd.f32 0.0, %v6410
      %6412 = vdwg.mxu0
      %6413 = vmatpush.bf16.msra.mxu0 %v6307
      %6414 = vmatpush.bf16.msra.mxu0 %v6305
      %6415 = vmatpush.bf16.msra.mxu0 %v6303
      %6416 = vmatpush.bf16.msra.mxu0 %v6301
      %6417 = vmatpush.bf16.msra.mxu0 %v6299
      %6418 = vmatpush.bf16.msra.mxu0 %v6297
      %6419 = vmatpush.bf16.msra.mxu0 %v6295
      %6420 = vmatpush.bf16.msra.mxu0 %v6293
      %6421 = vmatmul.bf16.gmra.mxu0 %v6197
      %v6422 = vpop.f32.mrf.mxu0
      %v6423 = vadd.f32 0.0, %v6422
      %v6424 = vpop.f32.mrf.mxu0
      %v6425 = vadd.f32 0.0, %v6424
      %6426 = vmatmul.bf16.gmra.mxu0 %v6199
      %v6427 = vpop.f32.mrf.mxu0
      %v6428 = vadd.f32 0.0, %v6427
      %v6429 = vpop.f32.mrf.mxu0
      %v6430 = vadd.f32 0.0, %v6429
      %6431 = vmatmul.bf16.gmra.mxu0 %v6201
      %v6432 = vpop.f32.mrf.mxu0
      %v6433 = vadd.f32 0.0, %v6432
      %v6434 = vpop.f32.mrf.mxu0
      %v6435 = vadd.f32 0.0, %v6434
      %6436 = vmatmul.bf16.gmra.mxu0 %v6203
      %v6437 = vpop.f32.mrf.mxu0
      %v6438 = vadd.f32 0.0, %v6437
      %v6439 = vpop.f32.mrf.mxu0
      %v6440 = vadd.f32 0.0, %v6439
      %6441 = vmatmul.bf16.gmra.mxu0 %v6205
      %v6442 = vpop.f32.mrf.mxu0
      %v6443 = vadd.f32 0.0, %v6442
      %v6444 = vpop.f32.mrf.mxu0
      %v6445 = vadd.f32 0.0, %v6444
      %6446 = vmatmul.bf16.gmra.mxu0 %v6207
      %v6447 = vpop.f32.mrf.mxu0
      %v6448 = vadd.f32 0.0, %v6447
      %v6449 = vpop.f32.mrf.mxu0
      %v6450 = vadd.f32 0.0, %v6449
      %6451 = vmatmul.bf16.gmra.mxu0 %v6209
      %v6452 = vpop.f32.mrf.mxu0
      %v6453 = vadd.f32 0.0, %v6452
      %v6454 = vpop.f32.mrf.mxu0
      %v6455 = vadd.f32 0.0, %v6454
      %6456 = vmatmul.bf16.gmra.mxu0 %v6211
      %v6457 = vpop.f32.mrf.mxu0
      %v6458 = vadd.f32 0.0, %v6457
      %v6459 = vpop.f32.mrf.mxu0
      %v6460 = vadd.f32 0.0, %v6459
      %6461 = vmatmul.bf16.gmra.mxu0 %v6213
      %v6462 = vpop.f32.mrf.mxu0
      %v6463 = vadd.f32 0.0, %v6462
      %v6464 = vpop.f32.mrf.mxu0
      %v6465 = vadd.f32 0.0, %v6464
      %6466 = vmatmul.bf16.gmra.mxu0 %v6215
      %v6467 = vpop.f32.mrf.mxu0
      %v6468 = vadd.f32 0.0, %v6467
      %v6469 = vpop.f32.mrf.mxu0
      %v6470 = vadd.f32 0.0, %v6469
      %6471 = vmatmul.bf16.gmra.mxu0 %v6217
      %v6472 = vpop.f32.mrf.mxu0
      %v6473 = vadd.f32 0.0, %v6472
      %v6474 = vpop.f32.mrf.mxu0
      %v6475 = vadd.f32 0.0, %v6474
      %6476 = vmatmul.bf16.gmra.mxu0 %v6219
      %v6477 = vpop.f32.mrf.mxu0
      %v6478 = vadd.f32 0.0, %v6477
      %v6479 = vpop.f32.mrf.mxu0
      %v6480 = vadd.f32 0.0, %v6479
      %6481 = vmatmul.bf16.gmra.mxu0 %v6221
      %v6482 = vpop.f32.mrf.mxu0
      %v6483 = vadd.f32 0.0, %v6482
      %v6484 = vpop.f32.mrf.mxu0
      %v6485 = vadd.f32 0.0, %v6484
      %6486 = vmatmul.bf16.gmra.mxu0 %v6223
      %v6487 = vpop.f32.mrf.mxu0
      %v6488 = vadd.f32 0.0, %v6487
      %v6489 = vpop.f32.mrf.mxu0
      %v6490 = vadd.f32 0.0, %v6489
      %6491 = vmatmul.bf16.gmra.mxu0 %v6225
      %v6492 = vpop.f32.mrf.mxu0
      %v6493 = vadd.f32 0.0, %v6492
      %v6494 = vpop.f32.mrf.mxu0
      %v6495 = vadd.f32 0.0, %v6494
      %6496 = vmatmul.bf16.gmra.mxu0 %v6227
      %v6497 = vpop.f32.mrf.mxu0
      %v6498 = vadd.f32 0.0, %v6497
      %v6499 = vpop.f32.mrf.mxu0
      %v6500 = vadd.f32 0.0, %v6499
      %6501 = vdwg.mxu0
      %v6502 = vadd.f32 %v5993, %v6334
      %v6503 = vadd.f32 %v6082, %v6423
      %v6504 = vadd.f32 %v5995, %v6336
      %v6505 = vadd.f32 %v6084, %v6425
      %v6506 = vadd.f32 %v5998, %v6339
      %v6507 = vadd.f32 %v6087, %v6428
      %v6508 = vadd.f32 %v6000, %v6341
      %v6509 = vadd.f32 %v6089, %v6430
      %v6510 = vadd.f32 %v6003, %v6344
      %v6511 = vadd.f32 %v6092, %v6433
      %v6512 = vadd.f32 %v6005, %v6346
      %v6513 = vadd.f32 %v6094, %v6435
      %v6514 = vadd.f32 %v6008, %v6349
      %v6515 = vadd.f32 %v6097, %v6438
      %v6516 = vadd.f32 %v6010, %v6351
      %v6517 = vadd.f32 %v6099, %v6440
      %v6518 = vadd.f32 %v6013, %v6354
      %v6519 = vadd.f32 %v6102, %v6443
      %v6520 = vadd.f32 %v6015, %v6356
      %v6521 = vadd.f32 %v6104, %v6445
      %v6522 = vadd.f32 %v6018, %v6359
      %v6523 = vadd.f32 %v6107, %v6448
      %v6524 = vadd.f32 %v6020, %v6361
      %v6525 = vadd.f32 %v6109, %v6450
      %v6526 = vadd.f32 %v6023, %v6364
      %v6527 = vadd.f32 %v6112, %v6453
      %v6528 = vadd.f32 %v6025, %v6366
      %v6529 = vadd.f32 %v6114, %v6455
      %v6530 = vadd.f32 %v6028, %v6369
      %v6531 = vadd.f32 %v6117, %v6458
      %v6532 = vadd.f32 %v6030, %v6371
      %v6533 = vadd.f32 %v6119, %v6460
      %v6534 = vadd.f32 %v6033, %v6374
      %v6535 = vadd.f32 %v6122, %v6463
      %v6536 = vadd.f32 %v6035, %v6376
      %v6537 = vadd.f32 %v6124, %v6465
      %v6538 = vadd.f32 %v6038, %v6379
      %v6539 = vadd.f32 %v6127, %v6468
      %v6540 = vadd.f32 %v6040, %v6381
      %v6541 = vadd.f32 %v6129, %v6470
      %v6542 = vadd.f32 %v6043, %v6384
      %v6543 = vadd.f32 %v6132, %v6473
      %v6544 = vadd.f32 %v6045, %v6386
      %v6545 = vadd.f32 %v6134, %v6475
      %v6546 = vadd.f32 %v6048, %v6389
      %v6547 = vadd.f32 %v6137, %v6478
      %v6548 = vadd.f32 %v6050, %v6391
      %v6549 = vadd.f32 %v6139, %v6480
      %v6550 = vadd.f32 %v6053, %v6394
      %v6551 = vadd.f32 %v6142, %v6483
      %v6552 = vadd.f32 %v6055, %v6396
      %v6553 = vadd.f32 %v6144, %v6485
      %v6554 = vadd.f32 %v6058, %v6399
      %v6555 = vadd.f32 %v6147, %v6488
      %v6556 = vadd.f32 %v6060, %v6401
      %v6557 = vadd.f32 %v6149, %v6490
      %v6558 = vadd.f32 %v6063, %v6404
      %v6559 = vadd.f32 %v6152, %v6493
      %v6560 = vadd.f32 %v6065, %v6406
      %v6561 = vadd.f32 %v6154, %v6495
      %v6562 = vadd.f32 %v6068, %v6409
      %v6563 = vadd.f32 %v6157, %v6498
      %v6564 = vadd.f32 %v6070, %v6411
      %v6565 = vadd.f32 %v6159, %v6500
      %v6567 = vperm.slane %v5445, 0
      %v6568 = vperm.slane %v5445, 1
      %v6571 = vmul.f32 %v6502, %v6567
      %v6572 = vmul.f32 %v6503, %v6568
      %v6573 = vmul.f32 %v6504, %v6567
      %v6574 = vmul.f32 %v6505, %v6568
      %v6575 = vmul.f32 %v6506, %v6567
      %v6576 = vmul.f32 %v6507, %v6568
      %v6577 = vmul.f32 %v6508, %v6567
      %v6578 = vmul.f32 %v6509, %v6568
      %v6579 = vmul.f32 %v6510, %v6567
      %v6580 = vmul.f32 %v6511, %v6568
      %v6581 = vmul.f32 %v6512, %v6567
      %v6582 = vmul.f32 %v6513, %v6568
      %v6583 = vmul.f32 %v6514, %v6567
      %v6584 = vmul.f32 %v6515, %v6568
      %v6585 = vmul.f32 %v6516, %v6567
      %v6586 = vmul.f32 %v6517, %v6568
      %v6587 = vmul.f32 %v6518, %v6567
      %v6588 = vmul.f32 %v6519, %v6568
      %v6589 = vmul.f32 %v6520, %v6567
      %v6590 = vmul.f32 %v6521, %v6568
      %v6591 = vmul.f32 %v6522, %v6567
      %v6592 = vmul.f32 %v6523, %v6568
      %v6593 = vmul.f32 %v6524, %v6567
      %v6594 = vmul.f32 %v6525, %v6568
      %v6595 = vmul.f32 %v6526, %v6567
      %v6596 = vmul.f32 %v6527, %v6568
      %v6597 = vmul.f32 %v6528, %v6567
      %v6598 = vmul.f32 %v6529, %v6568
      %v6599 = vmul.f32 %v6530, %v6567
      %v6600 = vmul.f32 %v6531, %v6568
      %v6601 = vmul.f32 %v6532, %v6567
      %v6602 = vmul.f32 %v6533, %v6568
      %v6603 = vmul.f32 %v6534, %v6567
      %v6604 = vmul.f32 %v6535, %v6568
      %v6605 = vmul.f32 %v6536, %v6567
      %v6606 = vmul.f32 %v6537, %v6568
      %v6607 = vmul.f32 %v6538, %v6567
      %v6608 = vmul.f32 %v6539, %v6568
      %v6609 = vmul.f32 %v6540, %v6567
      %v6610 = vmul.f32 %v6541, %v6568
      %v6611 = vmul.f32 %v6542, %v6567
      %v6612 = vmul.f32 %v6543, %v6568
      %v6613 = vmul.f32 %v6544, %v6567
      %v6614 = vmul.f32 %v6545, %v6568
      %v6615 = vmul.f32 %v6546, %v6567
      %v6616 = vmul.f32 %v6547, %v6568
      %v6617 = vmul.f32 %v6548, %v6567
      %v6618 = vmul.f32 %v6549, %v6568
      %v6619 = vmul.f32 %v6550, %v6567
      %v6620 = vmul.f32 %v6551, %v6568
      %v6621 = vmul.f32 %v6552, %v6567
      %v6622 = vmul.f32 %v6553, %v6568
      %v6623 = vmul.f32 %v6554, %v6567
      %v6624 = vmul.f32 %v6555, %v6568
      %v6625 = vmul.f32 %v6556, %v6567
      %v6626 = vmul.f32 %v6557, %v6568
      %v6627 = vmul.f32 %v6558, %v6567
      %v6628 = vmul.f32 %v6559, %v6568
      %v6629 = vmul.f32 %v6560, %v6567
      %v6630 = vmul.f32 %v6561, %v6568
      %v6631 = vmul.f32 %v6562, %v6567
      %v6632 = vmul.f32 %v6563, %v6568
      %v6633 = vmul.f32 %v6564, %v6567
      %v6634 = vmul.f32 %v6565, %v6568
      %v6636 = vperm.slane %v5446, 0
      %v6637 = vperm.slane %v5446, 1
      %v6640 = vadd.f32 %v6571, %v6636
      %v6641 = vadd.f32 %v6572, %v6637
      %v6642 = vadd.f32 %v6573, %v6636
      %v6643 = vadd.f32 %v6574, %v6637
      %v6644 = vadd.f32 %v6575, %v6636
      %v6645 = vadd.f32 %v6576, %v6637
      %v6646 = vadd.f32 %v6577, %v6636
      %v6647 = vadd.f32 %v6578, %v6637
      %v6648 = vadd.f32 %v6579, %v6636
      %v6649 = vadd.f32 %v6580, %v6637
      %v6650 = vadd.f32 %v6581, %v6636
      %v6651 = vadd.f32 %v6582, %v6637
      %v6652 = vadd.f32 %v6583, %v6636
      %v6653 = vadd.f32 %v6584, %v6637
      %v6654 = vadd.f32 %v6585, %v6636
      %v6655 = vadd.f32 %v6586, %v6637
      %v6656 = vadd.f32 %v6587, %v6636
      %v6657 = vadd.f32 %v6588, %v6637
      %v6658 = vadd.f32 %v6589, %v6636
      %v6659 = vadd.f32 %v6590, %v6637
      %v6660 = vadd.f32 %v6591, %v6636
      %v6661 = vadd.f32 %v6592, %v6637
      %v6662 = vadd.f32 %v6593, %v6636
      %v6663 = vadd.f32 %v6594, %v6637
      %v6664 = vadd.f32 %v6595, %v6636
      %v6665 = vadd.f32 %v6596, %v6637
      %v6666 = vadd.f32 %v6597, %v6636
      %v6667 = vadd.f32 %v6598, %v6637
      %v6668 = vadd.f32 %v6599, %v6636
      %v6669 = vadd.f32 %v6600, %v6637
      %v6670 = vadd.f32 %v6601, %v6636
      %v6671 = vadd.f32 %v6602, %v6637
      %v6672 = vadd.f32 %v6603, %v6636
      %v6673 = vadd.f32 %v6604, %v6637
      %v6674 = vadd.f32 %v6605, %v6636
      %v6675 = vadd.f32 %v6606, %v6637
      %v6676 = vadd.f32 %v6607, %v6636
      %v6677 = vadd.f32 %v6608, %v6637
      %v6678 = vadd.f32 %v6609, %v6636
      %v6679 = vadd.f32 %v6610, %v6637
      %v6680 = vadd.f32 %v6611, %v6636
      %v6681 = vadd.f32 %v6612, %v6637
      %v6682 = vadd.f32 %v6613, %v6636
      %v6683 = vadd.f32 %v6614, %v6637
      %v6684 = vadd.f32 %v6615, %v6636
      %v6685 = vadd.f32 %v6616, %v6637
      %v6686 = vadd.f32 %v6617, %v6636
      %v6687 = vadd.f32 %v6618, %v6637
      %v6688 = vadd.f32 %v6619, %v6636
      %v6689 = vadd.f32 %v6620, %v6637
      %v6690 = vadd.f32 %v6621, %v6636
      %v6691 = vadd.f32 %v6622, %v6637
      %v6692 = vadd.f32 %v6623, %v6636
      %v6693 = vadd.f32 %v6624, %v6637
      %v6694 = vadd.f32 %v6625, %v6636
      %v6695 = vadd.f32 %v6626, %v6637
      %v6696 = vadd.f32 %v6627, %v6636
      %v6697 = vadd.f32 %v6628, %v6637
      %v6698 = vadd.f32 %v6629, %v6636
      %v6699 = vadd.f32 %v6630, %v6637
      %v6700 = vadd.f32 %v6631, %v6636
      %v6701 = vadd.f32 %v6632, %v6637
      %v6702 = vadd.f32 %v6633, %v6636
      %v6703 = vadd.f32 %v6634, %v6637
      %v6704 = vmax.f32 %v6640, 0.0
      %v6705 = vmax.f32 %v6641, 0.0
      %v6706 = vmax.f32 %v6642, 0.0
      %v6707 = vmax.f32 %v6643, 0.0
      %v6708 = vmax.f32 %v6644, 0.0
      %v6709 = vmax.f32 %v6645, 0.0
      %v6710 = vmax.f32 %v6646, 0.0
      %v6711 = vmax.f32 %v6647, 0.0
      %v6712 = vmax.f32 %v6648, 0.0
      %v6713 = vmax.f32 %v6649, 0.0
      %v6714 = vmax.f32 %v6650, 0.0
      %v6715 = vmax.f32 %v6651, 0.0
      %v6716 = vmax.f32 %v6652, 0.0
      %v6717 = vmax.f32 %v6653, 0.0
      %v6718 = vmax.f32 %v6654, 0.0
      %v6719 = vmax.f32 %v6655, 0.0
      %v6720 = vmax.f32 %v6656, 0.0
      %v6721 = vmax.f32 %v6657, 0.0
      %v6722 = vmax.f32 %v6658, 0.0
      %v6723 = vmax.f32 %v6659, 0.0
      %v6724 = vmax.f32 %v6660, 0.0
      %v6725 = vmax.f32 %v6661, 0.0
      %v6726 = vmax.f32 %v6662, 0.0
      %v6727 = vmax.f32 %v6663, 0.0
      %v6728 = vmax.f32 %v6664, 0.0
      %v6729 = vmax.f32 %v6665, 0.0
      %v6730 = vmax.f32 %v6666, 0.0
      %v6731 = vmax.f32 %v6667, 0.0
      %v6732 = vmax.f32 %v6668, 0.0
      %v6733 = vmax.f32 %v6669, 0.0
      %v6734 = vmax.f32 %v6670, 0.0
      %v6735 = vmax.f32 %v6671, 0.0
      %v6736 = vmax.f32 %v6672, 0.0
      %v6737 = vmax.f32 %v6673, 0.0
      %v6738 = vmax.f32 %v6674, 0.0
      %v6739 = vmax.f32 %v6675, 0.0
      %v6740 = vmax.f32 %v6676, 0.0
      %v6741 = vmax.f32 %v6677, 0.0
      %v6742 = vmax.f32 %v6678, 0.0
      %v6743 = vmax.f32 %v6679, 0.0
      %v6744 = vmax.f32 %v6680, 0.0
      %v6745 = vmax.f32 %v6681, 0.0
      %v6746 = vmax.f32 %v6682, 0.0
      %v6747 = vmax.f32 %v6683, 0.0
      %v6748 = vmax.f32 %v6684, 0.0
      %v6749 = vmax.f32 %v6685, 0.0
      %v6750 = vmax.f32 %v6686, 0.0
      %v6751 = vmax.f32 %v6687, 0.0
      %v6752 = vmax.f32 %v6688, 0.0
      %v6753 = vmax.f32 %v6689, 0.0
      %v6754 = vmax.f32 %v6690, 0.0
      %v6755 = vmax.f32 %v6691, 0.0
      %v6756 = vmax.f32 %v6692, 0.0
      %v6757 = vmax.f32 %v6693, 0.0
      %v6758 = vmax.f32 %v6694, 0.0
      %v6759 = vmax.f32 %v6695, 0.0
      %v6760 = vmax.f32 %v6696, 0.0
      %v6761 = vmax.f32 %v6697, 0.0
      %v6762 = vmax.f32 %v6698, 0.0
      %v6763 = vmax.f32 %v6699, 0.0
      %v6764 = vmax.f32 %v6700, 0.0
      %v6765 = vmax.f32 %v6701, 0.0
      %v6766 = vmax.f32 %v6702, 0.0
      %v6767 = vmax.f32 %v6703, 0.0
      %v6768 = vld [vmem:[%s9] sm:$0xff]
      %v6769 = vld [vmem:[%s9 + $0x8] sm:$0xff]
      %v6770 = vld [vmem:[%s9 + $0x10] sm:$0xff]
      %v6771 = vld [vmem:[%s9 + $0x18] sm:$0xff]
      %v6772 = vld [vmem:[%s9 + $0x20] sm:$0xff]
      %v6773 = vld [vmem:[%s9 + $0x28] sm:$0xff]
      %v6774 = vld [vmem:[%s9 + $0x30] sm:$0xff]
      %v6775 = vld [vmem:[%s9 + $0x38] sm:$0xff]
      %v6776 = vld [vmem:[%s9 + $0x40] sm:$0xff]
      %v6777 = vld [vmem:[%s9 + $0x48] sm:$0xff]
      %v6778 = vld [vmem:[%s9 + $0x50] sm:$0xff]
      %v6779 = vld [vmem:[%s9 + $0x58] sm:$0xff]
      %v6780 = vld [vmem:[%s9 + $0x60] sm:$0xff]
      %v6781 = vld [vmem:[%s9 + $0x68] sm:$0xff]
      %v6782 = vld [vmem:[%s9 + $0x70] sm:$0xff]
      %v6783 = vld [vmem:[%s9 + $0x78] sm:$0xff]
      %v6784 = vld [vmem:[%s9 + $0x80] sm:$0xff]
      %v6785 = vld [vmem:[%s9 + $0x88] sm:$0xff]
      %v6786 = vld [vmem:[%s9 + $0x90] sm:$0x11]
      %v6787 = vld [vmem:[%s10] sm:$0xff]
      %v6788 = vld [vmem:[%s10 + $0x8] sm:$0xff]
      %v6789 = vld [vmem:[%s10 + $0x10] sm:$0xff]
      %v6790 = vld [vmem:[%s10 + $0x18] sm:$0xff]
      %v6791 = vld [vmem:[%s10 + $0x20] sm:$0xff]
      %v6792 = vld [vmem:[%s10 + $0x28] sm:$0xff]
      %v6793 = vld [vmem:[%s10 + $0x30] sm:$0xff]
      %v6794 = vld [vmem:[%s10 + $0x38] sm:$0xff]
      %v6795 = vld [vmem:[%s10 + $0x40] sm:$0xff]
      %v6796 = vld [vmem:[%s10 + $0x48] sm:$0xff]
      %v6797 = vld [vmem:[%s10 + $0x50] sm:$0xff]
      %v6798 = vld [vmem:[%s10 + $0x58] sm:$0xff]
      %v6799 = vld [vmem:[%s10 + $0x60] sm:$0xff]
      %v6800 = vld [vmem:[%s10 + $0x68] sm:$0xff]
      %v6801 = vld [vmem:[%s10 + $0x70] sm:$0xff]
      %v6802 = vld [vmem:[%s10 + $0x78] sm:$0xff]
      %v6803 = vld [vmem:[%s10 + $0x80] sm:$0xff]
      %v6804 = vld [vmem:[%s10 + $0x88] sm:$0xff]
      %v6805 = vld [vmem:[%s10 + $0x90] sm:$0xff]
      %v6806 = vld [vmem:[%s10 + $0x98] sm:$0xff]
      %v6807 = vld [vmem:[%s10 + $0xa0] sm:$0xff]
      %v6808 = vld [vmem:[%s10 + $0xa8] sm:$0xff]
      %v6809 = vld [vmem:[%s10 + $0xb0] sm:$0xff]
      %v6810 = vld [vmem:[%s10 + $0xb8] sm:$0xff]
      %v6811 = vld [vmem:[%s10 + $0xc0] sm:$0xff]
      %v6812 = vld [vmem:[%s10 + $0xc8] sm:$0xff]
      %v6813 = vld [vmem:[%s10 + $0xd0] sm:$0xff]
      %v6814 = vld [vmem:[%s10 + $0xd8] sm:$0xff]
      %v6815 = vld [vmem:[%s10 + $0xe0] sm:$0xff]
      %v6816 = vld [vmem:[%s10 + $0xe8] sm:$0xff]
      %v6881 = vrot.slane %v6704, 1
      %v6882 = vrot.slane %v6706, 1
      %v6883 = vsel %vm1089, %v6881, %v6882
      %v6884 = vrot.slane %v6705, 1
      %v6885 = vrot.slane %v6707, 1
      %v6886 = vsel %vm1089, %v6884, %v6885
      %v6887 = vrot.slane %v6708, 1
      %v6888 = vsel %vm1089, %v6882, %v6887
      %v6889 = vrot.slane %v6709, 1
      %v6890 = vsel %vm1089, %v6885, %v6889
      %v6891 = vrot.slane %v6710, 1
      %v6892 = vsel %vm1089, %v6887, %v6891
      %v6893 = vrot.slane %v6711, 1
      %v6894 = vsel %vm1089, %v6889, %v6893
      %v6895 = vrot.slane %v6712, 1
      %v6896 = vsel %vm1089, %v6891, %v6895
      %v6897 = vrot.slane %v6713, 1
      %v6898 = vsel %vm1089, %v6893, %v6897
      %v6899 = vrot.slane %v6714, 1
      %v6900 = vsel %vm1089, %v6895, %v6899
      %v6901 = vrot.slane %v6715, 1
      %v6902 = vsel %vm1089, %v6897, %v6901
      %v6903 = vrot.slane %v6716, 1
      %v6904 = vsel %vm1089, %v6899, %v6903
      %v6905 = vrot.slane %v6717, 1
      %v6906 = vsel %vm1089, %v6901, %v6905
      %v6907 = vrot.slane %v6718, 1
      %v6908 = vsel %vm1089, %v6903, %v6907
      %v6909 = vrot.slane %v6719, 1
      %v6910 = vsel %vm1089, %v6905, %v6909
      %v6911 = vrot.slane %v6720, 1
      %v6912 = vsel %vm1089, %v6907, %v6911
      %v6913 = vrot.slane %v6721, 1
      %v6914 = vsel %vm1089, %v6909, %v6913
      %v6915 = vrot.slane %v6722, 1
      %v6916 = vsel %vm1089, %v6911, %v6915
      %v6917 = vrot.slane %v6723, 1
      %v6918 = vsel %vm1089, %v6913, %v6917
      %v6919 = vrot.slane %v6724, 1
      %v6920 = vsel %vm1089, %v6915, %v6919
      %v6921 = vrot.slane %v6725, 1
      %v6922 = vsel %vm1089, %v6917, %v6921
      %v6923 = vrot.slane %v6726, 1
      %v6924 = vsel %vm1089, %v6919, %v6923
      %v6925 = vrot.slane %v6727, 1
      %v6926 = vsel %vm1089, %v6921, %v6925
      %v6927 = vrot.slane %v6728, 1
      %v6928 = vsel %vm1089, %v6923, %v6927
      %v6929 = vrot.slane %v6729, 1
      %v6930 = vsel %vm1089, %v6925, %v6929
      %v6931 = vrot.slane %v6730, 1
      %v6932 = vsel %vm1089, %v6927, %v6931
      %v6933 = vrot.slane %v6731, 1
      %v6934 = vsel %vm1089, %v6929, %v6933
      %v6935 = vrot.slane %v6732, 1
      %v6936 = vsel %vm1089, %v6931, %v6935
      %v6937 = vrot.slane %v6733, 1
      %v6938 = vsel %vm1089, %v6933, %v6937
      %v6939 = vrot.slane %v6734, 1
      %v6940 = vsel %vm1089, %v6935, %v6939
      %v6941 = vrot.slane %v6735, 1
      %v6942 = vsel %vm1089, %v6937, %v6941
      %v6943 = vrot.slane %v6736, 1
      %v6944 = vsel %vm1089, %v6939, %v6943
      %v6945 = vrot.slane %v6737, 1
      %v6946 = vsel %vm1089, %v6941, %v6945
      %v6947 = vrot.slane %v6738, 1
      %v6948 = vsel %vm1089, %v6943, %v6947
      %v6949 = vrot.slane %v6739, 1
      %v6950 = vsel %vm1089, %v6945, %v6949
      %v6951 = vrot.slane %v6740, 1
      %v6952 = vsel %vm1089, %v6947, %v6951
      %v6953 = vrot.slane %v6741, 1
      %v6954 = vsel %vm1089, %v6949, %v6953
      %v6955 = vrot.slane %v6742, 1
      %v6956 = vsel %vm1089, %v6951, %v6955
      %v6957 = vrot.slane %v6743, 1
      %v6958 = vsel %vm1089, %v6953, %v6957
      %v6959 = vrot.slane %v6744, 1
      %v6960 = vsel %vm1089, %v6955, %v6959
      %v6961 = vrot.slane %v6745, 1
      %v6962 = vsel %vm1089, %v6957, %v6961
      %v6963 = vrot.slane %v6746, 1
      %v6964 = vsel %vm1089, %v6959, %v6963
      %v6965 = vrot.slane %v6747, 1
      %v6966 = vsel %vm1089, %v6961, %v6965
      %v6967 = vrot.slane %v6748, 1
      %v6968 = vsel %vm1089, %v6963, %v6967
      %v6969 = vrot.slane %v6749, 1
      %v6970 = vsel %vm1089, %v6965, %v6969
      %v6971 = vrot.slane %v6750, 1
      %v6972 = vsel %vm1089, %v6967, %v6971
      %v6973 = vrot.slane %v6751, 1
      %v6974 = vsel %vm1089, %v6969, %v6973
      %v6975 = vrot.slane %v6752, 1
      %v6976 = vsel %vm1089, %v6971, %v6975
      %v6977 = vrot.slane %v6753, 1
      %v6978 = vsel %vm1089, %v6973, %v6977
      %v6979 = vrot.slane %v6754, 1
      %v6980 = vsel %vm1089, %v6975, %v6979
      %v6981 = vrot.slane %v6755, 1
      %v6982 = vsel %vm1089, %v6977, %v6981
      %v6983 = vrot.slane %v6756, 1
      %v6984 = vsel %vm1089, %v6979, %v6983
      %v6985 = vrot.slane %v6757, 1
      %v6986 = vsel %vm1089, %v6981, %v6985
      %v6987 = vrot.slane %v6758, 1
      %v6988 = vsel %vm1089, %v6983, %v6987
      %v6989 = vrot.slane %v6759, 1
      %v6990 = vsel %vm1089, %v6985, %v6989
      %v6991 = vrot.slane %v6760, 1
      %v6992 = vsel %vm1089, %v6987, %v6991
      %v6993 = vrot.slane %v6761, 1
      %v6994 = vsel %vm1089, %v6989, %v6993
      %v6995 = vrot.slane %v6762, 1
      %v6996 = vsel %vm1089, %v6991, %v6995
      %v6997 = vrot.slane %v6763, 1
      %v6998 = vsel %vm1089, %v6993, %v6997
      %v6999 = vrot.slane %v6764, 1
      %v7000 = vsel %vm1089, %v6995, %v6999
      %v7001 = vrot.slane %v6765, 1
      %v7002 = vsel %vm1089, %v6997, %v7001
      %v7003 = vrot.slane %v6766, 1
      %v7004 = vsel %vm1089, %v6999, %v7003
      %v7005 = vrot.slane %v6767, 1
      %v7006 = vsel %vm1089, %v7001, %v7005
      %v7071 = vmax.f32 %v6704, %v6883
      %v7072 = vmax.f32 %v6705, %v6886
      %v7073 = vmax.f32 %v6706, %v6888
      %v7074 = vmax.f32 %v6707, %v6890
      %v7075 = vmax.f32 %v6708, %v6892
      %v7076 = vmax.f32 %v6709, %v6894
      %v7077 = vmax.f32 %v6710, %v6896
      %v7078 = vmax.f32 %v6711, %v6898
      %v7079 = vmax.f32 %v6712, %v6900
      %v7080 = vmax.f32 %v6713, %v6902
      %v7081 = vmax.f32 %v6714, %v6904
      %v7082 = vmax.f32 %v6715, %v6906
      %v7083 = vmax.f32 %v6716, %v6908
      %v7084 = vmax.f32 %v6717, %v6910
      %v7085 = vmax.f32 %v6718, %v6912
      %v7086 = vmax.f32 %v6719, %v6914
      %v7087 = vmax.f32 %v6720, %v6916
      %v7088 = vmax.f32 %v6721, %v6918
      %v7089 = vmax.f32 %v6722, %v6920
      %v7090 = vmax.f32 %v6723, %v6922
      %v7091 = vmax.f32 %v6724, %v6924
      %v7092 = vmax.f32 %v6725, %v6926
      %v7093 = vmax.f32 %v6726, %v6928
      %v7094 = vmax.f32 %v6727, %v6930
      %v7095 = vmax.f32 %v6728, %v6932
      %v7096 = vmax.f32 %v6729, %v6934
      %v7097 = vmax.f32 %v6730, %v6936
      %v7098 = vmax.f32 %v6731, %v6938
      %v7099 = vmax.f32 %v6732, %v6940
      %v7100 = vmax.f32 %v6733, %v6942
      %v7101 = vmax.f32 %v6734, %v6944
      %v7102 = vmax.f32 %v6735, %v6946
      %v7103 = vmax.f32 %v6736, %v6948
      %v7104 = vmax.f32 %v6737, %v6950
      %v7105 = vmax.f32 %v6738, %v6952
      %v7106 = vmax.f32 %v6739, %v6954
      %v7107 = vmax.f32 %v6740, %v6956
      %v7108 = vmax.f32 %v6741, %v6958
      %v7109 = vmax.f32 %v6742, %v6960
      %v7110 = vmax.f32 %v6743, %v6962
      %v7111 = vmax.f32 %v6744, %v6964
      %v7112 = vmax.f32 %v6745, %v6966
      %v7113 = vmax.f32 %v6746, %v6968
      %v7114 = vmax.f32 %v6747, %v6970
      %v7115 = vmax.f32 %v6748, %v6972
      %v7116 = vmax.f32 %v6749, %v6974
      %v7117 = vmax.f32 %v6750, %v6976
      %v7118 = vmax.f32 %v6751, %v6978
      %v7119 = vmax.f32 %v6752, %v6980
      %v7120 = vmax.f32 %v6753, %v6982
      %v7121 = vmax.f32 %v6754, %v6984
      %v7122 = vmax.f32 %v6755, %v6986
      %v7123 = vmax.f32 %v6756, %v6988
      %v7124 = vmax.f32 %v6757, %v6990
      %v7125 = vmax.f32 %v6758, %v6992
      %v7126 = vmax.f32 %v6759, %v6994
      %v7127 = vmax.f32 %v6760, %v6996
      %v7128 = vmax.f32 %v6761, %v6998
      %v7129 = vmax.f32 %v6762, %v7000
      %v7130 = vmax.f32 %v6763, %v7002
      %v7131 = vmax.f32 %v6764, %v7004
      %v7132 = vmax.f32 %v6765, %v7006
      %v7133 = vmax.f32 %v6766, %v7003
      %v7134 = vmax.f32 %v6767, %v7005
      %v7135 = vpack.c.bf16 %v7073, %v7071
      %v7136 = vpack.c.bf16 %v7074, %v7072
      %v7137 = vpack.c.bf16 %v7077, %v7075
      %v7138 = vpack.c.bf16 %v7078, %v7076
      %v7139 = vpack.c.bf16 %v7081, %v7079
      %v7140 = vpack.c.bf16 %v7082, %v7080
      %v7141 = vpack.c.bf16 %v7085, %v7083
      %v7142 = vpack.c.bf16 %v7086, %v7084
      %v7143 = vpack.c.bf16 %v7089, %v7087
      %v7144 = vpack.c.bf16 %v7090, %v7088
      %v7145 = vpack.c.bf16 %v7093, %v7091
      %v7146 = vpack.c.bf16 %v7094, %v7092
      %v7147 = vpack.c.bf16 %v7097, %v7095
      %v7148 = vpack.c.bf16 %v7098, %v7096
      %v7149 = vpack.c.bf16 %v7101, %v7099
      %v7150 = vpack.c.bf16 %v7102, %v7100
      %v7151 = vpack.c.bf16 %v7105, %v7103
      %v7152 = vpack.c.bf16 %v7106, %v7104
      %v7153 = vpack.c.bf16 %v7109, %v7107
      %v7154 = vpack.c.bf16 %v7110, %v7108
      %v7155 = vpack.c.bf16 %v7113, %v7111
      %v7156 = vpack.c.bf16 %v7114, %v7112
      %v7157 = vpack.c.bf16 %v7117, %v7115
      %v7158 = vpack.c.bf16 %v7118, %v7116
      %v7159 = vpack.c.bf16 %v7121, %v7119
      %v7160 = vpack.c.bf16 %v7122, %v7120
      %v7161 = vpack.c.bf16 %v7125, %v7123
      %v7162 = vpack.c.bf16 %v7126, %v7124
      %v7163 = vpack.c.bf16 %v7129, %v7127
      %v7164 = vpack.c.bf16 %v7130, %v7128
      %v7165 = vpack.c.bf16 %v7133, %v7131
      %v7166 = vpack.c.bf16 %v7134, %v7132
      %v7186 = vunpack.c.l.b16 %v6768
      %v7187 = vunpack.c.h.b16 %v6768
      %v7188 = vunpack.c.l.b16 %v6769
      %v7189 = vunpack.c.h.b16 %v6769
      %v7190 = vunpack.c.l.b16 %v6770
      %v7191 = vunpack.c.h.b16 %v6770
      %v7192 = vunpack.c.l.b16 %v6771
      %v7193 = vunpack.c.h.b16 %v6771
      %v7194 = vunpack.c.l.b16 %v6772
      %v7195 = vunpack.c.h.b16 %v6772
      %v7196 = vunpack.c.l.b16 %v6773
      %v7197 = vunpack.c.h.b16 %v6773
      %v7198 = vunpack.c.l.b16 %v6774
      %v7199 = vunpack.c.h.b16 %v6774
      %v7200 = vunpack.c.l.b16 %v6775
      %v7201 = vunpack.c.h.b16 %v6775
      %v7202 = vunpack.c.l.b16 %v6776
      %v7203 = vunpack.c.h.b16 %v6776
      %v7204 = vunpack.c.l.b16 %v6777
      %v7205 = vunpack.c.h.b16 %v6777
      %v7206 = vunpack.c.l.b16 %v6778
      %v7207 = vunpack.c.h.b16 %v6778
      %v7208 = vunpack.c.l.b16 %v6779
      %v7209 = vunpack.c.h.b16 %v6779
      %v7210 = vunpack.c.l.b16 %v6780
      %v7211 = vunpack.c.h.b16 %v6780
      %v7212 = vunpack.c.l.b16 %v6781
      %v7213 = vunpack.c.h.b16 %v6781
      %v7214 = vunpack.c.l.b16 %v6782
      %v7215 = vunpack.c.h.b16 %v6782
      %v7216 = vunpack.c.l.b16 %v6783
      %v7217 = vunpack.c.h.b16 %v6783
      %v7218 = vunpack.c.l.b16 %v6784
      %v7219 = vunpack.c.h.b16 %v6784
      %v7220 = vunpack.c.l.b16 %v6785
      %v7221 = vunpack.c.h.b16 %v6785
      %v7222 = vunpack.c.l.b16 %v6786
      %v7223 = vunpack.c.h.b16 %v6786
      %v7224 = vpack.c.b16 %v7188, %v7186
      %v7225 = vpack.c.b16 %v7189, %v7187
      %v7226 = vpack.c.b16 %v7192, %v7190
      %v7227 = vpack.c.b16 %v7193, %v7191
      %v7228 = vpack.c.b16 %v7196, %v7194
      %v7229 = vpack.c.b16 %v7197, %v7195
      %v7230 = vpack.c.b16 %v7200, %v7198
      %v7231 = vpack.c.b16 %v7201, %v7199
      %v7232 = vpack.c.b16 %v7204, %v7202
      %v7233 = vpack.c.b16 %v7205, %v7203
      %v7234 = vpack.c.b16 %v7208, %v7206
      %v7235 = vpack.c.b16 %v7209, %v7207
      %v7236 = vpack.c.b16 %v7212, %v7210
      %v7237 = vpack.c.b16 %v7213, %v7211
      %v7238 = vpack.c.b16 %v7216, %v7214
      %v7239 = vpack.c.b16 %v7217, %v7215
      %v7240 = vpack.c.b16 %v7220, %v7218
      %v7241 = vpack.c.b16 %v7221, %v7219
      %v7242 = vpack.c.b16 %v7222, %v7222
      %v7243 = vpack.c.b16 %v7223, %v7223
      %vm7254 = vcmask 1039360
      %v7256 = vsel %vm7254, %v7225, 0
      %v7259 = vsel %vm7254, %v7227, 0
      %v7262 = vsel %vm7254, %v7229, 0
      %v7265 = vsel %vm7254, %v7231, 0
      %v7268 = vsel %vm7254, %v7233, 0
      %v7271 = vsel %vm7254, %v7235, 0
      %v7274 = vsel %vm7254, %v7237, 0
      %v7277 = vsel %vm7254, %v7239, 0
      %v7280 = vsel %vm7254, %v7241, 0
      %v7283 = vsel %vm7254, %v7243, 0
      %v7286 = vand.u32 %v7165, %v3962
      %v7289 = vand.u32 %v7166, %v3962
      %7291 = vmatpush.bf16.msra.mxu0 %v7149
      %7292 = vmatpush.bf16.msra.mxu0 %v7147
      %7293 = vmatpush.bf16.msra.mxu0 %v7145
      %7294 = vmatpush.bf16.msra.mxu0 %v7143
      %7295 = vmatpush.bf16.msra.mxu0 %v7141
      %7296 = vmatpush.bf16.msra.mxu0 %v7139
      %7297 = vmatpush.bf16.msra.mxu0 %v7137
      %7298 = vmatpush.bf16.msra.mxu0 %v7135
      %7299 = vmatmul.bf16.gmra.mxu0 %v7224
      %v7300 = vpop.f32.mrf.mxu0
      %v7301 = vadd.f32 0.0, %v7300
      %v7302 = vpop.f32.mrf.mxu0
      %v7303 = vadd.f32 0.0, %v7302
      %7304 = vmatmul.bf16.gmra.mxu0 %v7226
      %v7305 = vpop.f32.mrf.mxu0
      %v7306 = vadd.f32 0.0, %v7305
      %v7307 = vpop.f32.mrf.mxu0
      %v7308 = vadd.f32 0.0, %v7307
      %7309 = vmatmul.bf16.gmra.mxu0 %v7228
      %v7310 = vpop.f32.mrf.mxu0
      %v7311 = vadd.f32 0.0, %v7310
      %v7312 = vpop.f32.mrf.mxu0
      %v7313 = vadd.f32 0.0, %v7312
      %7314 = vmatmul.bf16.gmra.mxu0 %v7230
      %v7315 = vpop.f32.mrf.mxu0
      %v7316 = vadd.f32 0.0, %v7315
      %v7317 = vpop.f32.mrf.mxu0
      %v7318 = vadd.f32 0.0, %v7317
      %7319 = vmatmul.bf16.gmra.mxu0 %v7232
      %v7320 = vpop.f32.mrf.mxu0
      %v7321 = vadd.f32 0.0, %v7320
      %v7322 = vpop.f32.mrf.mxu0
      %v7323 = vadd.f32 0.0, %v7322
      %7324 = vmatmul.bf16.gmra.mxu0 %v7234
      %v7325 = vpop.f32.mrf.mxu0
      %v7326 = vadd.f32 0.0, %v7325
      %v7327 = vpop.f32.mrf.mxu0
      %v7328 = vadd.f32 0.0, %v7327
      %7329 = vmatmul.bf16.gmra.mxu0 %v7236
      %v7330 = vpop.f32.mrf.mxu0
      %v7331 = vadd.f32 0.0, %v7330
      %v7332 = vpop.f32.mrf.mxu0
      %v7333 = vadd.f32 0.0, %v7332
      %7334 = vmatmul.bf16.gmra.mxu0 %v7238
      %v7335 = vpop.f32.mrf.mxu0
      %v7336 = vadd.f32 0.0, %v7335
      %v7337 = vpop.f32.mrf.mxu0
      %v7338 = vadd.f32 0.0, %v7337
      %7339 = vmatmul.bf16.gmra.mxu0 %v7240
      %v7340 = vpop.f32.mrf.mxu0
      %v7341 = vadd.f32 0.0, %v7340
      %v7342 = vpop.f32.mrf.mxu0
      %v7343 = vadd.f32 0.0, %v7342
      %7344 = vmatmul.bf16.gmra.mxu0 %v7242
      %v7345 = vpop.f32.mrf.mxu0
      %v7346 = vadd.f32 0.0, %v7345
      %v7347 = vpop.f32.mrf.mxu0
      %7348 = vdwg.mxu0
      %7349 = vmatpush.bf16.msra.mxu0 %v7286
      %7350 = vmatpush.bf16.msra.mxu0 %v7163
      %7351 = vmatpush.bf16.msra.mxu0 %v7161
      %7352 = vmatpush.bf16.msra.mxu0 %v7159
      %7353 = vmatpush.bf16.msra.mxu0 %v7157
      %7354 = vmatpush.bf16.msra.mxu0 %v7155
      %7355 = vmatpush.bf16.msra.mxu0 %v7153
      %7356 = vmatpush.bf16.msra.mxu0 %v7151
      %7357 = vmatmul.bf16.gmra.mxu0 %v7256
      %v7358 = vpop.f32.mrf.mxu0
      %v7359 = vadd.f32 %v7301, %v7358
      %v7360 = vpop.f32.mrf.mxu0
      %v7361 = vadd.f32 %v7303, %v7360
      %7362 = vmatmul.bf16.gmra.mxu0 %v7259
      %v7363 = vpop.f32.mrf.mxu0
      %v7364 = vadd.f32 %v7306, %v7363
      %v7365 = vpop.f32.mrf.mxu0
      %v7366 = vadd.f32 %v7308, %v7365
      %7367 = vmatmul.bf16.gmra.mxu0 %v7262
      %v7368 = vpop.f32.mrf.mxu0
      %v7369 = vadd.f32 %v7311, %v7368
      %v7370 = vpop.f32.mrf.mxu0
      %v7371 = vadd.f32 %v7313, %v7370
      %7372 = vmatmul.bf16.gmra.mxu0 %v7265
      %v7373 = vpop.f32.mrf.mxu0
      %v7374 = vadd.f32 %v7316, %v7373
      %v7375 = vpop.f32.mrf.mxu0
      %v7376 = vadd.f32 %v7318, %v7375
      %7377 = vmatmul.bf16.gmra.mxu0 %v7268
      %v7378 = vpop.f32.mrf.mxu0
      %v7379 = vadd.f32 %v7321, %v7378
      %v7380 = vpop.f32.mrf.mxu0
      %v7381 = vadd.f32 %v7323, %v7380
      %7382 = vmatmul.bf16.gmra.mxu0 %v7271
      %v7383 = vpop.f32.mrf.mxu0
      %v7384 = vadd.f32 %v7326, %v7383
      %v7385 = vpop.f32.mrf.mxu0
      %v7386 = vadd.f32 %v7328, %v7385
      %7387 = vmatmul.bf16.gmra.mxu0 %v7274
      %v7388 = vpop.f32.mrf.mxu0
      %v7389 = vadd.f32 %v7331, %v7388
      %v7390 = vpop.f32.mrf.mxu0
      %v7391 = vadd.f32 %v7333, %v7390
      %7392 = vmatmul.bf16.gmra.mxu0 %v7277
      %v7393 = vpop.f32.mrf.mxu0
      %v7394 = vadd.f32 %v7336, %v7393
      %v7395 = vpop.f32.mrf.mxu0
      %v7396 = vadd.f32 %v7338, %v7395
      %7397 = vmatmul.bf16.gmra.mxu0 %v7280
      %v7398 = vpop.f32.mrf.mxu0
      %v7399 = vadd.f32 %v7341, %v7398
      %v7400 = vpop.f32.mrf.mxu0
      %v7401 = vadd.f32 %v7343, %v7400
      %7402 = vmatmul.bf16.gmra.mxu0 %v7283
      %v7403 = vpop.f32.mrf.mxu0
      %v7404 = vadd.f32 %v7346, %v7403
      %v7405 = vpop.f32.mrf.mxu0
      %7406 = vdwg.mxu0
      %7407 = vmatpush.bf16.msra.mxu0 %v7150
      %7408 = vmatpush.bf16.msra.mxu0 %v7148
      %7409 = vmatpush.bf16.msra.mxu0 %v7146
      %7410 = vmatpush.bf16.msra.mxu0 %v7144
      %7411 = vmatpush.bf16.msra.mxu0 %v7142
      %7412 = vmatpush.bf16.msra.mxu0 %v7140
      %7413 = vmatpush.bf16.msra.mxu0 %v7138
      %7414 = vmatpush.bf16.msra.mxu0 %v7136
      %7415 = vmatmul.bf16.gmra.mxu0 %v7224
      %v7416 = vpop.f32.mrf.mxu0
      %v7417 = vadd.f32 0.0, %v7416
      %v7418 = vpop.f32.mrf.mxu0
      %v7419 = vadd.f32 0.0, %v7418
      %7420 = vmatmul.bf16.gmra.mxu0 %v7226
      %v7421 = vpop.f32.mrf.mxu0
      %v7422 = vadd.f32 0.0, %v7421
      %v7423 = vpop.f32.mrf.mxu0
      %v7424 = vadd.f32 0.0, %v7423
      %7425 = vmatmul.bf16.gmra.mxu0 %v7228
      %v7426 = vpop.f32.mrf.mxu0
      %v7427 = vadd.f32 0.0, %v7426
      %v7428 = vpop.f32.mrf.mxu0
      %v7429 = vadd.f32 0.0, %v7428
      %7430 = vmatmul.bf16.gmra.mxu0 %v7230
      %v7431 = vpop.f32.mrf.mxu0
      %v7432 = vadd.f32 0.0, %v7431
      %v7433 = vpop.f32.mrf.mxu0
      %v7434 = vadd.f32 0.0, %v7433
      %7435 = vmatmul.bf16.gmra.mxu0 %v7232
      %v7436 = vpop.f32.mrf.mxu0
      %v7437 = vadd.f32 0.0, %v7436
      %v7438 = vpop.f32.mrf.mxu0
      %v7439 = vadd.f32 0.0, %v7438
      %7440 = vmatmul.bf16.gmra.mxu0 %v7234
      %v7441 = vpop.f32.mrf.mxu0
      %v7442 = vadd.f32 0.0, %v7441
      %v7443 = vpop.f32.mrf.mxu0
      %v7444 = vadd.f32 0.0, %v7443
      %7445 = vmatmul.bf16.gmra.mxu0 %v7236
      %v7446 = vpop.f32.mrf.mxu0
      %v7447 = vadd.f32 0.0, %v7446
      %v7448 = vpop.f32.mrf.mxu0
      %v7449 = vadd.f32 0.0, %v7448
      %7450 = vmatmul.bf16.gmra.mxu0 %v7238
      %v7451 = vpop.f32.mrf.mxu0
      %v7452 = vadd.f32 0.0, %v7451
      %v7453 = vpop.f32.mrf.mxu0
      %v7454 = vadd.f32 0.0, %v7453
      %7455 = vmatmul.bf16.gmra.mxu0 %v7240
      %v7456 = vpop.f32.mrf.mxu0
      %v7457 = vadd.f32 0.0, %v7456
      %v7458 = vpop.f32.mrf.mxu0
      %v7459 = vadd.f32 0.0, %v7458
      %7460 = vmatmul.bf16.gmra.mxu0 %v7242
      %v7461 = vpop.f32.mrf.mxu0
      %v7462 = vadd.f32 0.0, %v7461
      %v7463 = vpop.f32.mrf.mxu0
      %7464 = vdwg.mxu0
      %7465 = vmatpush.bf16.msra.mxu0 %v7289
      %7466 = vmatpush.bf16.msra.mxu0 %v7164
      %7467 = vmatpush.bf16.msra.mxu0 %v7162
      %7468 = vmatpush.bf16.msra.mxu0 %v7160
      %7469 = vmatpush.bf16.msra.mxu0 %v7158
      %7470 = vmatpush.bf16.msra.mxu0 %v7156
      %7471 = vmatpush.bf16.msra.mxu0 %v7154
      %7472 = vmatpush.bf16.msra.mxu0 %v7152
      %7473 = vmatmul.bf16.gmra.mxu0 %v7256
      %v7474 = vpop.f32.mrf.mxu0
      %v7475 = vadd.f32 %v7417, %v7474
      %v7476 = vpop.f32.mrf.mxu0
      %v7477 = vadd.f32 %v7419, %v7476
      %7478 = vmatmul.bf16.gmra.mxu0 %v7259
      %v7479 = vpop.f32.mrf.mxu0
      %v7480 = vadd.f32 %v7422, %v7479
      %v7481 = vpop.f32.mrf.mxu0
      %v7482 = vadd.f32 %v7424, %v7481
      %7483 = vmatmul.bf16.gmra.mxu0 %v7262
      %v7484 = vpop.f32.mrf.mxu0
      %v7485 = vadd.f32 %v7427, %v7484
      %v7486 = vpop.f32.mrf.mxu0
      %v7487 = vadd.f32 %v7429, %v7486
      %7488 = vmatmul.bf16.gmra.mxu0 %v7265
      %v7489 = vpop.f32.mrf.mxu0
      %v7490 = vadd.f32 %v7432, %v7489
      %v7491 = vpop.f32.mrf.mxu0
      %v7492 = vadd.f32 %v7434, %v7491
      %7493 = vmatmul.bf16.gmra.mxu0 %v7268
      %v7494 = vpop.f32.mrf.mxu0
      %v7495 = vadd.f32 %v7437, %v7494
      %v7496 = vpop.f32.mrf.mxu0
      %v7497 = vadd.f32 %v7439, %v7496
      %7498 = vmatmul.bf16.gmra.mxu0 %v7271
      %v7499 = vpop.f32.mrf.mxu0
      %v7500 = vadd.f32 %v7442, %v7499
      %v7501 = vpop.f32.mrf.mxu0
      %v7502 = vadd.f32 %v7444, %v7501
      %7503 = vmatmul.bf16.gmra.mxu0 %v7274
      %v7504 = vpop.f32.mrf.mxu0
      %v7505 = vadd.f32 %v7447, %v7504
      %v7506 = vpop.f32.mrf.mxu0
      %v7507 = vadd.f32 %v7449, %v7506
      %7508 = vmatmul.bf16.gmra.mxu0 %v7277
      %v7509 = vpop.f32.mrf.mxu0
      %v7510 = vadd.f32 %v7452, %v7509
      %v7511 = vpop.f32.mrf.mxu0
      %v7512 = vadd.f32 %v7454, %v7511
      %7513 = vmatmul.bf16.gmra.mxu0 %v7280
      %v7514 = vpop.f32.mrf.mxu0
      %v7515 = vadd.f32 %v7457, %v7514
      %v7516 = vpop.f32.mrf.mxu0
      %v7517 = vadd.f32 %v7459, %v7516
      %7518 = vmatmul.bf16.gmra.mxu0 %v7283
      %v7519 = vpop.f32.mrf.mxu0
      %v7520 = vadd.f32 %v7462, %v7519
      %v7521 = vpop.f32.mrf.mxu0
      %7522 = vdwg.mxu0
      %7561 = vrot.lane.b32.xlu0 %v7359, 112
      %v7562 = vpop.permute.xlu0 %7561
      %7563 = vrot.lane.b32.xlu0 %v7475, 112
      %v7564 = vpop.permute.xlu0 %7563
      %7565 = vrot.lane.b32.xlu0 %v7361, 112
      %v7566 = vpop.permute.xlu0 %7565
      %7567 = vrot.lane.b32.xlu0 %v7477, 112
      %v7568 = vpop.permute.xlu0 %7567
      %7569 = vrot.lane.b32.xlu0 %v7364, 112
      %v7570 = vpop.permute.xlu0 %7569
      %7571 = vrot.lane.b32.xlu0 %v7480, 112
      %v7572 = vpop.permute.xlu0 %7571
      %7573 = vrot.lane.b32.xlu0 %v7366, 112
      %v7574 = vpop.permute.xlu0 %7573
      %7575 = vrot.lane.b32.xlu0 %v7482, 112
      %v7576 = vpop.permute.xlu0 %7575
      %7577 = vrot.lane.b32.xlu0 %v7369, 112
      %v7578 = vpop.permute.xlu0 %7577
      %7579 = vrot.lane.b32.xlu0 %v7485, 112
      %v7580 = vpop.permute.xlu0 %7579
      %7581 = vrot.lane.b32.xlu0 %v7371, 112
      %v7582 = vpop.permute.xlu0 %7581
      %7583 = vrot.lane.b32.xlu0 %v7487, 112
      %v7584 = vpop.permute.xlu0 %7583
      %7585 = vrot.lane.b32.xlu0 %v7374, 112
      %v7586 = vpop.permute.xlu0 %7585
      %7587 = vrot.lane.b32.xlu0 %v7490, 112
      %v7588 = vpop.permute.xlu0 %7587
      %7589 = vrot.lane.b32.xlu0 %v7376, 112
      %v7590 = vpop.permute.xlu0 %7589
      %7591 = vrot.lane.b32.xlu0 %v7492, 112
      %v7592 = vpop.permute.xlu0 %7591
      %7593 = vrot.lane.b32.xlu0 %v7379, 112
      %v7594 = vpop.permute.xlu0 %7593
      %7595 = vrot.lane.b32.xlu0 %v7495, 112
      %v7596 = vpop.permute.xlu0 %7595
      %7597 = vrot.lane.b32.xlu0 %v7381, 112
      %v7598 = vpop.permute.xlu0 %7597
      %7599 = vrot.lane.b32.xlu0 %v7497, 112
      %v7600 = vpop.permute.xlu0 %7599
      %7601 = vrot.lane.b32.xlu0 %v7384, 112
      %v7602 = vpop.permute.xlu0 %7601
      %7603 = vrot.lane.b32.xlu0 %v7500, 112
      %v7604 = vpop.permute.xlu0 %7603
      %7605 = vrot.lane.b32.xlu0 %v7386, 112
      %v7606 = vpop.permute.xlu0 %7605
      %7607 = vrot.lane.b32.xlu0 %v7502, 112
      %v7608 = vpop.permute.xlu0 %7607
      %7609 = vrot.lane.b32.xlu0 %v7389, 112
      %v7610 = vpop.permute.xlu0 %7609
      %7611 = vrot.lane.b32.xlu0 %v7505, 112
      %v7612 = vpop.permute.xlu0 %7611
      %7613 = vrot.lane.b32.xlu0 %v7391, 112
      %v7614 = vpop.permute.xlu0 %7613
      %7615 = vrot.lane.b32.xlu0 %v7507, 112
      %v7616 = vpop.permute.xlu0 %7615
      %7617 = vrot.lane.b32.xlu0 %v7394, 112
      %v7618 = vpop.permute.xlu0 %7617
      %7619 = vrot.lane.b32.xlu0 %v7510, 112
      %v7620 = vpop.permute.xlu0 %7619
      %7621 = vrot.lane.b32.xlu0 %v7396, 112
      %v7622 = vpop.permute.xlu0 %7621
      %7623 = vrot.lane.b32.xlu0 %v7512, 112
      %v7624 = vpop.permute.xlu0 %7623
      %7625 = vrot.lane.b32.xlu0 %v7399, 112
      %v7626 = vpop.permute.xlu0 %7625
      %7627 = vrot.lane.b32.xlu0 %v7515, 112
      %v7628 = vpop.permute.xlu0 %7627
      %7629 = vrot.lane.b32.xlu0 %v7401, 112
      %v7630 = vpop.permute.xlu0 %7629
      %7631 = vrot.lane.b32.xlu0 %v7517, 112
      %v7632 = vpop.permute.xlu0 %7631
      %7633 = vrot.lane.b32.xlu0 %v7404, 112
      %v7634 = vpop.permute.xlu0 %7633
      %7635 = vrot.lane.b32.xlu0 %v7520, 112
      %v7636 = vpop.permute.xlu0 %7635
      %vm7637 = vcmask 916480
      %v7638 = vsel %vm7637, %v7562, %v7564
      %v7639 = vsel %vm7637, %v7566, %v7568
      %v7640 = vsel %vm7637, %v7570, %v7572
      %v7641 = vsel %vm7637, %v7574, %v7576
      %v7642 = vsel %vm7637, %v7578, %v7580
      %v7643 = vsel %vm7637, %v7582, %v7584
      %v7644 = vsel %vm7637, %v7586, %v7588
      %v7645 = vsel %vm7637, %v7590, %v7592
      %v7646 = vsel %vm7637, %v7594, %v7596
      %v7647 = vsel %vm7637, %v7598, %v7600
      %v7648 = vsel %vm7637, %v7602, %v7604
      %v7649 = vsel %vm7637, %v7606, %v7608
      %v7650 = vsel %vm7637, %v7610, %v7612
      %v7651 = vsel %vm7637, %v7614, %v7616
      %v7652 = vsel %vm7637, %v7618, %v7620
      %v7653 = vsel %vm7637, %v7622, %v7624
      %v7654 = vsel %vm7637, %v7626, %v7628
      %v7655 = vsel %vm7637, %v7630, %v7632
      %v7656 = vsel %vm7637, %v7634, %v7636
      %v7695 = vmax.f32 %v7359, %v7638
      %v7696 = vmax.f32 %v7475, %v7564
      %v7697 = vmax.f32 %v7361, %v7639
      %v7698 = vmax.f32 %v7477, %v7568
      %v7699 = vmax.f32 %v7364, %v7640
      %v7700 = vmax.f32 %v7480, %v7572
      %v7701 = vmax.f32 %v7366, %v7641
      %v7702 = vmax.f32 %v7482, %v7576
      %v7703 = vmax.f32 %v7369, %v7642
      %v7704 = vmax.f32 %v7485, %v7580
      %v7705 = vmax.f32 %v7371, %v7643
      %v7706 = vmax.f32 %v7487, %v7584
      %v7707 = vmax.f32 %v7374, %v7644
      %v7708 = vmax.f32 %v7490, %v7588
      %v7709 = vmax.f32 %v7376, %v7645
      %v7710 = vmax.f32 %v7492, %v7592
      %v7711 = vmax.f32 %v7379, %v7646
      %v7712 = vmax.f32 %v7495, %v7596
      %v7713 = vmax.f32 %v7381, %v7647
      %v7714 = vmax.f32 %v7497, %v7600
      %v7715 = vmax.f32 %v7384, %v7648
      %v7716 = vmax.f32 %v7500, %v7604
      %v7717 = vmax.f32 %v7386, %v7649
      %v7718 = vmax.f32 %v7502, %v7608
      %v7719 = vmax.f32 %v7389, %v7650
      %v7720 = vmax.f32 %v7505, %v7612
      %v7721 = vmax.f32 %v7391, %v7651
      %v7722 = vmax.f32 %v7507, %v7616
      %v7723 = vmax.f32 %v7394, %v7652
      %v7724 = vmax.f32 %v7510, %v7620
      %v7725 = vmax.f32 %v7396, %v7653
      %v7726 = vmax.f32 %v7512, %v7624
      %v7727 = vmax.f32 %v7399, %v7654
      %v7728 = vmax.f32 %v7515, %v7628
      %v7729 = vmax.f32 %v7401, %v7655
      %v7730 = vmax.f32 %v7517, %v7632
      %v7731 = vmax.f32 %v7404, %v7656
      %v7732 = vmax.f32 %v7520, %v7636
      %v7733 = vpack.c.bf16 %v7697, %v7695
      %v7734 = vpack.c.bf16 %v7698, %v7696
      %v7735 = vpack.c.bf16 %v7701, %v7699
      %v7736 = vpack.c.bf16 %v7702, %v7700
      %v7737 = vpack.c.bf16 %v7705, %v7703
      %v7738 = vpack.c.bf16 %v7706, %v7704
      %v7739 = vpack.c.bf16 %v7709, %v7707
      %v7740 = vpack.c.bf16 %v7710, %v7708
      %v7741 = vpack.c.bf16 %v7713, %v7711
      %v7742 = vpack.c.bf16 %v7714, %v7712
      %v7743 = vpack.c.bf16 %v7717, %v7715
      %v7744 = vpack.c.bf16 %v7718, %v7716
      %v7745 = vpack.c.bf16 %v7721, %v7719
      %v7746 = vpack.c.bf16 %v7722, %v7720
      %v7747 = vpack.c.bf16 %v7725, %v7723
      %v7748 = vpack.c.bf16 %v7726, %v7724
      %v7749 = vpack.c.bf16 %v7729, %v7727
      %v7750 = vpack.c.bf16 %v7730, %v7728
      %v7751 = vpack.c.bf16 %v7731, %v7731
      %v7752 = vpack.c.bf16 %v7732, %v7732
      %v7783 = vunpack.c.l.b16 %v6787
      %v7784 = vunpack.c.h.b16 %v6787
      %v7785 = vunpack.c.l.b16 %v6788
      %v7786 = vunpack.c.h.b16 %v6788
      %v7787 = vunpack.c.l.b16 %v6789
      %v7788 = vunpack.c.h.b16 %v6789
      %v7789 = vunpack.c.l.b16 %v6790
      %v7790 = vunpack.c.h.b16 %v6790
      %v7791 = vunpack.c.l.b16 %v6791
      %v7792 = vunpack.c.h.b16 %v6791
      %v7793 = vunpack.c.l.b16 %v6792
      %v7794 = vunpack.c.h.b16 %v6792
      %v7795 = vunpack.c.l.b16 %v6793
      %v7796 = vunpack.c.h.b16 %v6793
      %v7797 = vunpack.c.l.b16 %v6794
      %v7798 = vunpack.c.h.b16 %v6794
      %v7799 = vunpack.c.l.b16 %v6795
      %v7800 = vunpack.c.h.b16 %v6795
      %v7801 = vunpack.c.l.b16 %v6796
      %v7802 = vunpack.c.h.b16 %v6796
      %v7803 = vunpack.c.l.b16 %v6797
      %v7804 = vunpack.c.h.b16 %v6797
      %v7805 = vunpack.c.l.b16 %v6798
      %v7806 = vunpack.c.h.b16 %v6798
      %v7807 = vunpack.c.l.b16 %v6799
      %v7808 = vunpack.c.h.b16 %v6799
      %v7809 = vunpack.c.l.b16 %v6800
      %v7810 = vunpack.c.h.b16 %v6800
      %v7811 = vunpack.c.l.b16 %v6801
      %v7812 = vunpack.c.h.b16 %v6801
      %v7813 = vunpack.c.l.b16 %v6802
      %v7814 = vunpack.c.h.b16 %v6802
      %v7815 = vunpack.c.l.b16 %v6803
      %v7816 = vunpack.c.h.b16 %v6803
      %v7817 = vunpack.c.l.b16 %v6804
      %v7818 = vunpack.c.h.b16 %v6804
      %v7819 = vunpack.c.l.b16 %v6805
      %v7820 = vunpack.c.h.b16 %v6805
      %v7821 = vunpack.c.l.b16 %v6806
      %v7822 = vunpack.c.h.b16 %v6806
      %v7823 = vunpack.c.l.b16 %v6807
      %v7824 = vunpack.c.h.b16 %v6807
      %v7825 = vunpack.c.l.b16 %v6808
      %v7826 = vunpack.c.h.b16 %v6808
      %v7827 = vunpack.c.l.b16 %v6809
      %v7828 = vunpack.c.h.b16 %v6809
      %v7829 = vunpack.c.l.b16 %v6810
      %v7830 = vunpack.c.h.b16 %v6810
      %v7831 = vunpack.c.l.b16 %v6811
      %v7832 = vunpack.c.h.b16 %v6811
      %v7833 = vunpack.c.l.b16 %v6812
      %v7834 = vunpack.c.h.b16 %v6812
      %v7835 = vunpack.c.l.b16 %v6813
      %v7836 = vunpack.c.h.b16 %v6813
      %v7837 = vunpack.c.l.b16 %v6814
      %v7838 = vunpack.c.h.b16 %v6814
      %v7839 = vunpack.c.l.b16 %v6815
      %v7840 = vunpack.c.h.b16 %v6815
      %v7841 = vunpack.c.l.b16 %v6816
      %v7842 = vunpack.c.h.b16 %v6816
      %v7843 = vpack.c.b16 %v7785, %v7783
      %v7844 = vpack.c.b16 %v7786, %v7784
      %v7845 = vpack.c.b16 %v7789, %v7787
      %v7846 = vpack.c.b16 %v7790, %v7788
      %v7847 = vpack.c.b16 %v7793, %v7791
      %v7848 = vpack.c.b16 %v7794, %v7792
      %v7849 = vpack.c.b16 %v7797, %v7795
      %v7850 = vpack.c.b16 %v7798, %v7796
      %v7851 = vpack.c.b16 %v7801, %v7799
      %v7852 = vpack.c.b16 %v7802, %v7800
      %v7853 = vpack.c.b16 %v7805, %v7803
      %v7854 = vpack.c.b16 %v7806, %v7804
      %v7855 = vpack.c.b16 %v7809, %v7807
      %v7856 = vpack.c.b16 %v7810, %v7808
      %v7857 = vpack.c.b16 %v7813, %v7811
      %v7858 = vpack.c.b16 %v7814, %v7812
      %v7859 = vpack.c.b16 %v7817, %v7815
      %v7860 = vpack.c.b16 %v7818, %v7816
      %v7861 = vpack.c.b16 %v7821, %v7819
      %v7862 = vpack.c.b16 %v7822, %v7820
      %v7863 = vpack.c.b16 %v7825, %v7823
      %v7864 = vpack.c.b16 %v7826, %v7824
      %v7865 = vpack.c.b16 %v7829, %v7827
      %v7866 = vpack.c.b16 %v7830, %v7828
      %v7867 = vpack.c.b16 %v7833, %v7831
      %v7868 = vpack.c.b16 %v7834, %v7832
      %v7869 = vpack.c.b16 %v7837, %v7835
      %v7870 = vpack.c.b16 %v7838, %v7836
      %v7871 = vpack.c.b16 %v7841, %v7839
      %v7872 = vpack.c.b16 %v7842, %v7840
      %v7904 = vsel %vm7637, %v7734, 0
      %v7907 = vsel %vm7637, %v7736, 0
      %v7910 = vsel %vm7637, %v7738, 0
      %v7913 = vsel %vm7637, %v7740, 0
      %v7916 = vsel %vm7637, %v7742, 0
      %v7919 = vsel %vm7637, %v7744, 0
      %v7922 = vsel %vm7637, %v7746, 0
      %v7925 = vsel %vm7637, %v7748, 0
      %v7928 = vsel %vm7637, %v7750, 0
      %v7931 = vsel %vm7637, %v7752, 0
      %7933 = vmatpush.bf16.msra.mxu0 %v7857
      %7934 = vmatpush.bf16.msra.mxu0 %v7855
      %7935 = vmatpush.bf16.msra.mxu0 %v7853
      %7936 = vmatpush.bf16.msra.mxu0 %v7851
      %7937 = vmatpush.bf16.msra.mxu0 %v7849
      %7938 = vmatpush.bf16.msra.mxu0 %v7847
      %7939 = vmatpush.bf16.msra.mxu0 %v7845
      %7940 = vmatpush.bf16.msra.mxu0 %v7843
      %7941 = vmatmul.bf16.gmra.mxu0 %v7733
      %v7942 = vpop.f32.mrf.mxu0
      %v7943 = vadd.f32 0.0, %v7942
      %v7944 = vpop.f32.mrf.mxu0
      %v7945 = vadd.f32 0.0, %v7944
      %7946 = vmatmul.bf16.gmra.mxu0 %v7735
      %v7947 = vpop.f32.mrf.mxu0
      %v7948 = vadd.f32 0.0, %v7947
      %v7949 = vpop.f32.mrf.mxu0
      %v7950 = vadd.f32 0.0, %v7949
      %7951 = vmatmul.bf16.gmra.mxu0 %v7737
      %v7952 = vpop.f32.mrf.mxu0
      %v7953 = vadd.f32 0.0, %v7952
      %v7954 = vpop.f32.mrf.mxu0
      %v7955 = vadd.f32 0.0, %v7954
      %7956 = vmatmul.bf16.gmra.mxu0 %v7739
      %v7957 = vpop.f32.mrf.mxu0
      %v7958 = vadd.f32 0.0, %v7957
      %v7959 = vpop.f32.mrf.mxu0
      %v7960 = vadd.f32 0.0, %v7959
      %7961 = vmatmul.bf16.gmra.mxu0 %v7741
      %v7962 = vpop.f32.mrf.mxu0
      %v7963 = vadd.f32 0.0, %v7962
      %v7964 = vpop.f32.mrf.mxu0
      %v7965 = vadd.f32 0.0, %v7964
      %7966 = vmatmul.bf16.gmra.mxu0 %v7743
      %v7967 = vpop.f32.mrf.mxu0
      %v7968 = vadd.f32 0.0, %v7967
      %v7969 = vpop.f32.mrf.mxu0
      %v7970 = vadd.f32 0.0, %v7969
      %7971 = vmatmul.bf16.gmra.mxu0 %v7745
      %v7972 = vpop.f32.mrf.mxu0
      %v7973 = vadd.f32 0.0, %v7972
      %v7974 = vpop.f32.mrf.mxu0
      %v7975 = vadd.f32 0.0, %v7974
      %7976 = vmatmul.bf16.gmra.mxu0 %v7747
      %v7977 = vpop.f32.mrf.mxu0
      %v7978 = vadd.f32 0.0, %v7977
      %v7979 = vpop.f32.mrf.mxu0
      %v7980 = vadd.f32 0.0, %v7979
      %7981 = vmatmul.bf16.gmra.mxu0 %v7749
      %v7982 = vpop.f32.mrf.mxu0
      %v7983 = vadd.f32 0.0, %v7982
      %v7984 = vpop.f32.mrf.mxu0
      %v7985 = vadd.f32 0.0, %v7984
      %7986 = vmatmul.bf16.gmra.mxu0 %v7751
      %v7987 = vpop.f32.mrf.mxu0
      %v7988 = vadd.f32 0.0, %v7987
      %v7989 = vpop.f32.mrf.mxu0
      %7990 = vdwg.mxu0
      %7991 = vmatpush.bf16.msra.mxu0 0
      %7992 = vmatpush.bf16.msra.mxu0 %v7871
      %7993 = vmatpush.bf16.msra.mxu0 %v7869
      %7994 = vmatpush.bf16.msra.mxu0 %v7867
      %7995 = vmatpush.bf16.msra.mxu0 %v7865
      %7996 = vmatpush.bf16.msra.mxu0 %v7863
      %7997 = vmatpush.bf16.msra.mxu0 %v7861
      %7998 = vmatpush.bf16.msra.mxu0 %v7859
      %7999 = vmatmul.bf16.gmra.mxu0 %v7904
      %v8000 = vpop.f32.mrf.mxu0
      %v8001 = vadd.f32 %v7943, %v8000
      %v8002 = vpop.f32.mrf.mxu0
      %v8003 = vadd.f32 %v7945, %v8002
      %8004 = vmatmul.bf16.gmra.mxu0 %v7907
      %v8005 = vpop.f32.mrf.mxu0
      %v8006 = vadd.f32 %v7948, %v8005
      %v8007 = vpop.f32.mrf.mxu0
      %v8008 = vadd.f32 %v7950, %v8007
      %8009 = vmatmul.bf16.gmra.mxu0 %v7910
      %v8010 = vpop.f32.mrf.mxu0
      %v8011 = vadd.f32 %v7953, %v8010
      %v8012 = vpop.f32.mrf.mxu0
      %v8013 = vadd.f32 %v7955, %v8012
      %8014 = vmatmul.bf16.gmra.mxu0 %v7913
      %v8015 = vpop.f32.mrf.mxu0
      %v8016 = vadd.f32 %v7958, %v8015
      %v8017 = vpop.f32.mrf.mxu0
      %v8018 = vadd.f32 %v7960, %v8017
      %8019 = vmatmul.bf16.gmra.mxu0 %v7916
      %v8020 = vpop.f32.mrf.mxu0
      %v8021 = vadd.f32 %v7963, %v8020
      %v8022 = vpop.f32.mrf.mxu0
      %v8023 = vadd.f32 %v7965, %v8022
      %8024 = vmatmul.bf16.gmra.mxu0 %v7919
      %v8025 = vpop.f32.mrf.mxu0
      %v8026 = vadd.f32 %v7968, %v8025
      %v8027 = vpop.f32.mrf.mxu0
      %v8028 = vadd.f32 %v7970, %v8027
      %8029 = vmatmul.bf16.gmra.mxu0 %v7922
      %v8030 = vpop.f32.mrf.mxu0
      %v8031 = vadd.f32 %v7973, %v8030
      %v8032 = vpop.f32.mrf.mxu0
      %v8033 = vadd.f32 %v7975, %v8032
      %8034 = vmatmul.bf16.gmra.mxu0 %v7925
      %v8035 = vpop.f32.mrf.mxu0
      %v8036 = vadd.f32 %v7978, %v8035
      %v8037 = vpop.f32.mrf.mxu0
      %v8038 = vadd.f32 %v7980, %v8037
      %8039 = vmatmul.bf16.gmra.mxu0 %v7928
      %v8040 = vpop.f32.mrf.mxu0
      %v8041 = vadd.f32 %v7983, %v8040
      %v8042 = vpop.f32.mrf.mxu0
      %v8043 = vadd.f32 %v7985, %v8042
      %8044 = vmatmul.bf16.gmra.mxu0 %v7931
      %v8045 = vpop.f32.mrf.mxu0
      %v8046 = vadd.f32 %v7988, %v8045
      %v8047 = vpop.f32.mrf.mxu0
      %8048 = vdwg.mxu0
      %8049 = vmatpush.bf16.msra.mxu0 %v7858
      %8050 = vmatpush.bf16.msra.mxu0 %v7856
      %8051 = vmatpush.bf16.msra.mxu0 %v7854
      %8052 = vmatpush.bf16.msra.mxu0 %v7852
      %8053 = vmatpush.bf16.msra.mxu0 %v7850
      %8054 = vmatpush.bf16.msra.mxu0 %v7848
      %8055 = vmatpush.bf16.msra.mxu0 %v7846
      %8056 = vmatpush.bf16.msra.mxu0 %v7844
      %8057 = vmatmul.bf16.gmra.mxu0 %v7733
      %v8058 = vpop.f32.mrf.mxu0
      %v8059 = vadd.f32 0.0, %v8058
      %v8060 = vpop.f32.mrf.mxu0
      %v8061 = vadd.f32 0.0, %v8060
      %8062 = vmatmul.bf16.gmra.mxu0 %v7735
      %v8063 = vpop.f32.mrf.mxu0
      %v8064 = vadd.f32 0.0, %v8063
      %v8065 = vpop.f32.mrf.mxu0
      %v8066 = vadd.f32 0.0, %v8065
      %8067 = vmatmul.bf16.gmra.mxu0 %v7737
      %v8068 = vpop.f32.mrf.mxu0
      %v8069 = vadd.f32 0.0, %v8068
      %v8070 = vpop.f32.mrf.mxu0
      %v8071 = vadd.f32 0.0, %v8070
      %8072 = vmatmul.bf16.gmra.mxu0 %v7739
      %v8073 = vpop.f32.mrf.mxu0
      %v8074 = vadd.f32 0.0, %v8073
      %v8075 = vpop.f32.mrf.mxu0
      %v8076 = vadd.f32 0.0, %v8075
      %8077 = vmatmul.bf16.gmra.mxu0 %v7741
      %v8078 = vpop.f32.mrf.mxu0
      %v8079 = vadd.f32 0.0, %v8078
      %v8080 = vpop.f32.mrf.mxu0
      %v8081 = vadd.f32 0.0, %v8080
      %8082 = vmatmul.bf16.gmra.mxu0 %v7743
      %v8083 = vpop.f32.mrf.mxu0
      %v8084 = vadd.f32 0.0, %v8083
      %v8085 = vpop.f32.mrf.mxu0
      %v8086 = vadd.f32 0.0, %v8085
      %8087 = vmatmul.bf16.gmra.mxu0 %v7745
      %v8088 = vpop.f32.mrf.mxu0
      %v8089 = vadd.f32 0.0, %v8088
      %v8090 = vpop.f32.mrf.mxu0
      %v8091 = vadd.f32 0.0, %v8090
      %8092 = vmatmul.bf16.gmra.mxu0 %v7747
      %v8093 = vpop.f32.mrf.mxu0
      %v8094 = vadd.f32 0.0, %v8093
      %v8095 = vpop.f32.mrf.mxu0
      %v8096 = vadd.f32 0.0, %v8095
      %8097 = vmatmul.bf16.gmra.mxu0 %v7749
      %v8098 = vpop.f32.mrf.mxu0
      %v8099 = vadd.f32 0.0, %v8098
      %v8100 = vpop.f32.mrf.mxu0
      %v8101 = vadd.f32 0.0, %v8100
      %8102 = vmatmul.bf16.gmra.mxu0 %v7751
      %v8103 = vpop.f32.mrf.mxu0
      %v8104 = vadd.f32 0.0, %v8103
      %v8105 = vpop.f32.mrf.mxu0
      %8106 = vdwg.mxu0
      %8107 = vmatpush.bf16.msra.mxu0 0
      %8108 = vmatpush.bf16.msra.mxu0 %v7872
      %8109 = vmatpush.bf16.msra.mxu0 %v7870
      %8110 = vmatpush.bf16.msra.mxu0 %v7868
      %8111 = vmatpush.bf16.msra.mxu0 %v7866
      %8112 = vmatpush.bf16.msra.mxu0 %v7864
      %8113 = vmatpush.bf16.msra.mxu0 %v7862
      %8114 = vmatpush.bf16.msra.mxu0 %v7860
      %8115 = vmatmul.bf16.gmra.mxu0 %v7904
      %v8116 = vpop.f32.mrf.mxu0
      %v8117 = vadd.f32 %v8059, %v8116
      %v8118 = vpop.f32.mrf.mxu0
      %v8119 = vadd.f32 %v8061, %v8118
      %8120 = vmatmul.bf16.gmra.mxu0 %v7907
      %v8121 = vpop.f32.mrf.mxu0
      %v8122 = vadd.f32 %v8064, %v8121
      %v8123 = vpop.f32.mrf.mxu0
      %v8124 = vadd.f32 %v8066, %v8123
      %8125 = vmatmul.bf16.gmra.mxu0 %v7910
      %v8126 = vpop.f32.mrf.mxu0
      %v8127 = vadd.f32 %v8069, %v8126
      %v8128 = vpop.f32.mrf.mxu0
      %v8129 = vadd.f32 %v8071, %v8128
      %8130 = vmatmul.bf16.gmra.mxu0 %v7913
      %v8131 = vpop.f32.mrf.mxu0
      %v8132 = vadd.f32 %v8074, %v8131
      %v8133 = vpop.f32.mrf.mxu0
      %v8134 = vadd.f32 %v8076, %v8133
      %8135 = vmatmul.bf16.gmra.mxu0 %v7916
      %v8136 = vpop.f32.mrf.mxu0
      %v8137 = vadd.f32 %v8079, %v8136
      %v8138 = vpop.f32.mrf.mxu0
      %v8139 = vadd.f32 %v8081, %v8138
      %8140 = vmatmul.bf16.gmra.mxu0 %v7919
      %v8141 = vpop.f32.mrf.mxu0
      %v8142 = vadd.f32 %v8084, %v8141
      %v8143 = vpop.f32.mrf.mxu0
      %v8144 = vadd.f32 %v8086, %v8143
      %8145 = vmatmul.bf16.gmra.mxu0 %v7922
      %v8146 = vpop.f32.mrf.mxu0
      %v8147 = vadd.f32 %v8089, %v8146
      %v8148 = vpop.f32.mrf.mxu0
      %v8149 = vadd.f32 %v8091, %v8148
      %8150 = vmatmul.bf16.gmra.mxu0 %v7925
      %v8151 = vpop.f32.mrf.mxu0
      %v8152 = vadd.f32 %v8094, %v8151
      %v8153 = vpop.f32.mrf.mxu0
      %v8154 = vadd.f32 %v8096, %v8153
      %8155 = vmatmul.bf16.gmra.mxu0 %v7928
      %v8156 = vpop.f32.mrf.mxu0
      %v8157 = vadd.f32 %v8099, %v8156
      %v8158 = vpop.f32.mrf.mxu0
      %v8159 = vadd.f32 %v8101, %v8158
      %8160 = vmatmul.bf16.gmra.mxu0 %v7931
      %v8161 = vpop.f32.mrf.mxu0
      %v8162 = vadd.f32 %v8104, %v8161
      %v8163 = vpop.f32.mrf.mxu0
      %8164 = vdwg.mxu0
      %v8165 = vld [vmem:[%s12] sm:$0x3]
      %v8166 = vld [vmem:[%s13] sm:$0x3]
      %v8167 = vpack.c.bf16 %v8003, %v8001
      %v8168 = vpack.c.bf16 %v8119, %v8117
      %v8169 = vpack.c.bf16 %v8008, %v8006
      %v8170 = vpack.c.bf16 %v8124, %v8122
      %v8171 = vpack.c.bf16 %v8013, %v8011
      %v8172 = vpack.c.bf16 %v8129, %v8127
      %v8173 = vpack.c.bf16 %v8018, %v8016
      %v8174 = vpack.c.bf16 %v8134, %v8132
      %v8175 = vpack.c.bf16 %v8023, %v8021
      %v8176 = vpack.c.bf16 %v8139, %v8137
      %v8177 = vpack.c.bf16 %v8028, %v8026
      %v8178 = vpack.c.bf16 %v8144, %v8142
      %v8179 = vpack.c.bf16 %v8033, %v8031
      %v8180 = vpack.c.bf16 %v8149, %v8147
      %v8181 = vpack.c.bf16 %v8038, %v8036
      %v8182 = vpack.c.bf16 %v8154, %v8152
      %v8183 = vpack.c.bf16 %v8043, %v8041
      %v8184 = vpack.c.bf16 %v8159, %v8157
      %v8185 = vld [vmem:[%s11] sm:$0xff]
      %v8186 = vld [vmem:[%s11 + $0x8] sm:$0xff]
      %v8187 = vld [vmem:[%s11 + $0x10] sm:$0xff]
      %v8188 = vld [vmem:[%s11 + $0x18] sm:$0xff]
      %v8189 = vld [vmem:[%s11 + $0x20] sm:$0xff]
      %v8190 = vld [vmem:[%s11 + $0x28] sm:$0xff]
      %v8191 = vld [vmem:[%s11 + $0x30] sm:$0xff]
      %v8192 = vld [vmem:[%s11 + $0x38] sm:$0xff]
      %v8193 = vld [vmem:[%s11 + $0x40] sm:$0xff]
      %v8194 = vld [vmem:[%s11 + $0x48] sm:$0xff]
      %v8195 = vld [vmem:[%s11 + $0x50] sm:$0xff]
      %v8196 = vld [vmem:[%s11 + $0x58] sm:$0xff]
      %v8197 = vld [vmem:[%s11 + $0x60] sm:$0xff]
      %v8198 = vld [vmem:[%s11 + $0x68] sm:$0xff]
      %v8199 = vld [vmem:[%s11 + $0x70] sm:$0xff]
      %v8200 = vld [vmem:[%s11 + $0x78] sm:$0xff]
      %v8201 = vld [vmem:[%s11 + $0x80] sm:$0xff]
      %v8202 = vld [vmem:[%s11 + $0x88] sm:$0xff]
      %v8203 = vld [vmem:[%s11 + $0x90] sm:$0xff]
      %v8204 = vld [vmem:[%s11 + $0x98] sm:$0xff]
      %v8205 = vld [vmem:[%s11 + $0xa0] sm:$0xff]
      %v8206 = vld [vmem:[%s11 + $0xa8] sm:$0xff]
      %v8207 = vld [vmem:[%s11 + $0xb0] sm:$0xff]
      %v8208 = vld [vmem:[%s11 + $0xb8] sm:$0xff]
      %v8209 = vld [vmem:[%s11 + $0xc0] sm:$0xff]
      %v8210 = vld [vmem:[%s11 + $0xc8] sm:$0xff]
      %v8211 = vld [vmem:[%s11 + $0xd0] sm:$0xff]
      %v8212 = vld [vmem:[%s11 + $0xd8] sm:$0xff]
      %v8213 = vld [vmem:[%s11 + $0xe0] sm:$0xff]
      %v8214 = vld [vmem:[%s11 + $0xe8] sm:$0xff]
      %v8215 = vld [vmem:[%s11 + $0xf0] sm:$0xff]
      %v8216 = vld [vmem:[%s11 + $0xf8] sm:$0xff]
      %v8217 = vpack.c.bf16 %v8046, %v8046
      %v8218 = vpack.c.bf16 %v8162, %v8162
      %s8219 = scalar_lea.vmem %s11, 256
      %v8220 = vld [vmem:[%s8219] sm:$0xff]
      %v8221 = vld [vmem:[%s8219 + $0x8] sm:$0xff]
      %v8222 = vld [vmem:[%s8219 + $0x10] sm:$0xff]
      %v8223 = vld [vmem:[%s8219 + $0x18] sm:$0xff]
      %v8224 = vld [vmem:[%s8219 + $0x20] sm:$0xff]
      %v8225 = vld [vmem:[%s8219 + $0x28] sm:$0xff]
      %v8226 = vld [vmem:[%s8219 + $0x30] sm:$0xff]
      %v8227 = vld [vmem:[%s8219 + $0x38] sm:$0xff]
      %v8228 = vld [vmem:[%s8219 + $0x40] sm:$0xff]
      %v8229 = vld [vmem:[%s8219 + $0x48] sm:$0xff]
      %v8230 = vld [vmem:[%s8219 + $0x50] sm:$0xff]
      %v8231 = vld [vmem:[%s8219 + $0x58] sm:$0xff]
      %v8232 = vld [vmem:[%s8219 + $0x60] sm:$0xff]
      %v8233 = vld [vmem:[%s8219 + $0x68] sm:$0xff]
      %v8234 = vld [vmem:[%s8219 + $0x70] sm:$0xff]
      %v8235 = vld [vmem:[%s8219 + $0x78] sm:$0xff]
      %v8236 = vld [vmem:[%s8219 + $0x80] sm:$0xff]
      %v8237 = vld [vmem:[%s8219 + $0x88] sm:$0xff]
      %v8238 = vld [vmem:[%s8219 + $0x90] sm:$0xff]
      %v8239 = vld [vmem:[%s8219 + $0x98] sm:$0xff]
      %v8240 = vld [vmem:[%s8219 + $0xa0] sm:$0xff]
      %v8241 = vld [vmem:[%s8219 + $0xa8] sm:$0xff]
      %v8242 = vld [vmem:[%s8219 + $0xb0] sm:$0xff]
      %v8243 = vld [vmem:[%s8219 + $0xb8] sm:$0xff]
      %v8244 = vld [vmem:[%s8219 + $0xc0] sm:$0xff]
      %v8245 = vld [vmem:[%s8219 + $0xc8] sm:$0xff]
      %v8246 = vld [vmem:[%s8219 + $0xd0] sm:$0xff]
      %v8247 = vld [vmem:[%s8219 + $0xd8] sm:$0xff]
      %v8248 = vld [vmem:[%s8219 + $0xe0] sm:$0xff]
      %v8249 = vld [vmem:[%s8219 + $0xe8] sm:$0xff]
      %v8250 = vld [vmem:[%s8219 + $0xf0] sm:$0xff]
      %v8251 = vld [vmem:[%s8219 + $0xf8] sm:$0xff]
      %v8253 = vshrl.u32 %v8167, 16
      %v8255 = vshll.u32 %v8167, 16
      %v8257 = vrot.slane %v8255, 1
      %v8258 = vor.u32 %v8253, %v8257
      %v8260 = vshll.u32 %v8169, 16
      %v8262 = vrot.slane %v8260, 1
      %v8263 = vsel %vm735, %v8258, %v8262
      %v8265 = vshrl.u32 %v8168, 16
      %v8267 = vshll.u32 %v8168, 16
      %v8269 = vrot.slane %v8267, 1
      %v8270 = vor.u32 %v8265, %v8269
      %v8272 = vshll.u32 %v8170, 16
      %v8274 = vrot.slane %v8272, 1
      %v8275 = vsel %vm735, %v8270, %v8274
      %v8276 = vshrl.u32 %v8169, 16
      %v8278 = vor.u32 %v8276, %v8262
      %v8280 = vshll.u32 %v8171, 16
      %v8282 = vrot.slane %v8280, 1
      %v8283 = vsel %vm735, %v8278, %v8282
      %v8284 = vshrl.u32 %v8170, 16
      %v8286 = vor.u32 %v8284, %v8274
      %v8288 = vshll.u32 %v8172, 16
      %v8290 = vrot.slane %v8288, 1
      %v8291 = vsel %vm735, %v8286, %v8290
      %v8292 = vshrl.u32 %v8171, 16
      %v8294 = vor.u32 %v8292, %v8282
      %v8296 = vshll.u32 %v8173, 16
      %v8298 = vrot.slane %v8296, 1
      %v8299 = vsel %vm735, %v8294, %v8298
      %v8300 = vshrl.u32 %v8172, 16
      %v8302 = vor.u32 %v8300, %v8290
      %v8304 = vshll.u32 %v8174, 16
      %v8306 = vrot.slane %v8304, 1
      %v8307 = vsel %vm735, %v8302, %v8306
      %v8308 = vshrl.u32 %v8173, 16
      %v8310 = vor.u32 %v8308, %v8298
      %v8312 = vshll.u32 %v8175, 16
      %v8314 = vrot.slane %v8312, 1
      %v8315 = vsel %vm735, %v8310, %v8314
      %v8316 = vshrl.u32 %v8174, 16
      %v8318 = vor.u32 %v8316, %v8306
      %v8320 = vshll.u32 %v8176, 16
      %v8322 = vrot.slane %v8320, 1
      %v8323 = vsel %vm735, %v8318, %v8322
      %v8324 = vshrl.u32 %v8175, 16
      %v8326 = vor.u32 %v8324, %v8314
      %v8328 = vshll.u32 %v8177, 16
      %v8330 = vrot.slane %v8328, 1
      %v8331 = vsel %vm735, %v8326, %v8330
      %v8332 = vshrl.u32 %v8176, 16
      %v8334 = vor.u32 %v8332, %v8322
      %v8336 = vshll.u32 %v8178, 16
      %v8338 = vrot.slane %v8336, 1
      %v8339 = vsel %vm735, %v8334, %v8338
      %v8340 = vshrl.u32 %v8177, 16
      %v8342 = vor.u32 %v8340, %v8330
      %v8344 = vshll.u32 %v8179, 16
      %v8346 = vrot.slane %v8344, 1
      %v8347 = vsel %vm735, %v8342, %v8346
      %v8348 = vshrl.u32 %v8178, 16
      %v8350 = vor.u32 %v8348, %v8338
      %v8352 = vshll.u32 %v8180, 16
      %v8354 = vrot.slane %v8352, 1
      %v8355 = vsel %vm735, %v8350, %v8354
      %v8356 = vshrl.u32 %v8179, 16
      %v8358 = vor.u32 %v8356, %v8346
      %v8360 = vshll.u32 %v8181, 16
      %v8362 = vrot.slane %v8360, 1
      %v8363 = vsel %vm735, %v8358, %v8362
      %v8364 = vshrl.u32 %v8180, 16
      %v8366 = vor.u32 %v8364, %v8354
      %v8368 = vshll.u32 %v8182, 16
      %v8370 = vrot.slane %v8368, 1
      %v8371 = vsel %vm735, %v8366, %v8370
      %v8372 = vshrl.u32 %v8181, 16
      %v8374 = vor.u32 %v8372, %v8362
      %v8376 = vshll.u32 %v8183, 16
      %v8378 = vrot.slane %v8376, 1
      %v8379 = vsel %vm735, %v8374, %v8378
      %v8380 = vshrl.u32 %v8182, 16
      %v8382 = vor.u32 %v8380, %v8370
      %v8384 = vshll.u32 %v8184, 16
      %v8386 = vrot.slane %v8384, 1
      %v8387 = vsel %vm735, %v8382, %v8386
      %v8388 = vshrl.u32 %v8183, 16
      %v8390 = vor.u32 %v8388, %v8378
      %v8392 = vshll.u32 %v8217, 16
      %v8394 = vrot.slane %v8392, 1
      %v8395 = vsel %vm735, %v8390, %v8394
      %v8396 = vshrl.u32 %v8184, 16
      %v8398 = vor.u32 %v8396, %v8386
      %v8400 = vshll.u32 %v8218, 16
      %v8402 = vrot.slane %v8400, 1
      %v8403 = vsel %vm735, %v8398, %v8402
      %v8454 = vunpack.c.l.b16 %v8220
      %v8455 = vunpack.c.h.b16 %v8220
      %v8456 = vunpack.c.l.b16 %v8221
      %v8457 = vunpack.c.h.b16 %v8221
      %v8458 = vunpack.c.l.b16 %v8222
      %v8459 = vunpack.c.h.b16 %v8222
      %v8460 = vunpack.c.l.b16 %v8223
      %v8461 = vunpack.c.h.b16 %v8223
      %v8462 = vunpack.c.l.b16 %v8224
      %v8463 = vunpack.c.h.b16 %v8224
      %v8464 = vunpack.c.l.b16 %v8225
      %v8465 = vunpack.c.h.b16 %v8225
      %v8466 = vunpack.c.l.b16 %v8226
      %v8467 = vunpack.c.h.b16 %v8226
      %v8468 = vunpack.c.l.b16 %v8227
      %v8469 = vunpack.c.h.b16 %v8227
      %v8470 = vunpack.c.l.b16 %v8228
      %v8471 = vunpack.c.h.b16 %v8228
      %v8472 = vunpack.c.l.b16 %v8229
      %v8473 = vunpack.c.h.b16 %v8229
      %v8474 = vunpack.c.l.b16 %v8230
      %v8475 = vunpack.c.h.b16 %v8230
      %v8476 = vunpack.c.l.b16 %v8231
      %v8477 = vunpack.c.h.b16 %v8231
      %v8478 = vunpack.c.l.b16 %v8232
      %v8479 = vunpack.c.h.b16 %v8232
      %v8480 = vunpack.c.l.b16 %v8233
      %v8481 = vunpack.c.h.b16 %v8233
      %v8482 = vunpack.c.l.b16 %v8234
      %v8483 = vunpack.c.h.b16 %v8234
      %v8484 = vunpack.c.l.b16 %v8235
      %v8485 = vunpack.c.h.b16 %v8235
      %v8486 = vunpack.c.l.b16 %v8236
      %v8487 = vunpack.c.h.b16 %v8236
      %v8488 = vunpack.c.l.b16 %v8237
      %v8489 = vunpack.c.h.b16 %v8237
      %v8490 = vunpack.c.l.b16 %v8238
      %v8491 = vunpack.c.h.b16 %v8238
      %v8492 = vunpack.c.l.b16 %v8239
      %v8493 = vunpack.c.h.b16 %v8239
      %v8494 = vunpack.c.l.b16 %v8240
      %v8495 = vunpack.c.h.b16 %v8240
      %v8496 = vunpack.c.l.b16 %v8241
      %v8497 = vunpack.c.h.b16 %v8241
      %v8498 = vunpack.c.l.b16 %v8242
      %v8499 = vunpack.c.h.b16 %v8242
      %v8500 = vunpack.c.l.b16 %v8243
      %v8501 = vunpack.c.h.b16 %v8243
      %v8502 = vunpack.c.l.b16 %v8244
      %v8503 = vunpack.c.h.b16 %v8244
      %v8504 = vunpack.c.l.b16 %v8245
      %v8505 = vunpack.c.h.b16 %v8245
      %v8506 = vunpack.c.l.b16 %v8246
      %v8507 = vunpack.c.h.b16 %v8246
      %v8508 = vunpack.c.l.b16 %v8247
      %v8509 = vunpack.c.h.b16 %v8247
      %v8510 = vunpack.c.l.b16 %v8248
      %v8511 = vunpack.c.h.b16 %v8248
      %v8512 = vunpack.c.l.b16 %v8249
      %v8513 = vunpack.c.h.b16 %v8249
      %v8514 = vunpack.c.l.b16 %v8250
      %v8515 = vunpack.c.h.b16 %v8250
      %v8516 = vunpack.c.l.b16 %v8251
      %v8517 = vunpack.c.h.b16 %v8251
      %v8518 = vpack.c.b16 %v8456, %v8454
      %v8519 = vpack.c.b16 %v8457, %v8455
      %v8520 = vpack.c.b16 %v8460, %v8458
      %v8521 = vpack.c.b16 %v8461, %v8459
      %v8522 = vpack.c.b16 %v8464, %v8462
      %v8523 = vpack.c.b16 %v8465, %v8463
      %v8524 = vpack.c.b16 %v8468, %v8466
      %v8525 = vpack.c.b16 %v8469, %v8467
      %v8526 = vpack.c.b16 %v8472, %v8470
      %v8527 = vpack.c.b16 %v8473, %v8471
      %v8528 = vpack.c.b16 %v8476, %v8474
      %v8529 = vpack.c.b16 %v8477, %v8475
      %v8530 = vpack.c.b16 %v8480, %v8478
      %v8531 = vpack.c.b16 %v8481, %v8479
      %v8532 = vpack.c.b16 %v8484, %v8482
      %v8533 = vpack.c.b16 %v8485, %v8483
      %v8534 = vpack.c.b16 %v8488, %v8486
      %v8535 = vpack.c.b16 %v8489, %v8487
      %v8536 = vpack.c.b16 %v8492, %v8490
      %v8537 = vpack.c.b16 %v8493, %v8491
      %v8538 = vpack.c.b16 %v8496, %v8494
      %v8539 = vpack.c.b16 %v8497, %v8495
      %v8540 = vpack.c.b16 %v8500, %v8498
      %v8541 = vpack.c.b16 %v8501, %v8499
      %v8542 = vpack.c.b16 %v8504, %v8502
      %v8543 = vpack.c.b16 %v8505, %v8503
      %v8544 = vpack.c.b16 %v8508, %v8506
      %v8545 = vpack.c.b16 %v8509, %v8507
      %v8546 = vpack.c.b16 %v8512, %v8510
      %v8547 = vpack.c.b16 %v8513, %v8511
      %v8548 = vpack.c.b16 %v8516, %v8514
      %v8549 = vpack.c.b16 %v8517, %v8515
      %8582 = vmatpush.bf16.msra.mxu0 %v8532
      %8583 = vmatpush.bf16.msra.mxu0 %v8530
      %8584 = vmatpush.bf16.msra.mxu0 %v8528
      %8585 = vmatpush.bf16.msra.mxu0 %v8526
      %8586 = vmatpush.bf16.msra.mxu0 %v8524
      %8587 = vmatpush.bf16.msra.mxu0 %v8522
      %8588 = vmatpush.bf16.msra.mxu0 %v8520
      %8589 = vmatpush.bf16.msra.mxu0 %v8518
      %8590 = vmatmul.bf16.gmra.mxu0 %v8263
      %v8591 = vpop.f32.mrf.mxu0
      %v8592 = vadd.f32 0.0, %v8591
      %v8593 = vpop.f32.mrf.mxu0
      %v8594 = vadd.f32 0.0, %v8593
      %8595 = vmatmul.bf16.gmra.mxu0 %v8283
      %v8596 = vpop.f32.mrf.mxu0
      %v8597 = vadd.f32 0.0, %v8596
      %v8598 = vpop.f32.mrf.mxu0
      %v8599 = vadd.f32 0.0, %v8598
      %8600 = vmatmul.bf16.gmra.mxu0 %v8299
      %v8601 = vpop.f32.mrf.mxu0
      %v8602 = vadd.f32 0.0, %v8601
      %v8603 = vpop.f32.mrf.mxu0
      %v8604 = vadd.f32 0.0, %v8603
      %8605 = vmatmul.bf16.gmra.mxu0 %v8315
      %v8606 = vpop.f32.mrf.mxu0
      %v8607 = vadd.f32 0.0, %v8606
      %v8608 = vpop.f32.mrf.mxu0
      %v8609 = vadd.f32 0.0, %v8608
      %8610 = vmatmul.bf16.gmra.mxu0 %v8331
      %v8611 = vpop.f32.mrf.mxu0
      %v8612 = vadd.f32 0.0, %v8611
      %v8613 = vpop.f32.mrf.mxu0
      %v8614 = vadd.f32 0.0, %v8613
      %8615 = vmatmul.bf16.gmra.mxu0 %v8347
      %v8616 = vpop.f32.mrf.mxu0
      %v8617 = vadd.f32 0.0, %v8616
      %v8618 = vpop.f32.mrf.mxu0
      %v8619 = vadd.f32 0.0, %v8618
      %8620 = vmatmul.bf16.gmra.mxu0 %v8363
      %v8621 = vpop.f32.mrf.mxu0
      %v8622 = vadd.f32 0.0, %v8621
      %v8623 = vpop.f32.mrf.mxu0
      %v8624 = vadd.f32 0.0, %v8623
      %8625 = vmatmul.bf16.gmra.mxu0 %v8379
      %v8626 = vpop.f32.mrf.mxu0
      %v8627 = vadd.f32 0.0, %v8626
      %v8628 = vpop.f32.mrf.mxu0
      %v8629 = vadd.f32 0.0, %v8628
      %8630 = vmatmul.bf16.gmra.mxu0 %v8395
      %v8631 = vpop.f32.mrf.mxu0
      %v8632 = vadd.f32 0.0, %v8631
      %v8633 = vpop.f32.mrf.mxu0
      %v8634 = vadd.f32 0.0, %v8633
      %8635 = vdwg.mxu0
      %8636 = vmatpush.bf16.msra.mxu0 %v8548
      %8637 = vmatpush.bf16.msra.mxu0 %v8546
      %8638 = vmatpush.bf16.msra.mxu0 %v8544
      %8639 = vmatpush.bf16.msra.mxu0 %v8542
      %8640 = vmatpush.bf16.msra.mxu0 %v8540
      %8641 = vmatpush.bf16.msra.mxu0 %v8538
      %8642 = vmatpush.bf16.msra.mxu0 %v8536
      %8643 = vmatpush.bf16.msra.mxu0 %v8534
      %8644 = vmatmul.bf16.gmra.mxu0 %v8275
      %v8645 = vpop.f32.mrf.mxu0
      %v8646 = vadd.f32 %v8592, %v8645
      %v8647 = vpop.f32.mrf.mxu0
      %v8648 = vadd.f32 %v8594, %v8647
      %8649 = vmatmul.bf16.gmra.mxu0 %v8291
      %v8650 = vpop.f32.mrf.mxu0
      %v8651 = vadd.f32 %v8597, %v8650
      %v8652 = vpop.f32.mrf.mxu0
      %v8653 = vadd.f32 %v8599, %v8652
      %8654 = vmatmul.bf16.gmra.mxu0 %v8307
      %v8655 = vpop.f32.mrf.mxu0
      %v8656 = vadd.f32 %v8602, %v8655
      %v8657 = vpop.f32.mrf.mxu0
      %v8658 = vadd.f32 %v8604, %v8657
      %8659 = vmatmul.bf16.gmra.mxu0 %v8323
      %v8660 = vpop.f32.mrf.mxu0
      %v8661 = vadd.f32 %v8607, %v8660
      %v8662 = vpop.f32.mrf.mxu0
      %v8663 = vadd.f32 %v8609, %v8662
      %8664 = vmatmul.bf16.gmra.mxu0 %v8339
      %v8665 = vpop.f32.mrf.mxu0
      %v8666 = vadd.f32 %v8612, %v8665
      %v8667 = vpop.f32.mrf.mxu0
      %v8668 = vadd.f32 %v8614, %v8667
      %8669 = vmatmul.bf16.gmra.mxu0 %v8355
      %v8670 = vpop.f32.mrf.mxu0
      %v8671 = vadd.f32 %v8617, %v8670
      %v8672 = vpop.f32.mrf.mxu0
      %v8673 = vadd.f32 %v8619, %v8672
      %8674 = vmatmul.bf16.gmra.mxu0 %v8371
      %v8675 = vpop.f32.mrf.mxu0
      %v8676 = vadd.f32 %v8622, %v8675
      %v8677 = vpop.f32.mrf.mxu0
      %v8678 = vadd.f32 %v8624, %v8677
      %8679 = vmatmul.bf16.gmra.mxu0 %v8387
      %v8680 = vpop.f32.mrf.mxu0
      %v8681 = vadd.f32 %v8627, %v8680
      %v8682 = vpop.f32.mrf.mxu0
      %v8683 = vadd.f32 %v8629, %v8682
      %8684 = vmatmul.bf16.gmra.mxu0 %v8403
      %v8685 = vpop.f32.mrf.mxu0
      %v8686 = vadd.f32 %v8632, %v8685
      %v8687 = vpop.f32.mrf.mxu0
      %v8688 = vadd.f32 %v8634, %v8687
      %8689 = vdwg.mxu0
      %8690 = vmatpush.bf16.msra.mxu0 %v8533
      %8691 = vmatpush.bf16.msra.mxu0 %v8531
      %8692 = vmatpush.bf16.msra.mxu0 %v8529
      %8693 = vmatpush.bf16.msra.mxu0 %v8527
      %8694 = vmatpush.bf16.msra.mxu0 %v8525
      %8695 = vmatpush.bf16.msra.mxu0 %v8523
      %8696 = vmatpush.bf16.msra.mxu0 %v8521
      %8697 = vmatpush.bf16.msra.mxu0 %v8519
      %8698 = vmatmul.bf16.gmra.mxu0 %v8263
      %v8699 = vpop.f32.mrf.mxu0
      %v8700 = vadd.f32 0.0, %v8699
      %v8701 = vpop.f32.mrf.mxu0
      %v8702 = vadd.f32 0.0, %v8701
      %8703 = vmatmul.bf16.gmra.mxu0 %v8283
      %v8704 = vpop.f32.mrf.mxu0
      %v8705 = vadd.f32 0.0, %v8704
      %v8706 = vpop.f32.mrf.mxu0
      %v8707 = vadd.f32 0.0, %v8706
      %8708 = vmatmul.bf16.gmra.mxu0 %v8299
      %v8709 = vpop.f32.mrf.mxu0
      %v8710 = vadd.f32 0.0, %v8709
      %v8711 = vpop.f32.mrf.mxu0
      %v8712 = vadd.f32 0.0, %v8711
      %8713 = vmatmul.bf16.gmra.mxu0 %v8315
      %v8714 = vpop.f32.mrf.mxu0
      %v8715 = vadd.f32 0.0, %v8714
      %v8716 = vpop.f32.mrf.mxu0
      %v8717 = vadd.f32 0.0, %v8716
      %8718 = vmatmul.bf16.gmra.mxu0 %v8331
      %v8719 = vpop.f32.mrf.mxu0
      %v8720 = vadd.f32 0.0, %v8719
      %v8721 = vpop.f32.mrf.mxu0
      %v8722 = vadd.f32 0.0, %v8721
      %8723 = vmatmul.bf16.gmra.mxu0 %v8347
      %v8724 = vpop.f32.mrf.mxu0
      %v8725 = vadd.f32 0.0, %v8724
      %v8726 = vpop.f32.mrf.mxu0
      %v8727 = vadd.f32 0.0, %v8726
      %8728 = vmatmul.bf16.gmra.mxu0 %v8363
      %v8729 = vpop.f32.mrf.mxu0
      %v8730 = vadd.f32 0.0, %v8729
      %v8731 = vpop.f32.mrf.mxu0
      %v8732 = vadd.f32 0.0, %v8731
      %8733 = vmatmul.bf16.gmra.mxu0 %v8379
      %v8734 = vpop.f32.mrf.mxu0
      %v8735 = vadd.f32 0.0, %v8734
      %v8736 = vpop.f32.mrf.mxu0
      %v8737 = vadd.f32 0.0, %v8736
      %8738 = vmatmul.bf16.gmra.mxu0 %v8395
      %v8739 = vpop.f32.mrf.mxu0
      %v8740 = vadd.f32 0.0, %v8739
      %v8741 = vpop.f32.mrf.mxu0
      %v8742 = vadd.f32 0.0, %v8741
      %8743 = vdwg.mxu0
      %8744 = vmatpush.bf16.msra.mxu0 %v8549
      %8745 = vmatpush.bf16.msra.mxu0 %v8547
      %8746 = vmatpush.bf16.msra.mxu0 %v8545
      %8747 = vmatpush.bf16.msra.mxu0 %v8543
      %8748 = vmatpush.bf16.msra.mxu0 %v8541
      %8749 = vmatpush.bf16.msra.mxu0 %v8539
      %8750 = vmatpush.bf16.msra.mxu0 %v8537
      %8751 = vmatpush.bf16.msra.mxu0 %v8535
      %8752 = vmatmul.bf16.gmra.mxu0 %v8275
      %v8753 = vpop.f32.mrf.mxu0
      %v8754 = vadd.f32 %v8700, %v8753
      %v8755 = vpop.f32.mrf.mxu0
      %v8756 = vadd.f32 %v8702, %v8755
      %8757 = vmatmul.bf16.gmra.mxu0 %v8291
      %v8758 = vpop.f32.mrf.mxu0
      %v8759 = vadd.f32 %v8705, %v8758
      %v8760 = vpop.f32.mrf.mxu0
      %v8761 = vadd.f32 %v8707, %v8760
      %8762 = vmatmul.bf16.gmra.mxu0 %v8307
      %v8763 = vpop.f32.mrf.mxu0
      %v8764 = vadd.f32 %v8710, %v8763
      %v8765 = vpop.f32.mrf.mxu0
      %v8766 = vadd.f32 %v8712, %v8765
      %8767 = vmatmul.bf16.gmra.mxu0 %v8323
      %v8768 = vpop.f32.mrf.mxu0
      %v8769 = vadd.f32 %v8715, %v8768
      %v8770 = vpop.f32.mrf.mxu0
      %v8771 = vadd.f32 %v8717, %v8770
      %8772 = vmatmul.bf16.gmra.mxu0 %v8339
      %v8773 = vpop.f32.mrf.mxu0
      %v8774 = vadd.f32 %v8720, %v8773
      %v8775 = vpop.f32.mrf.mxu0
      %v8776 = vadd.f32 %v8722, %v8775
      %8777 = vmatmul.bf16.gmra.mxu0 %v8355
      %v8778 = vpop.f32.mrf.mxu0
      %v8779 = vadd.f32 %v8725, %v8778
      %v8780 = vpop.f32.mrf.mxu0
      %v8781 = vadd.f32 %v8727, %v8780
      %8782 = vmatmul.bf16.gmra.mxu0 %v8371
      %v8783 = vpop.f32.mrf.mxu0
      %v8784 = vadd.f32 %v8730, %v8783
      %v8785 = vpop.f32.mrf.mxu0
      %v8786 = vadd.f32 %v8732, %v8785
      %8787 = vmatmul.bf16.gmra.mxu0 %v8387
      %v8788 = vpop.f32.mrf.mxu0
      %v8789 = vadd.f32 %v8735, %v8788
      %v8790 = vpop.f32.mrf.mxu0
      %v8791 = vadd.f32 %v8737, %v8790
      %8792 = vmatmul.bf16.gmra.mxu0 %v8403
      %v8793 = vpop.f32.mrf.mxu0
      %v8794 = vadd.f32 %v8740, %v8793
      %v8795 = vpop.f32.mrf.mxu0
      %v8796 = vadd.f32 %v8742, %v8795
      %8797 = vdwg.mxu0
      %v8830 = vunpack.c.l.b16 %v8185
      %v8831 = vunpack.c.h.b16 %v8185
      %v8832 = vunpack.c.l.b16 %v8186
      %v8833 = vunpack.c.h.b16 %v8186
      %v8834 = vunpack.c.l.b16 %v8187
      %v8835 = vunpack.c.h.b16 %v8187
      %v8836 = vunpack.c.l.b16 %v8188
      %v8837 = vunpack.c.h.b16 %v8188
      %v8838 = vunpack.c.l.b16 %v8189
      %v8839 = vunpack.c.h.b16 %v8189
      %v8840 = vunpack.c.l.b16 %v8190
      %v8841 = vunpack.c.h.b16 %v8190
      %v8842 = vunpack.c.l.b16 %v8191
      %v8843 = vunpack.c.h.b16 %v8191
      %v8844 = vunpack.c.l.b16 %v8192
      %v8845 = vunpack.c.h.b16 %v8192
      %v8846 = vunpack.c.l.b16 %v8193
      %v8847 = vunpack.c.h.b16 %v8193
      %v8848 = vunpack.c.l.b16 %v8194
      %v8849 = vunpack.c.h.b16 %v8194
      %v8850 = vunpack.c.l.b16 %v8195
      %v8851 = vunpack.c.h.b16 %v8195
      %v8852 = vunpack.c.l.b16 %v8196
      %v8853 = vunpack.c.h.b16 %v8196
      %v8854 = vunpack.c.l.b16 %v8197
      %v8855 = vunpack.c.h.b16 %v8197
      %v8856 = vunpack.c.l.b16 %v8198
      %v8857 = vunpack.c.h.b16 %v8198
      %v8858 = vunpack.c.l.b16 %v8199
      %v8859 = vunpack.c.h.b16 %v8199
      %v8860 = vunpack.c.l.b16 %v8200
      %v8861 = vunpack.c.h.b16 %v8200
      %v8862 = vunpack.c.l.b16 %v8201
      %v8863 = vunpack.c.h.b16 %v8201
      %v8864 = vunpack.c.l.b16 %v8202
      %v8865 = vunpack.c.h.b16 %v8202
      %v8866 = vunpack.c.l.b16 %v8203
      %v8867 = vunpack.c.h.b16 %v8203
      %v8868 = vunpack.c.l.b16 %v8204
      %v8869 = vunpack.c.h.b16 %v8204
      %v8870 = vunpack.c.l.b16 %v8205
      %v8871 = vunpack.c.h.b16 %v8205
      %v8872 = vunpack.c.l.b16 %v8206
      %v8873 = vunpack.c.h.b16 %v8206
      %v8874 = vunpack.c.l.b16 %v8207
      %v8875 = vunpack.c.h.b16 %v8207
      %v8876 = vunpack.c.l.b16 %v8208
      %v8877 = vunpack.c.h.b16 %v8208
      %v8878 = vunpack.c.l.b16 %v8209
      %v8879 = vunpack.c.h.b16 %v8209
      %v8880 = vunpack.c.l.b16 %v8210
      %v8881 = vunpack.c.h.b16 %v8210
      %v8882 = vunpack.c.l.b16 %v8211
      %v8883 = vunpack.c.h.b16 %v8211
      %v8884 = vunpack.c.l.b16 %v8212
      %v8885 = vunpack.c.h.b16 %v8212
      %v8886 = vunpack.c.l.b16 %v8213
      %v8887 = vunpack.c.h.b16 %v8213
      %v8888 = vunpack.c.l.b16 %v8214
      %v8889 = vunpack.c.h.b16 %v8214
      %v8890 = vunpack.c.l.b16 %v8215
      %v8891 = vunpack.c.h.b16 %v8215
      %v8892 = vunpack.c.l.b16 %v8216
      %v8893 = vunpack.c.h.b16 %v8216
      %v8894 = vpack.c.b16 %v8832, %v8830
      %v8895 = vpack.c.b16 %v8833, %v8831
      %v8896 = vpack.c.b16 %v8836, %v8834
      %v8897 = vpack.c.b16 %v8837, %v8835
      %v8898 = vpack.c.b16 %v8840, %v8838
      %v8899 = vpack.c.b16 %v8841, %v8839
      %v8900 = vpack.c.b16 %v8844, %v8842
      %v8901 = vpack.c.b16 %v8845, %v8843
      %v8902 = vpack.c.b16 %v8848, %v8846
      %v8903 = vpack.c.b16 %v8849, %v8847
      %v8904 = vpack.c.b16 %v8852, %v8850
      %v8905 = vpack.c.b16 %v8853, %v8851
      %v8906 = vpack.c.b16 %v8856, %v8854
      %v8907 = vpack.c.b16 %v8857, %v8855
      %v8908 = vpack.c.b16 %v8860, %v8858
      %v8909 = vpack.c.b16 %v8861, %v8859
      %v8910 = vpack.c.b16 %v8864, %v8862
      %v8911 = vpack.c.b16 %v8865, %v8863
      %v8912 = vpack.c.b16 %v8868, %v8866
      %v8913 = vpack.c.b16 %v8869, %v8867
      %v8914 = vpack.c.b16 %v8872, %v8870
      %v8915 = vpack.c.b16 %v8873, %v8871
      %v8916 = vpack.c.b16 %v8876, %v8874
      %v8917 = vpack.c.b16 %v8877, %v8875
      %v8918 = vpack.c.b16 %v8880, %v8878
      %v8919 = vpack.c.b16 %v8881, %v8879
      %v8920 = vpack.c.b16 %v8884, %v8882
      %v8921 = vpack.c.b16 %v8885, %v8883
      %v8922 = vpack.c.b16 %v8888, %v8886
      %v8923 = vpack.c.b16 %v8889, %v8887
      %v8924 = vpack.c.b16 %v8892, %v8890
      %v8925 = vpack.c.b16 %v8893, %v8891
      %8958 = vmatpush.bf16.msra.mxu0 %v8908
      %8959 = vmatpush.bf16.msra.mxu0 %v8906
      %8960 = vmatpush.bf16.msra.mxu0 %v8904
      %8961 = vmatpush.bf16.msra.mxu0 %v8902
      %8962 = vmatpush.bf16.msra.mxu0 %v8900
      %8963 = vmatpush.bf16.msra.mxu0 %v8898
      %8964 = vmatpush.bf16.msra.mxu0 %v8896
      %8965 = vmatpush.bf16.msra.mxu0 %v8894
      %8966 = vmatmul.bf16.gmra.mxu0 %v8167
      %v8967 = vpop.f32.mrf.mxu0
      %v8968 = vadd.f32 %v8646, %v8967
      %v8969 = vpop.f32.mrf.mxu0
      %v8970 = vadd.f32 %v8648, %v8969
      %8971 = vmatmul.bf16.gmra.mxu0 %v8169
      %v8972 = vpop.f32.mrf.mxu0
      %v8973 = vadd.f32 %v8651, %v8972
      %v8974 = vpop.f32.mrf.mxu0
      %v8975 = vadd.f32 %v8653, %v8974
      %8976 = vmatmul.bf16.gmra.mxu0 %v8171
      %v8977 = vpop.f32.mrf.mxu0
      %v8978 = vadd.f32 %v8656, %v8977
      %v8979 = vpop.f32.mrf.mxu0
      %v8980 = vadd.f32 %v8658, %v8979
      %8981 = vmatmul.bf16.gmra.mxu0 %v8173
      %v8982 = vpop.f32.mrf.mxu0
      %v8983 = vadd.f32 %v8661, %v8982
      %v8984 = vpop.f32.mrf.mxu0
      %v8985 = vadd.f32 %v8663, %v8984
      %8986 = vmatmul.bf16.gmra.mxu0 %v8175
      %v8987 = vpop.f32.mrf.mxu0
      %v8988 = vadd.f32 %v8666, %v8987
      %v8989 = vpop.f32.mrf.mxu0
      %v8990 = vadd.f32 %v8668, %v8989
      %8991 = vmatmul.bf16.gmra.mxu0 %v8177
      %v8992 = vpop.f32.mrf.mxu0
      %v8993 = vadd.f32 %v8671, %v8992
      %v8994 = vpop.f32.mrf.mxu0
      %v8995 = vadd.f32 %v8673, %v8994
      %8996 = vmatmul.bf16.gmra.mxu0 %v8179
      %v8997 = vpop.f32.mrf.mxu0
      %v8998 = vadd.f32 %v8676, %v8997
      %v8999 = vpop.f32.mrf.mxu0
      %v9000 = vadd.f32 %v8678, %v8999
      %9001 = vmatmul.bf16.gmra.mxu0 %v8181
      %v9002 = vpop.f32.mrf.mxu0
      %v9003 = vadd.f32 %v8681, %v9002
      %v9004 = vpop.f32.mrf.mxu0
      %v9005 = vadd.f32 %v8683, %v9004
      %9006 = vmatmul.bf16.gmra.mxu0 %v8183
      %v9007 = vpop.f32.mrf.mxu0
      %v9008 = vadd.f32 %v8686, %v9007
      %v9009 = vpop.f32.mrf.mxu0
      %v9010 = vadd.f32 %v8688, %v9009
      %9011 = vdwg.mxu0
      %9012 = vmatpush.bf16.msra.mxu0 %v8924
      %9013 = vmatpush.bf16.msra.mxu0 %v8922
      %9014 = vmatpush.bf16.msra.mxu0 %v8920
      %9015 = vmatpush.bf16.msra.mxu0 %v8918
      %9016 = vmatpush.bf16.msra.mxu0 %v8916
      %9017 = vmatpush.bf16.msra.mxu0 %v8914
      %9018 = vmatpush.bf16.msra.mxu0 %v8912
      %9019 = vmatpush.bf16.msra.mxu0 %v8910
      %9020 = vmatmul.bf16.gmra.mxu0 %v8168
      %v9021 = vpop.f32.mrf.mxu0
      %v9022 = vadd.f32 %v8968, %v9021
      %v9023 = vpop.f32.mrf.mxu0
      %v9024 = vadd.f32 %v8970, %v9023
      %9025 = vmatmul.bf16.gmra.mxu0 %v8170
      %v9026 = vpop.f32.mrf.mxu0
      %v9027 = vadd.f32 %v8973, %v9026
      %v9028 = vpop.f32.mrf.mxu0
      %v9029 = vadd.f32 %v8975, %v9028
      %9030 = vmatmul.bf16.gmra.mxu0 %v8172
      %v9031 = vpop.f32.mrf.mxu0
      %v9032 = vadd.f32 %v8978, %v9031
      %v9033 = vpop.f32.mrf.mxu0
      %v9034 = vadd.f32 %v8980, %v9033
      %9035 = vmatmul.bf16.gmra.mxu0 %v8174
      %v9036 = vpop.f32.mrf.mxu0
      %v9037 = vadd.f32 %v8983, %v9036
      %v9038 = vpop.f32.mrf.mxu0
      %v9039 = vadd.f32 %v8985, %v9038
      %9040 = vmatmul.bf16.gmra.mxu0 %v8176
      %v9041 = vpop.f32.mrf.mxu0
      %v9042 = vadd.f32 %v8988, %v9041
      %v9043 = vpop.f32.mrf.mxu0
      %v9044 = vadd.f32 %v8990, %v9043
      %9045 = vmatmul.bf16.gmra.mxu0 %v8178
      %v9046 = vpop.f32.mrf.mxu0
      %v9047 = vadd.f32 %v8993, %v9046
      %v9048 = vpop.f32.mrf.mxu0
      %v9049 = vadd.f32 %v8995, %v9048
      %9050 = vmatmul.bf16.gmra.mxu0 %v8180
      %v9051 = vpop.f32.mrf.mxu0
      %v9052 = vadd.f32 %v8998, %v9051
      %v9053 = vpop.f32.mrf.mxu0
      %v9054 = vadd.f32 %v9000, %v9053
      %9055 = vmatmul.bf16.gmra.mxu0 %v8182
      %v9056 = vpop.f32.mrf.mxu0
      %v9057 = vadd.f32 %v9003, %v9056
      %v9058 = vpop.f32.mrf.mxu0
      %v9059 = vadd.f32 %v9005, %v9058
      %9060 = vmatmul.bf16.gmra.mxu0 %v8184
      %v9061 = vpop.f32.mrf.mxu0
      %v9062 = vadd.f32 %v9008, %v9061
      %v9063 = vpop.f32.mrf.mxu0
      %v9064 = vadd.f32 %v9010, %v9063
      %9065 = vdwg.mxu0
      %9066 = vmatpush.bf16.msra.mxu0 %v8909
      %9067 = vmatpush.bf16.msra.mxu0 %v8907
      %9068 = vmatpush.bf16.msra.mxu0 %v8905
      %9069 = vmatpush.bf16.msra.mxu0 %v8903
      %9070 = vmatpush.bf16.msra.mxu0 %v8901
      %9071 = vmatpush.bf16.msra.mxu0 %v8899
      %9072 = vmatpush.bf16.msra.mxu0 %v8897
      %9073 = vmatpush.bf16.msra.mxu0 %v8895
      %9074 = vmatmul.bf16.gmra.mxu0 %v8167
      %v9075 = vpop.f32.mrf.mxu0
      %v9076 = vadd.f32 %v8754, %v9075
      %v9077 = vpop.f32.mrf.mxu0
      %v9078 = vadd.f32 %v8756, %v9077
      %9079 = vmatmul.bf16.gmra.mxu0 %v8169
      %v9080 = vpop.f32.mrf.mxu0
      %v9081 = vadd.f32 %v8759, %v9080
      %v9082 = vpop.f32.mrf.mxu0
      %v9083 = vadd.f32 %v8761, %v9082
      %9084 = vmatmul.bf16.gmra.mxu0 %v8171
      %v9085 = vpop.f32.mrf.mxu0
      %v9086 = vadd.f32 %v8764, %v9085
      %v9087 = vpop.f32.mrf.mxu0
      %v9088 = vadd.f32 %v8766, %v9087
      %9089 = vmatmul.bf16.gmra.mxu0 %v8173
      %v9090 = vpop.f32.mrf.mxu0
      %v9091 = vadd.f32 %v8769, %v9090
      %v9092 = vpop.f32.mrf.mxu0
      %v9093 = vadd.f32 %v8771, %v9092
      %9094 = vmatmul.bf16.gmra.mxu0 %v8175
      %v9095 = vpop.f32.mrf.mxu0
      %v9096 = vadd.f32 %v8774, %v9095
      %v9097 = vpop.f32.mrf.mxu0
      %v9098 = vadd.f32 %v8776, %v9097
      %9099 = vmatmul.bf16.gmra.mxu0 %v8177
      %v9100 = vpop.f32.mrf.mxu0
      %v9101 = vadd.f32 %v8779, %v9100
      %v9102 = vpop.f32.mrf.mxu0
      %v9103 = vadd.f32 %v8781, %v9102
      %9104 = vmatmul.bf16.gmra.mxu0 %v8179
      %v9105 = vpop.f32.mrf.mxu0
      %v9106 = vadd.f32 %v8784, %v9105
      %v9107 = vpop.f32.mrf.mxu0
      %v9108 = vadd.f32 %v8786, %v9107
      %9109 = vmatmul.bf16.gmra.mxu0 %v8181
      %v9110 = vpop.f32.mrf.mxu0
      %v9111 = vadd.f32 %v8789, %v9110
      %v9112 = vpop.f32.mrf.mxu0
      %v9113 = vadd.f32 %v8791, %v9112
      %9114 = vmatmul.bf16.gmra.mxu0 %v8183
      %v9115 = vpop.f32.mrf.mxu0
      %v9116 = vadd.f32 %v8794, %v9115
      %v9117 = vpop.f32.mrf.mxu0
      %v9118 = vadd.f32 %v8796, %v9117
      %9119 = vdwg.mxu0
      %9120 = vmatpush.bf16.msra.mxu0 %v8925
      %9121 = vmatpush.bf16.msra.mxu0 %v8923
      %9122 = vmatpush.bf16.msra.mxu0 %v8921
      %9123 = vmatpush.bf16.msra.mxu0 %v8919
      %9124 = vmatpush.bf16.msra.mxu0 %v8917
      %9125 = vmatpush.bf16.msra.mxu0 %v8915
      %9126 = vmatpush.bf16.msra.mxu0 %v8913
      %9127 = vmatpush.bf16.msra.mxu0 %v8911
      %9128 = vmatmul.bf16.gmra.mxu0 %v8168
      %v9129 = vpop.f32.mrf.mxu0
      %v9130 = vadd.f32 %v9076, %v9129
      %v9131 = vpop.f32.mrf.mxu0
      %v9132 = vadd.f32 %v9078, %v9131
      %9133 = vmatmul.bf16.gmra.mxu0 %v8170
      %v9134 = vpop.f32.mrf.mxu0
      %v9135 = vadd.f32 %v9081, %v9134
      %v9136 = vpop.f32.mrf.mxu0
      %v9137 = vadd.f32 %v9083, %v9136
      %9138 = vmatmul.bf16.gmra.mxu0 %v8172
      %v9139 = vpop.f32.mrf.mxu0
      %v9140 = vadd.f32 %v9086, %v9139
      %v9141 = vpop.f32.mrf.mxu0
      %v9142 = vadd.f32 %v9088, %v9141
      %9143 = vmatmul.bf16.gmra.mxu0 %v8174
      %v9144 = vpop.f32.mrf.mxu0
      %v9145 = vadd.f32 %v9091, %v9144
      %v9146 = vpop.f32.mrf.mxu0
      %v9147 = vadd.f32 %v9093, %v9146
      %9148 = vmatmul.bf16.gmra.mxu0 %v8176
      %v9149 = vpop.f32.mrf.mxu0
      %v9150 = vadd.f32 %v9096, %v9149
      %v9151 = vpop.f32.mrf.mxu0
      %v9152 = vadd.f32 %v9098, %v9151
      %9153 = vmatmul.bf16.gmra.mxu0 %v8178
      %v9154 = vpop.f32.mrf.mxu0
      %v9155 = vadd.f32 %v9101, %v9154
      %v9156 = vpop.f32.mrf.mxu0
      %v9157 = vadd.f32 %v9103, %v9156
      %9158 = vmatmul.bf16.gmra.mxu0 %v8180
      %v9159 = vpop.f32.mrf.mxu0
      %v9160 = vadd.f32 %v9106, %v9159
      %v9161 = vpop.f32.mrf.mxu0
      %v9162 = vadd.f32 %v9108, %v9161
      %9163 = vmatmul.bf16.gmra.mxu0 %v8182
      %v9164 = vpop.f32.mrf.mxu0
      %v9165 = vadd.f32 %v9111, %v9164
      %v9166 = vpop.f32.mrf.mxu0
      %v9167 = vadd.f32 %v9113, %v9166
      %9168 = vmatmul.bf16.gmra.mxu0 %v8184
      %v9169 = vpop.f32.mrf.mxu0
      %v9170 = vadd.f32 %v9116, %v9169
      %v9171 = vpop.f32.mrf.mxu0
      %v9172 = vadd.f32 %v9118, %v9171
      %9173 = vdwg.mxu0
      %s9174 = scalar_lea.vmem %s11, 512
      %v9175 = vld [vmem:[%s9174] sm:$0xff]
      %v9176 = vld [vmem:[%s9174 + $0x8] sm:$0xff]
      %v9177 = vld [vmem:[%s9174 + $0x10] sm:$0xff]
      %v9178 = vld [vmem:[%s9174 + $0x18] sm:$0xff]
      %v9179 = vld [vmem:[%s9174 + $0x20] sm:$0xff]
      %v9180 = vld [vmem:[%s9174 + $0x28] sm:$0xff]
      %v9181 = vld [vmem:[%s9174 + $0x30] sm:$0xff]
      %v9182 = vld [vmem:[%s9174 + $0x38] sm:$0xff]
      %v9183 = vld [vmem:[%s9174 + $0x40] sm:$0xff]
      %v9184 = vld [vmem:[%s9174 + $0x48] sm:$0xff]
      %v9185 = vld [vmem:[%s9174 + $0x50] sm:$0xff]
      %v9186 = vld [vmem:[%s9174 + $0x58] sm:$0xff]
      %v9187 = vld [vmem:[%s9174 + $0x60] sm:$0xff]
      %v9188 = vld [vmem:[%s9174 + $0x68] sm:$0xff]
      %v9189 = vld [vmem:[%s9174 + $0x70] sm:$0xff]
      %v9190 = vld [vmem:[%s9174 + $0x78] sm:$0xff]
      %v9191 = vld [vmem:[%s9174 + $0x80] sm:$0xff]
      %v9192 = vld [vmem:[%s9174 + $0x88] sm:$0xff]
      %v9193 = vld [vmem:[%s9174 + $0x90] sm:$0xff]
      %v9194 = vld [vmem:[%s9174 + $0x98] sm:$0xff]
      %v9195 = vld [vmem:[%s9174 + $0xa0] sm:$0xff]
      %v9196 = vld [vmem:[%s9174 + $0xa8] sm:$0xff]
      %v9197 = vld [vmem:[%s9174 + $0xb0] sm:$0xff]
      %v9198 = vld [vmem:[%s9174 + $0xb8] sm:$0xff]
      %v9199 = vld [vmem:[%s9174 + $0xc0] sm:$0xff]
      %v9200 = vld [vmem:[%s9174 + $0xc8] sm:$0xff]
      %v9201 = vld [vmem:[%s9174 + $0xd0] sm:$0xff]
      %v9202 = vld [vmem:[%s9174 + $0xd8] sm:$0xff]
      %v9203 = vld [vmem:[%s9174 + $0xe0] sm:$0xff]
      %v9204 = vld [vmem:[%s9174 + $0xe8] sm:$0xff]
      %v9205 = vld [vmem:[%s9174 + $0xf0] sm:$0xff]
      %v9206 = vld [vmem:[%s9174 + $0xf8] sm:$0xff]
      %v9227 = vrot.slane %v8167, 1
      %v9228 = vrot.slane %v8169, 1
      %v9229 = vsel %vm1852, %v9227, %v9228
      %v9230 = vrot.slane %v8168, 1
      %v9231 = vrot.slane %v8170, 1
      %v9232 = vsel %vm1852, %v9230, %v9231
      %v9233 = vrot.slane %v8171, 1
      %v9234 = vsel %vm1852, %v9228, %v9233
      %v9235 = vrot.slane %v8172, 1
      %v9236 = vsel %vm1852, %v9231, %v9235
      %v9237 = vrot.slane %v8173, 1
      %v9238 = vsel %vm1852, %v9233, %v9237
      %v9239 = vrot.slane %v8174, 1
      %v9240 = vsel %vm1852, %v9235, %v9239
      %v9241 = vrot.slane %v8175, 1
      %v9242 = vsel %vm1852, %v9237, %v9241
      %v9243 = vrot.slane %v8176, 1
      %v9244 = vsel %vm1852, %v9239, %v9243
      %v9245 = vrot.slane %v8177, 1
      %v9246 = vsel %vm1852, %v9241, %v9245
      %v9247 = vrot.slane %v8178, 1
      %v9248 = vsel %vm1852, %v9243, %v9247
      %v9249 = vrot.slane %v8179, 1
      %v9250 = vsel %vm1852, %v9245, %v9249
      %v9251 = vrot.slane %v8180, 1
      %v9252 = vsel %vm1852, %v9247, %v9251
      %v9253 = vrot.slane %v8181, 1
      %v9254 = vsel %vm1852, %v9249, %v9253
      %v9255 = vrot.slane %v8182, 1
      %v9256 = vsel %vm1852, %v9251, %v9255
      %v9257 = vrot.slane %v8183, 1
      %v9258 = vsel %vm1852, %v9253, %v9257
      %v9259 = vrot.slane %v8184, 1
      %v9260 = vsel %vm1852, %v9255, %v9259
      %v9261 = vrot.slane %v8217, 1
      %v9262 = vsel %vm1852, %v9257, %v9261
      %v9263 = vrot.slane %v8218, 1
      %v9264 = vsel %vm1852, %v9259, %v9263
      %v9315 = vunpack.c.l.b16 %v9175
      %v9316 = vunpack.c.h.b16 %v9175
      %v9317 = vunpack.c.l.b16 %v9176
      %v9318 = vunpack.c.h.b16 %v9176
      %v9319 = vunpack.c.l.b16 %v9177
      %v9320 = vunpack.c.h.b16 %v9177
      %v9321 = vunpack.c.l.b16 %v9178
      %v9322 = vunpack.c.h.b16 %v9178
      %v9323 = vunpack.c.l.b16 %v9179
      %v9324 = vunpack.c.h.b16 %v9179
      %v9325 = vunpack.c.l.b16 %v9180
      %v9326 = vunpack.c.h.b16 %v9180
      %v9327 = vunpack.c.l.b16 %v9181
      %v9328 = vunpack.c.h.b16 %v9181
      %v9329 = vunpack.c.l.b16 %v9182
      %v9330 = vunpack.c.h.b16 %v9182
      %v9331 = vunpack.c.l.b16 %v9183
      %v9332 = vunpack.c.h.b16 %v9183
      %v9333 = vunpack.c.l.b16 %v9184
      %v9334 = vunpack.c.h.b16 %v9184
      %v9335 = vunpack.c.l.b16 %v9185
      %v9336 = vunpack.c.h.b16 %v9185
      %v9337 = vunpack.c.l.b16 %v9186
      %v9338 = vunpack.c.h.b16 %v9186
      %v9339 = vunpack.c.l.b16 %v9187
      %v9340 = vunpack.c.h.b16 %v9187
      %v9341 = vunpack.c.l.b16 %v9188
      %v9342 = vunpack.c.h.b16 %v9188
      %v9343 = vunpack.c.l.b16 %v9189
      %v9344 = vunpack.c.h.b16 %v9189
      %v9345 = vunpack.c.l.b16 %v9190
      %v9346 = vunpack.c.h.b16 %v9190
      %v9347 = vunpack.c.l.b16 %v9191
      %v9348 = vunpack.c.h.b16 %v9191
      %v9349 = vunpack.c.l.b16 %v9192
      %v9350 = vunpack.c.h.b16 %v9192
      %v9351 = vunpack.c.l.b16 %v9193
      %v9352 = vunpack.c.h.b16 %v9193
      %v9353 = vunpack.c.l.b16 %v9194
      %v9354 = vunpack.c.h.b16 %v9194
      %v9355 = vunpack.c.l.b16 %v9195
      %v9356 = vunpack.c.h.b16 %v9195
      %v9357 = vunpack.c.l.b16 %v9196
      %v9358 = vunpack.c.h.b16 %v9196
      %v9359 = vunpack.c.l.b16 %v9197
      %v9360 = vunpack.c.h.b16 %v9197
      %v9361 = vunpack.c.l.b16 %v9198
      %v9362 = vunpack.c.h.b16 %v9198
      %v9363 = vunpack.c.l.b16 %v9199
      %v9364 = vunpack.c.h.b16 %v9199
      %v9365 = vunpack.c.l.b16 %v9200
      %v9366 = vunpack.c.h.b16 %v9200
      %v9367 = vunpack.c.l.b16 %v9201
      %v9368 = vunpack.c.h.b16 %v9201
      %v9369 = vunpack.c.l.b16 %v9202
      %v9370 = vunpack.c.h.b16 %v9202
      %v9371 = vunpack.c.l.b16 %v9203
      %v9372 = vunpack.c.h.b16 %v9203
      %v9373 = vunpack.c.l.b16 %v9204
      %v9374 = vunpack.c.h.b16 %v9204
      %v9375 = vunpack.c.l.b16 %v9205
      %v9376 = vunpack.c.h.b16 %v9205
      %v9377 = vunpack.c.l.b16 %v9206
      %v9378 = vunpack.c.h.b16 %v9206
      %v9379 = vpack.c.b16 %v9317, %v9315
      %v9380 = vpack.c.b16 %v9318, %v9316
      %v9381 = vpack.c.b16 %v9321, %v9319
      %v9382 = vpack.c.b16 %v9322, %v9320
      %v9383 = vpack.c.b16 %v9325, %v9323
      %v9384 = vpack.c.b16 %v9326, %v9324
      %v9385 = vpack.c.b16 %v9329, %v9327
      %v9386 = vpack.c.b16 %v9330, %v9328
      %v9387 = vpack.c.b16 %v9333, %v9331
      %v9388 = vpack.c.b16 %v9334, %v9332
      %v9389 = vpack.c.b16 %v9337, %v9335
      %v9390 = vpack.c.b16 %v9338, %v9336
      %v9391 = vpack.c.b16 %v9341, %v9339
      %v9392 = vpack.c.b16 %v9342, %v9340
      %v9393 = vpack.c.b16 %v9345, %v9343
      %v9394 = vpack.c.b16 %v9346, %v9344
      %v9395 = vpack.c.b16 %v9349, %v9347
      %v9396 = vpack.c.b16 %v9350, %v9348
      %v9397 = vpack.c.b16 %v9353, %v9351
      %v9398 = vpack.c.b16 %v9354, %v9352
      %v9399 = vpack.c.b16 %v9357, %v9355
      %v9400 = vpack.c.b16 %v9358, %v9356
      %v9401 = vpack.c.b16 %v9361, %v9359
      %v9402 = vpack.c.b16 %v9362, %v9360
      %v9403 = vpack.c.b16 %v9365, %v9363
      %v9404 = vpack.c.b16 %v9366, %v9364
      %v9405 = vpack.c.b16 %v9369, %v9367
      %v9406 = vpack.c.b16 %v9370, %v9368
      %v9407 = vpack.c.b16 %v9373, %v9371
      %v9408 = vpack.c.b16 %v9374, %v9372
      %v9409 = vpack.c.b16 %v9377, %v9375
      %v9410 = vpack.c.b16 %v9378, %v9376
      %9443 = vmatpush.bf16.msra.mxu0 %v9393
      %9444 = vmatpush.bf16.msra.mxu0 %v9391
      %9445 = vmatpush.bf16.msra.mxu0 %v9389
      %9446 = vmatpush.bf16.msra.mxu0 %v9387
      %9447 = vmatpush.bf16.msra.mxu0 %v9385
      %9448 = vmatpush.bf16.msra.mxu0 %v9383
      %9449 = vmatpush.bf16.msra.mxu0 %v9381
      %9450 = vmatpush.bf16.msra.mxu0 %v9379
      %9451 = vmatmul.bf16.gmra.mxu0 %v9229
      %v9452 = vpop.f32.mrf.mxu0
      %v9453 = vadd.f32 0.0, %v9452
      %v9454 = vpop.f32.mrf.mxu0
      %v9455 = vadd.f32 0.0, %v9454
      %9456 = vmatmul.bf16.gmra.mxu0 %v9234
      %v9457 = vpop.f32.mrf.mxu0
      %v9458 = vadd.f32 0.0, %v9457
      %v9459 = vpop.f32.mrf.mxu0
      %v9460 = vadd.f32 0.0, %v9459
      %9461 = vmatmul.bf16.gmra.mxu0 %v9238
      %v9462 = vpop.f32.mrf.mxu0
      %v9463 = vadd.f32 0.0, %v9462
      %v9464 = vpop.f32.mrf.mxu0
      %v9465 = vadd.f32 0.0, %v9464
      %9466 = vmatmul.bf16.gmra.mxu0 %v9242
      %v9467 = vpop.f32.mrf.mxu0
      %v9468 = vadd.f32 0.0, %v9467
      %v9469 = vpop.f32.mrf.mxu0
      %v9470 = vadd.f32 0.0, %v9469
      %9471 = vmatmul.bf16.gmra.mxu0 %v9246
      %v9472 = vpop.f32.mrf.mxu0
      %v9473 = vadd.f32 0.0, %v9472
      %v9474 = vpop.f32.mrf.mxu0
      %v9475 = vadd.f32 0.0, %v9474
      %9476 = vmatmul.bf16.gmra.mxu0 %v9250
      %v9477 = vpop.f32.mrf.mxu0
      %v9478 = vadd.f32 0.0, %v9477
      %v9479 = vpop.f32.mrf.mxu0
      %v9480 = vadd.f32 0.0, %v9479
      %9481 = vmatmul.bf16.gmra.mxu0 %v9254
      %v9482 = vpop.f32.mrf.mxu0
      %v9483 = vadd.f32 0.0, %v9482
      %v9484 = vpop.f32.mrf.mxu0
      %v9485 = vadd.f32 0.0, %v9484
      %9486 = vmatmul.bf16.gmra.mxu0 %v9258
      %v9487 = vpop.f32.mrf.mxu0
      %v9488 = vadd.f32 0.0, %v9487
      %v9489 = vpop.f32.mrf.mxu0
      %v9490 = vadd.f32 0.0, %v9489
      %9491 = vmatmul.bf16.gmra.mxu0 %v9262
      %v9492 = vpop.f32.mrf.mxu0
      %v9493 = vadd.f32 0.0, %v9492
      %v9494 = vpop.f32.mrf.mxu0
      %v9495 = vadd.f32 0.0, %v9494
      %9496 = vdwg.mxu0
      %9497 = vmatpush.bf16.msra.mxu0 %v9409
      %9498 = vmatpush.bf16.msra.mxu0 %v9407
      %9499 = vmatpush.bf16.msra.mxu0 %v9405
      %9500 = vmatpush.bf16.msra.mxu0 %v9403
      %9501 = vmatpush.bf16.msra.mxu0 %v9401
      %9502 = vmatpush.bf16.msra.mxu0 %v9399
      %9503 = vmatpush.bf16.msra.mxu0 %v9397
      %9504 = vmatpush.bf16.msra.mxu0 %v9395
      %9505 = vmatmul.bf16.gmra.mxu0 %v9232
      %v9506 = vpop.f32.mrf.mxu0
      %v9507 = vadd.f32 %v9453, %v9506
      %v9508 = vpop.f32.mrf.mxu0
      %v9509 = vadd.f32 %v9455, %v9508
      %9510 = vmatmul.bf16.gmra.mxu0 %v9236
      %v9511 = vpop.f32.mrf.mxu0
      %v9512 = vadd.f32 %v9458, %v9511
      %v9513 = vpop.f32.mrf.mxu0
      %v9514 = vadd.f32 %v9460, %v9513
      %9515 = vmatmul.bf16.gmra.mxu0 %v9240
      %v9516 = vpop.f32.mrf.mxu0
      %v9517 = vadd.f32 %v9463, %v9516
      %v9518 = vpop.f32.mrf.mxu0
      %v9519 = vadd.f32 %v9465, %v9518
      %9520 = vmatmul.bf16.gmra.mxu0 %v9244
      %v9521 = vpop.f32.mrf.mxu0
      %v9522 = vadd.f32 %v9468, %v9521
      %v9523 = vpop.f32.mrf.mxu0
      %v9524 = vadd.f32 %v9470, %v9523
      %9525 = vmatmul.bf16.gmra.mxu0 %v9248
      %v9526 = vpop.f32.mrf.mxu0
      %v9527 = vadd.f32 %v9473, %v9526
      %v9528 = vpop.f32.mrf.mxu0
      %v9529 = vadd.f32 %v9475, %v9528
      %9530 = vmatmul.bf16.gmra.mxu0 %v9252
      %v9531 = vpop.f32.mrf.mxu0
      %v9532 = vadd.f32 %v9478, %v9531
      %v9533 = vpop.f32.mrf.mxu0
      %v9534 = vadd.f32 %v9480, %v9533
      %9535 = vmatmul.bf16.gmra.mxu0 %v9256
      %v9536 = vpop.f32.mrf.mxu0
      %v9537 = vadd.f32 %v9483, %v9536
      %v9538 = vpop.f32.mrf.mxu0
      %v9539 = vadd.f32 %v9485, %v9538
      %9540 = vmatmul.bf16.gmra.mxu0 %v9260
      %v9541 = vpop.f32.mrf.mxu0
      %v9542 = vadd.f32 %v9488, %v9541
      %v9543 = vpop.f32.mrf.mxu0
      %v9544 = vadd.f32 %v9490, %v9543
      %9545 = vmatmul.bf16.gmra.mxu0 %v9264
      %v9546 = vpop.f32.mrf.mxu0
      %v9547 = vadd.f32 %v9493, %v9546
      %v9548 = vpop.f32.mrf.mxu0
      %v9549 = vadd.f32 %v9495, %v9548
      %9550 = vdwg.mxu0
      %9551 = vmatpush.bf16.msra.mxu0 %v9394
      %9552 = vmatpush.bf16.msra.mxu0 %v9392
      %9553 = vmatpush.bf16.msra.mxu0 %v9390
      %9554 = vmatpush.bf16.msra.mxu0 %v9388
      %9555 = vmatpush.bf16.msra.mxu0 %v9386
      %9556 = vmatpush.bf16.msra.mxu0 %v9384
      %9557 = vmatpush.bf16.msra.mxu0 %v9382
      %9558 = vmatpush.bf16.msra.mxu0 %v9380
      %9559 = vmatmul.bf16.gmra.mxu0 %v9229
      %v9560 = vpop.f32.mrf.mxu0
      %v9561 = vadd.f32 0.0, %v9560
      %v9562 = vpop.f32.mrf.mxu0
      %v9563 = vadd.f32 0.0, %v9562
      %9564 = vmatmul.bf16.gmra.mxu0 %v9234
      %v9565 = vpop.f32.mrf.mxu0
      %v9566 = vadd.f32 0.0, %v9565
      %v9567 = vpop.f32.mrf.mxu0
      %v9568 = vadd.f32 0.0, %v9567
      %9569 = vmatmul.bf16.gmra.mxu0 %v9238
      %v9570 = vpop.f32.mrf.mxu0
      %v9571 = vadd.f32 0.0, %v9570
      %v9572 = vpop.f32.mrf.mxu0
      %v9573 = vadd.f32 0.0, %v9572
      %9574 = vmatmul.bf16.gmra.mxu0 %v9242
      %v9575 = vpop.f32.mrf.mxu0
      %v9576 = vadd.f32 0.0, %v9575
      %v9577 = vpop.f32.mrf.mxu0
      %v9578 = vadd.f32 0.0, %v9577
      %9579 = vmatmul.bf16.gmra.mxu0 %v9246
      %v9580 = vpop.f32.mrf.mxu0
      %v9581 = vadd.f32 0.0, %v9580
      %v9582 = vpop.f32.mrf.mxu0
      %v9583 = vadd.f32 0.0, %v9582
      %9584 = vmatmul.bf16.gmra.mxu0 %v9250
      %v9585 = vpop.f32.mrf.mxu0
      %v9586 = vadd.f32 0.0, %v9585
      %v9587 = vpop.f32.mrf.mxu0
      %v9588 = vadd.f32 0.0, %v9587
      %9589 = vmatmul.bf16.gmra.mxu0 %v9254
      %v9590 = vpop.f32.mrf.mxu0
      %v9591 = vadd.f32 0.0, %v9590
      %v9592 = vpop.f32.mrf.mxu0
      %v9593 = vadd.f32 0.0, %v9592
      %9594 = vmatmul.bf16.gmra.mxu0 %v9258
      %v9595 = vpop.f32.mrf.mxu0
      %v9596 = vadd.f32 0.0, %v9595
      %v9597 = vpop.f32.mrf.mxu0
      %v9598 = vadd.f32 0.0, %v9597
      %9599 = vmatmul.bf16.gmra.mxu0 %v9262
      %v9600 = vpop.f32.mrf.mxu0
      %v9601 = vadd.f32 0.0, %v9600
      %v9602 = vpop.f32.mrf.mxu0
      %v9603 = vadd.f32 0.0, %v9602
      %9604 = vdwg.mxu0
      %9605 = vmatpush.bf16.msra.mxu0 %v9410
      %9606 = vmatpush.bf16.msra.mxu0 %v9408
      %9607 = vmatpush.bf16.msra.mxu0 %v9406
      %9608 = vmatpush.bf16.msra.mxu0 %v9404
      %9609 = vmatpush.bf16.msra.mxu0 %v9402
      %9610 = vmatpush.bf16.msra.mxu0 %v9400
      %9611 = vmatpush.bf16.msra.mxu0 %v9398
      %9612 = vmatpush.bf16.msra.mxu0 %v9396
      %9613 = vmatmul.bf16.gmra.mxu0 %v9232
      %v9614 = vpop.f32.mrf.mxu0
      %v9615 = vadd.f32 %v9561, %v9614
      %v9616 = vpop.f32.mrf.mxu0
      %v9617 = vadd.f32 %v9563, %v9616
      %9618 = vmatmul.bf16.gmra.mxu0 %v9236
      %v9619 = vpop.f32.mrf.mxu0
      %v9620 = vadd.f32 %v9566, %v9619
      %v9621 = vpop.f32.mrf.mxu0
      %v9622 = vadd.f32 %v9568, %v9621
      %9623 = vmatmul.bf16.gmra.mxu0 %v9240
      %v9624 = vpop.f32.mrf.mxu0
      %v9625 = vadd.f32 %v9571, %v9624
      %v9626 = vpop.f32.mrf.mxu0
      %v9627 = vadd.f32 %v9573, %v9626
      %9628 = vmatmul.bf16.gmra.mxu0 %v9244
      %v9629 = vpop.f32.mrf.mxu0
      %v9630 = vadd.f32 %v9576, %v9629
      %v9631 = vpop.f32.mrf.mxu0
      %v9632 = vadd.f32 %v9578, %v9631
      %9633 = vmatmul.bf16.gmra.mxu0 %v9248
      %v9634 = vpop.f32.mrf.mxu0
      %v9635 = vadd.f32 %v9581, %v9634
      %v9636 = vpop.f32.mrf.mxu0
      %v9637 = vadd.f32 %v9583, %v9636
      %9638 = vmatmul.bf16.gmra.mxu0 %v9252
      %v9639 = vpop.f32.mrf.mxu0
      %v9640 = vadd.f32 %v9586, %v9639
      %v9641 = vpop.f32.mrf.mxu0
      %v9642 = vadd.f32 %v9588, %v9641
      %9643 = vmatmul.bf16.gmra.mxu0 %v9256
      %v9644 = vpop.f32.mrf.mxu0
      %v9645 = vadd.f32 %v9591, %v9644
      %v9646 = vpop.f32.mrf.mxu0
      %v9647 = vadd.f32 %v9593, %v9646
      %9648 = vmatmul.bf16.gmra.mxu0 %v9260
      %v9649 = vpop.f32.mrf.mxu0
      %v9650 = vadd.f32 %v9596, %v9649
      %v9651 = vpop.f32.mrf.mxu0
      %v9652 = vadd.f32 %v9598, %v9651
      %9653 = vmatmul.bf16.gmra.mxu0 %v9264
      %v9654 = vpop.f32.mrf.mxu0
      %v9655 = vadd.f32 %v9601, %v9654
      %v9656 = vpop.f32.mrf.mxu0
      %v9657 = vadd.f32 %v9603, %v9656
      %9658 = vdwg.mxu0
      %v9659 = vadd.f32 %v9022, %v9507
      %v9660 = vadd.f32 %v9130, %v9615
      %v9661 = vadd.f32 %v9024, %v9509
      %v9662 = vadd.f32 %v9132, %v9617
      %v9663 = vadd.f32 %v9027, %v9512
      %v9664 = vadd.f32 %v9135, %v9620
      %v9665 = vadd.f32 %v9029, %v9514
      %v9666 = vadd.f32 %v9137, %v9622
      %v9667 = vadd.f32 %v9032, %v9517
      %v9668 = vadd.f32 %v9140, %v9625
      %v9669 = vadd.f32 %v9034, %v9519
      %v9670 = vadd.f32 %v9142, %v9627
      %v9671 = vadd.f32 %v9037, %v9522
      %v9672 = vadd.f32 %v9145, %v9630
      %v9673 = vadd.f32 %v9039, %v9524
      %v9674 = vadd.f32 %v9147, %v9632
      %v9675 = vadd.f32 %v9042, %v9527
      %v9676 = vadd.f32 %v9150, %v9635
      %v9677 = vadd.f32 %v9044, %v9529
      %v9678 = vadd.f32 %v9152, %v9637
      %v9679 = vadd.f32 %v9047, %v9532
      %v9680 = vadd.f32 %v9155, %v9640
      %v9681 = vadd.f32 %v9049, %v9534
      %v9682 = vadd.f32 %v9157, %v9642
      %v9683 = vadd.f32 %v9052, %v9537
      %v9684 = vadd.f32 %v9160, %v9645
      %v9685 = vadd.f32 %v9054, %v9539
      %v9686 = vadd.f32 %v9162, %v9647
      %v9687 = vadd.f32 %v9057, %v9542
      %v9688 = vadd.f32 %v9165, %v9650
      %v9689 = vadd.f32 %v9059, %v9544
      %v9690 = vadd.f32 %v9167, %v9652
      %v9691 = vadd.f32 %v9062, %v9547
      %v9692 = vadd.f32 %v9170, %v9655
      %v9693 = vadd.f32 %v9064, %v9549
      %v9694 = vadd.f32 %v9172, %v9657
      %v9696 = vperm.slane %v8165, 0
      %v9697 = vperm.slane %v8165, 1
      %v9700 = vmul.f32 %v9659, %v9696
      %v9701 = vmul.f32 %v9660, %v9697
      %v9702 = vmul.f32 %v9661, %v9696
      %v9703 = vmul.f32 %v9662, %v9697
      %v9704 = vmul.f32 %v9663, %v9696
      %v9705 = vmul.f32 %v9664, %v9697
      %v9706 = vmul.f32 %v9665, %v9696
      %v9707 = vmul.f32 %v9666, %v9697
      %v9708 = vmul.f32 %v9667, %v9696
      %v9709 = vmul.f32 %v9668, %v9697
      %v9710 = vmul.f32 %v9669, %v9696
      %v9711 = vmul.f32 %v9670, %v9697
      %v9712 = vmul.f32 %v9671, %v9696
      %v9713 = vmul.f32 %v9672, %v9697
      %v9714 = vmul.f32 %v9673, %v9696
      %v9715 = vmul.f32 %v9674, %v9697
      %v9716 = vmul.f32 %v9675, %v9696
      %v9717 = vmul.f32 %v9676, %v9697
      %v9718 = vmul.f32 %v9677, %v9696
      %v9719 = vmul.f32 %v9678, %v9697
      %v9720 = vmul.f32 %v9679, %v9696
      %v9721 = vmul.f32 %v9680, %v9697
      %v9722 = vmul.f32 %v9681, %v9696
      %v9723 = vmul.f32 %v9682, %v9697
      %v9724 = vmul.f32 %v9683, %v9696
      %v9725 = vmul.f32 %v9684, %v9697
      %v9726 = vmul.f32 %v9685, %v9696
      %v9727 = vmul.f32 %v9686, %v9697
      %v9728 = vmul.f32 %v9687, %v9696
      %v9729 = vmul.f32 %v9688, %v9697
      %v9730 = vmul.f32 %v9689, %v9696
      %v9731 = vmul.f32 %v9690, %v9697
      %v9732 = vmul.f32 %v9691, %v9696
      %v9733 = vmul.f32 %v9692, %v9697
      %v9734 = vmul.f32 %v9693, %v9696
      %v9735 = vmul.f32 %v9694, %v9697
      %v9737 = vperm.slane %v8166, 0
      %v9738 = vperm.slane %v8166, 1
      %v9741 = vadd.f32 %v9700, %v9737
      %v9742 = vadd.f32 %v9701, %v9738
      %v9743 = vadd.f32 %v9702, %v9737
      %v9744 = vadd.f32 %v9703, %v9738
      %v9745 = vadd.f32 %v9704, %v9737
      %v9746 = vadd.f32 %v9705, %v9738
      %v9747 = vadd.f32 %v9706, %v9737
      %v9748 = vadd.f32 %v9707, %v9738
      %v9749 = vadd.f32 %v9708, %v9737
      %v9750 = vadd.f32 %v9709, %v9738
      %v9751 = vadd.f32 %v9710, %v9737
      %v9752 = vadd.f32 %v9711, %v9738
      %v9753 = vadd.f32 %v9712, %v9737
      %v9754 = vadd.f32 %v9713, %v9738
      %v9755 = vadd.f32 %v9714, %v9737
      %v9756 = vadd.f32 %v9715, %v9738
      %v9757 = vadd.f32 %v9716, %v9737
      %v9758 = vadd.f32 %v9717, %v9738
      %v9759 = vadd.f32 %v9718, %v9737
      %v9760 = vadd.f32 %v9719, %v9738
      %v9761 = vadd.f32 %v9720, %v9737
      %v9762 = vadd.f32 %v9721, %v9738
      %v9763 = vadd.f32 %v9722, %v9737
      %v9764 = vadd.f32 %v9723, %v9738
      %v9765 = vadd.f32 %v9724, %v9737
      %v9766 = vadd.f32 %v9725, %v9738
      %v9767 = vadd.f32 %v9726, %v9737
      %v9768 = vadd.f32 %v9727, %v9738
      %v9769 = vadd.f32 %v9728, %v9737
      %v9770 = vadd.f32 %v9729, %v9738
      %v9771 = vadd.f32 %v9730, %v9737
      %v9772 = vadd.f32 %v9731, %v9738
      %v9773 = vadd.f32 %v9732, %v9737
      %v9774 = vadd.f32 %v9733, %v9738
      %v9775 = vadd.f32 %v9734, %v9737
      %v9776 = vadd.f32 %v9735, %v9738
      %v9777 = vmax.f32 %v9741, 0.0
      %v9778 = vmax.f32 %v9742, 0.0
      %v9779 = vmax.f32 %v9743, 0.0
      %v9780 = vmax.f32 %v9744, 0.0
      %v9781 = vmax.f32 %v9745, 0.0
      %v9782 = vmax.f32 %v9746, 0.0
      %v9783 = vmax.f32 %v9747, 0.0
      %v9784 = vmax.f32 %v9748, 0.0
      %v9785 = vmax.f32 %v9749, 0.0
      %v9786 = vmax.f32 %v9750, 0.0
      %v9787 = vmax.f32 %v9751, 0.0
      %v9788 = vmax.f32 %v9752, 0.0
      %v9789 = vmax.f32 %v9753, 0.0
      %v9790 = vmax.f32 %v9754, 0.0
      %v9791 = vmax.f32 %v9755, 0.0
      %v9792 = vmax.f32 %v9756, 0.0
      %v9793 = vmax.f32 %v9757, 0.0
      %v9794 = vmax.f32 %v9758, 0.0
      %v9795 = vmax.f32 %v9759, 0.0
      %v9796 = vmax.f32 %v9760, 0.0
      %v9797 = vmax.f32 %v9761, 0.0
      %v9798 = vmax.f32 %v9762, 0.0
      %v9799 = vmax.f32 %v9763, 0.0
      %v9800 = vmax.f32 %v9764, 0.0
      %v9801 = vmax.f32 %v9765, 0.0
      %v9802 = vmax.f32 %v9766, 0.0
      %v9803 = vmax.f32 %v9767, 0.0
      %v9804 = vmax.f32 %v9768, 0.0
      %v9805 = vmax.f32 %v9769, 0.0
      %v9806 = vmax.f32 %v9770, 0.0
      %v9807 = vmax.f32 %v9771, 0.0
      %v9808 = vmax.f32 %v9772, 0.0
      %v9809 = vmax.f32 %v9773, 0.0
      %v9810 = vmax.f32 %v9774, 0.0
      %v9811 = vmax.f32 %v9775, 0.0
      %v9812 = vmax.f32 %v9776, 0.0
      %v9813 = vld [vmem:[%s14] sm:$0xff]
      %v9814 = vld [vmem:[%s14 + $0x8] sm:$0xff]
      %v9815 = vld [vmem:[%s14 + $0x10] sm:$0xff]
      %v9816 = vld [vmem:[%s14 + $0x18] sm:$0xff]
      %v9817 = vld [vmem:[%s14 + $0x20] sm:$0xff]
      %v9818 = vld [vmem:[%s14 + $0x28] sm:$0xff]
      %v9819 = vld [vmem:[%s15] sm:$0xf]
      %v9820 = vld [vmem:[%s15 + $0x4] sm:$0xf]
      %v9821 = vld [vmem:[%s15 + $0x8] sm:$0xf]
      %v9822 = vld [vmem:[%s15 + $0xc] sm:$0xf]
      %v9823 = vld [vmem:[%s15 + $0x10] sm:$0xf]
      %v9824 = vld [vmem:[%s15 + $0x14] sm:$0xf]
      %v9825 = vld [vmem:[%s15 + $0x18] sm:$0xf]
      %v9826 = vld [vmem:[%s15 + $0x1c] sm:$0xf]
      %v9827 = vld [vmem:[%s15 + $0x20] sm:$0xf]
      %v9828 = vld [vmem:[%s15 + $0x24] sm:$0xf]
      %v9829 = vld [vmem:[%s15 + $0x28] sm:$0xf]
      %v9830 = vld [vmem:[%s15 + $0x2c] sm:$0xf]
      %v9831 = vld [vmem:[%s15 + $0x30] sm:$0xf]
      %v9832 = vld [vmem:[%s15 + $0x34] sm:$0xf]
      %v9833 = vld [vmem:[%s15 + $0x38] sm:$0xf]
      %v9834 = vld [vmem:[%s15 + $0x3c] sm:$0xf]
      %v9835 = vld [vmem:[%s15 + $0x40] sm:$0xf]
      %v9836 = vld [vmem:[%s15 + $0x44] sm:$0xf]
      %v9837 = vld [vmem:[%s15 + $0x48] sm:$0xf]
      %v9838 = vld [vmem:[%s15 + $0x4c] sm:$0xf]
      %v9839 = vld [vmem:[%s15 + $0x50] sm:$0xf]
      %v9840 = vld [vmem:[%s15 + $0x54] sm:$0xf]
      %v9841 = vld [vmem:[%s15 + $0x58] sm:$0xf]
      %v9842 = vld [vmem:[%s15 + $0x5c] sm:$0xf]
      %v9843 = vld [vmem:[%s15 + $0x60] sm:$0xf]
      %v9844 = vld [vmem:[%s15 + $0x64] sm:$0xf]
      %v9845 = vld [vmem:[%s15 + $0x68] sm:$0xf]
      %v9846 = vld [vmem:[%s15 + $0x6c] sm:$0xf]
      %v9883 = vrot.slane %v9777, 1
      %v9884 = vrot.slane %v9779, 1
      %v9885 = vsel %vm1089, %v9883, %v9884
      %v9886 = vrot.slane %v9778, 1
      %v9887 = vrot.slane %v9780, 1
      %v9888 = vsel %vm1089, %v9886, %v9887
      %v9889 = vrot.slane %v9781, 1
      %v9890 = vsel %vm1089, %v9884, %v9889
      %v9891 = vrot.slane %v9782, 1
      %v9892 = vsel %vm1089, %v9887, %v9891
      %v9893 = vrot.slane %v9783, 1
      %v9894 = vsel %vm1089, %v9889, %v9893
      %v9895 = vrot.slane %v9784, 1
      %v9896 = vsel %vm1089, %v9891, %v9895
      %v9897 = vrot.slane %v9785, 1
      %v9898 = vsel %vm1089, %v9893, %v9897
      %v9899 = vrot.slane %v9786, 1
      %v9900 = vsel %vm1089, %v9895, %v9899
      %v9901 = vrot.slane %v9787, 1
      %v9902 = vsel %vm1089, %v9897, %v9901
      %v9903 = vrot.slane %v9788, 1
      %v9904 = vsel %vm1089, %v9899, %v9903
      %v9905 = vrot.slane %v9789, 1
      %v9906 = vsel %vm1089, %v9901, %v9905
      %v9907 = vrot.slane %v9790, 1
      %v9908 = vsel %vm1089, %v9903, %v9907
      %v9909 = vrot.slane %v9791, 1
      %v9910 = vsel %vm1089, %v9905, %v9909
      %v9911 = vrot.slane %v9792, 1
      %v9912 = vsel %vm1089, %v9907, %v9911
      %v9913 = vrot.slane %v9793, 1
      %v9914 = vsel %vm1089, %v9909, %v9913
      %v9915 = vrot.slane %v9794, 1
      %v9916 = vsel %vm1089, %v9911, %v9915
      %v9917 = vrot.slane %v9795, 1
      %v9918 = vsel %vm1089, %v9913, %v9917
      %v9919 = vrot.slane %v9796, 1
      %v9920 = vsel %vm1089, %v9915, %v9919
      %v9921 = vrot.slane %v9797, 1
      %v9922 = vsel %vm1089, %v9917, %v9921
      %v9923 = vrot.slane %v9798, 1
      %v9924 = vsel %vm1089, %v9919, %v9923
      %v9925 = vrot.slane %v9799, 1
      %v9926 = vsel %vm1089, %v9921, %v9925
      %v9927 = vrot.slane %v9800, 1
      %v9928 = vsel %vm1089, %v9923, %v9927
      %v9929 = vrot.slane %v9801, 1
      %v9930 = vsel %vm1089, %v9925, %v9929
      %v9931 = vrot.slane %v9802, 1
      %v9932 = vsel %vm1089, %v9927, %v9931
      %v9933 = vrot.slane %v9803, 1
      %v9934 = vsel %vm1089, %v9929, %v9933
      %v9935 = vrot.slane %v9804, 1
      %v9936 = vsel %vm1089, %v9931, %v9935
      %v9937 = vrot.slane %v9805, 1
      %v9938 = vsel %vm1089, %v9933, %v9937
      %v9939 = vrot.slane %v9806, 1
      %v9940 = vsel %vm1089, %v9935, %v9939
      %v9941 = vrot.slane %v9807, 1
      %v9942 = vsel %vm1089, %v9937, %v9941
      %v9943 = vrot.slane %v9808, 1
      %v9944 = vsel %vm1089, %v9939, %v9943
      %v9945 = vrot.slane %v9809, 1
      %v9946 = vsel %vm1089, %v9941, %v9945
      %v9947 = vrot.slane %v9810, 1
      %v9948 = vsel %vm1089, %v9943, %v9947
      %v9949 = vrot.slane %v9811, 1
      %v9950 = vsel %vm1089, %v9945, %v9949
      %v9951 = vrot.slane %v9812, 1
      %v9952 = vsel %vm1089, %v9947, %v9951
      %v9989 = vmax.f32 %v9777, %v9885
      %v9990 = vmax.f32 %v9778, %v9888
      %v9991 = vmax.f32 %v9779, %v9890
      %v9992 = vmax.f32 %v9780, %v9892
      %v9993 = vmax.f32 %v9781, %v9894
      %v9994 = vmax.f32 %v9782, %v9896
      %v9995 = vmax.f32 %v9783, %v9898
      %v9996 = vmax.f32 %v9784, %v9900
      %v9997 = vmax.f32 %v9785, %v9902
      %v9998 = vmax.f32 %v9786, %v9904
      %v9999 = vmax.f32 %v9787, %v9906
      %v10000 = vmax.f32 %v9788, %v9908
      %v10001 = vmax.f32 %v9789, %v9910
      %v10002 = vmax.f32 %v9790, %v9912
      %v10003 = vmax.f32 %v9791, %v9914
      %v10004 = vmax.f32 %v9792, %v9916
      %v10005 = vmax.f32 %v9793, %v9918
      %v10006 = vmax.f32 %v9794, %v9920
      %v10007 = vmax.f32 %v9795, %v9922
      %v10008 = vmax.f32 %v9796, %v9924
      %v10009 = vmax.f32 %v9797, %v9926
      %v10010 = vmax.f32 %v9798, %v9928
      %v10011 = vmax.f32 %v9799, %v9930
      %v10012 = vmax.f32 %v9800, %v9932
      %v10013 = vmax.f32 %v9801, %v9934
      %v10014 = vmax.f32 %v9802, %v9936
      %v10015 = vmax.f32 %v9803, %v9938
      %v10016 = vmax.f32 %v9804, %v9940
      %v10017 = vmax.f32 %v9805, %v9942
      %v10018 = vmax.f32 %v9806, %v9944
      %v10019 = vmax.f32 %v9807, %v9946
      %v10020 = vmax.f32 %v9808, %v9948
      %v10021 = vmax.f32 %v9809, %v9950
      %v10022 = vmax.f32 %v9810, %v9952
      %v10023 = vmax.f32 %v9811, %v9949
      %v10024 = vmax.f32 %v9812, %v9951
      %v10025 = vpack.c.bf16 %v9991, %v9989
      %v10026 = vpack.c.bf16 %v9992, %v9990
      %v10027 = vpack.c.bf16 %v9995, %v9993
      %v10028 = vpack.c.bf16 %v9996, %v9994
      %v10029 = vpack.c.bf16 %v9999, %v9997
      %v10030 = vpack.c.bf16 %v10000, %v9998
      %v10031 = vpack.c.bf16 %v10003, %v10001
      %v10032 = vpack.c.bf16 %v10004, %v10002
      %v10033 = vpack.c.bf16 %v10007, %v10005
      %v10034 = vpack.c.bf16 %v10008, %v10006
      %v10035 = vpack.c.bf16 %v10011, %v10009
      %v10036 = vpack.c.bf16 %v10012, %v10010
      %v10037 = vpack.c.bf16 %v10015, %v10013
      %v10038 = vpack.c.bf16 %v10016, %v10014
      %v10039 = vpack.c.bf16 %v10019, %v10017
      %v10040 = vpack.c.bf16 %v10020, %v10018
      %v10041 = vpack.c.bf16 %v10023, %v10021
      %v10042 = vpack.c.bf16 %v10024, %v10022
      %v10049 = vunpack.c.l.b16 %v9813
      %v10050 = vunpack.c.h.b16 %v9813
      %v10051 = vunpack.c.l.b16 %v9814
      %v10052 = vunpack.c.h.b16 %v9814
      %v10053 = vunpack.c.l.b16 %v9815
      %v10054 = vunpack.c.h.b16 %v9815
      %v10055 = vunpack.c.l.b16 %v9816
      %v10056 = vunpack.c.h.b16 %v9816
      %v10057 = vunpack.c.l.b16 %v9817
      %v10058 = vunpack.c.h.b16 %v9817
      %v10059 = vunpack.c.l.b16 %v9818
      %v10060 = vunpack.c.h.b16 %v9818
      %v10061 = vpack.c.b16 %v10051, %v10049
      %v10062 = vpack.c.b16 %v10052, %v10050
      %v10063 = vpack.c.b16 %v10055, %v10053
      %v10064 = vpack.c.b16 %v10056, %v10054
      %v10065 = vpack.c.b16 %v10059, %v10057
      %v10066 = vpack.c.b16 %v10060, %v10058
      %vm10070 = vcmask 121856
      %v10072 = vsel %vm10070, %v10062, 0
      %v10075 = vsel %vm10070, %v10064, 0
      %v10078 = vsel %vm10070, %v10066, 0
      %v10081 = vand.u32 %v10041, %v3962
      %v10084 = vand.u32 %v10042, %v3962
      %10086 = vmatpush.bf16.msra.mxu0 %v10039
      %10087 = vmatpush.bf16.msra.mxu0 %v10037
      %10088 = vmatpush.bf16.msra.mxu0 %v10035
      %10089 = vmatpush.bf16.msra.mxu0 %v10033
      %10090 = vmatpush.bf16.msra.mxu0 %v10031
      %10091 = vmatpush.bf16.msra.mxu0 %v10029
      %10092 = vmatpush.bf16.msra.mxu0 %v10027
      %10093 = vmatpush.bf16.msra.mxu0 %v10025
      %10094 = vmatmul.bf16.gmra.mxu0 %v10061
      %v10095 = vpop.f32.mrf.mxu0
      %v10096 = vadd.f32 0.0, %v10095
      %v10097 = vpop.f32.mrf.mxu0
      %v10098 = vadd.f32 0.0, %v10097
      %10099 = vmatmul.bf16.gmra.mxu0 %v10063
      %v10100 = vpop.f32.mrf.mxu0
      %v10101 = vadd.f32 0.0, %v10100
      %v10102 = vpop.f32.mrf.mxu0
      %v10103 = vadd.f32 0.0, %v10102
      %10104 = vmatmul.bf16.gmra.mxu0 %v10065
      %v10105 = vpop.f32.mrf.mxu0
      %v10106 = vadd.f32 0.0, %v10105
      %v10107 = vpop.f32.mrf.mxu0
      %v10108 = vadd.f32 0.0, %v10107
      %10109 = vdwg.mxu0
      %10110 = vmatpush.bf16.msra.mxu0 0
      %10111 = vmatpush.bf16.msra.mxu0 0
      %10112 = vmatpush.bf16.msra.mxu0 0
      %10113 = vmatpush.bf16.msra.mxu0 0
      %10114 = vmatpush.bf16.msra.mxu0 0
      %10115 = vmatpush.bf16.msra.mxu0 0
      %10116 = vmatpush.bf16.msra.mxu0 0
      %10117 = vmatpush.bf16.msra.mxu0 %v10081
      %10118 = vmatmul.bf16.gmra.mxu0 %v10072
      %v10119 = vpop.f32.mrf.mxu0
      %v10120 = vadd.f32 %v10096, %v10119
      %v10121 = vpop.f32.mrf.mxu0
      %v10122 = vadd.f32 %v10098, %v10121
      %10123 = vmatmul.bf16.gmra.mxu0 %v10075
      %v10124 = vpop.f32.mrf.mxu0
      %v10125 = vadd.f32 %v10101, %v10124
      %v10126 = vpop.f32.mrf.mxu0
      %v10127 = vadd.f32 %v10103, %v10126
      %10128 = vmatmul.bf16.gmra.mxu0 %v10078
      %v10129 = vpop.f32.mrf.mxu0
      %v10130 = vadd.f32 %v10106, %v10129
      %v10131 = vpop.f32.mrf.mxu0
      %v10132 = vadd.f32 %v10108, %v10131
      %10133 = vdwg.mxu0
      %10134 = vmatpush.bf16.msra.mxu0 %v10040
      %10135 = vmatpush.bf16.msra.mxu0 %v10038
      %10136 = vmatpush.bf16.msra.mxu0 %v10036
      %10137 = vmatpush.bf16.msra.mxu0 %v10034
      %10138 = vmatpush.bf16.msra.mxu0 %v10032
      %10139 = vmatpush.bf16.msra.mxu0 %v10030
      %10140 = vmatpush.bf16.msra.mxu0 %v10028
      %10141 = vmatpush.bf16.msra.mxu0 %v10026
      %10142 = vmatmul.bf16.gmra.mxu0 %v10061
      %v10143 = vpop.f32.mrf.mxu0
      %v10144 = vadd.f32 0.0, %v10143
      %v10145 = vpop.f32.mrf.mxu0
      %v10146 = vadd.f32 0.0, %v10145
      %10147 = vmatmul.bf16.gmra.mxu0 %v10063
      %v10148 = vpop.f32.mrf.mxu0
      %v10149 = vadd.f32 0.0, %v10148
      %v10150 = vpop.f32.mrf.mxu0
      %v10151 = vadd.f32 0.0, %v10150
      %10152 = vmatmul.bf16.gmra.mxu0 %v10065
      %v10153 = vpop.f32.mrf.mxu0
      %v10154 = vadd.f32 0.0, %v10153
      %v10155 = vpop.f32.mrf.mxu0
      %v10156 = vadd.f32 0.0, %v10155
      %10157 = vdwg.mxu0
      %10158 = vmatpush.bf16.msra.mxu0 0
      %10159 = vmatpush.bf16.msra.mxu0 0
      %10160 = vmatpush.bf16.msra.mxu0 0
      %10161 = vmatpush.bf16.msra.mxu0 0
      %10162 = vmatpush.bf16.msra.mxu0 0
      %10163 = vmatpush.bf16.msra.mxu0 0
      %10164 = vmatpush.bf16.msra.mxu0 0
      %10165 = vmatpush.bf16.msra.mxu0 %v10084
      %10166 = vmatmul.bf16.gmra.mxu0 %v10072
      %v10167 = vpop.f32.mrf.mxu0
      %v10168 = vadd.f32 %v10144, %v10167
      %v10169 = vpop.f32.mrf.mxu0
      %v10170 = vadd.f32 %v10146, %v10169
      %10171 = vmatmul.bf16.gmra.mxu0 %v10075
      %v10172 = vpop.f32.mrf.mxu0
      %v10173 = vadd.f32 %v10149, %v10172
      %v10174 = vpop.f32.mrf.mxu0
      %v10175 = vadd.f32 %v10151, %v10174
      %10176 = vmatmul.bf16.gmra.mxu0 %v10078
      %v10177 = vpop.f32.mrf.mxu0
      %v10178 = vadd.f32 %v10154, %v10177
      %v10179 = vpop.f32.mrf.mxu0
      %v10180 = vadd.f32 %v10156, %v10179
      %10181 = vdwg.mxu0
      %10194 = vrot.lane.b32.xlu0 %v10120, 96
      %v10195 = vpop.permute.xlu0 %10194
      %10196 = vrot.lane.b32.xlu0 %v10168, 96
      %v10197 = vpop.permute.xlu0 %10196
      %10198 = vrot.lane.b32.xlu0 %v10122, 96
      %v10199 = vpop.permute.xlu0 %10198
      %10200 = vrot.lane.b32.xlu0 %v10170, 96
      %v10201 = vpop.permute.xlu0 %10200
      %10202 = vrot.lane.b32.xlu0 %v10125, 96
      %v10203 = vpop.permute.xlu0 %10202
      %10204 = vrot.lane.b32.xlu0 %v10173, 96
      %v10205 = vpop.permute.xlu0 %10204
      %10206 = vrot.lane.b32.xlu0 %v10127, 96
      %v10207 = vpop.permute.xlu0 %10206
      %10208 = vrot.lane.b32.xlu0 %v10175, 96
      %v10209 = vpop.permute.xlu0 %10208
      %10210 = vrot.lane.b32.xlu0 %v10130, 96
      %v10211 = vpop.permute.xlu0 %10210
      %10212 = vrot.lane.b32.xlu0 %v10178, 96
      %v10213 = vpop.permute.xlu0 %10212
      %10214 = vrot.lane.b32.xlu0 %v10132, 96
      %v10215 = vpop.permute.xlu0 %10214
      %10216 = vrot.lane.b32.xlu0 %v10180, 96
      %v10217 = vpop.permute.xlu0 %10216
      %vm10218 = vcmask 785408
      %v10219 = vsel %vm10218, %v10195, %v10197
      %v10220 = vsel %vm10218, %v10199, %v10201
      %v10221 = vsel %vm10218, %v10203, %v10205
      %v10222 = vsel %vm10218, %v10207, %v10209
      %v10223 = vsel %vm10218, %v10211, %v10213
      %v10224 = vsel %vm10218, %v10215, %v10217
      %v10237 = vmax.f32 %v10120, %v10219
      %v10238 = vmax.f32 %v10168, %v10197
      %v10239 = vmax.f32 %v10122, %v10220
      %v10240 = vmax.f32 %v10170, %v10201
      %v10241 = vmax.f32 %v10125, %v10221
      %v10242 = vmax.f32 %v10173, %v10205
      %v10243 = vmax.f32 %v10127, %v10222
      %v10244 = vmax.f32 %v10175, %v10209
      %v10245 = vmax.f32 %v10130, %v10223
      %v10246 = vmax.f32 %v10178, %v10213
      %v10247 = vmax.f32 %v10132, %v10224
      %v10248 = vmax.f32 %v10180, %v10217
      %v10249 = vpack.c.bf16 %v10239, %v10237
      %v10250 = vpack.c.bf16 %v10240, %v10238
      %v10251 = vpack.c.bf16 %v10243, %v10241
      %v10252 = vpack.c.bf16 %v10244, %v10242
      %v10253 = vpack.c.bf16 %v10247, %v10245
      %v10254 = vpack.c.bf16 %v10248, %v10246
      %v10283 = vunpack.c.l.b16 %v9819
      %v10284 = vunpack.c.l.b16 %v9820
      %v10285 = vunpack.c.l.b16 %v9821
      %v10286 = vunpack.c.l.b16 %v9822
      %v10287 = vunpack.c.l.b16 %v9823
      %v10288 = vunpack.c.l.b16 %v9824
      %v10289 = vunpack.c.l.b16 %v9825
      %v10290 = vunpack.c.l.b16 %v9826
      %v10291 = vunpack.c.l.b16 %v9827
      %v10292 = vunpack.c.l.b16 %v9828
      %v10293 = vunpack.c.l.b16 %v9829
      %v10294 = vunpack.c.l.b16 %v9830
      %v10295 = vunpack.c.l.b16 %v9831
      %v10296 = vunpack.c.l.b16 %v9832
      %v10297 = vunpack.c.l.b16 %v9833
      %v10298 = vunpack.c.l.b16 %v9834
      %v10299 = vunpack.c.l.b16 %v9835
      %v10300 = vunpack.c.l.b16 %v9836
      %v10301 = vunpack.c.l.b16 %v9837
      %v10302 = vunpack.c.l.b16 %v9838
      %v10303 = vunpack.c.l.b16 %v9839
      %v10304 = vunpack.c.l.b16 %v9840
      %v10305 = vunpack.c.l.b16 %v9841
      %v10306 = vunpack.c.l.b16 %v9842
      %v10307 = vunpack.c.l.b16 %v9843
      %v10308 = vunpack.c.l.b16 %v9844
      %v10309 = vunpack.c.l.b16 %v9845
      %v10310 = vunpack.c.l.b16 %v9846
      %v10311 = vpack.c.b16 %v10284, %v10283
      %v10312 = vpack.c.b16 %v10286, %v10285
      %v10313 = vpack.c.b16 %v10288, %v10287
      %v10314 = vpack.c.b16 %v10290, %v10289
      %v10315 = vpack.c.b16 %v10292, %v10291
      %v10316 = vpack.c.b16 %v10294, %v10293
      %v10317 = vpack.c.b16 %v10296, %v10295
      %v10318 = vpack.c.b16 %v10298, %v10297
      %v10319 = vpack.c.b16 %v10300, %v10299
      %v10320 = vpack.c.b16 %v10302, %v10301
      %v10321 = vpack.c.b16 %v10304, %v10303
      %v10322 = vpack.c.b16 %v10306, %v10305
      %v10323 = vpack.c.b16 %v10308, %v10307
      %v10324 = vpack.c.b16 %v10310, %v10309
      %v10340 = vsel %vm10218, %v10250, 0
      %v10343 = vsel %vm10218, %v10252, 0
      %v10346 = vsel %vm10218, %v10254, 0
      %10348 = vmatpush.bf16.msra.mxu0 %v10318
      %10349 = vmatpush.bf16.msra.mxu0 %v10317
      %10350 = vmatpush.bf16.msra.mxu0 %v10316
      %10351 = vmatpush.bf16.msra.mxu0 %v10315
      %10352 = vmatpush.bf16.msra.mxu0 %v10314
      %10353 = vmatpush.bf16.msra.mxu0 %v10313
      %10354 = vmatpush.bf16.msra.mxu0 %v10312
      %10355 = vmatpush.bf16.msra.mxu0 %v10311
      %10356 = vmatmul.bf16.gmra.mxu0 %v10249
      %v10357 = vpop.f32.mrf.mxu0
      %v10358 = vadd.f32 0.0, %v10357
      %v10359 = vpop.f32.mrf.mxu0
      %v10360 = vadd.f32 0.0, %v10359
      %10361 = vmatmul.bf16.gmra.mxu0 %v10251
      %v10362 = vpop.f32.mrf.mxu0
      %v10363 = vadd.f32 0.0, %v10362
      %v10364 = vpop.f32.mrf.mxu0
      %v10365 = vadd.f32 0.0, %v10364
      %10366 = vmatmul.bf16.gmra.mxu0 %v10253
      %v10367 = vpop.f32.mrf.mxu0
      %v10368 = vadd.f32 0.0, %v10367
      %v10369 = vpop.f32.mrf.mxu0
      %v10370 = vadd.f32 0.0, %v10369
      %10371 = vdwg.mxu0
      %10372 = vmatpush.bf16.msra.mxu0 0
      %10373 = vmatpush.bf16.msra.mxu0 0
      %10374 = vmatpush.bf16.msra.mxu0 %v10324
      %10375 = vmatpush.bf16.msra.mxu0 %v10323
      %10376 = vmatpush.bf16.msra.mxu0 %v10322
      %10377 = vmatpush.bf16.msra.mxu0 %v10321
      %10378 = vmatpush.bf16.msra.mxu0 %v10320
      %10379 = vmatpush.bf16.msra.mxu0 %v10319
      %10380 = vmatmul.bf16.gmra.mxu0 %v10340
      %v10381 = vpop.f32.mrf.mxu0
      %v10382 = vadd.f32 %v10358, %v10381
      %v10383 = vpop.f32.mrf.mxu0
      %v10384 = vadd.f32 %v10360, %v10383
      %10385 = vmatmul.bf16.gmra.mxu0 %v10343
      %v10386 = vpop.f32.mrf.mxu0
      %v10387 = vadd.f32 %v10363, %v10386
      %v10388 = vpop.f32.mrf.mxu0
      %v10389 = vadd.f32 %v10365, %v10388
      %10390 = vmatmul.bf16.gmra.mxu0 %v10346
      %v10391 = vpop.f32.mrf.mxu0
      %v10392 = vadd.f32 %v10368, %v10391
      %v10393 = vpop.f32.mrf.mxu0
      %v10394 = vadd.f32 %v10370, %v10393
      %10395 = vdwg.mxu0
      %v10396 = vpack.c.bf16 %v10384, %v10382
      %v10397 = vld [vmem:[%s16] sm:$0xff]
      %v10398 = vld [vmem:[%s16 + $0x8] sm:$0xff]
      %v10399 = vld [vmem:[%s16 + $0x10] sm:$0xff]
      %v10400 = vld [vmem:[%s16 + $0x18] sm:$0xff]
      %v10401 = vld [vmem:[%s16 + $0x20] sm:$0xff]
      %v10402 = vld [vmem:[%s16 + $0x28] sm:$0xff]
      %v10403 = vld [vmem:[%s16 + $0x30] sm:$0xff]
      %v10404 = vld [vmem:[%s16 + $0x38] sm:$0xff]
      %v10405 = vld [vmem:[%s16 + $0x40] sm:$0xff]
      %v10406 = vld [vmem:[%s16 + $0x48] sm:$0xff]
      %v10407 = vld [vmem:[%s16 + $0x50] sm:$0xff]
      %v10408 = vld [vmem:[%s16 + $0x58] sm:$0xff]
      %v10409 = vld [vmem:[%s16 + $0x60] sm:$0xff]
      %v10410 = vld [vmem:[%s16 + $0x68] sm:$0xff]
      %v10411 = vld [vmem:[%s16 + $0x70] sm:$0xff]
      %v10412 = vld [vmem:[%s16 + $0x78] sm:$0xff]
      %v10413 = vpack.c.bf16 %v10389, %v10387
      %s10414 = scalar_lea.vmem %s16, 128
      %v10415 = vld [vmem:[%s10414] sm:$0xff]
      %v10416 = vld [vmem:[%s10414 + $0x8] sm:$0xff]
      %v10417 = vld [vmem:[%s10414 + $0x10] sm:$0xff]
      %v10418 = vld [vmem:[%s10414 + $0x18] sm:$0xff]
      %v10419 = vld [vmem:[%s10414 + $0x20] sm:$0xff]
      %v10420 = vld [vmem:[%s10414 + $0x28] sm:$0xff]
      %v10421 = vld [vmem:[%s10414 + $0x30] sm:$0xff]
      %v10422 = vld [vmem:[%s10414 + $0x38] sm:$0xff]
      %v10423 = vld [vmem:[%s10414 + $0x40] sm:$0xff]
      %v10424 = vld [vmem:[%s10414 + $0x48] sm:$0xff]
      %v10425 = vld [vmem:[%s10414 + $0x50] sm:$0xff]
      %v10426 = vld [vmem:[%s10414 + $0x58] sm:$0xff]
      %v10427 = vld [vmem:[%s10414 + $0x60] sm:$0xff]
      %v10428 = vld [vmem:[%s10414 + $0x68] sm:$0xff]
      %v10429 = vld [vmem:[%s10414 + $0x70] sm:$0xff]
      %v10430 = vld [vmem:[%s10414 + $0x78] sm:$0xff]
      %v10447 = vunpack.c.l.b16 %v10415
      %v10448 = vunpack.c.h.b16 %v10415
      %v10449 = vunpack.c.l.b16 %v10416
      %v10450 = vunpack.c.h.b16 %v10416
      %v10451 = vunpack.c.l.b16 %v10417
      %v10452 = vunpack.c.h.b16 %v10417
      %v10453 = vunpack.c.l.b16 %v10418
      %v10454 = vunpack.c.h.b16 %v10418
      %v10455 = vunpack.c.l.b16 %v10419
      %v10456 = vunpack.c.h.b16 %v10419
      %v10457 = vunpack.c.l.b16 %v10420
      %v10458 = vunpack.c.h.b16 %v10420
      %v10459 = vunpack.c.l.b16 %v10421
      %v10460 = vunpack.c.h.b16 %v10421
      %v10461 = vunpack.c.l.b16 %v10422
      %v10462 = vunpack.c.h.b16 %v10422
      %v10463 = vunpack.c.l.b16 %v10423
      %v10464 = vunpack.c.h.b16 %v10423
      %v10465 = vunpack.c.l.b16 %v10424
      %v10466 = vunpack.c.h.b16 %v10424
      %v10467 = vunpack.c.l.b16 %v10425
      %v10468 = vunpack.c.h.b16 %v10425
      %v10469 = vunpack.c.l.b16 %v10426
      %v10470 = vunpack.c.h.b16 %v10426
      %v10471 = vunpack.c.l.b16 %v10427
      %v10472 = vunpack.c.h.b16 %v10427
      %v10473 = vunpack.c.l.b16 %v10428
      %v10474 = vunpack.c.h.b16 %v10428
      %v10475 = vunpack.c.l.b16 %v10429
      %v10476 = vunpack.c.h.b16 %v10429
      %v10477 = vunpack.c.l.b16 %v10430
      %v10478 = vunpack.c.h.b16 %v10430
      %v10479 = vpack.c.b16 %v10449, %v10447
      %v10480 = vpack.c.b16 %v10450, %v10448
      %v10481 = vpack.c.b16 %v10453, %v10451
      %v10482 = vpack.c.b16 %v10454, %v10452
      %v10483 = vpack.c.b16 %v10457, %v10455
      %v10484 = vpack.c.b16 %v10458, %v10456
      %v10485 = vpack.c.b16 %v10461, %v10459
      %v10486 = vpack.c.b16 %v10462, %v10460
      %v10487 = vpack.c.b16 %v10465, %v10463
      %v10488 = vpack.c.b16 %v10466, %v10464
      %v10489 = vpack.c.b16 %v10469, %v10467
      %v10490 = vpack.c.b16 %v10470, %v10468
      %v10491 = vpack.c.b16 %v10473, %v10471
      %v10492 = vpack.c.b16 %v10474, %v10472
      %v10493 = vpack.c.b16 %v10477, %v10475
      %v10494 = vpack.c.b16 %v10478, %v10476
      %10511 = vmatpush.bf16.msra.mxu0 %v10493
      %10512 = vmatpush.bf16.msra.mxu0 %v10491
      %10513 = vmatpush.bf16.msra.mxu0 %v10489
      %10514 = vmatpush.bf16.msra.mxu0 %v10487
      %10515 = vmatpush.bf16.msra.mxu0 %v10485
      %10516 = vmatpush.bf16.msra.mxu0 %v10483
      %10517 = vmatpush.bf16.msra.mxu0 %v10481
      %10518 = vmatpush.bf16.msra.mxu0 %v10479
      %10519 = vmatmul.bf16.gmra.mxu0 %v10413
      %v10520 = vpop.f32.mrf.mxu0
      %v10521 = vadd.f32 0.0, %v10520
      %v10522 = vpop.f32.mrf.mxu0
      %v10523 = vadd.f32 0.0, %v10522
      %10524 = vdwg.mxu0
      %10525 = vmatpush.bf16.msra.mxu0 %v10494
      %10526 = vmatpush.bf16.msra.mxu0 %v10492
      %10527 = vmatpush.bf16.msra.mxu0 %v10490
      %10528 = vmatpush.bf16.msra.mxu0 %v10488
      %10529 = vmatpush.bf16.msra.mxu0 %v10486
      %10530 = vmatpush.bf16.msra.mxu0 %v10484
      %10531 = vmatpush.bf16.msra.mxu0 %v10482
      %10532 = vmatpush.bf16.msra.mxu0 %v10480
      %10533 = vmatmul.bf16.gmra.mxu0 %v10413
      %v10534 = vpop.f32.mrf.mxu0
      %v10535 = vadd.f32 0.0, %v10534
      %v10536 = vpop.f32.mrf.mxu0
      %v10537 = vadd.f32 0.0, %v10536
      %10538 = vdwg.mxu0
      %v10555 = vunpack.c.l.b16 %v10397
      %v10556 = vunpack.c.h.b16 %v10397
      %v10557 = vunpack.c.l.b16 %v10398
      %v10558 = vunpack.c.h.b16 %v10398
      %v10559 = vunpack.c.l.b16 %v10399
      %v10560 = vunpack.c.h.b16 %v10399
      %v10561 = vunpack.c.l.b16 %v10400
      %v10562 = vunpack.c.h.b16 %v10400
      %v10563 = vunpack.c.l.b16 %v10401
      %v10564 = vunpack.c.h.b16 %v10401
      %v10565 = vunpack.c.l.b16 %v10402
      %v10566 = vunpack.c.h.b16 %v10402
      %v10567 = vunpack.c.l.b16 %v10403
      %v10568 = vunpack.c.h.b16 %v10403
      %v10569 = vunpack.c.l.b16 %v10404
      %v10570 = vunpack.c.h.b16 %v10404
      %v10571 = vunpack.c.l.b16 %v10405
      %v10572 = vunpack.c.h.b16 %v10405
      %v10573 = vunpack.c.l.b16 %v10406
      %v10574 = vunpack.c.h.b16 %v10406
      %v10575 = vunpack.c.l.b16 %v10407
      %v10576 = vunpack.c.h.b16 %v10407
      %v10577 = vunpack.c.l.b16 %v10408
      %v10578 = vunpack.c.h.b16 %v10408
      %v10579 = vunpack.c.l.b16 %v10409
      %v10580 = vunpack.c.h.b16 %v10409
      %v10581 = vunpack.c.l.b16 %v10410
      %v10582 = vunpack.c.h.b16 %v10410
      %v10583 = vunpack.c.l.b16 %v10411
      %v10584 = vunpack.c.h.b16 %v10411
      %v10585 = vunpack.c.l.b16 %v10412
      %v10586 = vunpack.c.h.b16 %v10412
      %v10587 = vpack.c.b16 %v10557, %v10555
      %v10588 = vpack.c.b16 %v10558, %v10556
      %v10589 = vpack.c.b16 %v10561, %v10559
      %v10590 = vpack.c.b16 %v10562, %v10560
      %v10591 = vpack.c.b16 %v10565, %v10563
      %v10592 = vpack.c.b16 %v10566, %v10564
      %v10593 = vpack.c.b16 %v10569, %v10567
      %v10594 = vpack.c.b16 %v10570, %v10568
      %v10595 = vpack.c.b16 %v10573, %v10571
      %v10596 = vpack.c.b16 %v10574, %v10572
      %v10597 = vpack.c.b16 %v10577, %v10575
      %v10598 = vpack.c.b16 %v10578, %v10576
      %v10599 = vpack.c.b16 %v10581, %v10579
      %v10600 = vpack.c.b16 %v10582, %v10580
      %v10601 = vpack.c.b16 %v10585, %v10583
      %v10602 = vpack.c.b16 %v10586, %v10584
      %10619 = vmatpush.bf16.msra.mxu0 %v10601
      %10620 = vmatpush.bf16.msra.mxu0 %v10599
      %10621 = vmatpush.bf16.msra.mxu0 %v10597
      %10622 = vmatpush.bf16.msra.mxu0 %v10595
      %10623 = vmatpush.bf16.msra.mxu0 %v10593
      %10624 = vmatpush.bf16.msra.mxu0 %v10591
      %10625 = vmatpush.bf16.msra.mxu0 %v10589
      %10626 = vmatpush.bf16.msra.mxu0 %v10587
      %10627 = vmatmul.bf16.gmra.mxu0 %v10396
      %v10628 = vpop.f32.mrf.mxu0
      %v10629 = vadd.f32 %v10521, %v10628
      %v10630 = vpop.f32.mrf.mxu0
      %v10631 = vadd.f32 %v10523, %v10630
      %10632 = vdwg.mxu0
      %10633 = vmatpush.bf16.msra.mxu0 %v10602
      %10634 = vmatpush.bf16.msra.mxu0 %v10600
      %10635 = vmatpush.bf16.msra.mxu0 %v10598
      %10636 = vmatpush.bf16.msra.mxu0 %v10596
      %10637 = vmatpush.bf16.msra.mxu0 %v10594
      %10638 = vmatpush.bf16.msra.mxu0 %v10592
      %10639 = vmatpush.bf16.msra.mxu0 %v10590
      %10640 = vmatpush.bf16.msra.mxu0 %v10588
      %10641 = vmatmul.bf16.gmra.mxu0 %v10396
      %v10642 = vpop.f32.mrf.mxu0
      %v10643 = vadd.f32 %v10535, %v10642
      %v10644 = vpop.f32.mrf.mxu0
      %v10645 = vadd.f32 %v10537, %v10644
      %10646 = vdwg.mxu0
      %v10647 = vpack.c.bf16 %v10394, %v10392
      %s10648 = scalar_lea.vmem %s16, 256
      %v10649 = vld [vmem:[%s10648] sm:$0xff]
      %v10650 = vld [vmem:[%s10648 + $0x8] sm:$0xff]
      %v10651 = vld [vmem:[%s10648 + $0x10] sm:$0xff]
      %v10652 = vld [vmem:[%s10648 + $0x18] sm:$0xff]
      %v10653 = vld [vmem:[%s10648 + $0x20] sm:$0xff]
      %v10654 = vld [vmem:[%s10648 + $0x28] sm:$0xff]
      %v10655 = vld [vmem:[%s10648 + $0x30] sm:$0xff]
      %v10656 = vld [vmem:[%s10648 + $0x38] sm:$0xff]
      %v10657 = vld [vmem:[%s10648 + $0x40] sm:$0xff]
      %v10658 = vld [vmem:[%s10648 + $0x48] sm:$0xff]
      %v10659 = vld [vmem:[%s10648 + $0x50] sm:$0xff]
      %v10660 = vld [vmem:[%s10648 + $0x58] sm:$0xff]
      %v10661 = vld [vmem:[%s10648 + $0x60] sm:$0xff]
      %v10662 = vld [vmem:[%s10648 + $0x68] sm:$0xff]
      %v10663 = vld [vmem:[%s10648 + $0x70] sm:$0xff]
      %v10664 = vld [vmem:[%s10648 + $0x78] sm:$0xff]
      %v10681 = vunpack.c.l.b16 %v10649
      %v10682 = vunpack.c.h.b16 %v10649
      %v10683 = vunpack.c.l.b16 %v10650
      %v10684 = vunpack.c.h.b16 %v10650
      %v10685 = vunpack.c.l.b16 %v10651
      %v10686 = vunpack.c.h.b16 %v10651
      %v10687 = vunpack.c.l.b16 %v10652
      %v10688 = vunpack.c.h.b16 %v10652
      %v10689 = vunpack.c.l.b16 %v10653
      %v10690 = vunpack.c.h.b16 %v10653
      %v10691 = vunpack.c.l.b16 %v10654
      %v10692 = vunpack.c.h.b16 %v10654
      %v10693 = vunpack.c.l.b16 %v10655
      %v10694 = vunpack.c.h.b16 %v10655
      %v10695 = vunpack.c.l.b16 %v10656
      %v10696 = vunpack.c.h.b16 %v10656
      %v10697 = vunpack.c.l.b16 %v10657
      %v10698 = vunpack.c.h.b16 %v10657
      %v10699 = vunpack.c.l.b16 %v10658
      %v10700 = vunpack.c.h.b16 %v10658
      %v10701 = vunpack.c.l.b16 %v10659
      %v10702 = vunpack.c.h.b16 %v10659
      %v10703 = vunpack.c.l.b16 %v10660
      %v10704 = vunpack.c.h.b16 %v10660
      %v10705 = vunpack.c.l.b16 %v10661
      %v10706 = vunpack.c.h.b16 %v10661
      %v10707 = vunpack.c.l.b16 %v10662
      %v10708 = vunpack.c.h.b16 %v10662
      %v10709 = vunpack.c.l.b16 %v10663
      %v10710 = vunpack.c.h.b16 %v10663
      %v10711 = vunpack.c.l.b16 %v10664
      %v10712 = vunpack.c.h.b16 %v10664
      %v10713 = vpack.c.b16 %v10683, %v10681
      %v10714 = vpack.c.b16 %v10684, %v10682
      %v10715 = vpack.c.b16 %v10687, %v10685
      %v10716 = vpack.c.b16 %v10688, %v10686
      %v10717 = vpack.c.b16 %v10691, %v10689
      %v10718 = vpack.c.b16 %v10692, %v10690
      %v10719 = vpack.c.b16 %v10695, %v10693
      %v10720 = vpack.c.b16 %v10696, %v10694
      %v10721 = vpack.c.b16 %v10699, %v10697
      %v10722 = vpack.c.b16 %v10700, %v10698
      %v10723 = vpack.c.b16 %v10703, %v10701
      %v10724 = vpack.c.b16 %v10704, %v10702
      %v10725 = vpack.c.b16 %v10707, %v10705
      %v10726 = vpack.c.b16 %v10708, %v10706
      %v10727 = vpack.c.b16 %v10711, %v10709
      %v10728 = vpack.c.b16 %v10712, %v10710
      %10745 = vmatpush.bf16.msra.mxu0 %v10727
      %10746 = vmatpush.bf16.msra.mxu0 %v10725
      %10747 = vmatpush.bf16.msra.mxu0 %v10723
      %10748 = vmatpush.bf16.msra.mxu0 %v10721
      %10749 = vmatpush.bf16.msra.mxu0 %v10719
      %10750 = vmatpush.bf16.msra.mxu0 %v10717
      %10751 = vmatpush.bf16.msra.mxu0 %v10715
      %10752 = vmatpush.bf16.msra.mxu0 %v10713
      %10753 = vmatmul.bf16.gmra.mxu0 %v10647
      %v10754 = vpop.f32.mrf.mxu0
      %v10755 = vadd.f32 0.0, %v10754
      %v10756 = vpop.f32.mrf.mxu0
      %v10757 = vadd.f32 0.0, %v10756
      %10758 = vdwg.mxu0
      %10759 = vmatpush.bf16.msra.mxu0 %v10728
      %10760 = vmatpush.bf16.msra.mxu0 %v10726
      %10761 = vmatpush.bf16.msra.mxu0 %v10724
      %10762 = vmatpush.bf16.msra.mxu0 %v10722
      %10763 = vmatpush.bf16.msra.mxu0 %v10720
      %10764 = vmatpush.bf16.msra.mxu0 %v10718
      %10765 = vmatpush.bf16.msra.mxu0 %v10716
      %10766 = vmatpush.bf16.msra.mxu0 %v10714
      %10767 = vmatmul.bf16.gmra.mxu0 %v10647
      %v10768 = vpop.f32.mrf.mxu0
      %v10769 = vadd.f32 0.0, %v10768
      %v10770 = vpop.f32.mrf.mxu0
      %v10771 = vadd.f32 0.0, %v10770
      %10772 = vdwg.mxu0
      %v10773 = vadd.f32 %v10629, %v10755
      %v10774 = vadd.f32 %v10643, %v10769
      %v10775 = vadd.f32 %v10631, %v10757
      %v10776 = vadd.f32 %v10645, %v10771
      %v10777 = vld [vmem:[%s17] sm:$0x3]
      %v10779 = vperm.slane %v10777, 0
      %v10780 = vperm.slane %v10777, 1
      %v10783 = vadd.f32 %v10773, %v10779
      %v10784 = vadd.f32 %v10774, %v10780
      %v10785 = vadd.f32 %v10775, %v10779
      %v10786 = vadd.f32 %v10776, %v10780
      %v10787 = vmax.f32 %v10783, 0.0
      %v10788 = vmax.f32 %v10784, 0.0
      %v10789 = vmax.f32 %v10785, 0.0
      %v10790 = vmax.f32 %v10786, 0.0
      %v10791 = vpack.c.bf16 %v10789, %v10787
      %v10792 = vpack.c.bf16 %v10790, %v10788
      %v10793 = vld [vmem:[%s18] sm:$0xf]
      %v10794 = vld [vmem:[%s18 + $0x4] sm:$0xf]
      %v10795 = vld [vmem:[%s18 + $0x8] sm:$0xf]
      %v10796 = vld [vmem:[%s18 + $0xc] sm:$0xf]
      %v10797 = vld [vmem:[%s18 + $0x10] sm:$0xf]
      %v10798 = vld [vmem:[%s18 + $0x14] sm:$0xf]
      %v10799 = vld [vmem:[%s18 + $0x18] sm:$0xf]
      %v10800 = vld [vmem:[%s18 + $0x1c] sm:$0xf]
      %v10801 = vld [vmem:[%s18 + $0x20] sm:$0xf]
      %v10802 = vld [vmem:[%s18 + $0x24] sm:$0xf]
      %v10803 = vld [vmem:[%s18 + $0x28] sm:$0xf]
      %v10804 = vld [vmem:[%s18 + $0x2c] sm:$0xf]
      %v10805 = vld [vmem:[%s18 + $0x30] sm:$0xf]
      %v10806 = vld [vmem:[%s18 + $0x34] sm:$0xf]
      %v10807 = vld [vmem:[%s18 + $0x38] sm:$0xf]
      %v10808 = vld [vmem:[%s18 + $0x3c] sm:$0xf]
      %v10809 = vld [vmem:[%s18 + $0x40] sm:$0xf]
      %v10810 = vld [vmem:[%s18 + $0x44] sm:$0xf]
      %v10811 = vld [vmem:[%s18 + $0x48] sm:$0xf]
      %v10812 = vld [vmem:[%s18 + $0x4c] sm:$0xf]
      %v10813 = vld [vmem:[%s18 + $0x50] sm:$0xf]
      %v10814 = vld [vmem:[%s18 + $0x54] sm:$0xf]
      %v10815 = vld [vmem:[%s18 + $0x58] sm:$0xf]
      %v10816 = vld [vmem:[%s18 + $0x5c] sm:$0xf]
      %v10817 = vld [vmem:[%s18 + $0x60] sm:$0xf]
      %v10818 = vld [vmem:[%s18 + $0x64] sm:$0xf]
      %v10819 = vld [vmem:[%s18 + $0x68] sm:$0xf]
      %v10820 = vld [vmem:[%s18 + $0x6c] sm:$0xf]
      %v10821 = vld [vmem:[%s18 + $0x70] sm:$0xf]
      %v10822 = vld [vmem:[%s18 + $0x74] sm:$0xf]
      %v10823 = vld [vmem:[%s18 + $0x78] sm:$0xf]
      %v10824 = vld [vmem:[%s18 + $0x7c] sm:$0xf]
      %v10825 = vld [vmem:[%s19] sm:$0x1]
      %v10827 = vperm.slane %v10825, 0
      %v10861 = vunpack.c.l.b16 %v10793
      %v10862 = vunpack.c.l.b16 %v10794
      %v10863 = vunpack.c.l.b16 %v10795
      %v10864 = vunpack.c.l.b16 %v10796
      %v10865 = vunpack.c.l.b16 %v10797
      %v10866 = vunpack.c.l.b16 %v10798
      %v10867 = vunpack.c.l.b16 %v10799
      %v10868 = vunpack.c.l.b16 %v10800
      %v10869 = vunpack.c.l.b16 %v10801
      %v10870 = vunpack.c.l.b16 %v10802
      %v10871 = vunpack.c.l.b16 %v10803
      %v10872 = vunpack.c.l.b16 %v10804
      %v10873 = vunpack.c.l.b16 %v10805
      %v10874 = vunpack.c.l.b16 %v10806
      %v10875 = vunpack.c.l.b16 %v10807
      %v10876 = vunpack.c.l.b16 %v10808
      %v10877 = vunpack.c.l.b16 %v10809
      %v10878 = vunpack.c.l.b16 %v10810
      %v10879 = vunpack.c.l.b16 %v10811
      %v10880 = vunpack.c.l.b16 %v10812
      %v10881 = vunpack.c.l.b16 %v10813
      %v10882 = vunpack.c.l.b16 %v10814
      %v10883 = vunpack.c.l.b16 %v10815
      %v10884 = vunpack.c.l.b16 %v10816
      %v10885 = vunpack.c.l.b16 %v10817
      %v10886 = vunpack.c.l.b16 %v10818
      %v10887 = vunpack.c.l.b16 %v10819
      %v10888 = vunpack.c.l.b16 %v10820
      %v10889 = vunpack.c.l.b16 %v10821
      %v10890 = vunpack.c.l.b16 %v10822
      %v10891 = vunpack.c.l.b16 %v10823
      %v10892 = vunpack.c.l.b16 %v10824
      %v10893 = vpack.c.b16 %v10862, %v10861
      %v10894 = vpack.c.b16 %v10864, %v10863
      %v10895 = vpack.c.b16 %v10866, %v10865
      %v10896 = vpack.c.b16 %v10868, %v10867
      %v10897 = vpack.c.b16 %v10870, %v10869
      %v10898 = vpack.c.b16 %v10872, %v10871
      %v10899 = vpack.c.b16 %v10874, %v10873
      %v10900 = vpack.c.b16 %v10876, %v10875
      %v10901 = vpack.c.b16 %v10878, %v10877
      %v10902 = vpack.c.b16 %v10880, %v10879
      %v10903 = vpack.c.b16 %v10882, %v10881
      %v10904 = vpack.c.b16 %v10884, %v10883
      %v10905 = vpack.c.b16 %v10886, %v10885
      %v10906 = vpack.c.b16 %v10888, %v10887
      %v10907 = vpack.c.b16 %v10890, %v10889
      %v10908 = vpack.c.b16 %v10892, %v10891
      %10925 = vmatpush.bf16.msra.mxu0 %v10900
      %10926 = vmatpush.bf16.msra.mxu0 %v10899
      %10927 = vmatpush.bf16.msra.mxu0 %v10898
      %10928 = vmatpush.bf16.msra.mxu0 %v10897
      %10929 = vmatpush.bf16.msra.mxu0 %v10896
      %10930 = vmatpush.bf16.msra.mxu0 %v10895
      %10931 = vmatpush.bf16.msra.mxu0 %v10894
      %10932 = vmatpush.bf16.msra.mxu0 %v10893
      %10933 = vmatmul.bf16.gmra.mxu0 %v10791
      %v10934 = vpop.f32.mrf.mxu0
      %v10935 = vadd.f32 %v10827, %v10934
      %v10936 = vpop.f32.mrf.mxu0
      %v10937 = vadd.f32 %v10827, %v10936
      %10938 = vdwg.mxu0
      %10939 = vmatpush.bf16.msra.mxu0 %v10908
      %10940 = vmatpush.bf16.msra.mxu0 %v10907
      %10941 = vmatpush.bf16.msra.mxu0 %v10906
      %10942 = vmatpush.bf16.msra.mxu0 %v10905
      %10943 = vmatpush.bf16.msra.mxu0 %v10904
      %10944 = vmatpush.bf16.msra.mxu0 %v10903
      %10945 = vmatpush.bf16.msra.mxu0 %v10902
      %10946 = vmatpush.bf16.msra.mxu0 %v10901
      %10947 = vmatmul.bf16.gmra.mxu0 %v10792
      %v10948 = vpop.f32.mrf.mxu0
      %v10949 = vadd.f32 %v10935, %v10948
      %v10950 = vpop.f32.mrf.mxu0
      %v10951 = vadd.f32 %v10937, %v10950
      %10952 = vdwg.mxu0
      %10953 = vmax.xlane.f32.xlu0 %v10949
      %v10954 = vpop.xlane.xlu0 %10953
      %10955 = vmax.xlane.f32.xlu0 %v10951
      %v10956 = vpop.xlane.xlu0 %10955
      %v10957 = vsub.f32 %v10949, %v10954
      %v10958 = vsub.f32 %v10951, %v10956
      %v10959 = vmul.f32 %v10957, 1.442695
      %v10960 = vpow.pop %v10959
      %v10961 = vmul.f32 %v10958, 1.442695
      %v10962 = vpow.pop %v10961
      %10963 = vadd.xlane.f32.xlu0 %v10960
      %v10964 = vpop.xlane.xlu0 %10963
      %10965 = vadd.xlane.f32.xlu0 %v10962
      %v10966 = vpop.xlane.xlu0 %10965
      %v10967 = vlog2.pop %v10964
      %v10968 = vmul.f32 %v10967, 0.6931472
      %v10969 = vlog2.pop %v10966
      %v10970 = vmul.f32 %v10969, 0.6931472
      %v10971 = vsub.f32 %v10957, %v10968
      %v10972 = vsub.f32 %v10958, %v10970
      %10973 = vst [vmem:[%s629] sm:$0xff] %v10971
      %10974 = vst [vmem:[%s629 + $0x8] sm:$0xff] %v10972
      %s10975 = smul.u32 2, %s31
      %p10976 = scmp.lt.s32.totalorder %s10975, 3
      %s10977 = scalar_select %p10976, %s10975, 3
      %s10978 = smul.addr %s10977, 8
      %s10979 = scalar_lea.vmem %s20, %s10978
      // Predicated region
      $region101: #{mnist_forward.1} parent=99 // pred_check
        %p10980 = pneg %p474
      $region102: #{mnist_forward.1} parent=99 // pred_check_branch
        %10982 = sbr.rel (%p10980) target = $region104
      $region103: #{mnist_forward.1} parent=99 // pred_region
        %s10983 = smul.u32 2, %s31
      $region104: #{mnist_forward.1} parent=99 // pred_fallthru
        _
    $region100: #{mnist_forward.1} parent=5 // pred_fallthru
      _
    %p10984 = scmp.le.s32.totalorder 2, %s26
    // Predicated region
    $region105: #{mnist_forward.1} parent=5 // pred_check
      %p10985 = pneg %p10984
    $region106: #{mnist_forward.1} parent=5 // pred_check_branch
      %10987 = sbr.rel (%p10985) target = $region108
    $region107: #{mnist_forward.1} parent=5 // pred_region
      %s10988 = ssub.s32 %s26, 2
      // Predicated region
      $region109: #{mnist_forward.1} parent=107 // pred_check
        %p10989 = pneg %p480
      $region110: #{mnist_forward.1} parent=107 // pred_check_branch
        %10991 = sbr.rel (%p10989) target = $region112
      $region111: #{mnist_forward.1} parent=107 // pred_region
        %s10992 = smul.u32 2, %s32
        %p10993 = scmp.lt.s32.totalorder %s10992, 3
        %s10994 = scalar_select %p10993, %s10992, 3
        %s10995 = smul.addr %s10994, 8
        %s10996 = scalar_lea.vmem %s20, %s10995
      $region112: #{mnist_forward.1} parent=107 // pred_fallthru
        _
    $region108: #{mnist_forward.1} parent=5 // pred_fallthru
      _
  $region6: #{mnist_forward.1} parent=0 // loop_footer
    %s30 = sadd.s32 1, %s26
  $region7: #{mnist_forward.1} parent=0 // loop_footer_branch
    %25 = sbr.rel target = $region3
  $region8: #{mnist_forward.1} parent=0 // loop_exit
    _

</llo_original>
